<compile_context>
chip_gen: v7x
topology: tpu7x:2x2x1
jax: 0.10.0
libtpu: 0.0.40
codegen_flags: <defaults>
</compile_context>

<pallas_src>
import functools

import jax
import jax.numpy as jnp
from jax.experimental import pallas as pl
from jax.experimental.pallas import tpu as pltpu

_VMEM_LIMIT = 32 * 1024 * 1024  # safe on v5e/v6e/v7x scoped-VMEM budgets


def _silu(x):
    # explicit formula so kernel and reference use identical elementwise math
    return x * (1.0 / (1.0 + jnp.exp(-x)))


def _pick_row_tile(M, target=256):
    """Largest row tile <= target that is a multiple of 8 and divides M."""
    if M <= target or M % 8 != 0:
        return M
    for t in range(target, 7, -8):
        if M % t == 0:
            return t
    return M


# ----------------------------------------------------------------------------
# Kernel 1: fused cv0 + cv1 (1x1 conv), tiled over M = N*H*W
# ----------------------------------------------------------------------------
def stem_kernel(x_ref, w_ref, b_ref, o_ref):
    # x_ref: (tm, C1) f32   w_ref: (C1, 2c) bf16   b_ref: (1, 2c) f32   o_ref: (tm, 2c) bf16
    x = x_ref[...].astype(jnp.bfloat16)
    y = jnp.dot(x, w_ref[...], preferred_element_type=jnp.float32) + b_ref[...]
    o_ref[...] = _silu(y).astype(o_ref.dtype)


def fused_cv0_cv1(x_nhwc, w_stem, b_stem):
    """x: (N,H,W,C1) f32, w_stem: (C1,2c) bf16 -> y01: (N,H,W,2c) bf16, channels [y1|y0]."""
    N, H, W, C1 = x_nhwc.shape
    Cout = w_stem.shape[1]
    M = N * H * W
    tm = _pick_row_tile(M)
    x2 = x_nhwc.reshape(M, C1)
    out = pl.pallas_call(
        stem_kernel,
        out_shape=jax.ShapeDtypeStruct((M, Cout), jnp.bfloat16),
        grid=(M // tm,),
        in_specs=[
            pl.BlockSpec((tm, C1), lambda i: (i, 0)),
            pl.BlockSpec((C1, Cout), lambda i: (0, 0)),
            pl.BlockSpec((1, Cout), lambda i: (0, 0)),
        ],
        out_specs=pl.BlockSpec((tm, Cout), lambda i: (i, 0)),
        compiler_params=pltpu.CompilerParams(
            dimension_semantics=("parallel",), vmem_limit_bytes=_VMEM_LIMIT),
        cost_estimate=pl.CostEstimate(
            flops=2 * M * C1 * Cout,
            transcendentals=M * Cout,
            bytes_accessed=M * C1 * 4 + M * Cout * 2 + C1 * Cout * 2),
    )(x2, w_stem, b_stem.reshape(1, Cout))
    return out.reshape(N, H, W, Cout)


# ----------------------------------------------------------------------------
# Kernel 2: fused Bottleneck = SiLU(Conv3x3(SiLU(Conv3x3(y1))))  (shortcut=False)
# ----------------------------------------------------------------------------
def bottleneck_kernel(x_ref, w1_ref, b1_ref, w2_ref, b2_ref, o_ref, xpad, tpad,
                      *, H, W, C, TH):
    # x_ref: (1,H,W,Cin) bf16  (branch input; its FIRST C channels are the conv input)
    # w{1,2}_ref: (9,C,C) bf16   b{1,2}_ref: (1,C) f32   o_ref: (1,H,W,C) bf16
    # xpad/tpad: (H+2, W+2, C) f32 VMEM scratch with zero borders (in-kernel padding).
    xpad[...] = jnp.zeros_like(xpad)
    tpad[...] = jnp.zeros_like(tpad)
    xpad[1:H + 1, 1:W + 1, :] = x_ref[0, :, :, :C].astype(jnp.float32)

    def conv3x3_silu_chunk(pad_ref, w_ref, b_ref, h0, th):
        # 9 accumulating MXU dots on a bounded (th*W, C) f32 accumulator.
        acc = jnp.zeros((th * W, C), jnp.float32)
        for dy in range(3):
            for dx in range(3):
                patch = pad_ref[h0 + dy:h0 + dy + th, dx:dx + W, :]
                patch = patch.reshape(th * W, C).astype(jnp.bfloat16)
                acc = acc + jnp.dot(patch, w_ref[dy * 3 + dx],
                                    preferred_element_type=jnp.float32)
        return _silu(acc + b_ref[...]).reshape(th, W, C)

    # first 3x3 conv + SiLU -> padded VMEM scratch (intermediate never hits HBM)
    for h0 in range(0, H, TH):
        th = min(TH, H - h0)
        tpad[h0 + 1:h0 + 1 + th, 1:W + 1, :] = conv3x3_silu_chunk(xpad, w1_ref, b1_ref, h0, th)
    # second 3x3 conv + SiLU -> output
    for h0 in range(0, H, TH):
        th = min(TH, H - h0)
        y = conv3x3_silu_chunk(tpad, w2_ref, b2_ref, h0, th)
        o_ref[0, h0:h0 + th, :, :] = y.astype(o_ref.dtype)


def fused_bottleneck(x_nhwc, w1, b1, w2, b2, c):
    """x: (N,H,W,Cin) bf16 (first c channels used), w: (9,c,c) bf16 -> (N,H,W,c) bf16."""
    N, H, W, Cin = x_nhwc.shape
    TH = min(H, 8)
    kernel = functools.partial(bottleneck_kernel, H=H, W=W, C=c, TH=TH)
    # TODO(synk): for v7x-scale images add an H-tile grid axis with halo DMA; at these
    # shapes the whole image fits a single VMEM block per batch element.
    return pl.pallas_call(
        kernel,
        out_shape=jax.ShapeDtypeStruct((N, H, W, c), jnp.bfloat16),
        grid=(N,),
        in_specs=[
            pl.BlockSpec((1, H, W, Cin), lambda n: (n, 0, 0, 0)),
            pl.BlockSpec((9, c, c), lambda n: (0, 0, 0)),
            pl.BlockSpec((1, c), lambda n: (0, 0)),
            pl.BlockSpec((9, c, c), lambda n: (0, 0, 0)),
            pl.BlockSpec((1, c), lambda n: (0, 0)),
        ],
        out_specs=pl.BlockSpec((1, H, W, c), lambda n: (n, 0, 0, 0)),
        scratch_shapes=[
            pltpu.VMEM((H + 2, W + 2, c), jnp.float32),
            pltpu.VMEM((H + 2, W + 2, c), jnp.float32),
        ],
        compiler_params=pltpu.CompilerParams(
            dimension_semantics=("parallel",), vmem_limit_bytes=_VMEM_LIMIT),
        cost_estimate=pl.CostEstimate(
            flops=2 * 2 * 9 * N * H * W * c * c,
            transcendentals=2 * N * H * W * c,
            bytes_accessed=N * H * W * (Cin + c) * 2 + 2 * 9 * c * c * 2),
    )(x_nhwc, w1, b1.reshape(1, c), w2, b2.reshape(1, c))


# ----------------------------------------------------------------------------
# Kernel 3: cv2 epilogue as sum of per-branch partial matmuls (no channel concat)
# ----------------------------------------------------------------------------
def _make_epilogue_kernel(n_extra):
    def kernel(*refs):
        y01_ref = refs[0]
        y_refs = refs[1:1 + n_extra]
        wa_ref = refs[1 + n_extra]
        wb_refs = refs[2 + n_extra:2 + 2 * n_extra]
        b_ref = refs[2 + 2 * n_extra]
        o_ref = refs[3 + 2 * n_extra]
        acc = jnp.dot(y01_ref[...], wa_ref[...], preferred_element_type=jnp.float32)
        for y_ref, w_ref in zip(y_refs, wb_refs):
            acc = acc + jnp.dot(y_ref[...], w_ref[...], preferred_element_type=jnp.float32)
        o_ref[...] = _silu(acc + b_ref[...]).astype(o_ref.dtype)
    return kernel


def fused_cat_cv2(y01, y_extras, wa, wbs, b2, c2):
    """out = SiLU(y01 @ wa + sum_i y_i @ wb_i + b2)  -- replaces concat + cv2."""
    N, H, W, C01 = y01.shape
    M = N * H * W
    tm = _pick_row_tile(M)
    y01_2 = y01.reshape(M, C01)
    y_ex_2 = [y.reshape(M, y.shape[-1]) for y in y_extras]
    n_extra = len(y_ex_2)
    k_total = C01 + sum(y.shape[-1] for y in y_ex_2)

    in_specs = ([pl.BlockSpec((tm, C01), lambda i: (i, 0))]
                + [pl.BlockSpec((tm, y.shape[-1]), lambda i: (i, 0)) for y in y_ex_2]
                + [pl.BlockSpec(wa.shape, lambda i: (0, 0))]
                + [pl.BlockSpec(w.shape, lambda i: (0, 0)) for w in wbs]
                + [pl.BlockSpec((1, c2), lambda i: (0, 0))])

    out = pl.pallas_call(
        _make_epilogue_kernel(n_extra),
        out_shape=jax.ShapeDtypeStruct((M, c2), jnp.float32),
        grid=(M // tm,),
        in_specs=in_specs,
        out_specs=pl.BlockSpec((tm, c2), lambda i: (i, 0)),
        compiler_params=pltpu.CompilerParams(
            dimension_semantics=("parallel",), vmem_limit_bytes=_VMEM_LIMIT),
        cost_estimate=pl.CostEstimate(
            flops=2 * M * k_total * c2,
            transcendentals=M * c2,
            bytes_accessed=M * k_total * 2 + M * c2 * 4 + k_total * c2 * 2),
    )(y01_2, *y_ex_2, wa, *wbs, b2.reshape(1, c2))
    return out.reshape(N, H, W, c2)


# ----------------------------------------------------------------------------
# Parameter construction (Conv2d + BatchNorm2d folded, deterministic init)
# ----------------------------------------------------------------------------
def make_conv_bn_params(key, cin, cout, k):
    """Returns folded (weight, bias). weight: (Cin,Cout) for k=1, (9,Cin,Cout) for k=3."""
    k1, k2, k3, k4, k5 = jax.random.split(key, 5)
    w = jax.random.normal(k1, (cout, cin, k, k), jnp.float32) * 0.1   # OIHW, bias=False
    gamma = jax.random.uniform(k2, (cout,), jnp.float32, 0.5, 1.5)
    beta = jax.random.normal(k3, (cout,), jnp.float32) * 0.1
    mean = jax.random.normal(k4, (cout,), jnp.float32) * 0.1
    var = jax.random.uniform(k5, (cout,), jnp.float32, 0.5, 1.5)
    eps = 1e-5
    scale = gamma / jnp.sqrt(var + eps)
    bias = beta - mean * scale
    w_eff = w * scale[:, None, None, None]
    if k == 1:
        w_out = w_eff[:, :, 0, 0].T                                   # (Cin, Cout)
    else:
        w_out = jnp.transpose(w_eff, (2, 3, 1, 0)).reshape(k * k, cin, cout)
    return w_out, bias


def make_c2f_v2_params(key, c1, c2, n=1, e=0.5):
    c = int(c2 * e)
    keys = jax.random.split(key, 3 + 2 * n)
    return {
        "cv0": make_conv_bn_params(keys[0], c1, c, 1),
        "cv1": make_conv_bn_params(keys[1], c1, c, 1),
        "cv2": make_conv_bn_params(keys[2], (2 + n) * c, c2, 1),
        "m": [
            (make_conv_bn_params(keys[3 + 2 * i], c, c, 3),
             make_conv_bn_params(keys[3 + 2 * i + 1], c, c, 3))
            for i in range(n)
        ],
    }


# ----------------------------------------------------------------------------
# C2f_v2 forward (NCHW in / NCHW out, shortcut=False)
# ----------------------------------------------------------------------------
def c2f_v2_forward(x_nchw, params):
    bf = jnp.bfloat16
    w0, b0 = params["cv0"]
    w1, b1 = params["cv1"]
    w2, b2 = params["cv2"]
    c = w0.shape[1]
    n = len(params["m"])

    # Stem weights in [y1 | y0] channel order so the bottleneck reads a prefix slice.
    w_stem = jnp.concatenate([w1, w0], axis=1).astype(bf)
    b_stem = jnp.concatenate([b1, b0], axis=0)
    # cv2 weight rows reordered/split to match the [y1 | y0 | y2 | ...] branch order.
    wa = jnp.concatenate([w2[c:2 * c], w2[:c]], axis=0).astype(bf)
    wbs = [w2[(2 + i) * c:(3 + i) * c].astype(bf) for i in range(n)]

    x = jnp.transpose(x_nchw, (0, 2, 3, 1))            # NCHW -> NHWC
    y01 = fused_cv0_cv1(x, w_stem, b_stem)             # (N,H,W,2c), [..., :c] == y1
    branch = y01
    y_extras = []
    for (mw1, mb1), (mw2, mb2) in params["m"]:
        branch = fused_bottleneck(branch, mw1.astype(bf), mb1, mw2.astype(bf), mb2, c)
        y_extras.append(branch)
    out = fused_cat_cv2(y01, y_extras, wa, wbs, b2, w2.shape[1])
    return jnp.transpose(out, (0, 3, 1, 2))            # NHWC -> NCHW


# ----------------------------------------------------------------------------
# Pure-JAX reference (same bf16 operand quantization points) for validation
# ----------------------------------------------------------------------------
def c2f_v2_reference(x_nchw, params):
    bf = jnp.bfloat16
    w0, b0 = params["cv0"]
    w1, b1 = params["cv1"]
    w2, b2 = params["cv2"]

    def conv1x1(xb, w, b):
        M = xb.shape[0] * xb.shape[1] * xb.shape[2]
        y = jax.lax.dot_general(xb.reshape(M, xb.shape[-1]), w.astype(bf),
                                (((1,), (0,)), ((), ())),
                                preferred_element_type=jnp.float32)
        y = y.reshape(xb.shape[:-1] + (w.shape[1],)) + b
        return _silu(y)

    def conv3x3(xb, w, b):
        cin, cout = w.shape[1], w.shape[2]
        w_hwio = w.reshape(3, 3, cin, cout).astype(bf)
        y = jax.lax.conv_general_dilated(
            xb, w_hwio, (1, 1), "SAME",
            dimension_numbers=("NHWC", "HWIO", "NHWC"),
            preferred_element_type=jnp.float32) + b
        return _silu(y)

    x = jnp.transpose(x_nchw, (0, 2, 3, 1)).astype(bf)
    y0 = conv1x1(x, w0, b0).astype(bf)
    y1 = conv1x1(x, w1, b1).astype(bf)
    ys = [y0, y1]
    cur = y1
    for (mw1, mb1), (mw2, mb2) in params["m"]:
        t = conv3x3(cur, mw1, mb1)                     # f32
        cur = conv3x3(t.astype(bf), mw2, mb2).astype(bf)
        ys.append(cur)
    cat = jnp.concatenate(ys, axis=-1)
    out = conv1x1(cat, w2, b2)                         # f32
    return jnp.transpose(out, (0, 3, 1, 2))


# ----------------------------------------------------------------------------
if __name__ == "__main__":
    key = jax.random.PRNGKey(0)
    kx, kp = jax.random.split(key)

    # Small shapes consistent with the module: c1=4, c2=8, n=1, e=0.5 -> c=4
    N, C1, H, W = 2, 4, 16, 16
    C2 = 8
    x = jax.random.normal(kx, (N, C1, H, W), jnp.float32)
    params = make_c2f_v2_params(kp, C1, C2, n=1, e=0.5)

    fwd = jax.jit(c2f_v2_forward)
    out = jax.block_until_ready(fwd(x, params))
    ref = jax.block_until_ready(c2f_v2_reference(x, params))

    assert out.shape == (N, C2, H, W), out.shape
    err = float(jnp.max(jnp.abs(out - ref)))
    assert err < 2e-2, err

    print("KERNEL_OK")
</pallas_src>

<mosaic_0001>
module attributes {stable_mosaic.version = 11 : i64} {
  func.func @stem_kernel(%arg0: i32, %arg1: memref<256x4xf32, #tpu.memory_space<vmem>>, %arg2: memref<4x8xbf16, #tpu.memory_space<vmem>>, %arg3: memref<1x8xf32, #tpu.memory_space<vmem>>, %arg4: memref<256x8xbf16, #tpu.memory_space<vmem>>) attributes {dimension_semantics = [#tpu.dimension_semantics<parallel>], iteration_bounds = array<i64: 2>, scalar_prefetch = 0 : i64, scratch_operands = 0 : i64, tpu.core_type = #tpu.core_type<tc>, window_params = [{transform_indices = @transform_0, window_bounds = array<i64: 256, 4>}, {pipeline_mode = #tpu.pipeline_mode<synchronous>, transform_indices = @transform_1, window_bounds = array<i64: 4, 8>}, {pipeline_mode = #tpu.pipeline_mode<synchronous>, transform_indices = @transform_2, window_bounds = array<i64: 1, 8>}, {transform_indices = @transform_3, window_bounds = array<i64: 256, 8>}]} {
    %c0 = arith.constant 0 : index
    %c0_0 = arith.constant 0 : index
    %0 = vector.load %arg1[%c0, %c0_0] : memref<256x4xf32, #tpu.memory_space<vmem>>, vector<256x4xf32>
    %1 = arith.truncf %0 : vector<256x4xf32> to vector<256x4xbf16>
    %c0_1 = arith.constant 0 : index
    %c0_2 = arith.constant 0 : index
    %2 = vector.load %arg2[%c0_1, %c0_2] : memref<4x8xbf16, #tpu.memory_space<vmem>>, vector<4x8xbf16>
    %cst = arith.constant dense<0.000000e+00> : vector<256x8xf32>
    %3 = tpu.matmul %1, %2, %cst {dimension_numbers = #tpu.dot_dimension_numbers<[1], [0], [0], [1], [0, 0, 1, 1], [], []>} : vector<256x4xbf16>, vector<4x8xbf16>, vector<256x8xf32> -> vector<256x8xf32>
    %c0_3 = arith.constant 0 : index
    %c0_4 = arith.constant 0 : index
    %4 = vector.load %arg3[%c0_3, %c0_4] : memref<1x8xf32, #tpu.memory_space<vmem>>, vector<1x8xf32>
    %5 = vector.broadcast %4 : vector<1x8xf32> to vector<256x8xf32>
    %6 = arith.addf %3, %5 : vector<256x8xf32>
    %cst_5 = arith.constant 0.000000e+00 : f32
    %7 = vector.broadcast %cst_5 : f32 to vector<256x8xf32>
    %8 = arith.subf %7, %6 : vector<256x8xf32>
    %9 = math.exp %8 : vector<256x8xf32>
    %cst_6 = arith.constant 1.000000e+00 : f32
    %10 = vector.broadcast %cst_6 : f32 to vector<256x8xf32>
    %11 = arith.addf %10, %9 : vector<256x8xf32>
    %cst_7 = arith.constant 1.000000e+00 : f32
    %12 = vector.broadcast %cst_7 : f32 to vector<256x8xf32>
    %13 = arith.divf %12, %11 : vector<256x8xf32>
    %14 = arith.mulf %6, %13 : vector<256x8xf32>
    %15 = arith.truncf %14 : vector<256x8xf32> to vector<256x8xbf16>
    %c0_8 = arith.constant 0 : index
    %c0_9 = arith.constant 0 : index
    %16 = vector.load %arg4[%c0_8, %c0_9] : memref<256x8xbf16, #tpu.memory_space<vmem>>, vector<256x8xbf16>
    tpu.vector_store %arg4[%c0_8, %c0_9], %15 {strides = array<i32>} : memref<256x8xbf16, #tpu.memory_space<vmem>>, vector<256x8xbf16>,
    return
  }
  func.func @transform_0(%arg0: i32) -> (i32, i32) {
    %c0_i32 = arith.constant 0 : i32
    %c0_i32_0 = arith.constant 0 : i32
    return %arg0, %c0_i32 : i32, i32
  }
  func.func @transform_1(%arg0: i32) -> (i32, i32) {
    %c0_i32 = arith.constant 0 : i32
    %c0_i32_0 = arith.constant 0 : i32
    %c0_i32_1 = arith.constant 0 : i32
    return %c0_i32, %c0_i32_0 : i32, i32
  }
  func.func @transform_2(%arg0: i32) -> (i32, i32) {
    %c0_i32 = arith.constant 0 : i32
    %c0_i32_0 = arith.constant 0 : i32
    %c0_i32_1 = arith.constant 0 : i32
    return %c0_i32, %c0_i32_0 : i32, i32
  }
  func.func @transform_3(%arg0: i32) -> (i32, i32) {
    %c0_i32 = arith.constant 0 : i32
    %c0_i32_0 = arith.constant 0 : i32
    return %arg0, %c0_i32 : i32, i32
  }
}

module attributes {stable_mosaic.version = 11 : i64} {
  func.func @kernel(%arg0: i32, %arg1: memref<256x8xbf16, #tpu.memory_space<vmem>>, %arg2: memref<256x4xbf16, #tpu.memory_space<vmem>>, %arg3: memref<8x8xbf16, #tpu.memory_space<vmem>>, %arg4: memref<4x8xbf16, #tpu.memory_space<vmem>>, %arg5: memref<1x8xf32, #tpu.memory_space<vmem>>, %arg6: memref<256x8xf32, #tpu.memory_space<vmem>>) attributes {dimension_semantics = [#tpu.dimension_semantics<parallel>], iteration_bounds = array<i64: 2>, scalar_prefetch = 0 : i64, scratch_operands = 0 : i64, tpu.core_type = #tpu.core_type<tc>, window_params = [{transform_indices = @transform_0, window_bounds = array<i64: 256, 8>}, {transform_indices = @transform_1, window_bounds = array<i64: 256, 4>}, {pipeline_mode = #tpu.pipeline_mode<synchronous>, transform_indices = @transform_2, window_bounds = array<i64: 8, 8>}, {pipeline_mode = #tpu.pipeline_mode<synchronous>, transform_indices = @transform_3, window_bounds = array<i64: 4, 8>}, {pipeline_mode = #tpu.pipeline_mode<synchronous>, transform_indices = @transform_4, window_bounds = array<i64: 1, 8>}, {transform_indices = @transform_5, window_bounds = array<i64: 256, 8>}]} {
    %c0 = arith.constant 0 : index
    %c0_0 = arith.constant 0 : index
    %0 = vector.load %arg1[%c0, %c0_0] : memref<256x8xbf16, #tpu.memory_space<vmem>>, vector<256x8xbf16>
    %c0_1 = arith.constant 0 : index
    %c0_2 = arith.constant 0 : index
    %1 = vector.load %arg3[%c0_1, %c0_2] : memref<8x8xbf16, #tpu.memory_space<vmem>>, vector<8x8xbf16>
    %cst = arith.constant dense<0.000000e+00> : vector<256x8xf32>
    %2 = tpu.matmul %0, %1, %cst {dimension_numbers = #tpu.dot_dimension_numbers<[1], [0], [0], [1], [0, 0, 1, 1], [], []>} : vector<256x8xbf16>, vector<8x8xbf16>, vector<256x8xf32> -> vector<256x8xf32>
    %c0_3 = arith.constant 0 : index
    %c0_4 = arith.constant 0 : index
    %3 = vector.load %arg2[%c0_3, %c0_4] : memref<256x4xbf16, #tpu.memory_space<vmem>>, vector<256x4xbf16>
    %c0_5 = arith.constant 0 : index
    %c0_6 = arith.constant 0 : index
    %4 = vector.load %arg4[%c0_5, %c0_6] : memref<4x8xbf16, #tpu.memory_space<vmem>>, vector<4x8xbf16>
    %cst_7 = arith.constant dense<0.000000e+00> : vector<256x8xf32>
    %5 = tpu.matmul %3, %4, %cst_7 {dimension_numbers = #tpu.dot_dimension_numbers<[1], [0], [0], [1], [0, 0, 1, 1], [], []>} : vector<256x4xbf16>, vector<4x8xbf16>, vector<256x8xf32> -> vector<256x8xf32>
    %6 = arith.addf %2, %5 : vector<256x8xf32>
    %c0_8 = arith.constant 0 : index
    %c0_9 = arith.constant 0 : index
    %7 = vector.load %arg5[%c0_8, %c0_9] : memref<1x8xf32, #tpu.memory_space<vmem>>, vector<1x8xf32>
    %8 = vector.broadcast %7 : vector<1x8xf32> to vector<256x8xf32>
    %9 = arith.addf %6, %8 : vector<256x8xf32>
    %cst_10 = arith.constant 0.000000e+00 : f32
    %10 = vector.broadcast %cst_10 : f32 to vector<256x8xf32>
    %11 = arith.subf %10, %9 : vector<256x8xf32>
    %12 = math.exp %11 : vector<256x8xf32>
    %cst_11 = arith.constant 1.000000e+00 : f32
    %13 = vector.broadcast %cst_11 : f32 to vector<256x8xf32>
    %14 = arith.addf %13, %12 : vector<256x8xf32>
    %cst_12 = arith.constant 1.000000e+00 : f32
    %15 = vector.broadcast %cst_12 : f32 to vector<256x8xf32>
    %16 = arith.divf %15, %14 : vector<256x8xf32>
    %17 = arith.mulf %9, %16 : vector<256x8xf32>
    %c0_13 = arith.constant 0 : index
    %c0_14 = arith.constant 0 : index
    %18 = vector.load %arg6[%c0_13, %c0_14] : memref<256x8xf32, #tpu.memory_space<vmem>>, vector<256x8xf32>
    tpu.vector_store %arg6[%c0_13, %c0_14], %17 {strides = array<i32>} : memref<256x8xf32, #tpu.memory_space<vmem>>, vector<256x8xf32>,
    return
  }
  func.func @transform_0(%arg0: i32) -> (i32, i32) {
    %c0_i32 = arith.constant 0 : i32
    %c0_i32_0 = arith.constant 0 : i32
    return %arg0, %c0_i32 : i32, i32
  }
  func.func @transform_1(%arg0: i32) -> (i32, i32) {
    %c0_i32 = arith.constant 0 : i32
    %c0_i32_0 = arith.constant 0 : i32
    return %arg0, %c0_i32 : i32, i32
  }
  func.func @transform_2(%arg0: i32) -> (i32, i32) {
    %c0_i32 = arith.constant 0 : i32
    %c0_i32_0 = arith.constant 0 : i32
    %c0_i32_1 = arith.constant 0 : i32
    return %c0_i32, %c0_i32_0 : i32, i32
  }
  func.func @transform_3(%arg0: i32) -> (i32, i32) {
    %c0_i32 = arith.constant 0 : i32
    %c0_i32_0 = arith.constant 0 : i32
    %c0_i32_1 = arith.constant 0 : i32
    return %c0_i32, %c0_i32_0 : i32, i32
  }
  func.func @transform_4(%arg0: i32) -> (i32, i32) {
    %c0_i32 = arith.constant 0 : i32
    %c0_i32_0 = arith.constant 0 : i32
    %c0_i32_1 = arith.constant 0 : i32
    return %c0_i32, %c0_i32_0 : i32, i32
  }
  func.func @transform_5(%arg0: i32) -> (i32, i32) {
    %c0_i32 = arith.constant 0 : i32
    %c0_i32_0 = arith.constant 0 : i32
    return %arg0, %c0_i32 : i32, i32
  }
}

module attributes {stable_mosaic.version = 11 : i64} {
  func.func @bottleneck_kernel(%arg0: i32, %arg1: memref<1x16x16x8xbf16, #tpu.memory_space<vmem>>, %arg2: memref<9x4x4xbf16, #tpu.memory_space<vmem>>, %arg3: memref<1x4xf32, #tpu.memory_space<vmem>>, %arg4: memref<9x4x4xbf16, #tpu.memory_space<vmem>>, %arg5: memref<1x4xf32, #tpu.memory_space<vmem>>, %arg6: memref<1x16x16x4xbf16, #tpu.memory_space<vmem>>, %arg7: memref<18x18x4xf32, #tpu.memory_space<vmem>>, %arg8: memref<18x18x4xf32, #tpu.memory_space<vmem>>) attributes {dimension_semantics = [#tpu.dimension_semantics<parallel>], iteration_bounds = array<i64: 2>, scalar_prefetch = 0 : i64, scratch_operands = 2 : i64, tpu.core_type = #tpu.core_type<tc>, window_params = [{transform_indices = @transform_0, window_bounds = array<i64: 1, 16, 16, 8>}, {pipeline_mode = #tpu.pipeline_mode<synchronous>, transform_indices = @transform_1, window_bounds = array<i64: 9, 4, 4>}, {pipeline_mode = #tpu.pipeline_mode<synchronous>, transform_indices = @transform_2, window_bounds = array<i64: 1, 4>}, {pipeline_mode = #tpu.pipeline_mode<synchronous>, transform_indices = @transform_3, window_bounds = array<i64: 9, 4, 4>}, {pipeline_mode = #tpu.pipeline_mode<synchronous>, transform_indices = @transform_4, window_bounds = array<i64: 1, 4>}, {transform_indices = @transform_5, window_bounds = array<i64: 1, 16, 16, 4>}]} {
    %cst = arith.constant 0.000000e+00 : f32
    %0 = vector.broadcast %cst : f32 to vector<18x18x4xf32>
    %c0 = arith.constant 0 : index
    %c0_0 = arith.constant 0 : index
    %c0_1 = arith.constant 0 : index
    %1 = vector.load %arg7[%c0, %c0_0, %c0_1] : memref<18x18x4xf32, #tpu.memory_space<vmem>>, vector<18x18x4xf32>
    tpu.vector_store %arg7[%c0, %c0_0, %c0_1], %0 {strides = array<i32>} : memref<18x18x4xf32, #tpu.memory_space<vmem>>, vector<18x18x4xf32>,
    %cst_2 = arith.constant 0.000000e+00 : f32
    %2 = vector.broadcast %cst_2 : f32 to vector<18x18x4xf32>
    %c0_3 = arith.constant 0 : index
    %c0_4 = arith.constant 0 : index
    %c0_5 = arith.constant 0 : index
    %3 = vector.load %arg8[%c0_3, %c0_4, %c0_5] : memref<18x18x4xf32, #tpu.memory_space<vmem>>, vector<18x18x4xf32>
    tpu.vector_store %arg8[%c0_3, %c0_4, %c0_5], %2 {strides = array<i32>} : memref<18x18x4xf32, #tpu.memory_space<vmem>>, vector<18x18x4xf32>,
    %c0_6 = arith.constant 0 : index
    %c0_7 = arith.constant 0 : index
    %c0_8 = arith.constant 0 : index
    %c0_9 = arith.constant 0 : index
    %4 = vector.load %arg1[%c0_6, %c0_7, %c0_8, %c0_9] : memref<1x16x16x8xbf16, #tpu.memory_space<vmem>>, vector<1x16x16x4xbf16>
    %5 = vector.shape_cast %4 : vector<1x16x16x4xbf16> to vector<16x16x4xbf16>
    %6 = arith.extf %5 : vector<16x16x4xbf16> to vector<16x16x4xf32>
    %c1 = arith.constant 1 : index
    %c1_10 = arith.constant 1 : index
    %c0_11 = arith.constant 0 : index
    %7 = vector.load %arg7[%c1, %c1_10, %c0_11] : memref<18x18x4xf32, #tpu.memory_space<vmem>>, vector<16x16x4xf32>
    tpu.vector_store %arg7[%c1, %c1_10, %c0_11], %6 {strides = array<i32>} : memref<18x18x4xf32, #tpu.memory_space<vmem>>, vector<16x16x4xf32>,
    %cst_12 = arith.constant 0.000000e+00 : f32
    %8 = vector.broadcast %cst_12 : f32 to vector<128x4xf32>
    %c0_13 = arith.constant 0 : index
    %c0_14 = arith.constant 0 : index
    %c0_15 = arith.constant 0 : index
    %9 = vector.load %arg7[%c0_13, %c0_14, %c0_15] : memref<18x18x4xf32, #tpu.memory_space<vmem>>, vector<8x16x4xf32>
    %10 = vector.shape_cast %9 : vector<8x16x4xf32> to vector<128x4xf32>
    %11 = arith.truncf %10 : vector<128x4xf32> to vector<128x4xbf16>
    %c0_16 = arith.constant 0 : index
    %c0_17 = arith.constant 0 : index
    %c0_18 = arith.constant 0 : index
    %12 = vector.load %arg2[%c0_16, %c0_17, %c0_18] : memref<9x4x4xbf16, #tpu.memory_space<vmem>>, vector<1x4x4xbf16>
    %13 = vector.shape_cast %12 : vector<1x4x4xbf16> to vector<4x4xbf16>
    %cst_19 = arith.constant dense<0.000000e+00> : vector<128x4xf32>
    %14 = tpu.matmul %11, %13, %cst_19 {dimension_numbers = #tpu.dot_dimension_numbers<[1], [0], [0], [1], [0, 0, 1, 1], [], []>} : vector<128x4xbf16>, vector<4x4xbf16>, vector<128x4xf32> -> vector<128x4xf32>
    %15 = arith.addf %8, %14 : vector<128x4xf32>
    %c0_20 = arith.constant 0 : index
    %c1_21 = arith.constant 1 : index
    %c0_22 = arith.constant 0 : index
    %16 = vector.load %arg7[%c0_20, %c1_21, %c0_22] : memref<18x18x4xf32, #tpu.memory_space<vmem>>, vector<8x16x4xf32>
    %17 = vector.shape_cast %16 : vector<8x16x4xf32> to vector<128x4xf32>
    %18 = arith.truncf %17 : vector<128x4xf32> to vector<128x4xbf16>
    %c1_23 = arith.constant 1 : index
    %c0_24 = arith.constant 0 : index
    %c0_25 = arith.constant 0 : index
    %19 = vector.load %arg2[%c1_23, %c0_24, %c0_25] : memref<9x4x4xbf16, #tpu.memory_space<vmem>>, vector<1x4x4xbf16>
    %20 = vector.shape_cast %19 : vector<1x4x4xbf16> to vector<4x4xbf16>
    %cst_26 = arith.constant dense<0.000000e+00> : vector<128x4xf32>
    %21 = tpu.matmul %18, %20, %cst_26 {dimension_numbers = #tpu.dot_dimension_numbers<[1], [0], [0], [1], [0, 0, 1, 1], [], []>} : vector<128x4xbf16>, vector<4x4xbf16>, vector<128x4xf32> -> vector<128x4xf32>
    %22 = arith.addf %15, %21 : vector<128x4xf32>
    %c0_27 = arith.constant 0 : index
    %c2 = arith.constant 2 : index
    %c0_28 = arith.constant 0 : index
    %23 = vector.load %arg7[%c0_27, %c2, %c0_28] : memref<18x18x4xf32, #tpu.memory_space<vmem>>, vector<8x16x4xf32>
    %24 = vector.shape_cast %23 : vector<8x16x4xf32> to vector<128x4xf32>
    %25 = arith.truncf %24 : vector<128x4xf32> to vector<128x4xbf16>
    %c2_29 = arith.constant 2 : index
    %c0_30 = arith.constant 0 : index
    %c0_31 = arith.constant 0 : index
    %26 = vector.load %arg2[%c2_29, %c0_30, %c0_31] : memref<9x4x4xbf16, #tpu.memory_space<vmem>>, vector<1x4x4xbf16>
    %27 = vector.shape_cast %26 : vector<1x4x4xbf16> to vector<4x4xbf16>
    %cst_32 = arith.constant dense<0.000000e+00> : vector<128x4xf32>
    %28 = tpu.matmul %25, %27, %cst_32 {dimension_numbers = #tpu.dot_dimension_numbers<[1], [0], [0], [1], [0, 0, 1, 1], [], []>} : vector<128x4xbf16>, vector<4x4xbf16>, vector<128x4xf32> -> vector<128x4xf32>
    %29 = arith.addf %22, %28 : vector<128x4xf32>
    %c1_33 = arith.constant 1 : index
    %c0_34 = arith.constant 0 : index
    %c0_35 = arith.constant 0 : index
    %30 = vector.load %arg7[%c1_33, %c0_34, %c0_35] : memref<18x18x4xf32, #tpu.memory_space<vmem>>, vector<8x16x4xf32>
    %31 = vector.shape_cast %30 : vector<8x16x4xf32> to vector<128x4xf32>
    %32 = arith.truncf %31 : vector<128x4xf32> to vector<128x4xbf16>
    %c3 = arith.constant 3 : index
    %c0_36 = arith.constant 0 : index
    %c0_37 = arith.constant 0 : index
    %33 = vector.load %arg2[%c3, %c0_36, %c0_37] : memref<9x4x4xbf16, #tpu.memory_space<vmem>>, vector<1x4x4xbf16>
    %34 = vector.shape_cast %33 : vector<1x4x4xbf16> to vector<4x4xbf16>
    %cst_38 = arith.constant dense<0.000000e+00> : vector<128x4xf32>
    %35 = tpu.matmul %32, %34, %cst_38 {dimension_numbers = #tpu.dot_dimension_numbers<[1], [0], [0], [1], [0, 0, 1, 1], [], []>} : vector<128x4xbf16>, vector<4x4xbf16>, vector<128x4xf32> -> vector<128x4xf32>
    %36 = arith.addf %29, %35 : vector<128x4xf32>
    %c1_39 = arith.constant 1 : index
    %c1_40 = arith.constant 1 : index
    %c0_41 = arith.constant 0 : index
    %37 = vector.load %arg7[%c1_39, %c1_40, %c0_41] : memref<18x18x4xf32, #tpu.memory_space<vmem>>, vector<8x16x4xf32>
    %38 = vector.shape_cast %37 : vector<8x16x4xf32> to vector<128x4xf32>
    %39 = arith.truncf %38 : vector<128x4xf32> to vector<128x4xbf16>
    %c4 = arith.constant 4 : index
    %c0_42 = arith.constant 0 : index
    %c0_43 = arith.constant 0 : index
    %40 = vector.load %arg2[%c4, %c0_42, %c0_43] : memref<9x4x4xbf16, #tpu.memory_space<vmem>>, vector<1x4x4xbf16>
    %41 = vector.shape_cast %40 : vector<1x4x4xbf16> to vector<4x4xbf16>
    %cst_44 = arith.constant dense<0.000000e+00> : vector<128x4xf32>
    %42 = tpu.matmul %39, %41, %cst_44 {dimension_numbers = #tpu.dot_dimension_numbers<[1], [0], [0], [1], [0, 0, 1, 1], [], []>} : vector<128x4xbf16>, vector<4x4xbf16>, vector<128x4xf32> -> vector<128x4xf32>
    %43 = arith.addf %36, %42 : vector<128x4xf32>
    %c1_45 = arith.constant 1 : index
    %c2_46 = arith.constant 2 : index
    %c0_47 = arith.constant 0 : index
    %44 = vector.load %arg7[%c1_45, %c2_46, %c0_47] : memref<18x18x4xf32, #tpu.memory_space<vmem>>, vector<8x16x4xf32>
    %45 = vector.shape_cast %44 : vector<8x16x4xf32> to vector<128x4xf32>
    %46 = arith.truncf %45 : vector<128x4xf32> to vector<128x4xbf16>
    %c5 = arith.constant 5 : index
    %c0_48 = arith.constant 0 : index
    %c0_49 = arith.constant 0 : index
    %47 = vector.load %arg2[%c5, %c0_48, %c0_49] : memref<9x4x4xbf16, #tpu.memory_space<vmem>>, vector<1x4x4xbf16>
    %48 = vector.shape_cast %47 : vector<1x4x4xbf16> to vector<4x4xbf16>
    %cst_50 = arith.constant dense<0.000000e+00> : vector<128x4xf32>
    %49 = tpu.matmul %46, %48, %cst_50 {dimension_numbers = #tpu.dot_dimension_numbers<[1], [0], [0], [1], [0, 0, 1, 1], [], []>} : vector<128x4xbf16>, vector<4x4xbf16>, vector<128x4xf32> -> vector<128x4xf32>
    %50 = arith.addf %43, %49 : vector<128x4xf32>
    %c2_51 = arith.constant 2 : index
    %c0_52 = arith.constant 0 : index
    %c0_53 = arith.constant 0 : index
    %51 = vector.load %arg7[%c2_51, %c0_52, %c0_53] : memref<18x18x4xf32, #tpu.memory_space<vmem>>, vector<8x16x4xf32>
    %52 = vector.shape_cast %51 : vector<8x16x4xf32> to vector<128x4xf32>
    %53 = arith.truncf %52 : vector<128x4xf32> to vector<128x4xbf16>
    %c6 = arith.constant 6 : index
    %c0_54 = arith.constant 0 : index
    %c0_55 = arith.constant 0 : index
    %54 = vector.load %arg2[%c6, %c0_54, %c0_55] : memref<9x4x4xbf16, #tpu.memory_space<vmem>>, vector<1x4x4xbf16>
    %55 = vector.shape_cast %54 : vector<1x4x4xbf16> to vector<4x4xbf16>
    %cst_56 = arith.constant dense<0.000000e+00> : vector<128x4xf32>
    %56 = tpu.matmul %53, %55, %cst_56 {dimension_numbers = #tpu.dot_dimension_numbers<[1], [0], [0], [1], [0, 0, 1, 1], [], []>} : vector<128x4xbf16>, vector<4x4xbf16>, vector<128x4xf32> -> vector<128x4xf32>
    %57 = arith.addf %50, %56 : vector<128x4xf32>
    %c2_57 = arith.constant 2 : index
    %c1_58 = arith.constant 1 : index
    %c0_59 = arith.constant 0 : index
    %58 = vector.load %arg7[%c2_57, %c1_58, %c0_59] : memref<18x18x4xf32, #tpu.memory_space<vmem>>, vector<8x16x4xf32>
    %59 = vector.shape_cast %58 : vector<8x16x4xf32> to vector<128x4xf32>
    %60 = arith.truncf %59 : vector<128x4xf32> to vector<128x4xbf16>
    %c7 = arith.constant 7 : index
    %c0_60 = arith.constant 0 : index
    %c0_61 = arith.constant 0 : index
    %61 = vector.load %arg2[%c7, %c0_60, %c0_61] : memref<9x4x4xbf16, #tpu.memory_space<vmem>>, vector<1x4x4xbf16>
    %62 = vector.shape_cast %61 : vector<1x4x4xbf16> to vector<4x4xbf16>
    %cst_62 = arith.constant dense<0.000000e+00> : vector<128x4xf32>
    %63 = tpu.matmul %60, %62, %cst_62 {dimension_numbers = #tpu.dot_dimension_numbers<[1], [0], [0], [1], [0, 0, 1, 1], [], []>} : vector<128x4xbf16>, vector<4x4xbf16>, vector<128x4xf32> -> vector<128x4xf32>
    %64 = arith.addf %57, %63 : vector<128x4xf32>
    %c2_63 = arith.constant 2 : index
    %c2_64 = arith.constant 2 : index
    %c0_65 = arith.constant 0 : index
    %65 = vector.load %arg7[%c2_63, %c2_64, %c0_65] : memref<18x18x4xf32, #tpu.memory_space<vmem>>, vector<8x16x4xf32>
    %66 = vector.shape_cast %65 : vector<8x16x4xf32> to vector<128x4xf32>
    %67 = arith.truncf %66 : vector<128x4xf32> to vector<128x4xbf16>
    %c8 = arith.constant 8 : index
    %c0_66 = arith.constant 0 : index
    %c0_67 = arith.constant 0 : index
    %68 = vector.load %arg2[%c8, %c0_66, %c0_67] : memref<9x4x4xbf16, #tpu.memory_space<vmem>>, vector<1x4x4xbf16>
    %69 = vector.shape_cast %68 : vector<1x4x4xbf16> to vector<4x4xbf16>
    %cst_68 = arith.constant dense<0.000000e+00> : vector<128x4xf32>
    %70 = tpu.matmul %67, %69, %cst_68 {dimension_numbers = #tpu.dot_dimension_numbers<[1], [0], [0], [1], [0, 0, 1, 1], [], []>} : vector<128x4xbf16>, vector<4x4xbf16>, vector<128x4xf32> -> vector<128x4xf32>
    %71 = arith.addf %64, %70 : vector<128x4xf32>
    %c0_69 = arith.constant 0 : index
    %c0_70 = arith.constant 0 : index
    %72 = vector.load %arg3[%c0_69, %c0_70] : memref<1x4xf32, #tpu.memory_space<vmem>>, vector<1x4xf32>
    %73 = vector.broadcast %72 : vector<1x4xf32> to vector<128x4xf32>
    %74 = arith.addf %71, %73 : vector<128x4xf32>
    %cst_71 = arith.constant 0.000000e+00 : f32
    %75 = vector.broadcast %cst_71 : f32 to vector<128x4xf32>
    %76 = arith.subf %75, %74 : vector<128x4xf32>
    %77 = math.exp %76 : vector<128x4xf32>
    %cst_72 = arith.constant 1.000000e+00 : f32
    %78 = vector.broadcast %cst_72 : f32 to vector<128x4xf32>
    %79 = arith.addf %78, %77 : vector<128x4xf32>
    %cst_73 = arith.constant 1.000000e+00 : f32
    %80 = vector.broadcast %cst_73 : f32 to vector<128x4xf32>
    %81 = arith.divf %80, %79 : vector<128x4xf32>
    %82 = arith.mulf %74, %81 : vector<128x4xf32>
    %83 = vector.shape_cast %82 : vector<128x4xf32> to vector<8x16x4xf32>
    %c1_74 = arith.constant 1 : index
    %c1_75 = arith.constant 1 : index
    %c0_76 = arith.constant 0 : index
    %84 = vector.load %arg8[%c1_74, %c1_75, %c0_76] : memref<18x18x4xf32, #tpu.memory_space<vmem>>, vector<8x16x4xf32>
    tpu.vector_store %arg8[%c1_74, %c1_75, %c0_76], %83 {strides = array<i32>} : memref<18x18x4xf32, #tpu.memory_space<vmem>>, vector<8x16x4xf32>,
    %cst_77 = arith.constant 0.000000e+00 : f32
    %85 = vector.broadcast %cst_77 : f32 to vector<128x4xf32>
    %c8_78 = arith.constant 8 : index
    %c0_79 = arith.constant 0 : index
    %c0_80 = arith.constant 0 : index
    %86 = vector.load %arg7[%c8_78, %c0_79, %c0_80] : memref<18x18x4xf32, #tpu.memory_space<vmem>>, vector<8x16x4xf32>
    %87 = vector.shape_cast %86 : vector<8x16x4xf32> to vector<128x4xf32>
    %88 = arith.truncf %87 : vector<128x4xf32> to vector<128x4xbf16>
    %c0_81 = arith.constant 0 : index
    %c0_82 = arith.constant 0 : index
    %c0_83 = arith.constant 0 : index
    %89 = vector.load %arg2[%c0_81, %c0_82, %c0_83] : memref<9x4x4xbf16, #tpu.memory_space<vmem>>, vector<1x4x4xbf16>
    %90 = vector.shape_cast %89 : vector<1x4x4xbf16> to vector<4x4xbf16>
    %cst_84 = arith.constant dense<0.000000e+00> : vector<128x4xf32>
    %91 = tpu.matmul %88, %90, %cst_84 {dimension_numbers = #tpu.dot_dimension_numbers<[1], [0], [0], [1], [0, 0, 1, 1], [], []>} : vector<128x4xbf16>, vector<4x4xbf16>, vector<128x4xf32> -> vector<128x4xf32>
    %92 = arith.addf %85, %91 : vector<128x4xf32>
    %c8_85 = arith.constant 8 : index
    %c1_86 = arith.constant 1 : index
    %c0_87 = arith.constant 0 : index
    %93 = vector.load %arg7[%c8_85, %c1_86, %c0_87] : memref<18x18x4xf32, #tpu.memory_space<vmem>>, vector<8x16x4xf32>
    %94 = vector.shape_cast %93 : vector<8x16x4xf32> to vector<128x4xf32>
    %95 = arith.truncf %94 : vector<128x4xf32> to vector<128x4xbf16>
    %c1_88 = arith.constant 1 : index
    %c0_89 = arith.constant 0 : index
    %c0_90 = arith.constant 0 : index
    %96 = vector.load %arg2[%c1_88, %c0_89, %c0_90] : memref<9x4x4xbf16, #tpu.memory_space<vmem>>, vector<1x4x4xbf16>
    %97 = vector.shape_cast %96 : vector<1x4x4xbf16> to vector<4x4xbf16>
    %cst_91 = arith.constant dense<0.000000e+00> : vector<128x4xf32>
    %98 = tpu.matmul %95, %97, %cst_91 {dimension_numbers = #tpu.dot_dimension_numbers<[1], [0], [0], [1], [0, 0, 1, 1], [], []>} : vector<128x4xbf16>, vector<4x4xbf16>, vector<128x4xf32> -> vector<128x4xf32>
    %99 = arith.addf %92, %98 : vector<128x4xf32>
    %c8_92 = arith.constant 8 : index
    %c2_93 = arith.constant 2 : index
    %c0_94 = arith.constant 0 : index
    %100 = vector.load %arg7[%c8_92, %c2_93, %c0_94] : memref<18x18x4xf32, #tpu.memory_space<vmem>>, vector<8x16x4xf32>
    %101 = vector.shape_cast %100 : vector<8x16x4xf32> to vector<128x4xf32>
    %102 = arith.truncf %101 : vector<128x4xf32> to vector<128x4xbf16>
    %c2_95 = arith.constant 2 : index
    %c0_96 = arith.constant 0 : index
    %c0_97 = arith.constant 0 : index
    %103 = vector.load %arg2[%c2_95, %c0_96, %c0_97] : memref<9x4x4xbf16, #tpu.memory_space<vmem>>, vector<1x4x4xbf16>
    %104 = vector.shape_cast %103 : vector<1x4x4xbf16> to vector<4x4xbf16>
    %cst_98 = arith.constant dense<0.000000e+00> : vector<128x4xf32>
    %105 = tpu.matmul %102, %104, %cst_98 {dimension_numbers = #tpu.dot_dimension_numbers<[1], [0], [0], [1], [0, 0, 1, 1], [], []>} : vector<128x4xbf16>, vector<4x4xbf16>, vector<128x4xf32> -> vector<128x4xf32>
    %106 = arith.addf %99, %105 : vector<128x4xf32>
    %c9 = arith.constant 9 : index
    %c0_99 = arith.constant 0 : index
    %c0_100 = arith.constant 0 : index
    %107 = vector.load %arg7[%c9, %c0_99, %c0_100] : memref<18x18x4xf32, #tpu.memory_space<vmem>>, vector<8x16x4xf32>
    %108 = vector.shape_cast %107 : vector<8x16x4xf32> to vector<128x4xf32>
    %109 = arith.truncf %108 : vector<128x4xf32> to vector<128x4xbf16>
    %c3_101 = arith.constant 3 : index
    %c0_102 = arith.constant 0 : index
    %c0_103 = arith.constant 0 : index
    %110 = vector.load %arg2[%c3_101, %c0_102, %c0_103] : memref<9x4x4xbf16, #tpu.memory_space<vmem>>, vector<1x4x4xbf16>
    %111 = vector.shape_cast %110 : vector<1x4x4xbf16> to vector<4x4xbf16>
    %cst_104 = arith.constant dense<0.000000e+00> : vector<128x4xf32>
    %112 = tpu.matmul %109, %111, %cst_104 {dimension_numbers = #tpu.dot_dimension_numbers<[1], [0], [0], [1], [0, 0, 1, 1], [], []>} : vector<128x4xbf16>, vector<4x4xbf16>, vector<128x4xf32> -> vector<128x4xf32>
    %113 = arith.addf %106, %112 : vector<128x4xf32>
    %c9_105 = arith.constant 9 : index
    %c1_106 = arith.constant 1 : index
    %c0_107 = arith.constant 0 : index
    %114 = vector.load %arg7[%c9_105, %c1_106, %c0_107] : memref<18x18x4xf32, #tpu.memory_space<vmem>>, vector<8x16x4xf32>
    %115 = vector.shape_cast %114 : vector<8x16x4xf32> to vector<128x4xf32>
    %116 = arith.truncf %115 : vector<128x4xf32> to vector<128x4xbf16>
    %c4_108 = arith.constant 4 : index
    %c0_109 = arith.constant 0 : index
    %c0_110 = arith.constant 0 : index
    %117 = vector.load %arg2[%c4_108, %c0_109, %c0_110] : memref<9x4x4xbf16, #tpu.memory_space<vmem>>, vector<1x4x4xbf16>
    %118 = vector.shape_cast %117 : vector<1x4x4xbf16> to vector<4x4xbf16>
    %cst_111 = arith.constant dense<0.000000e+00> : vector<128x4xf32>
    %119 = tpu.matmul %116, %118, %cst_111 {dimension_numbers = #tpu.dot_dimension_numbers<[1], [0], [0], [1], [0, 0, 1, 1], [], []>} : vector<128x4xbf16>, vector<4x4xbf16>, vector<128x4xf32> -> vector<128x4xf32>
    %120 = arith.addf %113, %119 : vector<128x4xf32>
    %c9_112 = arith.constant 9 : index
    %c2_113 = arith.constant 2 : index
    %c0_114 = arith.constant 0 : index
    %121 = vector.load %arg7[%c9_112, %c2_113, %c0_114] : memref<18x18x4xf32, #tpu.memory_space<vmem>>, vector<8x16x4xf32>
    %122 = vector.shape_cast %121 : vector<8x16x4xf32> to vector<128x4xf32>
    %123 = arith.truncf %122 : vector<128x4xf32> to vector<128x4xbf16>
    %c5_115 = arith.constant 5 : index
    %c0_116 = arith.constant 0 : index
    %c0_117 = arith.constant 0 : index
    %124 = vector.load %arg2[%c5_115, %c0_116, %c0_117] : memref<9x4x4xbf16, #tpu.memory_space<vmem>>, vector<1x4x4xbf16>
    %125 = vector.shape_cast %124 : vector<1x4x4xbf16> to vector<4x4xbf16>
    %cst_118 = arith.constant dense<0.000000e+00> : vector<128x4xf32>
    %126 = tpu.matmul %123, %125, %cst_118 {dimension_numbers = #tpu.dot_dimension_numbers<[1], [0], [0], [1], [0, 0, 1, 1], [], []>} : vector<128x4xbf16>, vector<4x4xbf16>, vector<128x4xf32> -> vector<128x4xf32>
    %127 = arith.addf %120, %126 : vector<128x4xf32>
    %c10 = arith.constant 10 : index
    %c0_119 = arith.constant 0 : index
    %c0_120 = arith.constant 0 : index
    %128 = vector.load %arg7[%c10, %c0_119, %c0_120] : memref<18x18x4xf32, #tpu.memory_space<vmem>>, vector<8x16x4xf32>
    %129 = vector.shape_cast %128 : vector<8x16x4xf32> to vector<128x4xf32>
    %130 = arith.truncf %129 : vector<128x4xf32> to vector<128x4xbf16>
    %c6_121 = arith.constant 6 : index
    %c0_122 = arith.constant 0 : index
    %c0_123 = arith.constant 0 : index
    %131 = vector.load %arg2[%c6_121, %c0_122, %c0_123] : memref<9x4x4xbf16, #tpu.memory_space<vmem>>, vector<1x4x4xbf16>
    %132 = vector.shape_cast %131 : vector<1x4x4xbf16> to vector<4x4xbf16>
    %cst_124 = arith.constant dense<0.000000e+00> : vector<128x4xf32>
    %133 = tpu.matmul %130, %132, %cst_124 {dimension_numbers = #tpu.dot_dimension_numbers<[1], [0], [0], [1], [0, 0, 1, 1], [], []>} : vector<128x4xbf16>, vector<4x4xbf16>, vector<128x4xf32> -> vector<128x4xf32>
    %134 = arith.addf %127, %133 : vector<128x4xf32>
    %c10_125 = arith.constant 10 : index
    %c1_126 = arith.constant 1 : index
    %c0_127 = arith.constant 0 : index
    %135 = vector.load %arg7[%c10_125, %c1_126, %c0_127] : memref<18x18x4xf32, #tpu.memory_space<vmem>>, vector<8x16x4xf32>
    %136 = vector.shape_cast %135 : vector<8x16x4xf32> to vector<128x4xf32>
    %137 = arith.truncf %136 : vector<128x4xf32> to vector<128x4xbf16>
    %c7_128 = arith.constant 7 : index
    %c0_129 = arith.constant 0 : index
    %c0_130 = arith.constant 0 : index
    %138 = vector.load %arg2[%c7_128, %c0_129, %c0_130] : memref<9x4x4xbf16, #tpu.memory_space<vmem>>, vector<1x4x4xbf16>
    %139 = vector.shape_cast %138 : vector<1x4x4xbf16> to vector<4x4xbf16>
    %cst_131 = arith.constant dense<0.000000e+00> : vector<128x4xf32>
    %140 = tpu.matmul %137, %139, %cst_131 {dimension_numbers = #tpu.dot_dimension_numbers<[1], [0], [0], [1], [0, 0, 1, 1], [], []>} : vector<128x4xbf16>, vector<4x4xbf16>, vector<128x4xf32> -> vector<128x4xf32>
    %141 = arith.addf %134, %140 : vector<128x4xf32>
    %c10_132 = arith.constant 10 : index
    %c2_133 = arith.constant 2 : index
    %c0_134 = arith.constant 0 : index
    %142 = vector.load %arg7[%c10_132, %c2_133, %c0_134] : memref<18x18x4xf32, #tpu.memory_space<vmem>>, vector<8x16x4xf32>
    %143 = vector.shape_cast %142 : vector<8x16x4xf32> to vector<128x4xf32>
    %144 = arith.truncf %143 : vector<128x4xf32> to vector<128x4xbf16>
    %c8_135 = arith.constant 8 : index
    %c0_136 = arith.constant 0 : index
    %c0_137 = arith.constant 0 : index
    %145 = vector.load %arg2[%c8_135, %c0_136, %c0_137] : memref<9x4x4xbf16, #tpu.memory_space<vmem>>, vector<1x4x4xbf16>
    %146 = vector.shape_cast %145 : vector<1x4x4xbf16> to vector<4x4xbf16>
    %cst_138 = arith.constant dense<0.000000e+00> : vector<128x4xf32>
    %147 = tpu.matmul %144, %146, %cst_138 {dimension_numbers = #tpu.dot_dimension_numbers<[1], [0], [0], [1], [0, 0, 1, 1], [], []>} : vector<128x4xbf16>, vector<4x4xbf16>, vector<128x4xf32> -> vector<128x4xf32>
    %148 = arith.addf %141, %147 : vector<128x4xf32>
    %c0_139 = arith.constant 0 : index
    %c0_140 = arith.constant 0 : index
    %149 = vector.load %arg3[%c0_139, %c0_140] : memref<1x4xf32, #tpu.memory_space<vmem>>, vector<1x4xf32>
    %150 = vector.broadcast %149 : vector<1x4xf32> to vector<128x4xf32>
    %151 = arith.addf %148, %150 : vector<128x4xf32>
    %cst_141 = arith.constant 0.000000e+00 : f32
    %152 = vector.broadcast %cst_141 : f32 to vector<128x4xf32>
    %153 = arith.subf %152, %151 : vector<128x4xf32>
    %154 = math.exp %153 : vector<128x4xf32>
    %cst_142 = arith.constant 1.000000e+00 : f32
    %155 = vector.broadcast %cst_142 : f32 to vector<128x4xf32>
    %156 = arith.addf %155, %154 : vector<128x4xf32>
    %cst_143 = arith.constant 1.000000e+00 : f32
    %157 = vector.broadcast %cst_143 : f32 to vector<128x4xf32>
    %158 = arith.divf %157, %156 : vector<128x4xf32>
    %159 = arith.mulf %151, %158 : vector<128x4xf32>
    %160 = vector.shape_cast %159 : vector<128x4xf32> to vector<8x16x4xf32>
    %c9_144 = arith.constant 9 : index
    %c1_145 = arith.constant 1 : index
    %c0_146 = arith.constant 0 : index
    %161 = vector.load %arg8[%c9_144, %c1_145, %c0_146] : memref<18x18x4xf32, #tpu.memory_space<vmem>>, vector<8x16x4xf32>
    tpu.vector_store %arg8[%c9_144, %c1_145, %c0_146], %160 {strides = array<i32>} : memref<18x18x4xf32, #tpu.memory_space<vmem>>, vector<8x16x4xf32>,
    %cst_147 = arith.constant 0.000000e+00 : f32
    %162 = vector.broadcast %cst_147 : f32 to vector<128x4xf32>
    %c0_148 = arith.constant 0 : index
    %c0_149 = arith.constant 0 : index
    %c0_150 = arith.constant 0 : index
    %163 = vector.load %arg8[%c0_148, %c0_149, %c0_150] : memref<18x18x4xf32, #tpu.memory_space<vmem>>, vector<8x16x4xf32>
    %164 = vector.shape_cast %163 : vector<8x16x4xf32> to vector<128x4xf32>
    %165 = arith.truncf %164 : vector<128x4xf32> to vector<128x4xbf16>
    %c0_151 = arith.constant 0 : index
    %c0_152 = arith.constant 0 : index
    %c0_153 = arith.constant 0 : index
    %166 = vector.load %arg4[%c0_151, %c0_152, %c0_153] : memref<9x4x4xbf16, #tpu.memory_space<vmem>>, vector<1x4x4xbf16>
    %167 = vector.shape_cast %166 : vector<1x4x4xbf16> to vector<4x4xbf16>
    %cst_154 = arith.constant dense<0.000000e+00> : vector<128x4xf32>
    %168 = tpu.matmul %165, %167, %cst_154 {dimension_numbers = #tpu.dot_dimension_numbers<[1], [0], [0], [1], [0, 0, 1, 1], [], []>} : vector<128x4xbf16>, vector<4x4xbf16>, vector<128x4xf32> -> vector<128x4xf32>
    %169 = arith.addf %162, %168 : vector<128x4xf32>
    %c0_155 = arith.constant 0 : index
    %c1_156 = arith.constant 1 : index
    %c0_157 = arith.constant 0 : index
    %170 = vector.load %arg8[%c0_155, %c1_156, %c0_157] : memref<18x18x4xf32, #tpu.memory_space<vmem>>, vector<8x16x4xf32>
    %171 = vector.shape_cast %170 : vector<8x16x4xf32> to vector<128x4xf32>
    %172 = arith.truncf %171 : vector<128x4xf32> to vector<128x4xbf16>
    %c1_158 = arith.constant 1 : index
    %c0_159 = arith.constant 0 : index
    %c0_160 = arith.constant 0 : index
    %173 = vector.load %arg4[%c1_158, %c0_159, %c0_160] : memref<9x4x4xbf16, #tpu.memory_space<vmem>>, vector<1x4x4xbf16>
    %174 = vector.shape_cast %173 : vector<1x4x4xbf16> to vector<4x4xbf16>
    %cst_161 = arith.constant dense<0.000000e+00> : vector<128x4xf32>
    %175 = tpu.matmul %172, %174, %cst_161 {dimension_numbers = #tpu.dot_dimension_numbers<[1], [0], [0], [1], [0, 0, 1, 1], [], []>} : vector<128x4xbf16>, vector<4x4xbf16>, vector<128x4xf32> -> vector<128x4xf32>
    %176 = arith.addf %169, %175 : vector<128x4xf32>
    %c0_162 = arith.constant 0 : index
    %c2_163 = arith.constant 2 : index
    %c0_164 = arith.constant 0 : index
    %177 = vector.load %arg8[%c0_162, %c2_163, %c0_164] : memref<18x18x4xf32, #tpu.memory_space<vmem>>, vector<8x16x4xf32>
    %178 = vector.shape_cast %177 : vector<8x16x4xf32> to vector<128x4xf32>
    %179 = arith.truncf %178 : vector<128x4xf32> to vector<128x4xbf16>
    %c2_165 = arith.constant 2 : index
    %c0_166 = arith.constant 0 : index
    %c0_167 = arith.constant 0 : index
    %180 = vector.load %arg4[%c2_165, %c0_166, %c0_167] : memref<9x4x4xbf16, #tpu.memory_space<vmem>>, vector<1x4x4xbf16>
    %181 = vector.shape_cast %180 : vector<1x4x4xbf16> to vector<4x4xbf16>
    %cst_168 = arith.constant dense<0.000000e+00> : vector<128x4xf32>
    %182 = tpu.matmul %179, %181, %cst_168 {dimension_numbers = #tpu.dot_dimension_numbers<[1], [0], [0], [1], [0, 0, 1, 1], [], []>} : vector<128x4xbf16>, vector<4x4xbf16>, vector<128x4xf32> -> vector<128x4xf32>
    %183 = arith.addf %176, %182 : vector<128x4xf32>
    %c1_169 = arith.constant 1 : index
    %c0_170 = arith.constant 0 : index
    %c0_171 = arith.constant 0 : index
    %184 = vector.load %arg8[%c1_169, %c0_170, %c0_171] : memref<18x18x4xf32, #tpu.memory_space<vmem>>, vector<8x16x4xf32>
    %185 = vector.shape_cast %184 : vector<8x16x4xf32> to vector<128x4xf32>
    %186 = arith.truncf %185 : vector<128x4xf32> to vector<128x4xbf16>
    %c3_172 = arith.constant 3 : index
    %c0_173 = arith.constant 0 : index
    %c0_174 = arith.constant 0 : index
    %187 = vector.load %arg4[%c3_172, %c0_173, %c0_174] : memref<9x4x4xbf16, #tpu.memory_space<vmem>>, vector<1x4x4xbf16>
    %188 = vector.shape_cast %187 : vector<1x4x4xbf16> to vector<4x4xbf16>
    %cst_175 = arith.constant dense<0.000000e+00> : vector<128x4xf32>
    %189 = tpu.matmul %186, %188, %cst_175 {dimension_numbers = #tpu.dot_dimension_numbers<[1], [0], [0], [1], [0, 0, 1, 1], [], []>} : vector<128x4xbf16>, vector<4x4xbf16>, vector<128x4xf32> -> vector<128x4xf32>
    %190 = arith.addf %183, %189 : vector<128x4xf32>
    %c1_176 = arith.constant 1 : index
    %c1_177 = arith.constant 1 : index
    %c0_178 = arith.constant 0 : index
    %191 = vector.load %arg8[%c1_176, %c1_177, %c0_178] : memref<18x18x4xf32, #tpu.memory_space<vmem>>, vector<8x16x4xf32>
    %192 = vector.shape_cast %191 : vector<8x16x4xf32> to vector<128x4xf32>
    %193 = arith.truncf %192 : vector<128x4xf32> to vector<128x4xbf16>
    %c4_179 = arith.constant 4 : index
    %c0_180 = arith.constant 0 : index
    %c0_181 = arith.constant 0 : index
    %194 = vector.load %arg4[%c4_179, %c0_180, %c0_181] : memref<9x4x4xbf16, #tpu.memory_space<vmem>>, vector<1x4x4xbf16>
    %195 = vector.shape_cast %194 : vector<1x4x4xbf16> to vector<4x4xbf16>
    %cst_182 = arith.constant dense<0.000000e+00> : vector<128x4xf32>
    %196 = tpu.matmul %193, %195, %cst_182 {dimension_numbers = #tpu.dot_dimension_numbers<[1], [0], [0], [1], [0, 0, 1, 1], [], []>} : vector<128x4xbf16>, vector<4x4xbf16>, vector<128x4xf32> -> vector<128x4xf32>
    %197 = arith.addf %190, %196 : vector<128x4xf32>
    %c1_183 = arith.constant 1 : index
    %c2_184 = arith.constant 2 : index
    %c0_185 = arith.constant 0 : index
    %198 = vector.load %arg8[%c1_183, %c2_184, %c0_185] : memref<18x18x4xf32, #tpu.memory_space<vmem>>, vector<8x16x4xf32>
    %199 = vector.shape_cast %198 : vector<8x16x4xf32> to vector<128x4xf32>
    %200 = arith.truncf %199 : vector<128x4xf32> to vector<128x4xbf16>
    %c5_186 = arith.constant 5 : index
    %c0_187 = arith.constant 0 : index
    %c0_188 = arith.constant 0 : index
    %201 = vector.load %arg4[%c5_186, %c0_187, %c0_188] : memref<9x4x4xbf16, #tpu.memory_space<vmem>>, vector<1x4x4xbf16>
    %202 = vector.shape_cast %201 : vector<1x4x4xbf16> to vector<4x4xbf16>
    %cst_189 = arith.constant dense<0.000000e+00> : vector<128x4xf32>
    %203 = tpu.matmul %200, %202, %cst_189 {dimension_numbers = #tpu.dot_dimension_numbers<[1], [0], [0], [1], [0, 0, 1, 1], [], []>} : vector<128x4xbf16>, vector<4x4xbf16>, vector<128x4xf32> -> vector<128x4xf32>
    %204 = arith.addf %197, %203 : vector<128x4xf32>
    %c2_190 = arith.constant 2 : index
    %c0_191 = arith.constant 0 : index
    %c0_192 = arith.constant 0 : index
    %205 = vector.load %arg8[%c2_190, %c0_191, %c0_192] : memref<18x18x4xf32, #tpu.memory_space<vmem>>, vector<8x16x4xf32>
    %206 = vector.shape_cast %205 : vector<8x16x4xf32> to vector<128x4xf32>
    %207 = arith.truncf %206 : vector<128x4xf32> to vector<128x4xbf16>
    %c6_193 = arith.constant 6 : index
    %c0_194 = arith.constant 0 : index
    %c0_195 = arith.constant 0 : index
    %208 = vector.load %arg4[%c6_193, %c0_194, %c0_195] : memref<9x4x4xbf16, #tpu.memory_space<vmem>>, vector<1x4x4xbf16>
    %209 = vector.shape_cast %208 : vector<1x4x4xbf16> to vector<4x4xbf16>
    %cst_196 = arith.constant dense<0.000000e+00> : vector<128x4xf32>
    %210 = tpu.matmul %207, %209, %cst_196 {dimension_numbers = #tpu.dot_dimension_numbers<[1], [0], [0], [1], [0, 0, 1, 1], [], []>} : vector<128x4xbf16>, vector<4x4xbf16>, vector<128x4xf32> -> vector<128x4xf32>
    %211 = arith.addf %204, %210 : vector<128x4xf32>
    %c2_197 = arith.constant 2 : index
    %c1_198 = arith.constant 1 : index
    %c0_199 = arith.constant 0 : index
    %212 = vector.load %arg8[%c2_197, %c1_198, %c0_199] : memref<18x18x4xf32, #tpu.memory_space<vmem>>, vector<8x16x4xf32>
    %213 = vector.shape_cast %212 : vector<8x16x4xf32> to vector<128x4xf32>
    %214 = arith.truncf %213 : vector<128x4xf32> to vector<128x4xbf16>
    %c7_200 = arith.constant 7 : index
    %c0_201 = arith.constant 0 : index
    %c0_202 = arith.constant 0 : index
    %215 = vector.load %arg4[%c7_200, %c0_201, %c0_202] : memref<9x4x4xbf16, #tpu.memory_space<vmem>>, vector<1x4x4xbf16>
    %216 = vector.shape_cast %215 : vector<1x4x4xbf16> to vector<4x4xbf16>
    %cst_203 = arith.constant dense<0.000000e+00> : vector<128x4xf32>
    %217 = tpu.matmul %214, %216, %cst_203 {dimension_numbers = #tpu.dot_dimension_numbers<[1], [0], [0], [1], [0, 0, 1, 1], [], []>} : vector<128x4xbf16>, vector<4x4xbf16>, vector<128x4xf32> -> vector<128x4xf32>
    %218 = arith.addf %211, %217 : vector<128x4xf32>
    %c2_204 = arith.constant 2 : index
    %c2_205 = arith.constant 2 : index
    %c0_206 = arith.constant 0 : index
    %219 = vector.load %arg8[%c2_204, %c2_205, %c0_206] : memref<18x18x4xf32, #tpu.memory_space<vmem>>, vector<8x16x4xf32>
    %220 = vector.shape_cast %219 : vector<8x16x4xf32> to vector<128x4xf32>
    %221 = arith.truncf %220 : vector<128x4xf32> to vector<128x4xbf16>
    %c8_207 = arith.constant 8 : index
    %c0_208 = arith.constant 0 : index
    %c0_209 = arith.constant 0 : index
    %222 = vector.load %arg4[%c8_207, %c0_208, %c0_209] : memref<9x4x4xbf16, #tpu.memory_space<vmem>>, vector<1x4x4xbf16>
    %223 = vector.shape_cast %222 : vector<1x4x4xbf16> to vector<4x4xbf16>
    %cst_210 = arith.constant dense<0.000000e+00> : vector<128x4xf32>
    %224 = tpu.matmul %221, %223, %cst_210 {dimension_numbers = #tpu.dot_dimension_numbers<[1], [0], [0], [1], [0, 0, 1, 1], [], []>} : vector<128x4xbf16>, vector<4x4xbf16>, vector<128x4xf32> -> vector<128x4xf32>
    %225 = arith.addf %218, %224 : vector<128x4xf32>
    %c0_211 = arith.constant 0 : index
    %c0_212 = arith.constant 0 : index
    %226 = vector.load %arg5[%c0_211, %c0_212] : memref<1x4xf32, #tpu.memory_space<vmem>>, vector<1x4xf32>
    %227 = vector.broadcast %226 : vector<1x4xf32> to vector<128x4xf32>
    %228 = arith.addf %225, %227 : vector<128x4xf32>
    %cst_213 = arith.constant 0.000000e+00 : f32
    %229 = vector.broadcast %cst_213 : f32 to vector<128x4xf32>
    %230 = arith.subf %229, %228 : vector<128x4xf32>
    %231 = math.exp %230 : vector<128x4xf32>
    %cst_214 = arith.constant 1.000000e+00 : f32
    %232 = vector.broadcast %cst_214 : f32 to vector<128x4xf32>
    %233 = arith.addf %232, %231 : vector<128x4xf32>
    %cst_215 = arith.constant 1.000000e+00 : f32
    %234 = vector.broadcast %cst_215 : f32 to vector<128x4xf32>
    %235 = arith.divf %234, %233 : vector<128x4xf32>
    %236 = arith.mulf %228, %235 : vector<128x4xf32>
    %237 = vector.shape_cast %236 : vector<128x4xf32> to vector<8x16x4xf32>
    %238 = arith.truncf %237 : vector<8x16x4xf32> to vector<8x16x4xbf16>
    %c0_216 = arith.constant 0 : index
    %c0_217 = arith.constant 0 : index
    %c0_218 = arith.constant 0 : index
    %c0_219 = arith.constant 0 : index
    %239 = vector.load %arg6[%c0_216, %c0_217, %c0_218, %c0_219] : memref<1x16x16x4xbf16, #tpu.memory_space<vmem>>, vector<1x8x16x4xbf16>
    %240 = vector.shape_cast %239 : vector<1x8x16x4xbf16> to vector<8x16x4xbf16>
    %241 = vector.shape_cast %238 : vector<8x16x4xbf16> to vector<1x8x16x4xbf16>
    tpu.vector_store %arg6[%c0_216, %c0_217, %c0_218, %c0_219], %241 {strides = array<i32>} : memref<1x16x16x4xbf16, #tpu.memory_space<vmem>>, vector<1x8x16x4xbf16>,
    %cst_220 = arith.constant 0.000000e+00 : f32
    %242 = vector.broadcast %cst_220 : f32 to vector<128x4xf32>
    %c8_221 = arith.constant 8 : index
    %c0_222 = arith.constant 0 : index
    %c0_223 = arith.constant 0 : index
    %243 = vector.load %arg8[%c8_221, %c0_222, %c0_223] : memref<18x18x4xf32, #tpu.memory_space<vmem>>, vector<8x16x4xf32>
    %244 = vector.shape_cast %243 : vector<8x16x4xf32> to vector<128x4xf32>
    %245 = arith.truncf %244 : vector<128x4xf32> to vector<128x4xbf16>
    %c0_224 = arith.constant 0 : index
    %c0_225 = arith.constant 0 : index
    %c0_226 = arith.constant 0 : index
    %246 = vector.load %arg4[%c0_224, %c0_225, %c0_226] : memref<9x4x4xbf16, #tpu.memory_space<vmem>>, vector<1x4x4xbf16>
    %247 = vector.shape_cast %246 : vector<1x4x4xbf16> to vector<4x4xbf16>
    %cst_227 = arith.constant dense<0.000000e+00> : vector<128x4xf32>
    %248 = tpu.matmul %245, %247, %cst_227 {dimension_numbers = #tpu.dot_dimension_numbers<[1], [0], [0], [1], [0, 0, 1, 1], [], []>} : vector<128x4xbf16>, vector<4x4xbf16>, vector<128x4xf32> -> vector<128x4xf32>
    %249 = arith.addf %242, %248 : vector<128x4xf32>
    %c8_228 = arith.constant 8 : index
    %c1_229 = arith.constant 1 : index
    %c0_230 = arith.constant 0 : index
    %250 = vector.load %arg8[%c8_228, %c1_229, %c0_230] : memref<18x18x4xf32, #tpu.memory_space<vmem>>, vector<8x16x4xf32>
    %251 = vector.shape_cast %250 : vector<8x16x4xf32> to vector<128x4xf32>
    %252 = arith.truncf %251 : vector<128x4xf32> to vector<128x4xbf16>
    %c1_231 = arith.constant 1 : index
    %c0_232 = arith.constant 0 : index
    %c0_233 = arith.constant 0 : index
    %253 = vector.load %arg4[%c1_231, %c0_232, %c0_233] : memref<9x4x4xbf16, #tpu.memory_space<vmem>>, vector<1x4x4xbf16>
    %254 = vector.shape_cast %253 : vector<1x4x4xbf16> to vector<4x4xbf16>
    %cst_234 = arith.constant dense<0.000000e+00> : vector<128x4xf32>
    %255 = tpu.matmul %252, %254, %cst_234 {dimension_numbers = #tpu.dot_dimension_numbers<[1], [0], [0], [1], [0, 0, 1, 1], [], []>} : vector<128x4xbf16>, vector<4x4xbf16>, vector<128x4xf32> -> vector<128x4xf32>
    %256 = arith.addf %249, %255 : vector<128x4xf32>
    %c8_235 = arith.constant 8 : index
    %c2_236 = arith.constant 2 : index
    %c0_237 = arith.constant 0 : index
    %257 = vector.load %arg8[%c8_235, %c2_236, %c0_237] : memref<18x18x4xf32, #tpu.memory_space<vmem>>, vector<8x16x4xf32>
    %258 = vector.shape_cast %257 : vector<8x16x4xf32> to vector<128x4xf32>
    %259 = arith.truncf %258 : vector<128x4xf32> to vector<128x4xbf16>
    %c2_238 = arith.constant 2 : index
    %c0_239 = arith.constant 0 : index
    %c0_240 = arith.constant 0 : index
    %260 = vector.load %arg4[%c2_238, %c0_239, %c0_240] : memref<9x4x4xbf16, #tpu.memory_space<vmem>>, vector<1x4x4xbf16>
    %261 = vector.shape_cast %260 : vector<1x4x4xbf16> to vector<4x4xbf16>
    %cst_241 = arith.constant dense<0.000000e+00> : vector<128x4xf32>
    %262 = tpu.matmul %259, %261, %cst_241 {dimension_numbers = #tpu.dot_dimension_numbers<[1], [0], [0], [1], [0, 0, 1, 1], [], []>} : vector<128x4xbf16>, vector<4x4xbf16>, vector<128x4xf32> -> vector<128x4xf32>
    %263 = arith.addf %256, %262 : vector<128x4xf32>
    %c9_242 = arith.constant 9 : index
    %c0_243 = arith.constant 0 : index
    %c0_244 = arith.constant 0 : index
    %264 = vector.load %arg8[%c9_242, %c0_243, %c0_244] : memref<18x18x4xf32, #tpu.memory_space<vmem>>, vector<8x16x4xf32>
    %265 = vector.shape_cast %264 : vector<8x16x4xf32> to vector<128x4xf32>
    %266 = arith.truncf %265 : vector<128x4xf32> to vector<128x4xbf16>
    %c3_245 = arith.constant 3 : index
    %c0_246 = arith.constant 0 : index
    %c0_247 = arith.constant 0 : index
    %267 = vector.load %arg4[%c3_245, %c0_246, %c0_247] : memref<9x4x4xbf16, #tpu.memory_space<vmem>>, vector<1x4x4xbf16>
    %268 = vector.shape_cast %267 : vector<1x4x4xbf16> to vector<4x4xbf16>
    %cst_248 = arith.constant dense<0.000000e+00> : vector<128x4xf32>
    %269 = tpu.matmul %266, %268, %cst_248 {dimension_numbers = #tpu.dot_dimension_numbers<[1], [0], [0], [1], [0, 0, 1, 1], [], []>} : vector<128x4xbf16>, vector<4x4xbf16>, vector<128x4xf32> -> vector<128x4xf32>
    %270 = arith.addf %263, %269 : vector<128x4xf32>
    %c9_249 = arith.constant 9 : index
    %c1_250 = arith.constant 1 : index
    %c0_251 = arith.constant 0 : index
    %271 = vector.load %arg8[%c9_249, %c1_250, %c0_251] : memref<18x18x4xf32, #tpu.memory_space<vmem>>, vector<8x16x4xf32>
    %272 = vector.shape_cast %271 : vector<8x16x4xf32> to vector<128x4xf32>
    %273 = arith.truncf %272 : vector<128x4xf32> to vector<128x4xbf16>
    %c4_252 = arith.constant 4 : index
    %c0_253 = arith.constant 0 : index
    %c0_254 = arith.constant 0 : index
    %274 = vector.load %arg4[%c4_252, %c0_253, %c0_254] : memref<9x4x4xbf16, #tpu.memory_space<vmem>>, vector<1x4x4xbf16>
    %275 = vector.shape_cast %274 : vector<1x4x4xbf16> to vector<4x4xbf16>
    %cst_255 = arith.constant dense<0.000000e+00> : vector<128x4xf32>
    %276 = tpu.matmul %273, %275, %cst_255 {dimension_numbers = #tpu.dot_dimension_numbers<[1], [0], [0], [1], [0, 0, 1, 1], [], []>} : vector<128x4xbf16>, vector<4x4xbf16>, vector<128x4xf32> -> vector<128x4xf32>
    %277 = arith.addf %270, %276 : vector<128x4xf32>
    %c9_256 = arith.constant 9 : index
    %c2_257 = arith.constant 2 : index
    %c0_258 = arith.constant 0 : index
    %278 = vector.load %arg8[%c9_256, %c2_257, %c0_258] : memref<18x18x4xf32, #tpu.memory_space<vmem>>, vector<8x16x4xf32>
    %279 = vector.shape_cast %278 : vector<8x16x4xf32> to vector<128x4xf32>
    %280 = arith.truncf %279 : vector<128x4xf32> to vector<128x4xbf16>
    %c5_259 = arith.constant 5 : index
    %c0_260 = arith.constant 0 : index
    %c0_261 = arith.constant 0 : index
    %281 = vector.load %arg4[%c5_259, %c0_260, %c0_261] : memref<9x4x4xbf16, #tpu.memory_space<vmem>>, vector<1x4x4xbf16>
    %282 = vector.shape_cast %281 : vector<1x4x4xbf16> to vector<4x4xbf16>
    %cst_262 = arith.constant dense<0.000000e+00> : vector<128x4xf32>
    %283 = tpu.matmul %280, %282, %cst_262 {dimension_numbers = #tpu.dot_dimension_numbers<[1], [0], [0], [1], [0, 0, 1, 1], [], []>} : vector<128x4xbf16>, vector<4x4xbf16>, vector<128x4xf32> -> vector<128x4xf32>
    %284 = arith.addf %277, %283 : vector<128x4xf32>
    %c10_263 = arith.constant 10 : index
    %c0_264 = arith.constant 0 : index
    %c0_265 = arith.constant 0 : index
    %285 = vector.load %arg8[%c10_263, %c0_264, %c0_265] : memref<18x18x4xf32, #tpu.memory_space<vmem>>, vector<8x16x4xf32>
    %286 = vector.shape_cast %285 : vector<8x16x4xf32> to vector<128x4xf32>
    %287 = arith.truncf %286 : vector<128x4xf32> to vector<128x4xbf16>
    %c6_266 = arith.constant 6 : index
    %c0_267 = arith.constant 0 : index
    %c0_268 = arith.constant 0 : index
    %288 = vector.load %arg4[%c6_266, %c0_267, %c0_268] : memref<9x4x4xbf16, #tpu.memory_space<vmem>>, vector<1x4x4xbf16>
    %289 = vector.shape_cast %288 : vector<1x4x4xbf16> to vector<4x4xbf16>
    %cst_269 = arith.constant dense<0.000000e+00> : vector<128x4xf32>
    %290 = tpu.matmul %287, %289, %cst_269 {dimension_numbers = #tpu.dot_dimension_numbers<[1], [0], [0], [1], [0, 0, 1, 1], [], []>} : vector<128x4xbf16>, vector<4x4xbf16>, vector<128x4xf32> -> vector<128x4xf32>
    %291 = arith.addf %284, %290 : vector<128x4xf32>
    %c10_270 = arith.constant 10 : index
    %c1_271 = arith.constant 1 : index
    %c0_272 = arith.constant 0 : index
    %292 = vector.load %arg8[%c10_270, %c1_271, %c0_272] : memref<18x18x4xf32, #tpu.memory_space<vmem>>, vector<8x16x4xf32>
    %293 = vector.shape_cast %292 : vector<8x16x4xf32> to vector<128x4xf32>
    %294 = arith.truncf %293 : vector<128x4xf32> to vector<128x4xbf16>
    %c7_273 = arith.constant 7 : index
    %c0_274 = arith.constant 0 : index
    %c0_275 = arith.constant 0 : index
    %295 = vector.load %arg4[%c7_273, %c0_274, %c0_275] : memref<9x4x4xbf16, #tpu.memory_space<vmem>>, vector<1x4x4xbf16>
    %296 = vector.shape_cast %295 : vector<1x4x4xbf16> to vector<4x4xbf16>
    %cst_276 = arith.constant dense<0.000000e+00> : vector<128x4xf32>
    %297 = tpu.matmul %294, %296, %cst_276 {dimension_numbers = #tpu.dot_dimension_numbers<[1], [0], [0], [1], [0, 0, 1, 1], [], []>} : vector<128x4xbf16>, vector<4x4xbf16>, vector<128x4xf32> -> vector<128x4xf32>
    %298 = arith.addf %291, %297 : vector<128x4xf32>
    %c10_277 = arith.constant 10 : index
    %c2_278 = arith.constant 2 : index
    %c0_279 = arith.constant 0 : index
    %299 = vector.load %arg8[%c10_277, %c2_278, %c0_279] : memref<18x18x4xf32, #tpu.memory_space<vmem>>, vector<8x16x4xf32>
    %300 = vector.shape_cast %299 : vector<8x16x4xf32> to vector<128x4xf32>
    %301 = arith.truncf %300 : vector<128x4xf32> to vector<128x4xbf16>
    %c8_280 = arith.constant 8 : index
    %c0_281 = arith.constant 0 : index
    %c0_282 = arith.constant 0 : index
    %302 = vector.load %arg4[%c8_280, %c0_281, %c0_282] : memref<9x4x4xbf16, #tpu.memory_space<vmem>>, vector<1x4x4xbf16>
    %303 = vector.shape_cast %302 : vector<1x4x4xbf16> to vector<4x4xbf16>
    %cst_283 = arith.constant dense<0.000000e+00> : vector<128x4xf32>
    %304 = tpu.matmul %301, %303, %cst_283 {dimension_numbers = #tpu.dot_dimension_numbers<[1], [0], [0], [1], [0, 0, 1, 1], [], []>} : vector<128x4xbf16>, vector<4x4xbf16>, vector<128x4xf32> -> vector<128x4xf32>
    %305 = arith.addf %298, %304 : vector<128x4xf32>
    %c0_284 = arith.constant 0 : index
    %c0_285 = arith.constant 0 : index
    %306 = vector.load %arg5[%c0_284, %c0_285] : memref<1x4xf32, #tpu.memory_space<vmem>>, vector<1x4xf32>
    %307 = vector.broadcast %306 : vector<1x4xf32> to vector<128x4xf32>
    %308 = arith.addf %305, %307 : vector<128x4xf32>
    %cst_286 = arith.constant 0.000000e+00 : f32
    %309 = vector.broadcast %cst_286 : f32 to vector<128x4xf32>
    %310 = arith.subf %309, %308 : vector<128x4xf32>
    %311 = math.exp %310 : vector<128x4xf32>
    %cst_287 = arith.constant 1.000000e+00 : f32
    %312 = vector.broadcast %cst_287 : f32 to vector<128x4xf32>
    %313 = arith.addf %312, %311 : vector<128x4xf32>
    %cst_288 = arith.constant 1.000000e+00 : f32
    %314 = vector.broadcast %cst_288 : f32 to vector<128x4xf32>
    %315 = arith.divf %314, %313 : vector<128x4xf32>
    %316 = arith.mulf %308, %315 : vector<128x4xf32>
    %317 = vector.shape_cast %316 : vector<128x4xf32> to vector<8x16x4xf32>
    %318 = arith.truncf %317 : vector<8x16x4xf32> to vector<8x16x4xbf16>
    %c0_289 = arith.constant 0 : index
    %c8_290 = arith.constant 8 : index
    %c0_291 = arith.constant 0 : index
    %c0_292 = arith.constant 0 : index
    %319 = vector.load %arg6[%c0_289, %c8_290, %c0_291, %c0_292] : memref<1x16x16x4xbf16, #tpu.memory_space<vmem>>, vector<1x8x16x4xbf16>
    %320 = vector.shape_cast %319 : vector<1x8x16x4xbf16> to vector<8x16x4xbf16>
    %321 = vector.shape_cast %318 : vector<8x16x4xbf16> to vector<1x8x16x4xbf16>
    tpu.vector_store %arg6[%c0_289, %c8_290, %c0_291, %c0_292], %321 {strides = array<i32>} : memref<1x16x16x4xbf16, #tpu.memory_space<vmem>>, vector<1x8x16x4xbf16>,
    return
  }
  func.func @transform_0(%arg0: i32) -> (i32, i32, i32, i32) {
    %c0_i32 = arith.constant 0 : i32
    %c0_i32_0 = arith.constant 0 : i32
    %c0_i32_1 = arith.constant 0 : i32
    %c0_i32_2 = arith.constant 0 : i32
    return %arg0, %c0_i32, %c0_i32_0, %c0_i32_1 : i32, i32, i32, i32
  }
  func.func @transform_1(%arg0: i32) -> (i32, i32, i32) {
    %c0_i32 = arith.constant 0 : i32
    %c0_i32_0 = arith.constant 0 : i32
    %c0_i32_1 = arith.constant 0 : i32
    %c0_i32_2 = arith.constant 0 : i32
    return %c0_i32, %c0_i32_0, %c0_i32_1 : i32, i32, i32
  }
  func.func @transform_2(%arg0: i32) -> (i32, i32) {
    %c0_i32 = arith.constant 0 : i32
    %c0_i32_0 = arith.constant 0 : i32
    %c0_i32_1 = arith.constant 0 : i32
    return %c0_i32, %c0_i32_0 : i32, i32
  }
  func.func @transform_3(%arg0: i32) -> (i32, i32, i32) {
    %c0_i32 = arith.constant 0 : i32
    %c0_i32_0 = arith.constant 0 : i32
    %c0_i32_1 = arith.constant 0 : i32
    %c0_i32_2 = arith.constant 0 : i32
    return %c0_i32, %c0_i32_0, %c0_i32_1 : i32, i32, i32
  }
  func.func @transform_4(%arg0: i32) -> (i32, i32) {
    %c0_i32 = arith.constant 0 : i32
    %c0_i32_0 = arith.constant 0 : i32
    %c0_i32_1 = arith.constant 0 : i32
    return %c0_i32, %c0_i32_0 : i32, i32
  }
  func.func @transform_5(%arg0: i32) -> (i32, i32, i32, i32) {
    %c0_i32 = arith.constant 0 : i32
    %c0_i32_0 = arith.constant 0 : i32
    %c0_i32_1 = arith.constant 0 : i32
    %c0_i32_2 = arith.constant 0 : i32
    return %arg0, %c0_i32, %c0_i32_0, %c0_i32_1 : i32, i32, i32, i32
  }
}

</mosaic_0001>

<llo_original>
// kernel: c2f_v2_forward.5
$region0: #{c2f_v2_forward.5}
  #allocation0 [shape = 'u32[]', space=smem, size = 0x4, offset = 0x4, fixed_abs, tag = 'smem constant byte address 0x4 - core index']
  #allocation1 [shape = 'u32[144,128]{1,0:T(1,128)}', space=vmem, size = 0x12000, scoped, tag = 'internal scratch']
  %s0 = inlined_call_operand.vmem [shape: bf16[512,8], index: 0, kind: input, shape index: {}]
  %s1 = inlined_call_operand.vmem [shape: bf16[512,4], index: 1, kind: input, shape index: {}]
  %s2 = inlined_call_operand.vmem [shape: bf16[8,8], index: 2, kind: input, shape index: {}]
  %s3 = inlined_call_operand.vmem [shape: bf16[4,8], index: 3, kind: input, shape index: {}]
  %s4 = inlined_call_operand.vmem [shape: f32[1,8], index: 4, kind: input, shape index: {}]
  %s5 = inlined_call_operand.vmem [shape: f32[512,8], index: 5, kind: output, shape index: {}]
  %s6 = sld [smem:[#allocation0]]
  $region53: #{c2f_v2_forward.5} parent=0
    _
  %s8 = ssub.s32 1, %s6
  %s9 = scalar_select 0, %s8, %s6
  loop: start=0, step=1, limit=4
  $region2: #{c2f_v2_forward.5} parent=0 // loop_pre_header
    _
  $region3: #{c2f_v2_forward.5} parent=0 // loop_header
    %s11 = sphi 0, %s15
    %p12 = scmp.ge.s32.totalorder %s11, 4
    %s21 = sphi 0, %s23
    %s24 = sphi 0, %s21
    %s25 = sphi 0, %s24
    %s41 = sphi 0, %s25
    %s47 = sphi 0, %s49
    %s50 = sphi 0, %s47
    %s51 = sphi 0, %s50
    %s67 = sphi 0, %s51
    %s71 = sphi 0, %s71
    %s73 = sphi 0, %s71
    %s74 = sphi 0, %s73
    %s88 = sphi 0, %s74
    %s92 = sphi 0, %s92
    %s94 = sphi 0, %s92
    %s95 = sphi 0, %s94
    %s109 = sphi 0, %s95
    %s113 = sphi 0, %s113
    %s115 = sphi 0, %s113
    %s116 = sphi 0, %s115
    %s130 = sphi 0, %s116
    %s136 = sphi 0, %s138
    %s139 = sphi 0, %s136
    %s140 = sphi 0, %s139
    %s156 = sphi 0, %s140
  $region4: #{c2f_v2_forward.5} parent=0 // loop_header_branch
    %14 = sbr.rel (%p12) target = $region8
  $region5: #{c2f_v2_forward.5} parent=0 // loop_body
    %s16 = ssub.s32 %s11, 1
    %s17 = ssub.s32 %s11, 2
    %s18 = sadd.s32 %s11, 1
    %s19 = ssub.s32 %s11, %s18
    %p20 = scmp.eq.s32.totalorder %s19, 0
    %s22 = sadd.s32 %s21, 1
    %s23 = scalar_select %p20, %s21, %s22
    %p26 = pneg %p20
    %p27 = scmp.eq.s32.totalorder %s11, 1
    %p28 = por %p26, %p27
    %p29 = scmp.ne.s32.totalorder %s21, %s24
    %p30 = scmp.eq.s32.totalorder %s11, 0
    %p31 = por %p29, %p30
    %p32 = scmp.ne.s32.totalorder %s21, %s24
    %p33 = scmp.eq.s32.totalorder %s16, 1
    %p34 = por %p32, %p33
    %p35 = scmp.ne.s32.totalorder %s24, %s25
    %p36 = scmp.eq.s32.totalorder %s16, 0
    %p37 = por %p35, %p36
    %p38 = scmp.ne.s32.totalorder %s24, %s25
    %p39 = scmp.eq.s32.totalorder %s17, 1
    %p40 = por %p38, %p39
    %p42 = scmp.ne.s32.totalorder %s25, %s41
    %p43 = scmp.eq.s32.totalorder %s17, 0
    %p44 = por %p42, %p43
    %s45 = ssub.s32 %s11, %s18
    %p46 = scmp.eq.s32.totalorder %s45, 0
    %s48 = sadd.s32 %s47, 1
    %s49 = scalar_select %p46, %s47, %s48
    %p52 = pneg %p46
    %p53 = scmp.eq.s32.totalorder %s11, 1
    %p54 = por %p52, %p53
    %p55 = scmp.ne.s32.totalorder %s47, %s50
    %p56 = scmp.eq.s32.totalorder %s11, 0
    %p57 = por %p55, %p56
    %p58 = scmp.ne.s32.totalorder %s47, %s50
    %p59 = scmp.eq.s32.totalorder %s16, 1
    %p60 = por %p58, %p59
    %p61 = scmp.ne.s32.totalorder %s50, %s51
    %p62 = scmp.eq.s32.totalorder %s16, 0
    %p63 = por %p61, %p62
    %p64 = scmp.ne.s32.totalorder %s50, %s51
    %p65 = scmp.eq.s32.totalorder %s17, 1
    %p66 = por %p64, %p65
    %p68 = scmp.ne.s32.totalorder %s51, %s67
    %p69 = scmp.eq.s32.totalorder %s17, 0
    %p70 = por %p68, %p69
    %s72 = sadd.s32 %s71, 1
    %p75 = scmp.eq.s32.totalorder %s11, 1
    %p76 = scmp.ne.s32.totalorder %s71, %s73
    %p77 = scmp.eq.s32.totalorder %s11, 0
    %p78 = por %p76, %p77
    %p79 = scmp.ne.s32.totalorder %s71, %s73
    %p80 = scmp.eq.s32.totalorder %s16, 1
    %p81 = por %p79, %p80
    %p82 = scmp.ne.s32.totalorder %s73, %s74
    %p83 = scmp.eq.s32.totalorder %s16, 0
    %p84 = por %p82, %p83
    %p85 = scmp.ne.s32.totalorder %s73, %s74
    %p86 = scmp.eq.s32.totalorder %s17, 1
    %p87 = por %p85, %p86
    %p89 = scmp.ne.s32.totalorder %s74, %s88
    %p90 = scmp.eq.s32.totalorder %s17, 0
    %p91 = por %p89, %p90
    %s93 = sadd.s32 %s92, 1
    %p96 = scmp.eq.s32.totalorder %s11, 1
    %p97 = scmp.ne.s32.totalorder %s92, %s94
    %p98 = scmp.eq.s32.totalorder %s11, 0
    %p99 = por %p97, %p98
    %p100 = scmp.ne.s32.totalorder %s92, %s94
    %p101 = scmp.eq.s32.totalorder %s16, 1
    %p102 = por %p100, %p101
    %p103 = scmp.ne.s32.totalorder %s94, %s95
    %p104 = scmp.eq.s32.totalorder %s16, 0
    %p105 = por %p103, %p104
    %p106 = scmp.ne.s32.totalorder %s94, %s95
    %p107 = scmp.eq.s32.totalorder %s17, 1
    %p108 = por %p106, %p107
    %p110 = scmp.ne.s32.totalorder %s95, %s109
    %p111 = scmp.eq.s32.totalorder %s17, 0
    %p112 = por %p110, %p111
    %s114 = sadd.s32 %s113, 1
    %p117 = scmp.eq.s32.totalorder %s11, 1
    %p118 = scmp.ne.s32.totalorder %s113, %s115
    %p119 = scmp.eq.s32.totalorder %s11, 0
    %p120 = por %p118, %p119
    %p121 = scmp.ne.s32.totalorder %s113, %s115
    %p122 = scmp.eq.s32.totalorder %s16, 1
    %p123 = por %p121, %p122
    %p124 = scmp.ne.s32.totalorder %s115, %s116
    %p125 = scmp.eq.s32.totalorder %s16, 0
    %p126 = por %p124, %p125
    %p127 = scmp.ne.s32.totalorder %s115, %s116
    %p128 = scmp.eq.s32.totalorder %s17, 1
    %p129 = por %p127, %p128
    %p131 = scmp.ne.s32.totalorder %s116, %s130
    %p132 = scmp.eq.s32.totalorder %s17, 0
    %p133 = por %p131, %p132
    %s134 = ssub.s32 %s11, %s18
    %p135 = scmp.eq.s32.totalorder %s134, 0
    %s137 = sadd.s32 %s136, 1
    %s138 = scalar_select %p135, %s136, %s137
    %p141 = pneg %p135
    %p142 = scmp.eq.s32.totalorder %s11, 1
    %p143 = por %p141, %p142
    %p144 = scmp.ne.s32.totalorder %s136, %s139
    %p145 = scmp.eq.s32.totalorder %s11, 0
    %p146 = por %p144, %p145
    %p147 = scmp.ne.s32.totalorder %s136, %s139
    %p148 = scmp.eq.s32.totalorder %s16, 1
    %p149 = por %p147, %p148
    %p150 = scmp.ne.s32.totalorder %s139, %s140
    %p151 = scmp.eq.s32.totalorder %s16, 0
    %p152 = por %p150, %p151
    %p153 = scmp.ne.s32.totalorder %s139, %s140
    %p154 = scmp.eq.s32.totalorder %s17, 1
    %p155 = por %p153, %p154
    %p157 = scmp.ne.s32.totalorder %s140, %s156
    %p158 = scmp.eq.s32.totalorder %s17, 0
    %p159 = por %p157, %p158
    %p160 = scmp.le.s32.totalorder 1, %s11
    %p161 = scmp.lt.s32.totalorder %s11, 3
    %p162 = pnand %p160, %p161
    %p163 = pneg %p162
    // Predicated region
    $region9: #{c2f_v2_forward.5} parent=5 // pred_check
      _
    $region10: #{c2f_v2_forward.5} parent=5 // pred_check_branch
      %165 = sbr.rel (%p162) target = $region12
    $region11: #{c2f_v2_forward.5} parent=5 // pred_region
      %s166 = ssub.s32 %s11, 1
      // Predicated region
      $region13: #{c2f_v2_forward.5} parent=11 // pred_check
        %p167 = pneg %p84
      $region14: #{c2f_v2_forward.5} parent=11 // pred_check_branch
        %169 = sbr.rel (%p167) target = $region16
      $region15: #{c2f_v2_forward.5} parent=11 // pred_region
        _
      $region16: #{c2f_v2_forward.5} parent=11 // pred_fallthru
        _
      // Predicated region
      $region17: #{c2f_v2_forward.5} parent=11 // pred_check
        %p170 = pneg %p105
      $region18: #{c2f_v2_forward.5} parent=11 // pred_check_branch
        %172 = sbr.rel (%p170) target = $region20
      $region19: #{c2f_v2_forward.5} parent=11 // pred_region
        _
      $region20: #{c2f_v2_forward.5} parent=11 // pred_fallthru
        _
      // Predicated region
      $region21: #{c2f_v2_forward.5} parent=11 // pred_check
        %p173 = pneg %p126
      $region22: #{c2f_v2_forward.5} parent=11 // pred_check_branch
        %175 = sbr.rel (%p173) target = $region24
      $region23: #{c2f_v2_forward.5} parent=11 // pred_region
        _
      $region24: #{c2f_v2_forward.5} parent=11 // pred_fallthru
        _
    $region12: #{c2f_v2_forward.5} parent=5 // pred_fallthru
      _
    %p176 = scmp.lt.s32.totalorder %s11, 2
    // Predicated region
    $region25: #{c2f_v2_forward.5} parent=5 // pred_check
      %p177 = pneg %p176
    $region26: #{c2f_v2_forward.5} parent=5 // pred_check_branch
      %179 = sbr.rel (%p177) target = $region28
    $region27: #{c2f_v2_forward.5} parent=5 // pred_region
      // Predicated region
      $region29: #{c2f_v2_forward.5} parent=27 // pred_check
        %p180 = pneg %p31
      $region30: #{c2f_v2_forward.5} parent=27 // pred_check_branch
        %182 = sbr.rel (%p180) target = $region32
      $region31: #{c2f_v2_forward.5} parent=27 // pred_region
        %s183 = smul.u32 32, %s11
        %p184 = scmp.lt.s32.totalorder %s183, 63
        %s185 = scalar_select %p184, %s183, 63
        %s186 = smul.addr %s185, 4
        %s187 = scalar_lea.vmem %s0, %s186
        %s188 = smul.u32 32, %s11
      $region32: #{c2f_v2_forward.5} parent=27 // pred_fallthru
        _
      // Predicated region
      $region33: #{c2f_v2_forward.5} parent=27 // pred_check
        %p189 = pneg %p57
      $region34: #{c2f_v2_forward.5} parent=27 // pred_check_branch
        %191 = sbr.rel (%p189) target = $region36
      $region35: #{c2f_v2_forward.5} parent=27 // pred_region
        %s192 = smul.u32 32, %s11
        %p193 = scmp.lt.s32.totalorder %s192, 63
        %s194 = scalar_select %p193, %s192, 63
        %s195 = smul.addr %s194, 4
        %s196 = scalar_lea.vmem %s1, %s195
        %s197 = smul.u32 32, %s11
      $region36: #{c2f_v2_forward.5} parent=27 // pred_fallthru
        _
    $region28: #{c2f_v2_forward.5} parent=5 // pred_fallthru
      _
    %p198 = scmp.le.s32.totalorder 1, %s11
    %p199 = scmp.lt.s32.totalorder %s11, 3
    %p200 = pnand %p198, %p199
    %p201 = pneg %p200
    // Predicated region
    $region37: #{c2f_v2_forward.5} parent=5 // pred_check
      _
    $region38: #{c2f_v2_forward.5} parent=5 // pred_check_branch
      %203 = sbr.rel (%p200) target = $region40
    $region39: #{c2f_v2_forward.5} parent=5 // pred_region
      %s204 = ssub.s32 %s11, 1
      %s205 = smul.u32 32, %s16
      %p206 = scmp.lt.s32.totalorder %s205, 63
      %s207 = scalar_select %p206, %s205, 63
      %s208 = smul.addr %s207, 4
      %s209 = scalar_lea.vmem %s0, %s208
      %p210 = pneg %p37
      %p211 = pneg %p34
      %s212 = smul.u32 32, %s16
      %p213 = scmp.lt.s32.totalorder %s212, 63
      %s214 = scalar_select %p213, %s212, 63
      %s215 = smul.addr %s214, 4
      %s216 = scalar_lea.vmem %s1, %s215
      %p217 = pneg %p63
      %p218 = pneg %p60
      %p219 = pneg %p84
      %p220 = pneg %p81
      %p221 = pneg %p105
      %p222 = pneg %p102
      %p223 = pneg %p126
      %p224 = pneg %p123
      %p225 = pneg %p152
      %p226 = pneg %p149
      %s227 = smul.u32 32, %s16
      %p228 = scmp.lt.s32.totalorder %s227, 63
      %s229 = scalar_select %p228, %s227, 63
      %s230 = smul.addr %s229, 8
      %s231 = scalar_lea.vmem %s5, %s230
      %s232 = smul.u32 32, %s16
      %p233 = scmp.lt.s32.totalorder %s232, 63
      %s234 = scalar_select %p233, %s232, 63
      %s235 = smul.addr %s234, 4
      %s236 = scalar_lea.vmem %s0, %s235
      %s237 = smul.u32 32, %s16
      %s238 = smul.u32 32, %s16
      %p239 = scmp.lt.s32.totalorder %s238, 63
      %s240 = scalar_select %p239, %s238, 63
      %s241 = smul.addr %s240, 4
      %s242 = scalar_lea.vmem %s1, %s241
      %s243 = smul.u32 32, %s16
      %s244 = smul.u32 32, %s16
      %p245 = scmp.lt.s32.totalorder %s244, 63
      %s246 = scalar_select %p245, %s244, 63
      %s247 = smul.addr %s246, 8
      %s248 = scalar_lea.vmem %s5, %s247
      %s249 = smul.u32 32, %s16
      %v251 = vld [vmem:[%s236] sm:$0xf]
      %v252 = vld [vmem:[%s236 + $0x4] sm:$0xf]
      %v253 = vld [vmem:[%s236 + $0x8] sm:$0xf]
      %v254 = vld [vmem:[%s236 + $0xc] sm:$0xf]
      %v255 = vld [vmem:[%s236 + $0x10] sm:$0xf]
      %v256 = vld [vmem:[%s236 + $0x14] sm:$0xf]
      %v257 = vld [vmem:[%s236 + $0x18] sm:$0xf]
      %v258 = vld [vmem:[%s236 + $0x1c] sm:$0xf]
      %v259 = vld [vmem:[%s236 + $0x20] sm:$0xf]
      %v260 = vld [vmem:[%s236 + $0x24] sm:$0xf]
      %v261 = vld [vmem:[%s236 + $0x28] sm:$0xf]
      %v262 = vld [vmem:[%s236 + $0x2c] sm:$0xf]
      %v263 = vld [vmem:[%s236 + $0x30] sm:$0xf]
      %v264 = vld [vmem:[%s236 + $0x34] sm:$0xf]
      %v265 = vld [vmem:[%s236 + $0x38] sm:$0xf]
      %v266 = vld [vmem:[%s236 + $0x3c] sm:$0xf]
      %v267 = vld [vmem:[%s236 + $0x40] sm:$0xf]
      %v268 = vld [vmem:[%s236 + $0x44] sm:$0xf]
      %v269 = vld [vmem:[%s236 + $0x48] sm:$0xf]
      %v270 = vld [vmem:[%s236 + $0x4c] sm:$0xf]
      %v271 = vld [vmem:[%s236 + $0x50] sm:$0xf]
      %v272 = vld [vmem:[%s236 + $0x54] sm:$0xf]
      %v273 = vld [vmem:[%s236 + $0x58] sm:$0xf]
      %v274 = vld [vmem:[%s236 + $0x5c] sm:$0xf]
      %v275 = vld [vmem:[%s236 + $0x60] sm:$0xf]
      %v276 = vld [vmem:[%s236 + $0x64] sm:$0xf]
      %v277 = vld [vmem:[%s236 + $0x68] sm:$0xf]
      %v278 = vld [vmem:[%s236 + $0x6c] sm:$0xf]
      %v279 = vld [vmem:[%s236 + $0x70] sm:$0xf]
      %v280 = vld [vmem:[%s236 + $0x74] sm:$0xf]
      %v281 = vld [vmem:[%s236 + $0x78] sm:$0xf]
      %v282 = vld [vmem:[%s236 + $0x7c] sm:$0xf]
      %v283 = vld [vmem:[%s2] sm:$0xf]
      %v284 = vld [vmem:[%s242] sm:$0xf]
      %v285 = vld [vmem:[%s242 + $0x4] sm:$0xf]
      %v286 = vld [vmem:[%s242 + $0x8] sm:$0xf]
      %v287 = vld [vmem:[%s242 + $0xc] sm:$0xf]
      %v288 = vld [vmem:[%s242 + $0x10] sm:$0xf]
      %v289 = vld [vmem:[%s242 + $0x14] sm:$0xf]
      %v290 = vld [vmem:[%s242 + $0x18] sm:$0xf]
      %v291 = vld [vmem:[%s242 + $0x1c] sm:$0xf]
      %v292 = vld [vmem:[%s242 + $0x20] sm:$0xf]
      %v293 = vld [vmem:[%s242 + $0x24] sm:$0xf]
      %v294 = vld [vmem:[%s242 + $0x28] sm:$0xf]
      %v295 = vld [vmem:[%s242 + $0x2c] sm:$0xf]
      %v296 = vld [vmem:[%s242 + $0x30] sm:$0xf]
      %v297 = vld [vmem:[%s242 + $0x34] sm:$0xf]
      %v298 = vld [vmem:[%s242 + $0x38] sm:$0xf]
      %v299 = vld [vmem:[%s242 + $0x3c] sm:$0xf]
      %v300 = vld [vmem:[%s242 + $0x40] sm:$0xf]
      %v301 = vld [vmem:[%s242 + $0x44] sm:$0xf]
      %v302 = vld [vmem:[%s242 + $0x48] sm:$0xf]
      %v303 = vld [vmem:[%s242 + $0x4c] sm:$0xf]
      %v304 = vld [vmem:[%s242 + $0x50] sm:$0xf]
      %v305 = vld [vmem:[%s242 + $0x54] sm:$0xf]
      %v306 = vld [vmem:[%s242 + $0x58] sm:$0xf]
      %v307 = vld [vmem:[%s242 + $0x5c] sm:$0xf]
      %v308 = vld [vmem:[%s242 + $0x60] sm:$0xf]
      %v309 = vld [vmem:[%s242 + $0x64] sm:$0xf]
      %v310 = vld [vmem:[%s242 + $0x68] sm:$0xf]
      %v311 = vld [vmem:[%s242 + $0x6c] sm:$0xf]
      %v312 = vld [vmem:[%s242 + $0x70] sm:$0xf]
      %v313 = vld [vmem:[%s242 + $0x74] sm:$0xf]
      %v314 = vld [vmem:[%s242 + $0x78] sm:$0xf]
      %v315 = vld [vmem:[%s242 + $0x7c] sm:$0xf]
      %v316 = vld [vmem:[%s3] sm:$0x3]
      %v349 = vunpack.c.l.b16 %v284
      %v350 = vunpack.c.l.b16 %v285
      %v351 = vunpack.c.l.b16 %v286
      %v352 = vunpack.c.l.b16 %v287
      %v353 = vunpack.c.l.b16 %v288
      %v354 = vunpack.c.l.b16 %v289
      %v355 = vunpack.c.l.b16 %v290
      %v356 = vunpack.c.l.b16 %v291
      %v357 = vunpack.c.l.b16 %v292
      %v358 = vunpack.c.l.b16 %v293
      %v359 = vunpack.c.l.b16 %v294
      %v360 = vunpack.c.l.b16 %v295
      %v361 = vunpack.c.l.b16 %v296
      %v362 = vunpack.c.l.b16 %v297
      %v363 = vunpack.c.l.b16 %v298
      %v364 = vunpack.c.l.b16 %v299
      %v365 = vunpack.c.l.b16 %v300
      %v366 = vunpack.c.l.b16 %v301
      %v367 = vunpack.c.l.b16 %v302
      %v368 = vunpack.c.l.b16 %v303
      %v369 = vunpack.c.l.b16 %v304
      %v370 = vunpack.c.l.b16 %v305
      %v371 = vunpack.c.l.b16 %v306
      %v372 = vunpack.c.l.b16 %v307
      %v373 = vunpack.c.l.b16 %v308
      %v374 = vunpack.c.l.b16 %v309
      %v375 = vunpack.c.l.b16 %v310
      %v376 = vunpack.c.l.b16 %v311
      %v377 = vunpack.c.l.b16 %v312
      %v378 = vunpack.c.l.b16 %v313
      %v379 = vunpack.c.l.b16 %v314
      %v380 = vunpack.c.l.b16 %v315
      %v381 = vpack.c.b16 %v350, %v349
      %v382 = vpack.c.b16 %v352, %v351
      %v383 = vpack.c.b16 %v354, %v353
      %v384 = vpack.c.b16 %v356, %v355
      %v385 = vpack.c.b16 %v358, %v357
      %v386 = vpack.c.b16 %v360, %v359
      %v387 = vpack.c.b16 %v362, %v361
      %v388 = vpack.c.b16 %v364, %v363
      %v389 = vpack.c.b16 %v366, %v365
      %v390 = vpack.c.b16 %v368, %v367
      %v391 = vpack.c.b16 %v370, %v369
      %v392 = vpack.c.b16 %v372, %v371
      %v393 = vpack.c.b16 %v374, %v373
      %v394 = vpack.c.b16 %v376, %v375
      %v395 = vpack.c.b16 %v378, %v377
      %v396 = vpack.c.b16 %v380, %v379
      %vm397 = vcmask 31744
      %v399 = vsel %vm397, %v381, 0
      %v402 = vsel %vm397, %v382, 0
      %v405 = vsel %vm397, %v383, 0
      %v408 = vsel %vm397, %v384, 0
      %v411 = vsel %vm397, %v385, 0
      %v414 = vsel %vm397, %v386, 0
      %v417 = vsel %vm397, %v387, 0
      %v420 = vsel %vm397, %v388, 0
      %v423 = vsel %vm397, %v389, 0
      %v426 = vsel %vm397, %v390, 0
      %v429 = vsel %vm397, %v391, 0
      %v432 = vsel %vm397, %v392, 0
      %v435 = vsel %vm397, %v393, 0
      %v438 = vsel %vm397, %v394, 0
      %v441 = vsel %vm397, %v395, 0
      %v444 = vsel %vm397, %v396, 0
      %vm446 = vcmask 1041408
      %v448 = vsel %vm446, %v316, 0
      %450 = vmatprep.subr.bf16.mxu0 0
      %451 = vmatpush1.bf16.msra.mxu0 %v448
      %452 = vmatprep.subr.bf16.mxu0 0
      %453 = vmatpush1.bf16.msra.mxu0 0
      %454 = vmatprep.subr.bf16.mxu0 0
      %455 = vmatpush1.bf16.msra.mxu0 0
      %456 = vmatprep.subr.bf16.mxu0 0
      %457 = vmatpush1.bf16.msra.mxu0 0
      %458 = vmatprep.subr.bf16.mxu0 0
      %459 = vmatpush1.bf16.msra.mxu0 0
      %460 = vmatprep.subr.bf16.mxu0 0
      %461 = vmatpush1.bf16.msra.mxu0 0
      %462 = vmatprep.subr.bf16.mxu0 0
      %463 = vmatpush1.bf16.msra.mxu0 0
      %464 = vmatprep.subr.bf16.mxu0 0
      %465 = vmatpush1.bf16.msra.mxu0 0
      %466 = vmatprep.subr.bf16.mxu0 0
      %467 = vmatpush1.bf16.msra.mxu0 0
      %468 = vmatprep.subr.bf16.mxu0 0
      %469 = vmatpush1.bf16.msra.mxu0 0
      %470 = vmatprep.subr.bf16.mxu0 0
      %471 = vmatpush1.bf16.msra.mxu0 0
      %472 = vmatprep.subr.bf16.mxu0 0
      %473 = vmatpush1.bf16.msra.mxu0 0
      %474 = vmatprep.subr.bf16.mxu0 0
      %475 = vmatpush1.bf16.msra.mxu0 0
      %476 = vmatprep.subr.bf16.mxu0 0
      %477 = vmatpush1.bf16.msra.mxu0 0
      %478 = vmatprep.subr.bf16.mxu0 0
      %479 = vmatpush1.bf16.msra.mxu0 0
      %480 = vmatprep.subr.bf16.mxu0 0
      %481 = vmatpush1.bf16.msra.mxu0 0
      %482 = vmatprep.mubr.bf16.mxu0 0
      %483 = vmatmul.mubr.bf16.gmra.mrb[0].mxu0 %v399
      %v484 = vpop.f32.mrb[0].mxu0
      %v485 = vadd.f32 0.0, %v484
      %v486 = vpop.f32.mrb[0].mxu0
      %v487 = vpop.f32.mrb[0].mxu0
      %v488 = vadd.f32 0.0, %v487
      %v489 = vpop.f32.mrb[0].mxu0
      %490 = vmatprep.mubr.bf16.mxu0 0
      %491 = vmatmul.mubr.bf16.gmra.mrb[0].mxu0 %v402
      %v492 = vpop.f32.mrb[0].mxu0
      %v493 = vadd.f32 0.0, %v492
      %v494 = vpop.f32.mrb[0].mxu0
      %v495 = vpop.f32.mrb[0].mxu0
      %v496 = vadd.f32 0.0, %v495
      %v497 = vpop.f32.mrb[0].mxu0
      %498 = vmatprep.mubr.bf16.mxu0 0
      %499 = vmatmul.mubr.bf16.gmra.mrb[0].mxu0 %v405
      %v500 = vpop.f32.mrb[0].mxu0
      %v501 = vadd.f32 0.0, %v500
      %v502 = vpop.f32.mrb[0].mxu0
      %v503 = vpop.f32.mrb[0].mxu0
      %v504 = vadd.f32 0.0, %v503
      %v505 = vpop.f32.mrb[0].mxu0
      %506 = vmatprep.mubr.bf16.mxu0 0
      %507 = vmatmul.mubr.bf16.gmra.mrb[0].mxu0 %v408
      %v508 = vpop.f32.mrb[0].mxu0
      %v509 = vadd.f32 0.0, %v508
      %v510 = vpop.f32.mrb[0].mxu0
      %v511 = vpop.f32.mrb[0].mxu0
      %v512 = vadd.f32 0.0, %v511
      %v513 = vpop.f32.mrb[0].mxu0
      %514 = vmatprep.mubr.bf16.mxu0 0
      %515 = vmatmul.mubr.bf16.gmra.mrb[0].mxu0 %v411
      %v516 = vpop.f32.mrb[0].mxu0
      %v517 = vadd.f32 0.0, %v516
      %v518 = vpop.f32.mrb[0].mxu0
      %v519 = vpop.f32.mrb[0].mxu0
      %v520 = vadd.f32 0.0, %v519
      %v521 = vpop.f32.mrb[0].mxu0
      %522 = vmatprep.mubr.bf16.mxu0 0
      %523 = vmatmul.mubr.bf16.gmra.mrb[0].mxu0 %v414
      %v524 = vpop.f32.mrb[0].mxu0
      %v525 = vadd.f32 0.0, %v524
      %v526 = vpop.f32.mrb[0].mxu0
      %v527 = vpop.f32.mrb[0].mxu0
      %v528 = vadd.f32 0.0, %v527
      %v529 = vpop.f32.mrb[0].mxu0
      %530 = vmatprep.mubr.bf16.mxu0 0
      %531 = vmatmul.mubr.bf16.gmra.mrb[0].mxu0 %v417
      %v532 = vpop.f32.mrb[0].mxu0
      %v533 = vadd.f32 0.0, %v532
      %v534 = vpop.f32.mrb[0].mxu0
      %v535 = vpop.f32.mrb[0].mxu0
      %v536 = vadd.f32 0.0, %v535
      %v537 = vpop.f32.mrb[0].mxu0
      %538 = vmatprep.mubr.bf16.mxu0 0
      %539 = vmatmul.mubr.bf16.gmra.mrb[0].mxu0 %v420
      %v540 = vpop.f32.mrb[0].mxu0
      %v541 = vadd.f32 0.0, %v540
      %v542 = vpop.f32.mrb[0].mxu0
      %v543 = vpop.f32.mrb[0].mxu0
      %v544 = vadd.f32 0.0, %v543
      %v545 = vpop.f32.mrb[0].mxu0
      %546 = vmatprep.mubr.bf16.mxu0 0
      %547 = vmatmul.mubr.bf16.gmra.mrb[0].mxu0 %v423
      %v548 = vpop.f32.mrb[0].mxu0
      %v549 = vadd.f32 0.0, %v548
      %v550 = vpop.f32.mrb[0].mxu0
      %v551 = vpop.f32.mrb[0].mxu0
      %v552 = vadd.f32 0.0, %v551
      %v553 = vpop.f32.mrb[0].mxu0
      %554 = vmatprep.mubr.bf16.mxu0 0
      %555 = vmatmul.mubr.bf16.gmra.mrb[0].mxu0 %v426
      %v556 = vpop.f32.mrb[0].mxu0
      %v557 = vadd.f32 0.0, %v556
      %v558 = vpop.f32.mrb[0].mxu0
      %v559 = vpop.f32.mrb[0].mxu0
      %v560 = vadd.f32 0.0, %v559
      %v561 = vpop.f32.mrb[0].mxu0
      %562 = vmatprep.mubr.bf16.mxu0 0
      %563 = vmatmul.mubr.bf16.gmra.mrb[0].mxu0 %v429
      %v564 = vpop.f32.mrb[0].mxu0
      %v565 = vadd.f32 0.0, %v564
      %v566 = vpop.f32.mrb[0].mxu0
      %v567 = vpop.f32.mrb[0].mxu0
      %v568 = vadd.f32 0.0, %v567
      %v569 = vpop.f32.mrb[0].mxu0
      %570 = vmatprep.mubr.bf16.mxu0 0
      %571 = vmatmul.mubr.bf16.gmra.mrb[0].mxu0 %v432
      %v572 = vpop.f32.mrb[0].mxu0
      %v573 = vadd.f32 0.0, %v572
      %v574 = vpop.f32.mrb[0].mxu0
      %v575 = vpop.f32.mrb[0].mxu0
      %v576 = vadd.f32 0.0, %v575
      %v577 = vpop.f32.mrb[0].mxu0
      %578 = vmatprep.mubr.bf16.mxu0 0
      %579 = vmatmul.mubr.bf16.gmra.mrb[0].mxu0 %v435
      %v580 = vpop.f32.mrb[0].mxu0
      %v581 = vadd.f32 0.0, %v580
      %v582 = vpop.f32.mrb[0].mxu0
      %v583 = vpop.f32.mrb[0].mxu0
      %v584 = vadd.f32 0.0, %v583
      %v585 = vpop.f32.mrb[0].mxu0
      %586 = vmatprep.mubr.bf16.mxu0 0
      %587 = vmatmul.mubr.bf16.gmra.mrb[0].mxu0 %v438
      %v588 = vpop.f32.mrb[0].mxu0
      %v589 = vadd.f32 0.0, %v588
      %v590 = vpop.f32.mrb[0].mxu0
      %v591 = vpop.f32.mrb[0].mxu0
      %v592 = vadd.f32 0.0, %v591
      %v593 = vpop.f32.mrb[0].mxu0
      %594 = vmatprep.mubr.bf16.mxu0 0
      %595 = vmatmul.mubr.bf16.gmra.mrb[0].mxu0 %v441
      %v596 = vpop.f32.mrb[0].mxu0
      %v597 = vadd.f32 0.0, %v596
      %v598 = vpop.f32.mrb[0].mxu0
      %v599 = vpop.f32.mrb[0].mxu0
      %v600 = vadd.f32 0.0, %v599
      %v601 = vpop.f32.mrb[0].mxu0
      %602 = vmatprep.mubr.bf16.mxu0 0
      %603 = vmatmul.mubr.bf16.gmra.mrb[0].mxu0 %v444
      %v604 = vpop.f32.mrb[0].mxu0
      %v605 = vadd.f32 0.0, %v604
      %v606 = vpop.f32.mrb[0].mxu0
      %v607 = vpop.f32.mrb[0].mxu0
      %v608 = vadd.f32 0.0, %v607
      %v609 = vpop.f32.mrb[0].mxu0
      %610 = vdwg.mxu0
      %v643 = vunpack.c.l.b16 %v251
      %v644 = vunpack.c.l.b16 %v252
      %v645 = vunpack.c.l.b16 %v253
      %v646 = vunpack.c.l.b16 %v254
      %v647 = vunpack.c.l.b16 %v255
      %v648 = vunpack.c.l.b16 %v256
      %v649 = vunpack.c.l.b16 %v257
      %v650 = vunpack.c.l.b16 %v258
      %v651 = vunpack.c.l.b16 %v259
      %v652 = vunpack.c.l.b16 %v260
      %v653 = vunpack.c.l.b16 %v261
      %v654 = vunpack.c.l.b16 %v262
      %v655 = vunpack.c.l.b16 %v263
      %v656 = vunpack.c.l.b16 %v264
      %v657 = vunpack.c.l.b16 %v265
      %v658 = vunpack.c.l.b16 %v266
      %v659 = vunpack.c.l.b16 %v267
      %v660 = vunpack.c.l.b16 %v268
      %v661 = vunpack.c.l.b16 %v269
      %v662 = vunpack.c.l.b16 %v270
      %v663 = vunpack.c.l.b16 %v271
      %v664 = vunpack.c.l.b16 %v272
      %v665 = vunpack.c.l.b16 %v273
      %v666 = vunpack.c.l.b16 %v274
      %v667 = vunpack.c.l.b16 %v275
      %v668 = vunpack.c.l.b16 %v276
      %v669 = vunpack.c.l.b16 %v277
      %v670 = vunpack.c.l.b16 %v278
      %v671 = vunpack.c.l.b16 %v279
      %v672 = vunpack.c.l.b16 %v280
      %v673 = vunpack.c.l.b16 %v281
      %v674 = vunpack.c.l.b16 %v282
      %v675 = vpack.c.b16 %v644, %v643
      %v676 = vpack.c.b16 %v646, %v645
      %v677 = vpack.c.b16 %v648, %v647
      %v678 = vpack.c.b16 %v650, %v649
      %v679 = vpack.c.b16 %v652, %v651
      %v680 = vpack.c.b16 %v654, %v653
      %v681 = vpack.c.b16 %v656, %v655
      %v682 = vpack.c.b16 %v658, %v657
      %v683 = vpack.c.b16 %v660, %v659
      %v684 = vpack.c.b16 %v662, %v661
      %v685 = vpack.c.b16 %v664, %v663
      %v686 = vpack.c.b16 %v666, %v665
      %v687 = vpack.c.b16 %v668, %v667
      %v688 = vpack.c.b16 %v670, %v669
      %v689 = vpack.c.b16 %v672, %v671
      %v690 = vpack.c.b16 %v674, %v673
      %vm691 = vcmask 64512
      %v693 = vsel %vm691, %v675, 0
      %v696 = vsel %vm691, %v676, 0
      %v699 = vsel %vm691, %v677, 0
      %v702 = vsel %vm691, %v678, 0
      %v705 = vsel %vm691, %v679, 0
      %v708 = vsel %vm691, %v680, 0
      %v711 = vsel %vm691, %v681, 0
      %v714 = vsel %vm691, %v682, 0
      %v717 = vsel %vm691, %v683, 0
      %v720 = vsel %vm691, %v684, 0
      %v723 = vsel %vm691, %v685, 0
      %v726 = vsel %vm691, %v686, 0
      %v729 = vsel %vm691, %v687, 0
      %v732 = vsel %vm691, %v688, 0
      %v735 = vsel %vm691, %v689, 0
      %v738 = vsel %vm691, %v690, 0
      %vm740 = vcmask 1043456
      %v742 = vsel %vm740, %v283, 0
      %744 = vmatprep.subr.bf16.mxu0 0
      %745 = vmatpush1.bf16.msra.mxu0 %v742
      %746 = vmatprep.subr.bf16.mxu0 0
      %747 = vmatpush1.bf16.msra.mxu0 0
      %748 = vmatprep.subr.bf16.mxu0 0
      %749 = vmatpush1.bf16.msra.mxu0 0
      %750 = vmatprep.subr.bf16.mxu0 0
      %751 = vmatpush1.bf16.msra.mxu0 0
      %752 = vmatprep.subr.bf16.mxu0 0
      %753 = vmatpush1.bf16.msra.mxu0 0
      %754 = vmatprep.subr.bf16.mxu0 0
      %755 = vmatpush1.bf16.msra.mxu0 0
      %756 = vmatprep.subr.bf16.mxu0 0
      %757 = vmatpush1.bf16.msra.mxu0 0
      %758 = vmatprep.subr.bf16.mxu0 0
      %759 = vmatpush1.bf16.msra.mxu0 0
      %760 = vmatprep.subr.bf16.mxu0 0
      %761 = vmatpush1.bf16.msra.mxu0 0
      %762 = vmatprep.subr.bf16.mxu0 0
      %763 = vmatpush1.bf16.msra.mxu0 0
      %764 = vmatprep.subr.bf16.mxu0 0
      %765 = vmatpush1.bf16.msra.mxu0 0
      %766 = vmatprep.subr.bf16.mxu0 0
      %767 = vmatpush1.bf16.msra.mxu0 0
      %768 = vmatprep.subr.bf16.mxu0 0
      %769 = vmatpush1.bf16.msra.mxu0 0
      %770 = vmatprep.subr.bf16.mxu0 0
      %771 = vmatpush1.bf16.msra.mxu0 0
      %772 = vmatprep.subr.bf16.mxu0 0
      %773 = vmatpush1.bf16.msra.mxu0 0
      %774 = vmatprep.subr.bf16.mxu0 0
      %775 = vmatpush1.bf16.msra.mxu0 0
      %776 = vmatprep.mubr.bf16.mxu0 0
      %777 = vmatmul.mubr.bf16.gmra.mrb[0].mxu0 %v693
      %v778 = vpop.f32.mrb[0].mxu0
      %v779 = vadd.f32 %v485, %v778
      %v780 = vpop.f32.mrb[0].mxu0
      %v781 = vpop.f32.mrb[0].mxu0
      %v782 = vadd.f32 %v488, %v781
      %v783 = vpop.f32.mrb[0].mxu0
      %784 = vmatprep.mubr.bf16.mxu0 0
      %785 = vmatmul.mubr.bf16.gmra.mrb[0].mxu0 %v696
      %v786 = vpop.f32.mrb[0].mxu0
      %v787 = vadd.f32 %v493, %v786
      %v788 = vpop.f32.mrb[0].mxu0
      %v789 = vpop.f32.mrb[0].mxu0
      %v790 = vadd.f32 %v496, %v789
      %v791 = vpop.f32.mrb[0].mxu0
      %792 = vmatprep.mubr.bf16.mxu0 0
      %793 = vmatmul.mubr.bf16.gmra.mrb[0].mxu0 %v699
      %v794 = vpop.f32.mrb[0].mxu0
      %v795 = vadd.f32 %v501, %v794
      %v796 = vpop.f32.mrb[0].mxu0
      %v797 = vpop.f32.mrb[0].mxu0
      %v798 = vadd.f32 %v504, %v797
      %v799 = vpop.f32.mrb[0].mxu0
      %800 = vmatprep.mubr.bf16.mxu0 0
      %801 = vmatmul.mubr.bf16.gmra.mrb[0].mxu0 %v702
      %v802 = vpop.f32.mrb[0].mxu0
      %v803 = vadd.f32 %v509, %v802
      %v804 = vpop.f32.mrb[0].mxu0
      %v805 = vpop.f32.mrb[0].mxu0
      %v806 = vadd.f32 %v512, %v805
      %v807 = vpop.f32.mrb[0].mxu0
      %808 = vmatprep.mubr.bf16.mxu0 0
      %809 = vmatmul.mubr.bf16.gmra.mrb[0].mxu0 %v705
      %v810 = vpop.f32.mrb[0].mxu0
      %v811 = vadd.f32 %v517, %v810
      %v812 = vpop.f32.mrb[0].mxu0
      %v813 = vpop.f32.mrb[0].mxu0
      %v814 = vadd.f32 %v520, %v813
      %v815 = vpop.f32.mrb[0].mxu0
      %816 = vmatprep.mubr.bf16.mxu0 0
      %817 = vmatmul.mubr.bf16.gmra.mrb[0].mxu0 %v708
      %v818 = vpop.f32.mrb[0].mxu0
      %v819 = vadd.f32 %v525, %v818
      %v820 = vpop.f32.mrb[0].mxu0
      %v821 = vpop.f32.mrb[0].mxu0
      %v822 = vadd.f32 %v528, %v821
      %v823 = vpop.f32.mrb[0].mxu0
      %824 = vmatprep.mubr.bf16.mxu0 0
      %825 = vmatmul.mubr.bf16.gmra.mrb[0].mxu0 %v711
      %v826 = vpop.f32.mrb[0].mxu0
      %v827 = vadd.f32 %v533, %v826
      %v828 = vpop.f32.mrb[0].mxu0
      %v829 = vpop.f32.mrb[0].mxu0
      %v830 = vadd.f32 %v536, %v829
      %v831 = vpop.f32.mrb[0].mxu0
      %832 = vmatprep.mubr.bf16.mxu0 0
      %833 = vmatmul.mubr.bf16.gmra.mrb[0].mxu0 %v714
      %v834 = vpop.f32.mrb[0].mxu0
      %v835 = vadd.f32 %v541, %v834
      %v836 = vpop.f32.mrb[0].mxu0
      %v837 = vpop.f32.mrb[0].mxu0
      %v838 = vadd.f32 %v544, %v837
      %v839 = vpop.f32.mrb[0].mxu0
      %840 = vmatprep.mubr.bf16.mxu0 0
      %841 = vmatmul.mubr.bf16.gmra.mrb[0].mxu0 %v717
      %v842 = vpop.f32.mrb[0].mxu0
      %v843 = vadd.f32 %v549, %v842
      %v844 = vpop.f32.mrb[0].mxu0
      %v845 = vpop.f32.mrb[0].mxu0
      %v846 = vadd.f32 %v552, %v845
      %v847 = vpop.f32.mrb[0].mxu0
      %848 = vmatprep.mubr.bf16.mxu0 0
      %849 = vmatmul.mubr.bf16.gmra.mrb[0].mxu0 %v720
      %v850 = vpop.f32.mrb[0].mxu0
      %v851 = vadd.f32 %v557, %v850
      %v852 = vpop.f32.mrb[0].mxu0
      %v853 = vpop.f32.mrb[0].mxu0
      %v854 = vadd.f32 %v560, %v853
      %v855 = vpop.f32.mrb[0].mxu0
      %856 = vmatprep.mubr.bf16.mxu0 0
      %857 = vmatmul.mubr.bf16.gmra.mrb[0].mxu0 %v723
      %v858 = vpop.f32.mrb[0].mxu0
      %v859 = vadd.f32 %v565, %v858
      %v860 = vpop.f32.mrb[0].mxu0
      %v861 = vpop.f32.mrb[0].mxu0
      %v862 = vadd.f32 %v568, %v861
      %v863 = vpop.f32.mrb[0].mxu0
      %864 = vmatprep.mubr.bf16.mxu0 0
      %865 = vmatmul.mubr.bf16.gmra.mrb[0].mxu0 %v726
      %v866 = vpop.f32.mrb[0].mxu0
      %v867 = vadd.f32 %v573, %v866
      %v868 = vpop.f32.mrb[0].mxu0
      %v869 = vpop.f32.mrb[0].mxu0
      %v870 = vadd.f32 %v576, %v869
      %v871 = vpop.f32.mrb[0].mxu0
      %872 = vmatprep.mubr.bf16.mxu0 0
      %873 = vmatmul.mubr.bf16.gmra.mrb[0].mxu0 %v729
      %v874 = vpop.f32.mrb[0].mxu0
      %v875 = vadd.f32 %v581, %v874
      %v876 = vpop.f32.mrb[0].mxu0
      %v877 = vpop.f32.mrb[0].mxu0
      %v878 = vadd.f32 %v584, %v877
      %v879 = vpop.f32.mrb[0].mxu0
      %880 = vmatprep.mubr.bf16.mxu0 0
      %881 = vmatmul.mubr.bf16.gmra.mrb[0].mxu0 %v732
      %v882 = vpop.f32.mrb[0].mxu0
      %v883 = vadd.f32 %v589, %v882
      %v884 = vpop.f32.mrb[0].mxu0
      %v885 = vpop.f32.mrb[0].mxu0
      %v886 = vadd.f32 %v592, %v885
      %v887 = vpop.f32.mrb[0].mxu0
      %888 = vmatprep.mubr.bf16.mxu0 0
      %889 = vmatmul.mubr.bf16.gmra.mrb[0].mxu0 %v735
      %v890 = vpop.f32.mrb[0].mxu0
      %v891 = vadd.f32 %v597, %v890
      %v892 = vpop.f32.mrb[0].mxu0
      %v893 = vpop.f32.mrb[0].mxu0
      %v894 = vadd.f32 %v600, %v893
      %v895 = vpop.f32.mrb[0].mxu0
      %896 = vmatprep.mubr.bf16.mxu0 0
      %897 = vmatmul.mubr.bf16.gmra.mrb[0].mxu0 %v738
      %v898 = vpop.f32.mrb[0].mxu0
      %v899 = vadd.f32 %v605, %v898
      %v900 = vpop.f32.mrb[0].mxu0
      %v901 = vpop.f32.mrb[0].mxu0
      %v902 = vadd.f32 %v608, %v901
      %v903 = vpop.f32.mrb[0].mxu0
      %904 = vdwg.mxu0
      %v905 = vld [vmem:[%s4] sm:$0x1]
      %v907 = vlaneseq
      %v908 = vshrl.u32 %v907, 7
      %v909 = vsub.s32 0, %v908
      %v910 = vrot.slane %v905, %v909
      %v912 = vadd.f32 %v779, %v910
      %v913 = vadd.f32 %v782, %v910
      %v914 = vadd.f32 %v787, %v910
      %v915 = vadd.f32 %v790, %v910
      %v916 = vadd.f32 %v795, %v910
      %v917 = vadd.f32 %v798, %v910
      %v918 = vadd.f32 %v803, %v910
      %v919 = vadd.f32 %v806, %v910
      %v920 = vadd.f32 %v811, %v910
      %v921 = vadd.f32 %v814, %v910
      %v922 = vadd.f32 %v819, %v910
      %v923 = vadd.f32 %v822, %v910
      %v924 = vadd.f32 %v827, %v910
      %v925 = vadd.f32 %v830, %v910
      %v926 = vadd.f32 %v835, %v910
      %v927 = vadd.f32 %v838, %v910
      %v928 = vadd.f32 %v843, %v910
      %v929 = vadd.f32 %v846, %v910
      %v930 = vadd.f32 %v851, %v910
      %v931 = vadd.f32 %v854, %v910
      %v932 = vadd.f32 %v859, %v910
      %v933 = vadd.f32 %v862, %v910
      %v934 = vadd.f32 %v867, %v910
      %v935 = vadd.f32 %v870, %v910
      %v936 = vadd.f32 %v875, %v910
      %v937 = vadd.f32 %v878, %v910
      %v938 = vadd.f32 %v883, %v910
      %v939 = vadd.f32 %v886, %v910
      %v940 = vadd.f32 %v891, %v910
      %v941 = vadd.f32 %v894, %v910
      %v942 = vadd.f32 %v899, %v910
      %v943 = vadd.f32 %v902, %v910
      %v944 = vsub.f32 0.0, %v912
      %v945 = vsub.f32 0.0, %v913
      %v946 = vsub.f32 0.0, %v914
      %v947 = vsub.f32 0.0, %v915
      %v948 = vsub.f32 0.0, %v916
      %v949 = vsub.f32 0.0, %v917
      %v950 = vsub.f32 0.0, %v918
      %v951 = vsub.f32 0.0, %v919
      %v952 = vsub.f32 0.0, %v920
      %v953 = vsub.f32 0.0, %v921
      %v954 = vsub.f32 0.0, %v922
      %v955 = vsub.f32 0.0, %v923
      %v956 = vsub.f32 0.0, %v924
      %v957 = vsub.f32 0.0, %v925
      %v958 = vsub.f32 0.0, %v926
      %v959 = vsub.f32 0.0, %v927
      %v960 = vsub.f32 0.0, %v928
      %v961 = vsub.f32 0.0, %v929
      %v962 = vsub.f32 0.0, %v930
      %v963 = vsub.f32 0.0, %v931
      %v964 = vsub.f32 0.0, %v932
      %v965 = vsub.f32 0.0, %v933
      %v966 = vsub.f32 0.0, %v934
      %v967 = vsub.f32 0.0, %v935
      %v968 = vsub.f32 0.0, %v936
      %v969 = vsub.f32 0.0, %v937
      %v970 = vsub.f32 0.0, %v938
      %v971 = vsub.f32 0.0, %v939
      %v972 = vsub.f32 0.0, %v940
      %v973 = vsub.f32 0.0, %v941
      %v974 = vsub.f32 0.0, %v942
      %v975 = vsub.f32 0.0, %v943
      %v976 = vmul.f32 %v944, 1.442695
      %v977 = vpow.pop %v976
      %v978 = vmul.f32 %v945, 1.442695
      %v979 = vpow.pop %v978
      %v980 = vmul.f32 %v946, 1.442695
      %v981 = vpow.pop %v980
      %v982 = vmul.f32 %v947, 1.442695
      %v983 = vpow.pop %v982
      %v984 = vmul.f32 %v948, 1.442695
      %v985 = vpow.pop %v984
      %v986 = vmul.f32 %v949, 1.442695
      %v987 = vpow.pop %v986
      %v988 = vmul.f32 %v950, 1.442695
      %v989 = vpow.pop %v988
      %v990 = vmul.f32 %v951, 1.442695
      %v991 = vpow.pop %v990
      %v992 = vmul.f32 %v952, 1.442695
      %v993 = vpow.pop %v992
      %v994 = vmul.f32 %v953, 1.442695
      %v995 = vpow.pop %v994
      %v996 = vmul.f32 %v954, 1.442695
      %v997 = vpow.pop %v996
      %v998 = vmul.f32 %v955, 1.442695
      %v999 = vpow.pop %v998
      %v1000 = vmul.f32 %v956, 1.442695
      %v1001 = vpow.pop %v1000
      %v1002 = vmul.f32 %v957, 1.442695
      %v1003 = vpow.pop %v1002
      %v1004 = vmul.f32 %v958, 1.442695
      %v1005 = vpow.pop %v1004
      %v1006 = vmul.f32 %v959, 1.442695
      %v1007 = vpow.pop %v1006
      %v1008 = vmul.f32 %v960, 1.442695
      %v1009 = vpow.pop %v1008
      %v1010 = vmul.f32 %v961, 1.442695
      %v1011 = vpow.pop %v1010
      %v1012 = vmul.f32 %v962, 1.442695
      %v1013 = vpow.pop %v1012
      %v1014 = vmul.f32 %v963, 1.442695
      %v1015 = vpow.pop %v1014
      %v1016 = vmul.f32 %v964, 1.442695
      %v1017 = vpow.pop %v1016
      %v1018 = vmul.f32 %v965, 1.442695
      %v1019 = vpow.pop %v1018
      %v1020 = vmul.f32 %v966, 1.442695
      %v1021 = vpow.pop %v1020
      %v1022 = vmul.f32 %v967, 1.442695
      %v1023 = vpow.pop %v1022
      %v1024 = vmul.f32 %v968, 1.442695
      %v1025 = vpow.pop %v1024
      %v1026 = vmul.f32 %v969, 1.442695
      %v1027 = vpow.pop %v1026
      %v1028 = vmul.f32 %v970, 1.442695
      %v1029 = vpow.pop %v1028
      %v1030 = vmul.f32 %v971, 1.442695
      %v1031 = vpow.pop %v1030
      %v1032 = vmul.f32 %v972, 1.442695
      %v1033 = vpow.pop %v1032
      %v1034 = vmul.f32 %v973, 1.442695
      %v1035 = vpow.pop %v1034
      %v1036 = vmul.f32 %v974, 1.442695
      %v1037 = vpow.pop %v1036
      %v1038 = vmul.f32 %v975, 1.442695
      %v1039 = vpow.pop %v1038
      %v1040 = vadd.f32 %v977, 1.0
      %v1041 = vadd.f32 %v979, 1.0
      %v1042 = vadd.f32 %v981, 1.0
      %v1043 = vadd.f32 %v983, 1.0
      %v1044 = vadd.f32 %v985, 1.0
      %v1045 = vadd.f32 %v987, 1.0
      %v1046 = vadd.f32 %v989, 1.0
      %v1047 = vadd.f32 %v991, 1.0
      %v1048 = vadd.f32 %v993, 1.0
      %v1049 = vadd.f32 %v995, 1.0
      %v1050 = vadd.f32 %v997, 1.0
      %v1051 = vadd.f32 %v999, 1.0
      %v1052 = vadd.f32 %v1001, 1.0
      %v1053 = vadd.f32 %v1003, 1.0
      %v1054 = vadd.f32 %v1005, 1.0
      %v1055 = vadd.f32 %v1007, 1.0
      %v1056 = vadd.f32 %v1009, 1.0
      %v1057 = vadd.f32 %v1011, 1.0
      %v1058 = vadd.f32 %v1013, 1.0
      %v1059 = vadd.f32 %v1015, 1.0
      %v1060 = vadd.f32 %v1017, 1.0
      %v1061 = vadd.f32 %v1019, 1.0
      %v1062 = vadd.f32 %v1021, 1.0
      %v1063 = vadd.f32 %v1023, 1.0
      %v1064 = vadd.f32 %v1025, 1.0
      %v1065 = vadd.f32 %v1027, 1.0
      %v1066 = vadd.f32 %v1029, 1.0
      %v1067 = vadd.f32 %v1031, 1.0
      %v1068 = vadd.f32 %v1033, 1.0
      %v1069 = vadd.f32 %v1035, 1.0
      %v1070 = vadd.f32 %v1037, 1.0
      %v1071 = vadd.f32 %v1039, 1.0
      %v1072 = vrcp.pop %v1040
      %v1073 = vmul.f32 1.0, %v1072
      %v1074 = vrcp.pop %v1041
      %v1075 = vmul.f32 1.0, %v1074
      %v1076 = vrcp.pop %v1042
      %v1077 = vmul.f32 1.0, %v1076
      %v1078 = vrcp.pop %v1043
      %v1079 = vmul.f32 1.0, %v1078
      %v1080 = vrcp.pop %v1044
      %v1081 = vmul.f32 1.0, %v1080
      %v1082 = vrcp.pop %v1045
      %v1083 = vmul.f32 1.0, %v1082
      %v1084 = vrcp.pop %v1046
      %v1085 = vmul.f32 1.0, %v1084
      %v1086 = vrcp.pop %v1047
      %v1087 = vmul.f32 1.0, %v1086
      %v1088 = vrcp.pop %v1048
      %v1089 = vmul.f32 1.0, %v1088
      %v1090 = vrcp.pop %v1049
      %v1091 = vmul.f32 1.0, %v1090
      %v1092 = vrcp.pop %v1050
      %v1093 = vmul.f32 1.0, %v1092
      %v1094 = vrcp.pop %v1051
      %v1095 = vmul.f32 1.0, %v1094
      %v1096 = vrcp.pop %v1052
      %v1097 = vmul.f32 1.0, %v1096
      %v1098 = vrcp.pop %v1053
      %v1099 = vmul.f32 1.0, %v1098
      %v1100 = vrcp.pop %v1054
      %v1101 = vmul.f32 1.0, %v1100
      %v1102 = vrcp.pop %v1055
      %v1103 = vmul.f32 1.0, %v1102
      %v1104 = vrcp.pop %v1056
      %v1105 = vmul.f32 1.0, %v1104
      %v1106 = vrcp.pop %v1057
      %v1107 = vmul.f32 1.0, %v1106
      %v1108 = vrcp.pop %v1058
      %v1109 = vmul.f32 1.0, %v1108
      %v1110 = vrcp.pop %v1059
      %v1111 = vmul.f32 1.0, %v1110
      %v1112 = vrcp.pop %v1060
      %v1113 = vmul.f32 1.0, %v1112
      %v1114 = vrcp.pop %v1061
      %v1115 = vmul.f32 1.0, %v1114
      %v1116 = vrcp.pop %v1062
      %v1117 = vmul.f32 1.0, %v1116
      %v1118 = vrcp.pop %v1063
      %v1119 = vmul.f32 1.0, %v1118
      %v1120 = vrcp.pop %v1064
      %v1121 = vmul.f32 1.0, %v1120
      %v1122 = vrcp.pop %v1065
      %v1123 = vmul.f32 1.0, %v1122
      %v1124 = vrcp.pop %v1066
      %v1125 = vmul.f32 1.0, %v1124
      %v1126 = vrcp.pop %v1067
      %v1127 = vmul.f32 1.0, %v1126
      %v1128 = vrcp.pop %v1068
      %v1129 = vmul.f32 1.0, %v1128
      %v1130 = vrcp.pop %v1069
      %v1131 = vmul.f32 1.0, %v1130
      %v1132 = vrcp.pop %v1070
      %v1133 = vmul.f32 1.0, %v1132
      %v1134 = vrcp.pop %v1071
      %v1135 = vmul.f32 1.0, %v1134
      %v1136 = vmul.f32 %v912, %v1073
      %v1137 = vmul.f32 %v913, %v1075
      %v1138 = vmul.f32 %v914, %v1077
      %v1139 = vmul.f32 %v915, %v1079
      %v1140 = vmul.f32 %v916, %v1081
      %v1141 = vmul.f32 %v917, %v1083
      %v1142 = vmul.f32 %v918, %v1085
      %v1143 = vmul.f32 %v919, %v1087
      %v1144 = vmul.f32 %v920, %v1089
      %v1145 = vmul.f32 %v921, %v1091
      %v1146 = vmul.f32 %v922, %v1093
      %v1147 = vmul.f32 %v923, %v1095
      %v1148 = vmul.f32 %v924, %v1097
      %v1149 = vmul.f32 %v925, %v1099
      %v1150 = vmul.f32 %v926, %v1101
      %v1151 = vmul.f32 %v927, %v1103
      %v1152 = vmul.f32 %v928, %v1105
      %v1153 = vmul.f32 %v929, %v1107
      %v1154 = vmul.f32 %v930, %v1109
      %v1155 = vmul.f32 %v931, %v1111
      %v1156 = vmul.f32 %v932, %v1113
      %v1157 = vmul.f32 %v933, %v1115
      %v1158 = vmul.f32 %v934, %v1117
      %v1159 = vmul.f32 %v935, %v1119
      %v1160 = vmul.f32 %v936, %v1121
      %v1161 = vmul.f32 %v937, %v1123
      %v1162 = vmul.f32 %v938, %v1125
      %v1163 = vmul.f32 %v939, %v1127
      %v1164 = vmul.f32 %v940, %v1129
      %v1165 = vmul.f32 %v941, %v1131
      %v1166 = vmul.f32 %v942, %v1133
      %v1167 = vmul.f32 %v943, %v1135
      %1168 = vst.msk [vmem:[%s248] sm:$0xff] %vm691, %v1136
      %1169 = vst.msk [vmem:[%s248 + $0x8] sm:$0xff] %vm691, %v1137
      %1170 = vst.msk [vmem:[%s248 + $0x10] sm:$0xff] %vm691, %v1138
      %1171 = vst.msk [vmem:[%s248 + $0x18] sm:$0xff] %vm691, %v1139
      %1172 = vst.msk [vmem:[%s248 + $0x20] sm:$0xff] %vm691, %v1140
      %1173 = vst.msk [vmem:[%s248 + $0x28] sm:$0xff] %vm691, %v1141
      %1174 = vst.msk [vmem:[%s248 + $0x30] sm:$0xff] %vm691, %v1142
      %1175 = vst.msk [vmem:[%s248 + $0x38] sm:$0xff] %vm691, %v1143
      %1176 = vst.msk [vmem:[%s248 + $0x40] sm:$0xff] %vm691, %v1144
      %1177 = vst.msk [vmem:[%s248 + $0x48] sm:$0xff] %vm691, %v1145
      %1178 = vst.msk [vmem:[%s248 + $0x50] sm:$0xff] %vm691, %v1146
      %1179 = vst.msk [vmem:[%s248 + $0x58] sm:$0xff] %vm691, %v1147
      %1180 = vst.msk [vmem:[%s248 + $0x60] sm:$0xff] %vm691, %v1148
      %1181 = vst.msk [vmem:[%s248 + $0x68] sm:$0xff] %vm691, %v1149
      %1182 = vst.msk [vmem:[%s248 + $0x70] sm:$0xff] %vm691, %v1150
      %1183 = vst.msk [vmem:[%s248 + $0x78] sm:$0xff] %vm691, %v1151
      %1184 = vst.msk [vmem:[%s248 + $0x80] sm:$0xff] %vm691, %v1152
      %1185 = vst.msk [vmem:[%s248 + $0x88] sm:$0xff] %vm691, %v1153
      %1186 = vst.msk [vmem:[%s248 + $0x90] sm:$0xff] %vm691, %v1154
      %1187 = vst.msk [vmem:[%s248 + $0x98] sm:$0xff] %vm691, %v1155
      %1188 = vst.msk [vmem:[%s248 + $0xa0] sm:$0xff] %vm691, %v1156
      %1189 = vst.msk [vmem:[%s248 + $0xa8] sm:$0xff] %vm691, %v1157
      %1190 = vst.msk [vmem:[%s248 + $0xb0] sm:$0xff] %vm691, %v1158
      %1191 = vst.msk [vmem:[%s248 + $0xb8] sm:$0xff] %vm691, %v1159
      %1192 = vst.msk [vmem:[%s248 + $0xc0] sm:$0xff] %vm691, %v1160
      %1193 = vst.msk [vmem:[%s248 + $0xc8] sm:$0xff] %vm691, %v1161
      %1194 = vst.msk [vmem:[%s248 + $0xd0] sm:$0xff] %vm691, %v1162
      %1195 = vst.msk [vmem:[%s248 + $0xd8] sm:$0xff] %vm691, %v1163
      %1196 = vst.msk [vmem:[%s248 + $0xe0] sm:$0xff] %vm691, %v1164
      %1197 = vst.msk [vmem:[%s248 + $0xe8] sm:$0xff] %vm691, %v1165
      %1198 = vst.msk [vmem:[%s248 + $0xf0] sm:$0xff] %vm691, %v1166
      %1199 = vst.msk [vmem:[%s248 + $0xf8] sm:$0xff] %vm691, %v1167
      %s1200 = smul.u32 32, %s16
      %p1201 = scmp.lt.s32.totalorder %s1200, 63
      %s1202 = scalar_select %p1201, %s1200, 63
      %s1203 = smul.addr %s1202, 8
      %s1204 = scalar_lea.vmem %s5, %s1203
      // Predicated region
      $region41: #{c2f_v2_forward.5} parent=39 // pred_check
        %p1205 = pneg %p149
      $region42: #{c2f_v2_forward.5} parent=39 // pred_check_branch
        %1207 = sbr.rel (%p1205) target = $region44
      $region43: #{c2f_v2_forward.5} parent=39 // pred_region
        %s1208 = smul.u32 32, %s16
      $region44: #{c2f_v2_forward.5} parent=39 // pred_fallthru
        _
    $region40: #{c2f_v2_forward.5} parent=5 // pred_fallthru
      _
    %p1209 = scmp.le.s32.totalorder 2, %s11
    // Predicated region
    $region45: #{c2f_v2_forward.5} parent=5 // pred_check
      %p1210 = pneg %p1209
    $region46: #{c2f_v2_forward.5} parent=5 // pred_check_branch
      %1212 = sbr.rel (%p1210) target = $region48
    $region47: #{c2f_v2_forward.5} parent=5 // pred_region
      %s1213 = ssub.s32 %s11, 2
      // Predicated region
      $region49: #{c2f_v2_forward.5} parent=47 // pred_check
        %p1214 = pneg %p155
      $region50: #{c2f_v2_forward.5} parent=47 // pred_check_branch
        %1216 = sbr.rel (%p1214) target = $region52
      $region51: #{c2f_v2_forward.5} parent=47 // pred_region
        %s1217 = smul.u32 32, %s17
        %p1218 = scmp.lt.s32.totalorder %s1217, 63
        %s1219 = scalar_select %p1218, %s1217, 63
        %s1220 = smul.addr %s1219, 8
        %s1221 = scalar_lea.vmem %s5, %s1220
      $region52: #{c2f_v2_forward.5} parent=47 // pred_fallthru
        _
    $region48: #{c2f_v2_forward.5} parent=5 // pred_fallthru
      _
  $region6: #{c2f_v2_forward.5} parent=0 // loop_footer
    %s15 = sadd.s32 1, %s11
  $region7: #{c2f_v2_forward.5} parent=0 // loop_footer_branch
    %10 = sbr.rel target = $region3
  $region8: #{c2f_v2_forward.5} parent=0 // loop_exit
    _

// kernel: c2f_v2_forward.3
$region0: #{c2f_v2_forward.3}
  #allocation0 [shape = 'u32[]', space=smem, size = 0x4, offset = 0x4, fixed_abs, tag = 'smem constant byte address 0x4 - core index']
  #allocation1 [shape = 'u32[144,128]{1,0:T(1,128)}', space=vmem, size = 0x12000, scoped, tag = 'internal scratch']
  %s0 = inlined_call_operand.vmem [shape: f32[512,4], index: 0, kind: input, shape index: {}]
  %s1 = inlined_call_operand.vmem [shape: bf16[4,8], index: 1, kind: input, shape index: {}]
  %s2 = inlined_call_operand.vmem [shape: f32[1,8], index: 2, kind: input, shape index: {}]
  %s3 = inlined_call_operand.vmem [shape: bf16[512,8], index: 3, kind: output, shape index: {}]
  %s4 = sld [smem:[#allocation0]]
  $region45: #{c2f_v2_forward.3} parent=0
    _
  %s6 = ssub.s32 1, %s4
  %s7 = scalar_select 0, %s6, %s4
  loop: start=0, step=1, limit=4
  $region2: #{c2f_v2_forward.3} parent=0 // loop_pre_header
    _
  $region3: #{c2f_v2_forward.3} parent=0 // loop_header
    %s9 = sphi 0, %s13
    %p10 = scmp.ge.s32.totalorder %s9, 4
    %s19 = sphi 0, %s21
    %s22 = sphi 0, %s19
    %s23 = sphi 0, %s22
    %s39 = sphi 0, %s23
    %s43 = sphi 0, %s43
    %s45 = sphi 0, %s43
    %s46 = sphi 0, %s45
    %s60 = sphi 0, %s46
    %s64 = sphi 0, %s64
    %s66 = sphi 0, %s64
    %s67 = sphi 0, %s66
    %s81 = sphi 0, %s67
    %s87 = sphi 0, %s89
    %s90 = sphi 0, %s87
    %s91 = sphi 0, %s90
    %s107 = sphi 0, %s91
  $region4: #{c2f_v2_forward.3} parent=0 // loop_header_branch
    %12 = sbr.rel (%p10) target = $region8
  $region5: #{c2f_v2_forward.3} parent=0 // loop_body
    %s14 = ssub.s32 %s9, 1
    %s15 = ssub.s32 %s9, 2
    %s16 = sadd.s32 %s9, 1
    %s17 = ssub.s32 %s9, %s16
    %p18 = scmp.eq.s32.totalorder %s17, 0
    %s20 = sadd.s32 %s19, 1
    %s21 = scalar_select %p18, %s19, %s20
    %p24 = pneg %p18
    %p25 = scmp.eq.s32.totalorder %s9, 1
    %p26 = por %p24, %p25
    %p27 = scmp.ne.s32.totalorder %s19, %s22
    %p28 = scmp.eq.s32.totalorder %s9, 0
    %p29 = por %p27, %p28
    %p30 = scmp.ne.s32.totalorder %s19, %s22
    %p31 = scmp.eq.s32.totalorder %s14, 1
    %p32 = por %p30, %p31
    %p33 = scmp.ne.s32.totalorder %s22, %s23
    %p34 = scmp.eq.s32.totalorder %s14, 0
    %p35 = por %p33, %p34
    %p36 = scmp.ne.s32.totalorder %s22, %s23
    %p37 = scmp.eq.s32.totalorder %s15, 1
    %p38 = por %p36, %p37
    %p40 = scmp.ne.s32.totalorder %s23, %s39
    %p41 = scmp.eq.s32.totalorder %s15, 0
    %p42 = por %p40, %p41
    %s44 = sadd.s32 %s43, 1
    %p47 = scmp.eq.s32.totalorder %s9, 1
    %p48 = scmp.ne.s32.totalorder %s43, %s45
    %p49 = scmp.eq.s32.totalorder %s9, 0
    %p50 = por %p48, %p49
    %p51 = scmp.ne.s32.totalorder %s43, %s45
    %p52 = scmp.eq.s32.totalorder %s14, 1
    %p53 = por %p51, %p52
    %p54 = scmp.ne.s32.totalorder %s45, %s46
    %p55 = scmp.eq.s32.totalorder %s14, 0
    %p56 = por %p54, %p55
    %p57 = scmp.ne.s32.totalorder %s45, %s46
    %p58 = scmp.eq.s32.totalorder %s15, 1
    %p59 = por %p57, %p58
    %p61 = scmp.ne.s32.totalorder %s46, %s60
    %p62 = scmp.eq.s32.totalorder %s15, 0
    %p63 = por %p61, %p62
    %s65 = sadd.s32 %s64, 1
    %p68 = scmp.eq.s32.totalorder %s9, 1
    %p69 = scmp.ne.s32.totalorder %s64, %s66
    %p70 = scmp.eq.s32.totalorder %s9, 0
    %p71 = por %p69, %p70
    %p72 = scmp.ne.s32.totalorder %s64, %s66
    %p73 = scmp.eq.s32.totalorder %s14, 1
    %p74 = por %p72, %p73
    %p75 = scmp.ne.s32.totalorder %s66, %s67
    %p76 = scmp.eq.s32.totalorder %s14, 0
    %p77 = por %p75, %p76
    %p78 = scmp.ne.s32.totalorder %s66, %s67
    %p79 = scmp.eq.s32.totalorder %s15, 1
    %p80 = por %p78, %p79
    %p82 = scmp.ne.s32.totalorder %s67, %s81
    %p83 = scmp.eq.s32.totalorder %s15, 0
    %p84 = por %p82, %p83
    %s85 = ssub.s32 %s9, %s16
    %p86 = scmp.eq.s32.totalorder %s85, 0
    %s88 = sadd.s32 %s87, 1
    %s89 = scalar_select %p86, %s87, %s88
    %p92 = pneg %p86
    %p93 = scmp.eq.s32.totalorder %s9, 1
    %p94 = por %p92, %p93
    %p95 = scmp.ne.s32.totalorder %s87, %s90
    %p96 = scmp.eq.s32.totalorder %s9, 0
    %p97 = por %p95, %p96
    %p98 = scmp.ne.s32.totalorder %s87, %s90
    %p99 = scmp.eq.s32.totalorder %s14, 1
    %p100 = por %p98, %p99
    %p101 = scmp.ne.s32.totalorder %s90, %s91
    %p102 = scmp.eq.s32.totalorder %s14, 0
    %p103 = por %p101, %p102
    %p104 = scmp.ne.s32.totalorder %s90, %s91
    %p105 = scmp.eq.s32.totalorder %s15, 1
    %p106 = por %p104, %p105
    %p108 = scmp.ne.s32.totalorder %s91, %s107
    %p109 = scmp.eq.s32.totalorder %s15, 0
    %p110 = por %p108, %p109
    %p111 = scmp.le.s32.totalorder 1, %s9
    %p112 = scmp.lt.s32.totalorder %s9, 3
    %p113 = pnand %p111, %p112
    %p114 = pneg %p113
    // Predicated region
    $region9: #{c2f_v2_forward.3} parent=5 // pred_check
      _
    $region10: #{c2f_v2_forward.3} parent=5 // pred_check_branch
      %116 = sbr.rel (%p113) target = $region12
    $region11: #{c2f_v2_forward.3} parent=5 // pred_region
      %s117 = ssub.s32 %s9, 1
      // Predicated region
      $region13: #{c2f_v2_forward.3} parent=11 // pred_check
        %p118 = pneg %p56
      $region14: #{c2f_v2_forward.3} parent=11 // pred_check_branch
        %120 = sbr.rel (%p118) target = $region16
      $region15: #{c2f_v2_forward.3} parent=11 // pred_region
        _
      $region16: #{c2f_v2_forward.3} parent=11 // pred_fallthru
        _
      // Predicated region
      $region17: #{c2f_v2_forward.3} parent=11 // pred_check
        %p121 = pneg %p77
      $region18: #{c2f_v2_forward.3} parent=11 // pred_check_branch
        %123 = sbr.rel (%p121) target = $region20
      $region19: #{c2f_v2_forward.3} parent=11 // pred_region
        _
      $region20: #{c2f_v2_forward.3} parent=11 // pred_fallthru
        _
    $region12: #{c2f_v2_forward.3} parent=5 // pred_fallthru
      _
    %p124 = scmp.lt.s32.totalorder %s9, 2
    // Predicated region
    $region21: #{c2f_v2_forward.3} parent=5 // pred_check
      %p125 = pneg %p124
    $region22: #{c2f_v2_forward.3} parent=5 // pred_check_branch
      %127 = sbr.rel (%p125) target = $region24
    $region23: #{c2f_v2_forward.3} parent=5 // pred_region
      // Predicated region
      $region25: #{c2f_v2_forward.3} parent=23 // pred_check
        %p128 = pneg %p29
      $region26: #{c2f_v2_forward.3} parent=23 // pred_check_branch
        %130 = sbr.rel (%p128) target = $region28
      $region27: #{c2f_v2_forward.3} parent=23 // pred_region
        %s131 = smul.u32 32, %s9
        %p132 = scmp.lt.s32.totalorder %s131, 63
        %s133 = scalar_select %p132, %s131, 63
        %s134 = smul.addr %s133, 8
        %s135 = scalar_lea.vmem %s0, %s134
        %s136 = smul.u32 32, %s9
      $region28: #{c2f_v2_forward.3} parent=23 // pred_fallthru
        _
    $region24: #{c2f_v2_forward.3} parent=5 // pred_fallthru
      _
    %p137 = scmp.le.s32.totalorder 1, %s9
    %p138 = scmp.lt.s32.totalorder %s9, 3
    %p139 = pnand %p137, %p138
    %p140 = pneg %p139
    // Predicated region
    $region29: #{c2f_v2_forward.3} parent=5 // pred_check
      _
    $region30: #{c2f_v2_forward.3} parent=5 // pred_check_branch
      %142 = sbr.rel (%p139) target = $region32
    $region31: #{c2f_v2_forward.3} parent=5 // pred_region
      %s143 = ssub.s32 %s9, 1
      %s144 = smul.u32 32, %s14
      %p145 = scmp.lt.s32.totalorder %s144, 63
      %s146 = scalar_select %p145, %s144, 63
      %s147 = smul.addr %s146, 8
      %s148 = scalar_lea.vmem %s0, %s147
      %p149 = pneg %p35
      %p150 = pneg %p32
      %p151 = pneg %p56
      %p152 = pneg %p53
      %p153 = pneg %p77
      %p154 = pneg %p74
      %p155 = pneg %p103
      %p156 = pneg %p100
      %s157 = smul.u32 32, %s14
      %p158 = scmp.lt.s32.totalorder %s157, 63
      %s159 = scalar_select %p158, %s157, 63
      %s160 = smul.addr %s159, 4
      %s161 = scalar_lea.vmem %s3, %s160
      %s162 = smul.u32 32, %s14
      %p163 = scmp.lt.s32.totalorder %s162, 63
      %s164 = scalar_select %p163, %s162, 63
      %s165 = smul.addr %s164, 8
      %s166 = scalar_lea.vmem %s0, %s165
      %s167 = smul.u32 32, %s14
      %s168 = smul.u32 32, %s14
      %p169 = scmp.lt.s32.totalorder %s168, 63
      %s170 = scalar_select %p169, %s168, 63
      %s171 = smul.addr %s170, 4
      %s172 = scalar_lea.vmem %s3, %s171
      %s173 = smul.u32 32, %s14
      %v175 = vld [vmem:[%s166] sm:$0xff]
      %v176 = vld [vmem:[%s166 + $0x8] sm:$0xff]
      %v177 = vld [vmem:[%s166 + $0x10] sm:$0xff]
      %v178 = vld [vmem:[%s166 + $0x18] sm:$0xff]
      %v179 = vld [vmem:[%s166 + $0x20] sm:$0xff]
      %v180 = vld [vmem:[%s166 + $0x28] sm:$0xff]
      %v181 = vld [vmem:[%s166 + $0x30] sm:$0xff]
      %v182 = vld [vmem:[%s166 + $0x38] sm:$0xff]
      %v183 = vld [vmem:[%s166 + $0x40] sm:$0xff]
      %v184 = vld [vmem:[%s166 + $0x48] sm:$0xff]
      %v185 = vld [vmem:[%s166 + $0x50] sm:$0xff]
      %v186 = vld [vmem:[%s166 + $0x58] sm:$0xff]
      %v187 = vld [vmem:[%s166 + $0x60] sm:$0xff]
      %v188 = vld [vmem:[%s166 + $0x68] sm:$0xff]
      %v189 = vld [vmem:[%s166 + $0x70] sm:$0xff]
      %v190 = vld [vmem:[%s166 + $0x78] sm:$0xff]
      %v191 = vld [vmem:[%s166 + $0x80] sm:$0xff]
      %v192 = vld [vmem:[%s166 + $0x88] sm:$0xff]
      %v193 = vld [vmem:[%s166 + $0x90] sm:$0xff]
      %v194 = vld [vmem:[%s166 + $0x98] sm:$0xff]
      %v195 = vld [vmem:[%s166 + $0xa0] sm:$0xff]
      %v196 = vld [vmem:[%s166 + $0xa8] sm:$0xff]
      %v197 = vld [vmem:[%s166 + $0xb0] sm:$0xff]
      %v198 = vld [vmem:[%s166 + $0xb8] sm:$0xff]
      %v199 = vld [vmem:[%s166 + $0xc0] sm:$0xff]
      %v200 = vld [vmem:[%s166 + $0xc8] sm:$0xff]
      %v201 = vld [vmem:[%s166 + $0xd0] sm:$0xff]
      %v202 = vld [vmem:[%s166 + $0xd8] sm:$0xff]
      %v203 = vld [vmem:[%s166 + $0xe0] sm:$0xff]
      %v204 = vld [vmem:[%s166 + $0xe8] sm:$0xff]
      %v205 = vld [vmem:[%s166 + $0xf0] sm:$0xff]
      %v206 = vld [vmem:[%s166 + $0xf8] sm:$0xff]
      %v207 = vpack.c.bf16 %v176, %v175
      %v208 = vpack.c.bf16 %v178, %v177
      %v209 = vpack.c.bf16 %v180, %v179
      %v210 = vpack.c.bf16 %v182, %v181
      %v211 = vpack.c.bf16 %v184, %v183
      %v212 = vpack.c.bf16 %v186, %v185
      %v213 = vpack.c.bf16 %v188, %v187
      %v214 = vpack.c.bf16 %v190, %v189
      %v215 = vpack.c.bf16 %v192, %v191
      %v216 = vpack.c.bf16 %v194, %v193
      %v217 = vpack.c.bf16 %v196, %v195
      %v218 = vpack.c.bf16 %v198, %v197
      %v219 = vpack.c.bf16 %v200, %v199
      %v220 = vpack.c.bf16 %v202, %v201
      %v221 = vpack.c.bf16 %v204, %v203
      %v222 = vpack.c.bf16 %v206, %v205
      %v223 = vld [vmem:[%s1] sm:$0x3]
      %v224 = vld [vmem:[%s2] sm:$0x1]
      %v226 = vlaneseq
      %v227 = vshrl.u32 %v226, 7
      %v228 = vsub.s32 0, %v227
      %v229 = vrot.slane %v224, %v228
      %vm231 = vcmask 31744
      %v233 = vsel %vm231, %v207, 0
      %v236 = vsel %vm231, %v208, 0
      %v239 = vsel %vm231, %v209, 0
      %v242 = vsel %vm231, %v210, 0
      %v245 = vsel %vm231, %v211, 0
      %v248 = vsel %vm231, %v212, 0
      %v251 = vsel %vm231, %v213, 0
      %v254 = vsel %vm231, %v214, 0
      %v257 = vsel %vm231, %v215, 0
      %v260 = vsel %vm231, %v216, 0
      %v263 = vsel %vm231, %v217, 0
      %v266 = vsel %vm231, %v218, 0
      %v269 = vsel %vm231, %v219, 0
      %v272 = vsel %vm231, %v220, 0
      %v275 = vsel %vm231, %v221, 0
      %v278 = vsel %vm231, %v222, 0
      %vm280 = vcmask 1041408
      %v282 = vsel %vm280, %v223, 0
      %284 = vmatprep.subr.bf16.mxu0 0
      %285 = vmatpush1.bf16.msra.mxu0 %v282
      %286 = vmatprep.subr.bf16.mxu0 0
      %287 = vmatpush1.bf16.msra.mxu0 0
      %288 = vmatprep.subr.bf16.mxu0 0
      %289 = vmatpush1.bf16.msra.mxu0 0
      %290 = vmatprep.subr.bf16.mxu0 0
      %291 = vmatpush1.bf16.msra.mxu0 0
      %292 = vmatprep.subr.bf16.mxu0 0
      %293 = vmatpush1.bf16.msra.mxu0 0
      %294 = vmatprep.subr.bf16.mxu0 0
      %295 = vmatpush1.bf16.msra.mxu0 0
      %296 = vmatprep.subr.bf16.mxu0 0
      %297 = vmatpush1.bf16.msra.mxu0 0
      %298 = vmatprep.subr.bf16.mxu0 0
      %299 = vmatpush1.bf16.msra.mxu0 0
      %300 = vmatprep.subr.bf16.mxu0 0
      %301 = vmatpush1.bf16.msra.mxu0 0
      %302 = vmatprep.subr.bf16.mxu0 0
      %303 = vmatpush1.bf16.msra.mxu0 0
      %304 = vmatprep.subr.bf16.mxu0 0
      %305 = vmatpush1.bf16.msra.mxu0 0
      %306 = vmatprep.subr.bf16.mxu0 0
      %307 = vmatpush1.bf16.msra.mxu0 0
      %308 = vmatprep.subr.bf16.mxu0 0
      %309 = vmatpush1.bf16.msra.mxu0 0
      %310 = vmatprep.subr.bf16.mxu0 0
      %311 = vmatpush1.bf16.msra.mxu0 0
      %312 = vmatprep.subr.bf16.mxu0 0
      %313 = vmatpush1.bf16.msra.mxu0 0
      %314 = vmatprep.subr.bf16.mxu0 0
      %315 = vmatpush1.bf16.msra.mxu0 0
      %316 = vmatprep.mubr.bf16.mxu0 0
      %317 = vmatmul.mubr.bf16.gmra.mrb[0].mxu0 %v233
      %v318 = vpop.f32.mrb[0].mxu0
      %v319 = vadd.f32 %v229, %v318
      %v320 = vpop.f32.mrb[0].mxu0
      %v321 = vpop.f32.mrb[0].mxu0
      %v322 = vadd.f32 %v229, %v321
      %v323 = vpop.f32.mrb[0].mxu0
      %324 = vmatprep.mubr.bf16.mxu0 0
      %325 = vmatmul.mubr.bf16.gmra.mrb[0].mxu0 %v236
      %v326 = vpop.f32.mrb[0].mxu0
      %v327 = vadd.f32 %v229, %v326
      %v328 = vpop.f32.mrb[0].mxu0
      %v329 = vpop.f32.mrb[0].mxu0
      %v330 = vadd.f32 %v229, %v329
      %v331 = vpop.f32.mrb[0].mxu0
      %332 = vmatprep.mubr.bf16.mxu0 0
      %333 = vmatmul.mubr.bf16.gmra.mrb[0].mxu0 %v239
      %v334 = vpop.f32.mrb[0].mxu0
      %v335 = vadd.f32 %v229, %v334
      %v336 = vpop.f32.mrb[0].mxu0
      %v337 = vpop.f32.mrb[0].mxu0
      %v338 = vadd.f32 %v229, %v337
      %v339 = vpop.f32.mrb[0].mxu0
      %340 = vmatprep.mubr.bf16.mxu0 0
      %341 = vmatmul.mubr.bf16.gmra.mrb[0].mxu0 %v242
      %v342 = vpop.f32.mrb[0].mxu0
      %v343 = vadd.f32 %v229, %v342
      %v344 = vpop.f32.mrb[0].mxu0
      %v345 = vpop.f32.mrb[0].mxu0
      %v346 = vadd.f32 %v229, %v345
      %v347 = vpop.f32.mrb[0].mxu0
      %348 = vmatprep.mubr.bf16.mxu0 0
      %349 = vmatmul.mubr.bf16.gmra.mrb[0].mxu0 %v245
      %v350 = vpop.f32.mrb[0].mxu0
      %v351 = vadd.f32 %v229, %v350
      %v352 = vpop.f32.mrb[0].mxu0
      %v353 = vpop.f32.mrb[0].mxu0
      %v354 = vadd.f32 %v229, %v353
      %v355 = vpop.f32.mrb[0].mxu0
      %356 = vmatprep.mubr.bf16.mxu0 0
      %357 = vmatmul.mubr.bf16.gmra.mrb[0].mxu0 %v248
      %v358 = vpop.f32.mrb[0].mxu0
      %v359 = vadd.f32 %v229, %v358
      %v360 = vpop.f32.mrb[0].mxu0
      %v361 = vpop.f32.mrb[0].mxu0
      %v362 = vadd.f32 %v229, %v361
      %v363 = vpop.f32.mrb[0].mxu0
      %364 = vmatprep.mubr.bf16.mxu0 0
      %365 = vmatmul.mubr.bf16.gmra.mrb[0].mxu0 %v251
      %v366 = vpop.f32.mrb[0].mxu0
      %v367 = vadd.f32 %v229, %v366
      %v368 = vpop.f32.mrb[0].mxu0
      %v369 = vpop.f32.mrb[0].mxu0
      %v370 = vadd.f32 %v229, %v369
      %v371 = vpop.f32.mrb[0].mxu0
      %372 = vmatprep.mubr.bf16.mxu0 0
      %373 = vmatmul.mubr.bf16.gmra.mrb[0].mxu0 %v254
      %v374 = vpop.f32.mrb[0].mxu0
      %v375 = vadd.f32 %v229, %v374
      %v376 = vpop.f32.mrb[0].mxu0
      %v377 = vpop.f32.mrb[0].mxu0
      %v378 = vadd.f32 %v229, %v377
      %v379 = vpop.f32.mrb[0].mxu0
      %380 = vmatprep.mubr.bf16.mxu0 0
      %381 = vmatmul.mubr.bf16.gmra.mrb[0].mxu0 %v257
      %v382 = vpop.f32.mrb[0].mxu0
      %v383 = vadd.f32 %v229, %v382
      %v384 = vpop.f32.mrb[0].mxu0
      %v385 = vpop.f32.mrb[0].mxu0
      %v386 = vadd.f32 %v229, %v385
      %v387 = vpop.f32.mrb[0].mxu0
      %388 = vmatprep.mubr.bf16.mxu0 0
      %389 = vmatmul.mubr.bf16.gmra.mrb[0].mxu0 %v260
      %v390 = vpop.f32.mrb[0].mxu0
      %v391 = vadd.f32 %v229, %v390
      %v392 = vpop.f32.mrb[0].mxu0
      %v393 = vpop.f32.mrb[0].mxu0
      %v394 = vadd.f32 %v229, %v393
      %v395 = vpop.f32.mrb[0].mxu0
      %396 = vmatprep.mubr.bf16.mxu0 0
      %397 = vmatmul.mubr.bf16.gmra.mrb[0].mxu0 %v263
      %v398 = vpop.f32.mrb[0].mxu0
      %v399 = vadd.f32 %v229, %v398
      %v400 = vpop.f32.mrb[0].mxu0
      %v401 = vpop.f32.mrb[0].mxu0
      %v402 = vadd.f32 %v229, %v401
      %v403 = vpop.f32.mrb[0].mxu0
      %404 = vmatprep.mubr.bf16.mxu0 0
      %405 = vmatmul.mubr.bf16.gmra.mrb[0].mxu0 %v266
      %v406 = vpop.f32.mrb[0].mxu0
      %v407 = vadd.f32 %v229, %v406
      %v408 = vpop.f32.mrb[0].mxu0
      %v409 = vpop.f32.mrb[0].mxu0
      %v410 = vadd.f32 %v229, %v409
      %v411 = vpop.f32.mrb[0].mxu0
      %412 = vmatprep.mubr.bf16.mxu0 0
      %413 = vmatmul.mubr.bf16.gmra.mrb[0].mxu0 %v269
      %v414 = vpop.f32.mrb[0].mxu0
      %v415 = vadd.f32 %v229, %v414
      %v416 = vpop.f32.mrb[0].mxu0
      %v417 = vpop.f32.mrb[0].mxu0
      %v418 = vadd.f32 %v229, %v417
      %v419 = vpop.f32.mrb[0].mxu0
      %420 = vmatprep.mubr.bf16.mxu0 0
      %421 = vmatmul.mubr.bf16.gmra.mrb[0].mxu0 %v272
      %v422 = vpop.f32.mrb[0].mxu0
      %v423 = vadd.f32 %v229, %v422
      %v424 = vpop.f32.mrb[0].mxu0
      %v425 = vpop.f32.mrb[0].mxu0
      %v426 = vadd.f32 %v229, %v425
      %v427 = vpop.f32.mrb[0].mxu0
      %428 = vmatprep.mubr.bf16.mxu0 0
      %429 = vmatmul.mubr.bf16.gmra.mrb[0].mxu0 %v275
      %v430 = vpop.f32.mrb[0].mxu0
      %v431 = vadd.f32 %v229, %v430
      %v432 = vpop.f32.mrb[0].mxu0
      %v433 = vpop.f32.mrb[0].mxu0
      %v434 = vadd.f32 %v229, %v433
      %v435 = vpop.f32.mrb[0].mxu0
      %436 = vmatprep.mubr.bf16.mxu0 0
      %437 = vmatmul.mubr.bf16.gmra.mrb[0].mxu0 %v278
      %v438 = vpop.f32.mrb[0].mxu0
      %v439 = vadd.f32 %v229, %v438
      %v440 = vpop.f32.mrb[0].mxu0
      %v441 = vpop.f32.mrb[0].mxu0
      %v442 = vadd.f32 %v229, %v441
      %v443 = vpop.f32.mrb[0].mxu0
      %444 = vdwg.mxu0
      %v445 = vsub.f32 0.0, %v319
      %v446 = vsub.f32 0.0, %v322
      %v447 = vsub.f32 0.0, %v327
      %v448 = vsub.f32 0.0, %v330
      %v449 = vsub.f32 0.0, %v335
      %v450 = vsub.f32 0.0, %v338
      %v451 = vsub.f32 0.0, %v343
      %v452 = vsub.f32 0.0, %v346
      %v453 = vsub.f32 0.0, %v351
      %v454 = vsub.f32 0.0, %v354
      %v455 = vsub.f32 0.0, %v359
      %v456 = vsub.f32 0.0, %v362
      %v457 = vsub.f32 0.0, %v367
      %v458 = vsub.f32 0.0, %v370
      %v459 = vsub.f32 0.0, %v375
      %v460 = vsub.f32 0.0, %v378
      %v461 = vsub.f32 0.0, %v383
      %v462 = vsub.f32 0.0, %v386
      %v463 = vsub.f32 0.0, %v391
      %v464 = vsub.f32 0.0, %v394
      %v465 = vsub.f32 0.0, %v399
      %v466 = vsub.f32 0.0, %v402
      %v467 = vsub.f32 0.0, %v407
      %v468 = vsub.f32 0.0, %v410
      %v469 = vsub.f32 0.0, %v415
      %v470 = vsub.f32 0.0, %v418
      %v471 = vsub.f32 0.0, %v423
      %v472 = vsub.f32 0.0, %v426
      %v473 = vsub.f32 0.0, %v431
      %v474 = vsub.f32 0.0, %v434
      %v475 = vsub.f32 0.0, %v439
      %v476 = vsub.f32 0.0, %v442
      %v477 = vmul.f32 %v445, 1.442695
      %v478 = vpow.pop %v477
      %v479 = vmul.f32 %v446, 1.442695
      %v480 = vpow.pop %v479
      %v481 = vmul.f32 %v447, 1.442695
      %v482 = vpow.pop %v481
      %v483 = vmul.f32 %v448, 1.442695
      %v484 = vpow.pop %v483
      %v485 = vmul.f32 %v449, 1.442695
      %v486 = vpow.pop %v485
      %v487 = vmul.f32 %v450, 1.442695
      %v488 = vpow.pop %v487
      %v489 = vmul.f32 %v451, 1.442695
      %v490 = vpow.pop %v489
      %v491 = vmul.f32 %v452, 1.442695
      %v492 = vpow.pop %v491
      %v493 = vmul.f32 %v453, 1.442695
      %v494 = vpow.pop %v493
      %v495 = vmul.f32 %v454, 1.442695
      %v496 = vpow.pop %v495
      %v497 = vmul.f32 %v455, 1.442695
      %v498 = vpow.pop %v497
      %v499 = vmul.f32 %v456, 1.442695
      %v500 = vpow.pop %v499
      %v501 = vmul.f32 %v457, 1.442695
      %v502 = vpow.pop %v501
      %v503 = vmul.f32 %v458, 1.442695
      %v504 = vpow.pop %v503
      %v505 = vmul.f32 %v459, 1.442695
      %v506 = vpow.pop %v505
      %v507 = vmul.f32 %v460, 1.442695
      %v508 = vpow.pop %v507
      %v509 = vmul.f32 %v461, 1.442695
      %v510 = vpow.pop %v509
      %v511 = vmul.f32 %v462, 1.442695
      %v512 = vpow.pop %v511
      %v513 = vmul.f32 %v463, 1.442695
      %v514 = vpow.pop %v513
      %v515 = vmul.f32 %v464, 1.442695
      %v516 = vpow.pop %v515
      %v517 = vmul.f32 %v465, 1.442695
      %v518 = vpow.pop %v517
      %v519 = vmul.f32 %v466, 1.442695
      %v520 = vpow.pop %v519
      %v521 = vmul.f32 %v467, 1.442695
      %v522 = vpow.pop %v521
      %v523 = vmul.f32 %v468, 1.442695
      %v524 = vpow.pop %v523
      %v525 = vmul.f32 %v469, 1.442695
      %v526 = vpow.pop %v525
      %v527 = vmul.f32 %v470, 1.442695
      %v528 = vpow.pop %v527
      %v529 = vmul.f32 %v471, 1.442695
      %v530 = vpow.pop %v529
      %v531 = vmul.f32 %v472, 1.442695
      %v532 = vpow.pop %v531
      %v533 = vmul.f32 %v473, 1.442695
      %v534 = vpow.pop %v533
      %v535 = vmul.f32 %v474, 1.442695
      %v536 = vpow.pop %v535
      %v537 = vmul.f32 %v475, 1.442695
      %v538 = vpow.pop %v537
      %v539 = vmul.f32 %v476, 1.442695
      %v540 = vpow.pop %v539
      %v541 = vadd.f32 %v478, 1.0
      %v542 = vadd.f32 %v480, 1.0
      %v543 = vadd.f32 %v482, 1.0
      %v544 = vadd.f32 %v484, 1.0
      %v545 = vadd.f32 %v486, 1.0
      %v546 = vadd.f32 %v488, 1.0
      %v547 = vadd.f32 %v490, 1.0
      %v548 = vadd.f32 %v492, 1.0
      %v549 = vadd.f32 %v494, 1.0
      %v550 = vadd.f32 %v496, 1.0
      %v551 = vadd.f32 %v498, 1.0
      %v552 = vadd.f32 %v500, 1.0
      %v553 = vadd.f32 %v502, 1.0
      %v554 = vadd.f32 %v504, 1.0
      %v555 = vadd.f32 %v506, 1.0
      %v556 = vadd.f32 %v508, 1.0
      %v557 = vadd.f32 %v510, 1.0
      %v558 = vadd.f32 %v512, 1.0
      %v559 = vadd.f32 %v514, 1.0
      %v560 = vadd.f32 %v516, 1.0
      %v561 = vadd.f32 %v518, 1.0
      %v562 = vadd.f32 %v520, 1.0
      %v563 = vadd.f32 %v522, 1.0
      %v564 = vadd.f32 %v524, 1.0
      %v565 = vadd.f32 %v526, 1.0
      %v566 = vadd.f32 %v528, 1.0
      %v567 = vadd.f32 %v530, 1.0
      %v568 = vadd.f32 %v532, 1.0
      %v569 = vadd.f32 %v534, 1.0
      %v570 = vadd.f32 %v536, 1.0
      %v571 = vadd.f32 %v538, 1.0
      %v572 = vadd.f32 %v540, 1.0
      %v573 = vrcp.pop %v541
      %v574 = vmul.f32 1.0, %v573
      %v575 = vrcp.pop %v542
      %v576 = vmul.f32 1.0, %v575
      %v577 = vrcp.pop %v543
      %v578 = vmul.f32 1.0, %v577
      %v579 = vrcp.pop %v544
      %v580 = vmul.f32 1.0, %v579
      %v581 = vrcp.pop %v545
      %v582 = vmul.f32 1.0, %v581
      %v583 = vrcp.pop %v546
      %v584 = vmul.f32 1.0, %v583
      %v585 = vrcp.pop %v547
      %v586 = vmul.f32 1.0, %v585
      %v587 = vrcp.pop %v548
      %v588 = vmul.f32 1.0, %v587
      %v589 = vrcp.pop %v549
      %v590 = vmul.f32 1.0, %v589
      %v591 = vrcp.pop %v550
      %v592 = vmul.f32 1.0, %v591
      %v593 = vrcp.pop %v551
      %v594 = vmul.f32 1.0, %v593
      %v595 = vrcp.pop %v552
      %v596 = vmul.f32 1.0, %v595
      %v597 = vrcp.pop %v553
      %v598 = vmul.f32 1.0, %v597
      %v599 = vrcp.pop %v554
      %v600 = vmul.f32 1.0, %v599
      %v601 = vrcp.pop %v555
      %v602 = vmul.f32 1.0, %v601
      %v603 = vrcp.pop %v556
      %v604 = vmul.f32 1.0, %v603
      %v605 = vrcp.pop %v557
      %v606 = vmul.f32 1.0, %v605
      %v607 = vrcp.pop %v558
      %v608 = vmul.f32 1.0, %v607
      %v609 = vrcp.pop %v559
      %v610 = vmul.f32 1.0, %v609
      %v611 = vrcp.pop %v560
      %v612 = vmul.f32 1.0, %v611
      %v613 = vrcp.pop %v561
      %v614 = vmul.f32 1.0, %v613
      %v615 = vrcp.pop %v562
      %v616 = vmul.f32 1.0, %v615
      %v617 = vrcp.pop %v563
      %v618 = vmul.f32 1.0, %v617
      %v619 = vrcp.pop %v564
      %v620 = vmul.f32 1.0, %v619
      %v621 = vrcp.pop %v565
      %v622 = vmul.f32 1.0, %v621
      %v623 = vrcp.pop %v566
      %v624 = vmul.f32 1.0, %v623
      %v625 = vrcp.pop %v567
      %v626 = vmul.f32 1.0, %v625
      %v627 = vrcp.pop %v568
      %v628 = vmul.f32 1.0, %v627
      %v629 = vrcp.pop %v569
      %v630 = vmul.f32 1.0, %v629
      %v631 = vrcp.pop %v570
      %v632 = vmul.f32 1.0, %v631
      %v633 = vrcp.pop %v571
      %v634 = vmul.f32 1.0, %v633
      %v635 = vrcp.pop %v572
      %v636 = vmul.f32 1.0, %v635
      %v637 = vmul.f32 %v319, %v574
      %v638 = vmul.f32 %v322, %v576
      %v639 = vmul.f32 %v327, %v578
      %v640 = vmul.f32 %v330, %v580
      %v641 = vmul.f32 %v335, %v582
      %v642 = vmul.f32 %v338, %v584
      %v643 = vmul.f32 %v343, %v586
      %v644 = vmul.f32 %v346, %v588
      %v645 = vmul.f32 %v351, %v590
      %v646 = vmul.f32 %v354, %v592
      %v647 = vmul.f32 %v359, %v594
      %v648 = vmul.f32 %v362, %v596
      %v649 = vmul.f32 %v367, %v598
      %v650 = vmul.f32 %v370, %v600
      %v651 = vmul.f32 %v375, %v602
      %v652 = vmul.f32 %v378, %v604
      %v653 = vmul.f32 %v383, %v606
      %v654 = vmul.f32 %v386, %v608
      %v655 = vmul.f32 %v391, %v610
      %v656 = vmul.f32 %v394, %v612
      %v657 = vmul.f32 %v399, %v614
      %v658 = vmul.f32 %v402, %v616
      %v659 = vmul.f32 %v407, %v618
      %v660 = vmul.f32 %v410, %v620
      %v661 = vmul.f32 %v415, %v622
      %v662 = vmul.f32 %v418, %v624
      %v663 = vmul.f32 %v423, %v626
      %v664 = vmul.f32 %v426, %v628
      %v665 = vmul.f32 %v431, %v630
      %v666 = vmul.f32 %v434, %v632
      %v667 = vmul.f32 %v439, %v634
      %v668 = vmul.f32 %v442, %v636
      %v669 = vpack.c.bf16 %v638, %v637
      %v670 = vpack.c.bf16 %v640, %v639
      %v671 = vpack.c.bf16 %v642, %v641
      %v672 = vpack.c.bf16 %v644, %v643
      %v673 = vpack.c.bf16 %v646, %v645
      %v674 = vpack.c.bf16 %v648, %v647
      %v675 = vpack.c.bf16 %v650, %v649
      %v676 = vpack.c.bf16 %v652, %v651
      %v677 = vpack.c.bf16 %v654, %v653
      %v678 = vpack.c.bf16 %v656, %v655
      %v679 = vpack.c.bf16 %v658, %v657
      %v680 = vpack.c.bf16 %v660, %v659
      %v681 = vpack.c.bf16 %v662, %v661
      %v682 = vpack.c.bf16 %v664, %v663
      %v683 = vpack.c.bf16 %v666, %v665
      %v684 = vpack.c.bf16 %v668, %v667
      %v701 = vunpack.c.l.b16 %v669
      %v702 = vunpack.c.h.b16 %v669
      %v703 = vunpack.c.l.b16 %v670
      %v704 = vunpack.c.h.b16 %v670
      %v705 = vunpack.c.l.b16 %v671
      %v706 = vunpack.c.h.b16 %v671
      %v707 = vunpack.c.l.b16 %v672
      %v708 = vunpack.c.h.b16 %v672
      %v709 = vunpack.c.l.b16 %v673
      %v710 = vunpack.c.h.b16 %v673
      %v711 = vunpack.c.l.b16 %v674
      %v712 = vunpack.c.h.b16 %v674
      %v713 = vunpack.c.l.b16 %v675
      %v714 = vunpack.c.h.b16 %v675
      %v715 = vunpack.c.l.b16 %v676
      %v716 = vunpack.c.h.b16 %v676
      %v717 = vunpack.c.l.b16 %v677
      %v718 = vunpack.c.h.b16 %v677
      %v719 = vunpack.c.l.b16 %v678
      %v720 = vunpack.c.h.b16 %v678
      %v721 = vunpack.c.l.b16 %v679
      %v722 = vunpack.c.h.b16 %v679
      %v723 = vunpack.c.l.b16 %v680
      %v724 = vunpack.c.h.b16 %v680
      %v725 = vunpack.c.l.b16 %v681
      %v726 = vunpack.c.h.b16 %v681
      %v727 = vunpack.c.l.b16 %v682
      %v728 = vunpack.c.h.b16 %v682
      %v729 = vunpack.c.l.b16 %v683
      %v730 = vunpack.c.h.b16 %v683
      %v731 = vunpack.c.l.b16 %v684
      %v732 = vunpack.c.h.b16 %v684
      %v733 = vpack.c.b16 %v701, %v701
      %v734 = vpack.c.b16 %v702, %v702
      %v735 = vpack.c.b16 %v703, %v703
      %v736 = vpack.c.b16 %v704, %v704
      %v737 = vpack.c.b16 %v705, %v705
      %v738 = vpack.c.b16 %v706, %v706
      %v739 = vpack.c.b16 %v707, %v707
      %v740 = vpack.c.b16 %v708, %v708
      %v741 = vpack.c.b16 %v709, %v709
      %v742 = vpack.c.b16 %v710, %v710
      %v743 = vpack.c.b16 %v711, %v711
      %v744 = vpack.c.b16 %v712, %v712
      %v745 = vpack.c.b16 %v713, %v713
      %v746 = vpack.c.b16 %v714, %v714
      %v747 = vpack.c.b16 %v715, %v715
      %v748 = vpack.c.b16 %v716, %v716
      %v749 = vpack.c.b16 %v717, %v717
      %v750 = vpack.c.b16 %v718, %v718
      %v751 = vpack.c.b16 %v719, %v719
      %v752 = vpack.c.b16 %v720, %v720
      %v753 = vpack.c.b16 %v721, %v721
      %v754 = vpack.c.b16 %v722, %v722
      %v755 = vpack.c.b16 %v723, %v723
      %v756 = vpack.c.b16 %v724, %v724
      %v757 = vpack.c.b16 %v725, %v725
      %v758 = vpack.c.b16 %v726, %v726
      %v759 = vpack.c.b16 %v727, %v727
      %v760 = vpack.c.b16 %v728, %v728
      %v761 = vpack.c.b16 %v729, %v729
      %v762 = vpack.c.b16 %v730, %v730
      %v763 = vpack.c.b16 %v731, %v731
      %v764 = vpack.c.b16 %v732, %v732
      %vm797 = vcmask 60416
      %798 = vst.msk [vmem:[%s172] sm:$0xf] %vm797, %v733
      %799 = vst.msk [vmem:[%s172 + $0x4] sm:$0xf] %vm797, %v734
      %800 = vst.msk [vmem:[%s172 + $0x8] sm:$0xf] %vm797, %v735
      %801 = vst.msk [vmem:[%s172 + $0xc] sm:$0xf] %vm797, %v736
      %802 = vst.msk [vmem:[%s172 + $0x10] sm:$0xf] %vm797, %v737
      %803 = vst.msk [vmem:[%s172 + $0x14] sm:$0xf] %vm797, %v738
      %804 = vst.msk [vmem:[%s172 + $0x18] sm:$0xf] %vm797, %v739
      %805 = vst.msk [vmem:[%s172 + $0x1c] sm:$0xf] %vm797, %v740
      %806 = vst.msk [vmem:[%s172 + $0x20] sm:$0xf] %vm797, %v741
      %807 = vst.msk [vmem:[%s172 + $0x24] sm:$0xf] %vm797, %v742
      %808 = vst.msk [vmem:[%s172 + $0x28] sm:$0xf] %vm797, %v743
      %809 = vst.msk [vmem:[%s172 + $0x2c] sm:$0xf] %vm797, %v744
      %810 = vst.msk [vmem:[%s172 + $0x30] sm:$0xf] %vm797, %v745
      %811 = vst.msk [vmem:[%s172 + $0x34] sm:$0xf] %vm797, %v746
      %812 = vst.msk [vmem:[%s172 + $0x38] sm:$0xf] %vm797, %v747
      %813 = vst.msk [vmem:[%s172 + $0x3c] sm:$0xf] %vm797, %v748
      %814 = vst.msk [vmem:[%s172 + $0x40] sm:$0xf] %vm797, %v749
      %815 = vst.msk [vmem:[%s172 + $0x44] sm:$0xf] %vm797, %v750
      %816 = vst.msk [vmem:[%s172 + $0x48] sm:$0xf] %vm797, %v751
      %817 = vst.msk [vmem:[%s172 + $0x4c] sm:$0xf] %vm797, %v752
      %818 = vst.msk [vmem:[%s172 + $0x50] sm:$0xf] %vm797, %v753
      %819 = vst.msk [vmem:[%s172 + $0x54] sm:$0xf] %vm797, %v754
      %820 = vst.msk [vmem:[%s172 + $0x58] sm:$0xf] %vm797, %v755
      %821 = vst.msk [vmem:[%s172 + $0x5c] sm:$0xf] %vm797, %v756
      %822 = vst.msk [vmem:[%s172 + $0x60] sm:$0xf] %vm797, %v757
      %823 = vst.msk [vmem:[%s172 + $0x64] sm:$0xf] %vm797, %v758
      %824 = vst.msk [vmem:[%s172 + $0x68] sm:$0xf] %vm797, %v759
      %825 = vst.msk [vmem:[%s172 + $0x6c] sm:$0xf] %vm797, %v760
      %826 = vst.msk [vmem:[%s172 + $0x70] sm:$0xf] %vm797, %v761
      %827 = vst.msk [vmem:[%s172 + $0x74] sm:$0xf] %vm797, %v762
      %828 = vst.msk [vmem:[%s172 + $0x78] sm:$0xf] %vm797, %v763
      %829 = vst.msk [vmem:[%s172 + $0x7c] sm:$0xf] %vm797, %v764
      %s830 = smul.u32 32, %s14
      %p831 = scmp.lt.s32.totalorder %s830, 63
      %s832 = scalar_select %p831, %s830, 63
      %s833 = smul.addr %s832, 4
      %s834 = scalar_lea.vmem %s3, %s833
      // Predicated region
      $region33: #{c2f_v2_forward.3} parent=31 // pred_check
        %p835 = pneg %p100
      $region34: #{c2f_v2_forward.3} parent=31 // pred_check_branch
        %837 = sbr.rel (%p835) target = $region36
      $region35: #{c2f_v2_forward.3} parent=31 // pred_region
        %s838 = smul.u32 32, %s14
      $region36: #{c2f_v2_forward.3} parent=31 // pred_fallthru
        _
    $region32: #{c2f_v2_forward.3} parent=5 // pred_fallthru
      _
    %p839 = scmp.le.s32.totalorder 2, %s9
    // Predicated region
    $region37: #{c2f_v2_forward.3} parent=5 // pred_check
      %p840 = pneg %p839
    $region38: #{c2f_v2_forward.3} parent=5 // pred_check_branch
      %842 = sbr.rel (%p840) target = $region40
    $region39: #{c2f_v2_forward.3} parent=5 // pred_region
      %s843 = ssub.s32 %s9, 2
      // Predicated region
      $region41: #{c2f_v2_forward.3} parent=39 // pred_check
        %p844 = pneg %p106
      $region42: #{c2f_v2_forward.3} parent=39 // pred_check_branch
        %846 = sbr.rel (%p844) target = $region44
      $region43: #{c2f_v2_forward.3} parent=39 // pred_region
        %s847 = smul.u32 32, %s15
        %p848 = scmp.lt.s32.totalorder %s847, 63
        %s849 = scalar_select %p848, %s847, 63
        %s850 = smul.addr %s849, 4
        %s851 = scalar_lea.vmem %s3, %s850
      $region44: #{c2f_v2_forward.3} parent=39 // pred_fallthru
        _
    $region40: #{c2f_v2_forward.3} parent=5 // pred_fallthru
      _
  $region6: #{c2f_v2_forward.3} parent=0 // loop_footer
    %s13 = sadd.s32 1, %s9
  $region7: #{c2f_v2_forward.3} parent=0 // loop_footer_branch
    %8 = sbr.rel target = $region3
  $region8: #{c2f_v2_forward.3} parent=0 // loop_exit
    _

// kernel: c2f_v2_forward.4
$region0: #{c2f_v2_forward.4}
  #allocation0 [shape = 'u32[]', space=smem, size = 0x4, offset = 0x4, fixed_abs, tag = 'smem constant byte address 0x4 - core index']
  #allocation1 [shape = 'u32[144,128]{1,0:T(1,128)}', space=vmem, size = 0x12000, scoped, tag = 'internal scratch']
  #allocation2 [shape = 'f32[18,18,4]{2,1,0:T(8,128)}', space=vmem, size = 0x36000, scoped, tag = 'scratch operand']
  #allocation3 [shape = 'f32[18,18,4]{2,1,0:T(8,128)}', space=vmem, size = 0x36000, scoped, tag = 'scratch operand']
  %s0 = inlined_call_operand.vmem [shape: bf16[2,16,16,8], index: 0, kind: input, shape index: {}]
  %s1 = inlined_call_operand.vmem [shape: bf16[9,4,4], index: 1, kind: input, shape index: {}]
  %s2 = inlined_call_operand.vmem [shape: f32[1,4], index: 2, kind: input, shape index: {}]
  %s3 = inlined_call_operand.vmem [shape: bf16[9,4,4], index: 3, kind: input, shape index: {}]
  %s4 = inlined_call_operand.vmem [shape: f32[1,4], index: 4, kind: input, shape index: {}]
  %s5 = inlined_call_operand.vmem [shape: bf16[2,16,16,4], index: 5, kind: output, shape index: {}]
  %s6 = sld [smem:[#allocation0]]
  $region53: #{c2f_v2_forward.4} parent=0
    _
  %s8 = ssub.s32 1, %s6
  %s9 = scalar_select 0, %s8, %s6
  loop: start=0, step=1, limit=4
  $region2: #{c2f_v2_forward.4} parent=0 // loop_pre_header
    _
  $region3: #{c2f_v2_forward.4} parent=0 // loop_header
    %s11 = sphi 0, %s15
    %p12 = scmp.ge.s32.totalorder %s11, 4
    %s21 = sphi 0, %s23
    %s24 = sphi 0, %s21
    %s25 = sphi 0, %s24
    %s41 = sphi 0, %s25
    %s45 = sphi 0, %s45
    %s47 = sphi 0, %s45
    %s48 = sphi 0, %s47
    %s62 = sphi 0, %s48
    %s66 = sphi 0, %s66
    %s68 = sphi 0, %s66
    %s69 = sphi 0, %s68
    %s83 = sphi 0, %s69
    %s87 = sphi 0, %s87
    %s89 = sphi 0, %s87
    %s90 = sphi 0, %s89
    %s104 = sphi 0, %s90
    %s108 = sphi 0, %s108
    %s110 = sphi 0, %s108
    %s111 = sphi 0, %s110
    %s125 = sphi 0, %s111
    %s131 = sphi 0, %s133
    %s134 = sphi 0, %s131
    %s135 = sphi 0, %s134
    %s151 = sphi 0, %s135
  $region4: #{c2f_v2_forward.4} parent=0 // loop_header_branch
    %14 = sbr.rel (%p12) target = $region8
  $region5: #{c2f_v2_forward.4} parent=0 // loop_body
    %s16 = ssub.s32 %s11, 1
    %s17 = ssub.s32 %s11, 2
    %s18 = sadd.s32 %s11, 1
    %s19 = ssub.s32 %s11, %s18
    %p20 = scmp.eq.s32.totalorder %s19, 0
    %s22 = sadd.s32 %s21, 1
    %s23 = scalar_select %p20, %s21, %s22
    %p26 = pneg %p20
    %p27 = scmp.eq.s32.totalorder %s11, 1
    %p28 = por %p26, %p27
    %p29 = scmp.ne.s32.totalorder %s21, %s24
    %p30 = scmp.eq.s32.totalorder %s11, 0
    %p31 = por %p29, %p30
    %p32 = scmp.ne.s32.totalorder %s21, %s24
    %p33 = scmp.eq.s32.totalorder %s16, 1
    %p34 = por %p32, %p33
    %p35 = scmp.ne.s32.totalorder %s24, %s25
    %p36 = scmp.eq.s32.totalorder %s16, 0
    %p37 = por %p35, %p36
    %p38 = scmp.ne.s32.totalorder %s24, %s25
    %p39 = scmp.eq.s32.totalorder %s17, 1
    %p40 = por %p38, %p39
    %p42 = scmp.ne.s32.totalorder %s25, %s41
    %p43 = scmp.eq.s32.totalorder %s17, 0
    %p44 = por %p42, %p43
    %s46 = sadd.s32 %s45, 1
    %p49 = scmp.eq.s32.totalorder %s11, 1
    %p50 = scmp.ne.s32.totalorder %s45, %s47
    %p51 = scmp.eq.s32.totalorder %s11, 0
    %p52 = por %p50, %p51
    %p53 = scmp.ne.s32.totalorder %s45, %s47
    %p54 = scmp.eq.s32.totalorder %s16, 1
    %p55 = por %p53, %p54
    %p56 = scmp.ne.s32.totalorder %s47, %s48
    %p57 = scmp.eq.s32.totalorder %s16, 0
    %p58 = por %p56, %p57
    %p59 = scmp.ne.s32.totalorder %s47, %s48
    %p60 = scmp.eq.s32.totalorder %s17, 1
    %p61 = por %p59, %p60
    %p63 = scmp.ne.s32.totalorder %s48, %s62
    %p64 = scmp.eq.s32.totalorder %s17, 0
    %p65 = por %p63, %p64
    %s67 = sadd.s32 %s66, 1
    %p70 = scmp.eq.s32.totalorder %s11, 1
    %p71 = scmp.ne.s32.totalorder %s66, %s68
    %p72 = scmp.eq.s32.totalorder %s11, 0
    %p73 = por %p71, %p72
    %p74 = scmp.ne.s32.totalorder %s66, %s68
    %p75 = scmp.eq.s32.totalorder %s16, 1
    %p76 = por %p74, %p75
    %p77 = scmp.ne.s32.totalorder %s68, %s69
    %p78 = scmp.eq.s32.totalorder %s16, 0
    %p79 = por %p77, %p78
    %p80 = scmp.ne.s32.totalorder %s68, %s69
    %p81 = scmp.eq.s32.totalorder %s17, 1
    %p82 = por %p80, %p81
    %p84 = scmp.ne.s32.totalorder %s69, %s83
    %p85 = scmp.eq.s32.totalorder %s17, 0
    %p86 = por %p84, %p85
    %s88 = sadd.s32 %s87, 1
    %p91 = scmp.eq.s32.totalorder %s11, 1
    %p92 = scmp.ne.s32.totalorder %s87, %s89
    %p93 = scmp.eq.s32.totalorder %s11, 0
    %p94 = por %p92, %p93
    %p95 = scmp.ne.s32.totalorder %s87, %s89
    %p96 = scmp.eq.s32.totalorder %s16, 1
    %p97 = por %p95, %p96
    %p98 = scmp.ne.s32.totalorder %s89, %s90
    %p99 = scmp.eq.s32.totalorder %s16, 0
    %p100 = por %p98, %p99
    %p101 = scmp.ne.s32.totalorder %s89, %s90
    %p102 = scmp.eq.s32.totalorder %s17, 1
    %p103 = por %p101, %p102
    %p105 = scmp.ne.s32.totalorder %s90, %s104
    %p106 = scmp.eq.s32.totalorder %s17, 0
    %p107 = por %p105, %p106
    %s109 = sadd.s32 %s108, 1
    %p112 = scmp.eq.s32.totalorder %s11, 1
    %p113 = scmp.ne.s32.totalorder %s108, %s110
    %p114 = scmp.eq.s32.totalorder %s11, 0
    %p115 = por %p113, %p114
    %p116 = scmp.ne.s32.totalorder %s108, %s110
    %p117 = scmp.eq.s32.totalorder %s16, 1
    %p118 = por %p116, %p117
    %p119 = scmp.ne.s32.totalorder %s110, %s111
    %p120 = scmp.eq.s32.totalorder %s16, 0
    %p121 = por %p119, %p120
    %p122 = scmp.ne.s32.totalorder %s110, %s111
    %p123 = scmp.eq.s32.totalorder %s17, 1
    %p124 = por %p122, %p123
    %p126 = scmp.ne.s32.totalorder %s111, %s125
    %p127 = scmp.eq.s32.totalorder %s17, 0
    %p128 = por %p126, %p127
    %s129 = ssub.s32 %s11, %s18
    %p130 = scmp.eq.s32.totalorder %s129, 0
    %s132 = sadd.s32 %s131, 1
    %s133 = scalar_select %p130, %s131, %s132
    %p136 = pneg %p130
    %p137 = scmp.eq.s32.totalorder %s11, 1
    %p138 = por %p136, %p137
    %p139 = scmp.ne.s32.totalorder %s131, %s134
    %p140 = scmp.eq.s32.totalorder %s11, 0
    %p141 = por %p139, %p140
    %p142 = scmp.ne.s32.totalorder %s131, %s134
    %p143 = scmp.eq.s32.totalorder %s16, 1
    %p144 = por %p142, %p143
    %p145 = scmp.ne.s32.totalorder %s134, %s135
    %p146 = scmp.eq.s32.totalorder %s16, 0
    %p147 = por %p145, %p146
    %p148 = scmp.ne.s32.totalorder %s134, %s135
    %p149 = scmp.eq.s32.totalorder %s17, 1
    %p150 = por %p148, %p149
    %p152 = scmp.ne.s32.totalorder %s135, %s151
    %p153 = scmp.eq.s32.totalorder %s17, 0
    %p154 = por %p152, %p153
    %p155 = scmp.le.s32.totalorder 1, %s11
    %p156 = scmp.lt.s32.totalorder %s11, 3
    %p157 = pnand %p155, %p156
    %p158 = pneg %p157
    // Predicated region
    $region9: #{c2f_v2_forward.4} parent=5 // pred_check
      _
    $region10: #{c2f_v2_forward.4} parent=5 // pred_check_branch
      %160 = sbr.rel (%p157) target = $region12
    $region11: #{c2f_v2_forward.4} parent=5 // pred_region
      %s161 = ssub.s32 %s11, 1
      // Predicated region
      $region13: #{c2f_v2_forward.4} parent=11 // pred_check
        %p162 = pneg %p58
      $region14: #{c2f_v2_forward.4} parent=11 // pred_check_branch
        %164 = sbr.rel (%p162) target = $region16
      $region15: #{c2f_v2_forward.4} parent=11 // pred_region
        _
      $region16: #{c2f_v2_forward.4} parent=11 // pred_fallthru
        _
      // Predicated region
      $region17: #{c2f_v2_forward.4} parent=11 // pred_check
        %p165 = pneg %p79
      $region18: #{c2f_v2_forward.4} parent=11 // pred_check_branch
        %167 = sbr.rel (%p165) target = $region20
      $region19: #{c2f_v2_forward.4} parent=11 // pred_region
        _
      $region20: #{c2f_v2_forward.4} parent=11 // pred_fallthru
        _
      // Predicated region
      $region21: #{c2f_v2_forward.4} parent=11 // pred_check
        %p168 = pneg %p100
      $region22: #{c2f_v2_forward.4} parent=11 // pred_check_branch
        %170 = sbr.rel (%p168) target = $region24
      $region23: #{c2f_v2_forward.4} parent=11 // pred_region
        _
      $region24: #{c2f_v2_forward.4} parent=11 // pred_fallthru
        _
      // Predicated region
      $region25: #{c2f_v2_forward.4} parent=11 // pred_check
        %p171 = pneg %p121
      $region26: #{c2f_v2_forward.4} parent=11 // pred_check_branch
        %173 = sbr.rel (%p171) target = $region28
      $region27: #{c2f_v2_forward.4} parent=11 // pred_region
        _
      $region28: #{c2f_v2_forward.4} parent=11 // pred_fallthru
        _
    $region12: #{c2f_v2_forward.4} parent=5 // pred_fallthru
      _
    %p174 = scmp.lt.s32.totalorder %s11, 2
    // Predicated region
    $region29: #{c2f_v2_forward.4} parent=5 // pred_check
      %p175 = pneg %p174
    $region30: #{c2f_v2_forward.4} parent=5 // pred_check_branch
      %177 = sbr.rel (%p175) target = $region32
    $region31: #{c2f_v2_forward.4} parent=5 // pred_region
      // Predicated region
      $region33: #{c2f_v2_forward.4} parent=31 // pred_check
        %p178 = pneg %p31
      $region34: #{c2f_v2_forward.4} parent=31 // pred_check_branch
        %180 = sbr.rel (%p178) target = $region36
      $region35: #{c2f_v2_forward.4} parent=31 // pred_region
        %p181 = scmp.lt.s32.totalorder %s11, 1
        %s182 = scalar_select %p181, %s11, 1
        %s183 = smul.addr %s182, 32
        %s184 = smul.addr %s183, 4
        %s185 = scalar_lea.vmem %s0, %s184
      $region36: #{c2f_v2_forward.4} parent=31 // pred_fallthru
        _
    $region32: #{c2f_v2_forward.4} parent=5 // pred_fallthru
      _
    %p186 = scmp.le.s32.totalorder 1, %s11
    %p187 = scmp.lt.s32.totalorder %s11, 3
    %p188 = pnand %p186, %p187
    %p189 = pneg %p188
    // Predicated region
    $region37: #{c2f_v2_forward.4} parent=5 // pred_check
      _
    $region38: #{c2f_v2_forward.4} parent=5 // pred_check_branch
      %191 = sbr.rel (%p188) target = $region40
    $region39: #{c2f_v2_forward.4} parent=5 // pred_region
      %s192 = ssub.s32 %s11, 1
      %p193 = scmp.lt.s32.totalorder %s16, 1
      %s194 = scalar_select %p193, %s16, 1
      %s195 = smul.addr %s194, 32
      %s196 = smul.addr %s195, 4
      %s197 = scalar_lea.vmem %s0, %s196
      %p198 = pneg %p37
      %p199 = pneg %p34
      %p200 = pneg %p58
      %p201 = pneg %p55
      %p202 = pneg %p79
      %p203 = pneg %p76
      %p204 = pneg %p100
      %p205 = pneg %p97
      %p206 = pneg %p121
      %p207 = pneg %p118
      %p208 = pneg %p147
      %p209 = pneg %p144
      %p210 = scmp.lt.s32.totalorder %s16, 1
      %s211 = scalar_select %p210, %s16, 1
      %s212 = smul.addr %s211, 32
      %s213 = smul.addr %s212, 4
      %s214 = scalar_lea.vmem %s5, %s213
      %p215 = scmp.lt.s32.totalorder %s16, 1
      %s216 = scalar_select %p215, %s16, 1
      %s217 = smul.addr %s216, 32
      %s218 = smul.addr %s217, 4
      %s219 = scalar_lea.vmem %s0, %s218
      %p220 = scmp.lt.s32.totalorder %s16, 1
      %s221 = scalar_select %p220, %s16, 1
      %s222 = smul.addr %s221, 32
      %s223 = smul.addr %s222, 4
      %s224 = scalar_lea.vmem %s5, %s223
      %vm226 = vcmask 31744
      %227 = vst.msk [vmem:[#allocation2] sm:$0xff] %vm226, 0.0
      %228 = vst.msk [vmem:[#allocation2 + $0x8] sm:$0xff] %vm226, 0.0
      %vm229 = vcmask 25600
      %230 = vst.msk [vmem:[#allocation2 + $0x10] sm:$0x3] %vm229, 0.0
      %231 = vst.msk [vmem:[#allocation2 + $0x18] sm:$0xff] %vm226, 0.0
      %232 = vst.msk [vmem:[#allocation2 + $0x20] sm:$0xff] %vm226, 0.0
      %233 = vst.msk [vmem:[#allocation2 + $0x28] sm:$0x3] %vm229, 0.0
      %234 = vst.msk [vmem:[#allocation2 + $0x30] sm:$0xff] %vm226, 0.0
      %235 = vst.msk [vmem:[#allocation2 + $0x38] sm:$0xff] %vm226, 0.0
      %236 = vst.msk [vmem:[#allocation2 + $0x40] sm:$0x3] %vm229, 0.0
      %237 = vst.msk [vmem:[#allocation2 + $0x48] sm:$0xff] %vm226, 0.0
      %238 = vst.msk [vmem:[#allocation2 + $0x50] sm:$0xff] %vm226, 0.0
      %239 = vst.msk [vmem:[#allocation2 + $0x58] sm:$0x3] %vm229, 0.0
      %240 = vst.msk [vmem:[#allocation2 + $0x60] sm:$0xff] %vm226, 0.0
      %241 = vst.msk [vmem:[#allocation2 + $0x68] sm:$0xff] %vm226, 0.0
      %242 = vst.msk [vmem:[#allocation2 + $0x70] sm:$0x3] %vm229, 0.0
      %243 = vst.msk [vmem:[#allocation2 + $0x78] sm:$0xff] %vm226, 0.0
      %244 = vst.msk [vmem:[#allocation2 + $0x80] sm:$0xff] %vm226, 0.0
      %245 = vst.msk [vmem:[#allocation2 + $0x88] sm:$0x3] %vm229, 0.0
      %246 = vst.msk [vmem:[#allocation2 + $0x90] sm:$0xff] %vm226, 0.0
      %247 = vst.msk [vmem:[#allocation2 + $0x98] sm:$0xff] %vm226, 0.0
      %248 = vst.msk [vmem:[#allocation2 + $0xa0] sm:$0x3] %vm229, 0.0
      %249 = vst.msk [vmem:[#allocation2 + $0xa8] sm:$0xff] %vm226, 0.0
      %250 = vst.msk [vmem:[#allocation2 + $0xb0] sm:$0xff] %vm226, 0.0
      %251 = vst.msk [vmem:[#allocation2 + $0xb8] sm:$0x3] %vm229, 0.0
      %252 = vst.msk [vmem:[#allocation2 + $0xc0] sm:$0xff] %vm226, 0.0
      %253 = vst.msk [vmem:[#allocation2 + $0xc8] sm:$0xff] %vm226, 0.0
      %254 = vst.msk [vmem:[#allocation2 + $0xd0] sm:$0x3] %vm229, 0.0
      %255 = vst.msk [vmem:[#allocation2 + $0xd8] sm:$0xff] %vm226, 0.0
      %256 = vst.msk [vmem:[#allocation2 + $0xe0] sm:$0xff] %vm226, 0.0
      %257 = vst.msk [vmem:[#allocation2 + $0xe8] sm:$0x3] %vm229, 0.0
      %258 = vst.msk [vmem:[#allocation2 + $0xf0] sm:$0xff] %vm226, 0.0
      %259 = vst.msk [vmem:[#allocation2 + $0xf8] sm:$0xff] %vm226, 0.0
      %260 = vst.msk [vmem:[#allocation2 + $0x100] sm:$0x3] %vm229, 0.0
      %261 = vst.msk [vmem:[#allocation2 + $0x108] sm:$0xff] %vm226, 0.0
      %262 = vst.msk [vmem:[#allocation2 + $0x110] sm:$0xff] %vm226, 0.0
      %263 = vst.msk [vmem:[#allocation2 + $0x118] sm:$0x3] %vm229, 0.0
      %264 = vst.msk [vmem:[#allocation2 + $0x120] sm:$0xff] %vm226, 0.0
      %265 = vst.msk [vmem:[#allocation2 + $0x128] sm:$0xff] %vm226, 0.0
      %266 = vst.msk [vmem:[#allocation2 + $0x130] sm:$0x3] %vm229, 0.0
      %267 = vst.msk [vmem:[#allocation2 + $0x138] sm:$0xff] %vm226, 0.0
      %268 = vst.msk [vmem:[#allocation2 + $0x140] sm:$0xff] %vm226, 0.0
      %269 = vst.msk [vmem:[#allocation2 + $0x148] sm:$0x3] %vm229, 0.0
      %270 = vst.msk [vmem:[#allocation2 + $0x150] sm:$0xff] %vm226, 0.0
      %271 = vst.msk [vmem:[#allocation2 + $0x158] sm:$0xff] %vm226, 0.0
      %272 = vst.msk [vmem:[#allocation2 + $0x160] sm:$0x3] %vm229, 0.0
      %273 = vst.msk [vmem:[#allocation2 + $0x168] sm:$0xff] %vm226, 0.0
      %274 = vst.msk [vmem:[#allocation2 + $0x170] sm:$0xff] %vm226, 0.0
      %275 = vst.msk [vmem:[#allocation2 + $0x178] sm:$0x3] %vm229, 0.0
      %276 = vst.msk [vmem:[#allocation2 + $0x180] sm:$0xff] %vm226, 0.0
      %277 = vst.msk [vmem:[#allocation2 + $0x188] sm:$0xff] %vm226, 0.0
      %278 = vst.msk [vmem:[#allocation2 + $0x190] sm:$0x3] %vm229, 0.0
      %279 = vst.msk [vmem:[#allocation2 + $0x198] sm:$0xff] %vm226, 0.0
      %280 = vst.msk [vmem:[#allocation2 + $0x1a0] sm:$0xff] %vm226, 0.0
      %281 = vst.msk [vmem:[#allocation2 + $0x1a8] sm:$0x3] %vm229, 0.0
      %282 = vst.msk [vmem:[#allocation3] sm:$0xff] %vm226, 0.0
      %283 = vst.msk [vmem:[#allocation3 + $0x8] sm:$0xff] %vm226, 0.0
      %284 = vst.msk [vmem:[#allocation3 + $0x10] sm:$0x3] %vm229, 0.0
      %285 = vst.msk [vmem:[#allocation3 + $0x18] sm:$0xff] %vm226, 0.0
      %286 = vst.msk [vmem:[#allocation3 + $0x20] sm:$0xff] %vm226, 0.0
      %287 = vst.msk [vmem:[#allocation3 + $0x28] sm:$0x3] %vm229, 0.0
      %288 = vst.msk [vmem:[#allocation3 + $0x30] sm:$0xff] %vm226, 0.0
      %289 = vst.msk [vmem:[#allocation3 + $0x38] sm:$0xff] %vm226, 0.0
      %290 = vst.msk [vmem:[#allocation3 + $0x40] sm:$0x3] %vm229, 0.0
      %291 = vst.msk [vmem:[#allocation3 + $0x48] sm:$0xff] %vm226, 0.0
      %292 = vst.msk [vmem:[#allocation3 + $0x50] sm:$0xff] %vm226, 0.0
      %293 = vst.msk [vmem:[#allocation3 + $0x58] sm:$0x3] %vm229, 0.0
      %294 = vst.msk [vmem:[#allocation3 + $0x60] sm:$0xff] %vm226, 0.0
      %295 = vst.msk [vmem:[#allocation3 + $0x68] sm:$0xff] %vm226, 0.0
      %296 = vst.msk [vmem:[#allocation3 + $0x70] sm:$0x3] %vm229, 0.0
      %297 = vst.msk [vmem:[#allocation3 + $0x78] sm:$0xff] %vm226, 0.0
      %298 = vst.msk [vmem:[#allocation3 + $0x80] sm:$0xff] %vm226, 0.0
      %299 = vst.msk [vmem:[#allocation3 + $0x88] sm:$0x3] %vm229, 0.0
      %300 = vst.msk [vmem:[#allocation3 + $0x90] sm:$0xff] %vm226, 0.0
      %301 = vst.msk [vmem:[#allocation3 + $0x98] sm:$0xff] %vm226, 0.0
      %302 = vst.msk [vmem:[#allocation3 + $0xa0] sm:$0x3] %vm229, 0.0
      %303 = vst.msk [vmem:[#allocation3 + $0xa8] sm:$0xff] %vm226, 0.0
      %304 = vst.msk [vmem:[#allocation3 + $0xb0] sm:$0xff] %vm226, 0.0
      %305 = vst.msk [vmem:[#allocation3 + $0xb8] sm:$0x3] %vm229, 0.0
      %306 = vst.msk [vmem:[#allocation3 + $0xc0] sm:$0xff] %vm226, 0.0
      %307 = vst.msk [vmem:[#allocation3 + $0xc8] sm:$0xff] %vm226, 0.0
      %308 = vst.msk [vmem:[#allocation3 + $0xd0] sm:$0x3] %vm229, 0.0
      %309 = vst.msk [vmem:[#allocation3 + $0xd8] sm:$0xff] %vm226, 0.0
      %310 = vst.msk [vmem:[#allocation3 + $0xe0] sm:$0xff] %vm226, 0.0
      %311 = vst.msk [vmem:[#allocation3 + $0xe8] sm:$0x3] %vm229, 0.0
      %312 = vst.msk [vmem:[#allocation3 + $0xf0] sm:$0xff] %vm226, 0.0
      %313 = vst.msk [vmem:[#allocation3 + $0xf8] sm:$0xff] %vm226, 0.0
      %314 = vst.msk [vmem:[#allocation3 + $0x100] sm:$0x3] %vm229, 0.0
      %315 = vst.msk [vmem:[#allocation3 + $0x108] sm:$0xff] %vm226, 0.0
      %316 = vst.msk [vmem:[#allocation3 + $0x110] sm:$0xff] %vm226, 0.0
      %317 = vst.msk [vmem:[#allocation3 + $0x118] sm:$0x3] %vm229, 0.0
      %318 = vst.msk [vmem:[#allocation3 + $0x120] sm:$0xff] %vm226, 0.0
      %319 = vst.msk [vmem:[#allocation3 + $0x128] sm:$0xff] %vm226, 0.0
      %320 = vst.msk [vmem:[#allocation3 + $0x130] sm:$0x3] %vm229, 0.0
      %321 = vst.msk [vmem:[#allocation3 + $0x138] sm:$0xff] %vm226, 0.0
      %322 = vst.msk [vmem:[#allocation3 + $0x140] sm:$0xff] %vm226, 0.0
      %323 = vst.msk [vmem:[#allocation3 + $0x148] sm:$0x3] %vm229, 0.0
      %324 = vst.msk [vmem:[#allocation3 + $0x150] sm:$0xff] %vm226, 0.0
      %325 = vst.msk [vmem:[#allocation3 + $0x158] sm:$0xff] %vm226, 0.0
      %326 = vst.msk [vmem:[#allocation3 + $0x160] sm:$0x3] %vm229, 0.0
      %327 = vst.msk [vmem:[#allocation3 + $0x168] sm:$0xff] %vm226, 0.0
      %328 = vst.msk [vmem:[#allocation3 + $0x170] sm:$0xff] %vm226, 0.0
      %329 = vst.msk [vmem:[#allocation3 + $0x178] sm:$0x3] %vm229, 0.0
      %330 = vst.msk [vmem:[#allocation3 + $0x180] sm:$0xff] %vm226, 0.0
      %331 = vst.msk [vmem:[#allocation3 + $0x188] sm:$0xff] %vm226, 0.0
      %332 = vst.msk [vmem:[#allocation3 + $0x190] sm:$0x3] %vm229, 0.0
      %333 = vst.msk [vmem:[#allocation3 + $0x198] sm:$0xff] %vm226, 0.0
      %334 = vst.msk [vmem:[#allocation3 + $0x1a0] sm:$0xff] %vm226, 0.0
      %335 = vst.msk [vmem:[#allocation3 + $0x1a8] sm:$0x3] %vm229, 0.0
      %v336 = vld [vmem:[%s219] sm:$0xf]
      %v337 = vld [vmem:[%s219 + $0x4] sm:$0xf]
      %v338 = vld [vmem:[%s219 + $0x8] sm:$0xf]
      %v339 = vld [vmem:[%s219 + $0xc] sm:$0xf]
      %v340 = vld [vmem:[%s219 + $0x10] sm:$0xf]
      %v341 = vld [vmem:[%s219 + $0x14] sm:$0xf]
      %v342 = vld [vmem:[%s219 + $0x18] sm:$0xf]
      %v343 = vld [vmem:[%s219 + $0x1c] sm:$0xf]
      %v344 = vld [vmem:[%s219 + $0x20] sm:$0xf]
      %v345 = vld [vmem:[%s219 + $0x24] sm:$0xf]
      %v346 = vld [vmem:[%s219 + $0x28] sm:$0xf]
      %v347 = vld [vmem:[%s219 + $0x2c] sm:$0xf]
      %v348 = vld [vmem:[%s219 + $0x30] sm:$0xf]
      %v349 = vld [vmem:[%s219 + $0x34] sm:$0xf]
      %v350 = vld [vmem:[%s219 + $0x38] sm:$0xf]
      %v351 = vld [vmem:[%s219 + $0x3c] sm:$0xf]
      %v352 = vld [vmem:[%s219 + $0x40] sm:$0xf]
      %v353 = vld [vmem:[%s219 + $0x44] sm:$0xf]
      %v354 = vld [vmem:[%s219 + $0x48] sm:$0xf]
      %v355 = vld [vmem:[%s219 + $0x4c] sm:$0xf]
      %v356 = vld [vmem:[%s219 + $0x50] sm:$0xf]
      %v357 = vld [vmem:[%s219 + $0x54] sm:$0xf]
      %v358 = vld [vmem:[%s219 + $0x58] sm:$0xf]
      %v359 = vld [vmem:[%s219 + $0x5c] sm:$0xf]
      %v360 = vld [vmem:[%s219 + $0x60] sm:$0xf]
      %v361 = vld [vmem:[%s219 + $0x64] sm:$0xf]
      %v362 = vld [vmem:[%s219 + $0x68] sm:$0xf]
      %v363 = vld [vmem:[%s219 + $0x6c] sm:$0xf]
      %v364 = vld [vmem:[%s219 + $0x70] sm:$0xf]
      %v365 = vld [vmem:[%s219 + $0x74] sm:$0xf]
      %v366 = vld [vmem:[%s219 + $0x78] sm:$0xf]
      %v367 = vld [vmem:[%s219 + $0x7c] sm:$0xf]
      %v368 = vunpack.c.l.bf16 %v336
      %v369 = vunpack.c.l.bf16 %v337
      %v370 = vunpack.c.l.bf16 %v338
      %v371 = vunpack.c.l.bf16 %v339
      %v372 = vunpack.c.l.bf16 %v340
      %v373 = vunpack.c.l.bf16 %v341
      %v374 = vunpack.c.l.bf16 %v342
      %v375 = vunpack.c.l.bf16 %v343
      %v376 = vunpack.c.l.bf16 %v344
      %v377 = vunpack.c.l.bf16 %v345
      %v378 = vunpack.c.l.bf16 %v346
      %v379 = vunpack.c.l.bf16 %v347
      %v380 = vunpack.c.l.bf16 %v348
      %v381 = vunpack.c.l.bf16 %v349
      %v382 = vunpack.c.l.bf16 %v350
      %v383 = vunpack.c.l.bf16 %v351
      %v384 = vunpack.c.l.bf16 %v352
      %v385 = vunpack.c.l.bf16 %v353
      %v386 = vunpack.c.l.bf16 %v354
      %v387 = vunpack.c.l.bf16 %v355
      %v388 = vunpack.c.l.bf16 %v356
      %v389 = vunpack.c.l.bf16 %v357
      %v390 = vunpack.c.l.bf16 %v358
      %v391 = vunpack.c.l.bf16 %v359
      %v392 = vunpack.c.l.bf16 %v360
      %v393 = vunpack.c.l.bf16 %v361
      %v394 = vunpack.c.l.bf16 %v362
      %v395 = vunpack.c.l.bf16 %v363
      %v396 = vunpack.c.l.bf16 %v364
      %v397 = vunpack.c.l.bf16 %v365
      %v398 = vunpack.c.l.bf16 %v366
      %v399 = vunpack.c.l.bf16 %v367
      %s400 = scalar_lea.vmem [#allocation2], 24
      %401 = vst.msk [vmem:[%s400 + $0x1] sm:$0xff] %vm226, %v368
      %402 = vst.msk [vmem:[%s400 + $0x9] sm:$0xff] %vm226, %v369
      %403 = vst.msk [vmem:[%s400 + $0x19] sm:$0xff] %vm226, %v370
      %404 = vst.msk [vmem:[%s400 + $0x21] sm:$0xff] %vm226, %v371
      %405 = vst.msk [vmem:[%s400 + $0x31] sm:$0xff] %vm226, %v372
      %406 = vst.msk [vmem:[%s400 + $0x39] sm:$0xff] %vm226, %v373
      %407 = vst.msk [vmem:[%s400 + $0x49] sm:$0xff] %vm226, %v374
      %408 = vst.msk [vmem:[%s400 + $0x51] sm:$0xff] %vm226, %v375
      %409 = vst.msk [vmem:[%s400 + $0x61] sm:$0xff] %vm226, %v376
      %410 = vst.msk [vmem:[%s400 + $0x69] sm:$0xff] %vm226, %v377
      %411 = vst.msk [vmem:[%s400 + $0x79] sm:$0xff] %vm226, %v378
      %412 = vst.msk [vmem:[%s400 + $0x81] sm:$0xff] %vm226, %v379
      %413 = vst.msk [vmem:[%s400 + $0x91] sm:$0xff] %vm226, %v380
      %414 = vst.msk [vmem:[%s400 + $0x99] sm:$0xff] %vm226, %v381
      %415 = vst.msk [vmem:[%s400 + $0xa9] sm:$0xff] %vm226, %v382
      %416 = vst.msk [vmem:[%s400 + $0xb1] sm:$0xff] %vm226, %v383
      %417 = vst.msk [vmem:[%s400 + $0xc1] sm:$0xff] %vm226, %v384
      %418 = vst.msk [vmem:[%s400 + $0xc9] sm:$0xff] %vm226, %v385
      %419 = vst.msk [vmem:[%s400 + $0xd9] sm:$0xff] %vm226, %v386
      %420 = vst.msk [vmem:[%s400 + $0xe1] sm:$0xff] %vm226, %v387
      %421 = vst.msk [vmem:[%s400 + $0xf1] sm:$0xff] %vm226, %v388
      %422 = vst.msk [vmem:[%s400 + $0xf9] sm:$0xff] %vm226, %v389
      %423 = vst.msk [vmem:[%s400 + $0x109] sm:$0xff] %vm226, %v390
      %424 = vst.msk [vmem:[%s400 + $0x111] sm:$0xff] %vm226, %v391
      %425 = vst.msk [vmem:[%s400 + $0x121] sm:$0xff] %vm226, %v392
      %426 = vst.msk [vmem:[%s400 + $0x129] sm:$0xff] %vm226, %v393
      %427 = vst.msk [vmem:[%s400 + $0x139] sm:$0xff] %vm226, %v394
      %428 = vst.msk [vmem:[%s400 + $0x141] sm:$0xff] %vm226, %v395
      %429 = vst.msk [vmem:[%s400 + $0x151] sm:$0xff] %vm226, %v396
      %430 = vst.msk [vmem:[%s400 + $0x159] sm:$0xff] %vm226, %v397
      %431 = vst.msk [vmem:[%s400 + $0x169] sm:$0xff] %vm226, %v398
      %432 = vst.msk [vmem:[%s400 + $0x171] sm:$0xff] %vm226, %v399
      %v433 = vld [vmem:[#allocation2] sm:$0xff]
      %v434 = vld [vmem:[#allocation2 + $0x8] sm:$0xff]
      %v435 = vld [vmem:[#allocation2 + $0x18] sm:$0xff]
      %v436 = vld [vmem:[#allocation2 + $0x20] sm:$0xff]
      %v437 = vld [vmem:[#allocation2 + $0x30] sm:$0xff]
      %v438 = vld [vmem:[#allocation2 + $0x38] sm:$0xff]
      %v439 = vld [vmem:[#allocation2 + $0x48] sm:$0xff]
      %v440 = vld [vmem:[#allocation2 + $0x50] sm:$0xff]
      %v441 = vld [vmem:[#allocation2 + $0x60] sm:$0xff]
      %v442 = vld [vmem:[#allocation2 + $0x68] sm:$0xff]
      %v443 = vld [vmem:[#allocation2 + $0x78] sm:$0xff]
      %v444 = vld [vmem:[#allocation2 + $0x80] sm:$0xff]
      %v445 = vld [vmem:[#allocation2 + $0x90] sm:$0xff]
      %v446 = vld [vmem:[#allocation2 + $0x98] sm:$0xff]
      %v447 = vld [vmem:[#allocation2 + $0xa8] sm:$0xff]
      %v448 = vld [vmem:[#allocation2 + $0xb0] sm:$0xff]
      %v449 = vpack.c.bf16 %v434, %v433
      %v450 = vpack.c.bf16 %v436, %v435
      %v451 = vpack.c.bf16 %v438, %v437
      %v452 = vpack.c.bf16 %v440, %v439
      %v453 = vpack.c.bf16 %v442, %v441
      %v454 = vpack.c.bf16 %v444, %v443
      %v455 = vpack.c.bf16 %v446, %v445
      %v456 = vpack.c.bf16 %v448, %v447
      %v457 = vld [vmem:[%s1] sm:$0x3]
      %v458 = vld [vmem:[#allocation2 + $0x1] sm:$0xff]
      %v459 = vld [vmem:[#allocation2 + $0x9] sm:$0xff]
      %v460 = vld [vmem:[#allocation2 + $0x19] sm:$0xff]
      %v461 = vld [vmem:[#allocation2 + $0x21] sm:$0xff]
      %v462 = vld [vmem:[#allocation2 + $0x31] sm:$0xff]
      %v463 = vld [vmem:[#allocation2 + $0x39] sm:$0xff]
      %v464 = vld [vmem:[#allocation2 + $0x49] sm:$0xff]
      %v465 = vld [vmem:[#allocation2 + $0x51] sm:$0xff]
      %v466 = vld [vmem:[#allocation2 + $0x61] sm:$0xff]
      %v467 = vld [vmem:[#allocation2 + $0x69] sm:$0xff]
      %v468 = vld [vmem:[#allocation2 + $0x79] sm:$0xff]
      %v469 = vld [vmem:[#allocation2 + $0x81] sm:$0xff]
      %v470 = vld [vmem:[#allocation2 + $0x91] sm:$0xff]
      %v471 = vld [vmem:[#allocation2 + $0x99] sm:$0xff]
      %v472 = vld [vmem:[#allocation2 + $0xa9] sm:$0xff]
      %v473 = vld [vmem:[#allocation2 + $0xb1] sm:$0xff]
      %v474 = vpack.c.bf16 %v459, %v458
      %v475 = vpack.c.bf16 %v461, %v460
      %v476 = vpack.c.bf16 %v463, %v462
      %v477 = vpack.c.bf16 %v465, %v464
      %v478 = vpack.c.bf16 %v467, %v466
      %v479 = vpack.c.bf16 %v469, %v468
      %v480 = vpack.c.bf16 %v471, %v470
      %v481 = vpack.c.bf16 %v473, %v472
      %s482 = scalar_lea.vmem %s1, 2
      %v483 = vld [vmem:[%s482] sm:$0x3]
      %v485 = vsel %vm226, %v474, 0
      %v488 = vsel %vm226, %v475, 0
      %v491 = vsel %vm226, %v476, 0
      %v494 = vsel %vm226, %v477, 0
      %v497 = vsel %vm226, %v478, 0
      %v500 = vsel %vm226, %v479, 0
      %v503 = vsel %vm226, %v480, 0
      %v506 = vsel %vm226, %v481, 0
      %vm508 = vcmask 1041408
      %v510 = vsel %vm508, %v483, 0
      %512 = vmatprep.subr.bf16.mxu0 0
      %513 = vmatpush1.bf16.msra.mxu0 %v510
      %514 = vmatprep.subr.bf16.mxu0 0
      %515 = vmatpush1.bf16.msra.mxu0 0
      %516 = vmatprep.subr.bf16.mxu0 0
      %517 = vmatpush1.bf16.msra.mxu0 0
      %518 = vmatprep.subr.bf16.mxu0 0
      %519 = vmatpush1.bf16.msra.mxu0 0
      %520 = vmatprep.subr.bf16.mxu0 0
      %521 = vmatpush1.bf16.msra.mxu0 0
      %522 = vmatprep.subr.bf16.mxu0 0
      %523 = vmatpush1.bf16.msra.mxu0 0
      %524 = vmatprep.subr.bf16.mxu0 0
      %525 = vmatpush1.bf16.msra.mxu0 0
      %526 = vmatprep.subr.bf16.mxu0 0
      %527 = vmatpush1.bf16.msra.mxu0 0
      %528 = vmatprep.subr.bf16.mxu0 0
      %529 = vmatpush1.bf16.msra.mxu0 0
      %530 = vmatprep.subr.bf16.mxu0 0
      %531 = vmatpush1.bf16.msra.mxu0 0
      %532 = vmatprep.subr.bf16.mxu0 0
      %533 = vmatpush1.bf16.msra.mxu0 0
      %534 = vmatprep.subr.bf16.mxu0 0
      %535 = vmatpush1.bf16.msra.mxu0 0
      %536 = vmatprep.subr.bf16.mxu0 0
      %537 = vmatpush1.bf16.msra.mxu0 0
      %538 = vmatprep.subr.bf16.mxu0 0
      %539 = vmatpush1.bf16.msra.mxu0 0
      %540 = vmatprep.subr.bf16.mxu0 0
      %541 = vmatpush1.bf16.msra.mxu0 0
      %542 = vmatprep.subr.bf16.mxu0 0
      %543 = vmatpush1.bf16.msra.mxu0 0
      %544 = vmatprep.mubr.bf16.mxu0 0
      %545 = vmatmul.mubr.bf16.gmra.mrb[0].mxu0 %v485
      %v546 = vpop.f32.mrb[0].mxu0
      %v547 = vadd.f32 0.0, %v546
      %v548 = vpop.f32.mrb[0].mxu0
      %v549 = vpop.f32.mrb[0].mxu0
      %v550 = vadd.f32 0.0, %v549
      %v551 = vpop.f32.mrb[0].mxu0
      %552 = vmatprep.mubr.bf16.mxu0 0
      %553 = vmatmul.mubr.bf16.gmra.mrb[0].mxu0 %v488
      %v554 = vpop.f32.mrb[0].mxu0
      %v555 = vadd.f32 0.0, %v554
      %v556 = vpop.f32.mrb[0].mxu0
      %v557 = vpop.f32.mrb[0].mxu0
      %v558 = vadd.f32 0.0, %v557
      %v559 = vpop.f32.mrb[0].mxu0
      %560 = vmatprep.mubr.bf16.mxu0 0
      %561 = vmatmul.mubr.bf16.gmra.mrb[0].mxu0 %v491
      %v562 = vpop.f32.mrb[0].mxu0
      %v563 = vadd.f32 0.0, %v562
      %v564 = vpop.f32.mrb[0].mxu0
      %v565 = vpop.f32.mrb[0].mxu0
      %v566 = vadd.f32 0.0, %v565
      %v567 = vpop.f32.mrb[0].mxu0
      %568 = vmatprep.mubr.bf16.mxu0 0
      %569 = vmatmul.mubr.bf16.gmra.mrb[0].mxu0 %v494
      %v570 = vpop.f32.mrb[0].mxu0
      %v571 = vadd.f32 0.0, %v570
      %v572 = vpop.f32.mrb[0].mxu0
      %v573 = vpop.f32.mrb[0].mxu0
      %v574 = vadd.f32 0.0, %v573
      %v575 = vpop.f32.mrb[0].mxu0
      %576 = vmatprep.mubr.bf16.mxu0 0
      %577 = vmatmul.mubr.bf16.gmra.mrb[0].mxu0 %v497
      %v578 = vpop.f32.mrb[0].mxu0
      %v579 = vadd.f32 0.0, %v578
      %v580 = vpop.f32.mrb[0].mxu0
      %v581 = vpop.f32.mrb[0].mxu0
      %v582 = vadd.f32 0.0, %v581
      %v583 = vpop.f32.mrb[0].mxu0
      %584 = vmatprep.mubr.bf16.mxu0 0
      %585 = vmatmul.mubr.bf16.gmra.mrb[0].mxu0 %v500
      %v586 = vpop.f32.mrb[0].mxu0
      %v587 = vadd.f32 0.0, %v586
      %v588 = vpop.f32.mrb[0].mxu0
      %v589 = vpop.f32.mrb[0].mxu0
      %v590 = vadd.f32 0.0, %v589
      %v591 = vpop.f32.mrb[0].mxu0
      %592 = vmatprep.mubr.bf16.mxu0 0
      %593 = vmatmul.mubr.bf16.gmra.mrb[0].mxu0 %v503
      %v594 = vpop.f32.mrb[0].mxu0
      %v595 = vadd.f32 0.0, %v594
      %v596 = vpop.f32.mrb[0].mxu0
      %v597 = vpop.f32.mrb[0].mxu0
      %v598 = vadd.f32 0.0, %v597
      %v599 = vpop.f32.mrb[0].mxu0
      %600 = vmatprep.mubr.bf16.mxu0 0
      %601 = vmatmul.mubr.bf16.gmra.mrb[0].mxu0 %v506
      %v602 = vpop.f32.mrb[0].mxu0
      %v603 = vadd.f32 0.0, %v602
      %v604 = vpop.f32.mrb[0].mxu0
      %v605 = vpop.f32.mrb[0].mxu0
      %v606 = vadd.f32 0.0, %v605
      %v607 = vpop.f32.mrb[0].mxu0
      %608 = vdwg.mxu0
      %v610 = vsel %vm226, %v449, 0
      %v613 = vsel %vm226, %v450, 0
      %v616 = vsel %vm226, %v451, 0
      %v619 = vsel %vm226, %v452, 0
      %v622 = vsel %vm226, %v453, 0
      %v625 = vsel %vm226, %v454, 0
      %v628 = vsel %vm226, %v455, 0
      %v631 = vsel %vm226, %v456, 0
      %v634 = vsel %vm508, %v457, 0
      %636 = vmatprep.subr.bf16.mxu0 0
      %637 = vmatpush1.bf16.msra.mxu0 %v634
      %638 = vmatprep.subr.bf16.mxu0 0
      %639 = vmatpush1.bf16.msra.mxu0 0
      %640 = vmatprep.subr.bf16.mxu0 0
      %641 = vmatpush1.bf16.msra.mxu0 0
      %642 = vmatprep.subr.bf16.mxu0 0
      %643 = vmatpush1.bf16.msra.mxu0 0
      %644 = vmatprep.subr.bf16.mxu0 0
      %645 = vmatpush1.bf16.msra.mxu0 0
      %646 = vmatprep.subr.bf16.mxu0 0
      %647 = vmatpush1.bf16.msra.mxu0 0
      %648 = vmatprep.subr.bf16.mxu0 0
      %649 = vmatpush1.bf16.msra.mxu0 0
      %650 = vmatprep.subr.bf16.mxu0 0
      %651 = vmatpush1.bf16.msra.mxu0 0
      %652 = vmatprep.subr.bf16.mxu0 0
      %653 = vmatpush1.bf16.msra.mxu0 0
      %654 = vmatprep.subr.bf16.mxu0 0
      %655 = vmatpush1.bf16.msra.mxu0 0
      %656 = vmatprep.subr.bf16.mxu0 0
      %657 = vmatpush1.bf16.msra.mxu0 0
      %658 = vmatprep.subr.bf16.mxu0 0
      %659 = vmatpush1.bf16.msra.mxu0 0
      %660 = vmatprep.subr.bf16.mxu0 0
      %661 = vmatpush1.bf16.msra.mxu0 0
      %662 = vmatprep.subr.bf16.mxu0 0
      %663 = vmatpush1.bf16.msra.mxu0 0
      %664 = vmatprep.subr.bf16.mxu0 0
      %665 = vmatpush1.bf16.msra.mxu0 0
      %666 = vmatprep.subr.bf16.mxu0 0
      %667 = vmatpush1.bf16.msra.mxu0 0
      %668 = vmatprep.mubr.bf16.mxu0 0
      %669 = vmatmul.mubr.bf16.gmra.mrb[0].mxu0 %v610
      %v670 = vpop.f32.mrb[0].mxu0
      %v671 = vadd.f32 %v547, %v670
      %v672 = vpop.f32.mrb[0].mxu0
      %v673 = vpop.f32.mrb[0].mxu0
      %v674 = vadd.f32 %v550, %v673
      %v675 = vpop.f32.mrb[0].mxu0
      %676 = vmatprep.mubr.bf16.mxu0 0
      %677 = vmatmul.mubr.bf16.gmra.mrb[0].mxu0 %v613
      %v678 = vpop.f32.mrb[0].mxu0
      %v679 = vadd.f32 %v555, %v678
      %v680 = vpop.f32.mrb[0].mxu0
      %v681 = vpop.f32.mrb[0].mxu0
      %v682 = vadd.f32 %v558, %v681
      %v683 = vpop.f32.mrb[0].mxu0
      %684 = vmatprep.mubr.bf16.mxu0 0
      %685 = vmatmul.mubr.bf16.gmra.mrb[0].mxu0 %v616
      %v686 = vpop.f32.mrb[0].mxu0
      %v687 = vadd.f32 %v563, %v686
      %v688 = vpop.f32.mrb[0].mxu0
      %v689 = vpop.f32.mrb[0].mxu0
      %v690 = vadd.f32 %v566, %v689
      %v691 = vpop.f32.mrb[0].mxu0
      %692 = vmatprep.mubr.bf16.mxu0 0
      %693 = vmatmul.mubr.bf16.gmra.mrb[0].mxu0 %v619
      %v694 = vpop.f32.mrb[0].mxu0
      %v695 = vadd.f32 %v571, %v694
      %v696 = vpop.f32.mrb[0].mxu0
      %v697 = vpop.f32.mrb[0].mxu0
      %v698 = vadd.f32 %v574, %v697
      %v699 = vpop.f32.mrb[0].mxu0
      %700 = vmatprep.mubr.bf16.mxu0 0
      %701 = vmatmul.mubr.bf16.gmra.mrb[0].mxu0 %v622
      %v702 = vpop.f32.mrb[0].mxu0
      %v703 = vadd.f32 %v579, %v702
      %v704 = vpop.f32.mrb[0].mxu0
      %v705 = vpop.f32.mrb[0].mxu0
      %v706 = vadd.f32 %v582, %v705
      %v707 = vpop.f32.mrb[0].mxu0
      %708 = vmatprep.mubr.bf16.mxu0 0
      %709 = vmatmul.mubr.bf16.gmra.mrb[0].mxu0 %v625
      %v710 = vpop.f32.mrb[0].mxu0
      %v711 = vadd.f32 %v587, %v710
      %v712 = vpop.f32.mrb[0].mxu0
      %v713 = vpop.f32.mrb[0].mxu0
      %v714 = vadd.f32 %v590, %v713
      %v715 = vpop.f32.mrb[0].mxu0
      %716 = vmatprep.mubr.bf16.mxu0 0
      %717 = vmatmul.mubr.bf16.gmra.mrb[0].mxu0 %v628
      %v718 = vpop.f32.mrb[0].mxu0
      %v719 = vadd.f32 %v595, %v718
      %v720 = vpop.f32.mrb[0].mxu0
      %v721 = vpop.f32.mrb[0].mxu0
      %v722 = vadd.f32 %v598, %v721
      %v723 = vpop.f32.mrb[0].mxu0
      %724 = vmatprep.mubr.bf16.mxu0 0
      %725 = vmatmul.mubr.bf16.gmra.mrb[0].mxu0 %v631
      %v726 = vpop.f32.mrb[0].mxu0
      %v727 = vadd.f32 %v603, %v726
      %v728 = vpop.f32.mrb[0].mxu0
      %v729 = vpop.f32.mrb[0].mxu0
      %v730 = vadd.f32 %v606, %v729
      %v731 = vpop.f32.mrb[0].mxu0
      %732 = vdwg.mxu0
      %v733 = vld [vmem:[#allocation2 + $0x2] sm:$0xff]
      %v734 = vld [vmem:[#allocation2 + $0xa] sm:$0xff]
      %v735 = vld [vmem:[#allocation2 + $0x1a] sm:$0xff]
      %v736 = vld [vmem:[#allocation2 + $0x22] sm:$0xff]
      %v737 = vld [vmem:[#allocation2 + $0x32] sm:$0xff]
      %v738 = vld [vmem:[#allocation2 + $0x3a] sm:$0xff]
      %v739 = vld [vmem:[#allocation2 + $0x4a] sm:$0xff]
      %v740 = vld [vmem:[#allocation2 + $0x52] sm:$0xff]
      %v741 = vld [vmem:[#allocation2 + $0x62] sm:$0xff]
      %v742 = vld [vmem:[#allocation2 + $0x6a] sm:$0xff]
      %v743 = vld [vmem:[#allocation2 + $0x7a] sm:$0xff]
      %v744 = vld [vmem:[#allocation2 + $0x82] sm:$0xff]
      %v745 = vld [vmem:[#allocation2 + $0x92] sm:$0xff]
      %v746 = vld [vmem:[#allocation2 + $0x9a] sm:$0xff]
      %v747 = vld [vmem:[#allocation2 + $0xaa] sm:$0xff]
      %v748 = vld [vmem:[#allocation2 + $0xb2] sm:$0xff]
      %v749 = vpack.c.bf16 %v734, %v733
      %v750 = vpack.c.bf16 %v736, %v735
      %v751 = vpack.c.bf16 %v738, %v737
      %v752 = vpack.c.bf16 %v740, %v739
      %v753 = vpack.c.bf16 %v742, %v741
      %v754 = vpack.c.bf16 %v744, %v743
      %v755 = vpack.c.bf16 %v746, %v745
      %v756 = vpack.c.bf16 %v748, %v747
      %s757 = scalar_lea.vmem %s1, 4
      %v758 = vld [vmem:[%s757] sm:$0x3]
      %v760 = vsel %vm226, %v749, 0
      %v763 = vsel %vm226, %v750, 0
      %v766 = vsel %vm226, %v751, 0
      %v769 = vsel %vm226, %v752, 0
      %v772 = vsel %vm226, %v753, 0
      %v775 = vsel %vm226, %v754, 0
      %v778 = vsel %vm226, %v755, 0
      %v781 = vsel %vm226, %v756, 0
      %v784 = vsel %vm508, %v758, 0
      %786 = vmatprep.subr.bf16.mxu0 0
      %787 = vmatpush1.bf16.msra.mxu0 %v784
      %788 = vmatprep.subr.bf16.mxu0 0
      %789 = vmatpush1.bf16.msra.mxu0 0
      %790 = vmatprep.subr.bf16.mxu0 0
      %791 = vmatpush1.bf16.msra.mxu0 0
      %792 = vmatprep.subr.bf16.mxu0 0
      %793 = vmatpush1.bf16.msra.mxu0 0
      %794 = vmatprep.subr.bf16.mxu0 0
      %795 = vmatpush1.bf16.msra.mxu0 0
      %796 = vmatprep.subr.bf16.mxu0 0
      %797 = vmatpush1.bf16.msra.mxu0 0
      %798 = vmatprep.subr.bf16.mxu0 0
      %799 = vmatpush1.bf16.msra.mxu0 0
      %800 = vmatprep.subr.bf16.mxu0 0
      %801 = vmatpush1.bf16.msra.mxu0 0
      %802 = vmatprep.subr.bf16.mxu0 0
      %803 = vmatpush1.bf16.msra.mxu0 0
      %804 = vmatprep.subr.bf16.mxu0 0
      %805 = vmatpush1.bf16.msra.mxu0 0
      %806 = vmatprep.subr.bf16.mxu0 0
      %807 = vmatpush1.bf16.msra.mxu0 0
      %808 = vmatprep.subr.bf16.mxu0 0
      %809 = vmatpush1.bf16.msra.mxu0 0
      %810 = vmatprep.subr.bf16.mxu0 0
      %811 = vmatpush1.bf16.msra.mxu0 0
      %812 = vmatprep.subr.bf16.mxu0 0
      %813 = vmatpush1.bf16.msra.mxu0 0
      %814 = vmatprep.subr.bf16.mxu0 0
      %815 = vmatpush1.bf16.msra.mxu0 0
      %816 = vmatprep.subr.bf16.mxu0 0
      %817 = vmatpush1.bf16.msra.mxu0 0
      %818 = vmatprep.mubr.bf16.mxu0 0
      %819 = vmatmul.mubr.bf16.gmra.mrb[0].mxu0 %v760
      %v820 = vpop.f32.mrb[0].mxu0
      %v821 = vadd.f32 0.0, %v820
      %v822 = vpop.f32.mrb[0].mxu0
      %v823 = vpop.f32.mrb[0].mxu0
      %v824 = vadd.f32 0.0, %v823
      %v825 = vpop.f32.mrb[0].mxu0
      %826 = vmatprep.mubr.bf16.mxu0 0
      %827 = vmatmul.mubr.bf16.gmra.mrb[0].mxu0 %v763
      %v828 = vpop.f32.mrb[0].mxu0
      %v829 = vadd.f32 0.0, %v828
      %v830 = vpop.f32.mrb[0].mxu0
      %v831 = vpop.f32.mrb[0].mxu0
      %v832 = vadd.f32 0.0, %v831
      %v833 = vpop.f32.mrb[0].mxu0
      %834 = vmatprep.mubr.bf16.mxu0 0
      %835 = vmatmul.mubr.bf16.gmra.mrb[0].mxu0 %v766
      %v836 = vpop.f32.mrb[0].mxu0
      %v837 = vadd.f32 0.0, %v836
      %v838 = vpop.f32.mrb[0].mxu0
      %v839 = vpop.f32.mrb[0].mxu0
      %v840 = vadd.f32 0.0, %v839
      %v841 = vpop.f32.mrb[0].mxu0
      %842 = vmatprep.mubr.bf16.mxu0 0
      %843 = vmatmul.mubr.bf16.gmra.mrb[0].mxu0 %v769
      %v844 = vpop.f32.mrb[0].mxu0
      %v845 = vadd.f32 0.0, %v844
      %v846 = vpop.f32.mrb[0].mxu0
      %v847 = vpop.f32.mrb[0].mxu0
      %v848 = vadd.f32 0.0, %v847
      %v849 = vpop.f32.mrb[0].mxu0
      %850 = vmatprep.mubr.bf16.mxu0 0
      %851 = vmatmul.mubr.bf16.gmra.mrb[0].mxu0 %v772
      %v852 = vpop.f32.mrb[0].mxu0
      %v853 = vadd.f32 0.0, %v852
      %v854 = vpop.f32.mrb[0].mxu0
      %v855 = vpop.f32.mrb[0].mxu0
      %v856 = vadd.f32 0.0, %v855
      %v857 = vpop.f32.mrb[0].mxu0
      %858 = vmatprep.mubr.bf16.mxu0 0
      %859 = vmatmul.mubr.bf16.gmra.mrb[0].mxu0 %v775
      %v860 = vpop.f32.mrb[0].mxu0
      %v861 = vadd.f32 0.0, %v860
      %v862 = vpop.f32.mrb[0].mxu0
      %v863 = vpop.f32.mrb[0].mxu0
      %v864 = vadd.f32 0.0, %v863
      %v865 = vpop.f32.mrb[0].mxu0
      %866 = vmatprep.mubr.bf16.mxu0 0
      %867 = vmatmul.mubr.bf16.gmra.mrb[0].mxu0 %v778
      %v868 = vpop.f32.mrb[0].mxu0
      %v869 = vadd.f32 0.0, %v868
      %v870 = vpop.f32.mrb[0].mxu0
      %v871 = vpop.f32.mrb[0].mxu0
      %v872 = vadd.f32 0.0, %v871
      %v873 = vpop.f32.mrb[0].mxu0
      %874 = vmatprep.mubr.bf16.mxu0 0
      %875 = vmatmul.mubr.bf16.gmra.mrb[0].mxu0 %v781
      %v876 = vpop.f32.mrb[0].mxu0
      %v877 = vadd.f32 0.0, %v876
      %v878 = vpop.f32.mrb[0].mxu0
      %v879 = vpop.f32.mrb[0].mxu0
      %v880 = vadd.f32 0.0, %v879
      %v881 = vpop.f32.mrb[0].mxu0
      %882 = vdwg.mxu0
      %v883 = vadd.f32 %v671, %v821
      %v884 = vadd.f32 %v674, %v824
      %v885 = vadd.f32 %v679, %v829
      %v886 = vadd.f32 %v682, %v832
      %v887 = vadd.f32 %v687, %v837
      %v888 = vadd.f32 %v690, %v840
      %v889 = vadd.f32 %v695, %v845
      %v890 = vadd.f32 %v698, %v848
      %v891 = vadd.f32 %v703, %v853
      %v892 = vadd.f32 %v706, %v856
      %v893 = vadd.f32 %v711, %v861
      %v894 = vadd.f32 %v714, %v864
      %v895 = vadd.f32 %v719, %v869
      %v896 = vadd.f32 %v722, %v872
      %v897 = vadd.f32 %v727, %v877
      %v898 = vadd.f32 %v730, %v880
      %v899 = vld [vmem:[%s400] sm:$0xff]
      %v900 = vld [vmem:[%s400 + $0x8] sm:$0xff]
      %v901 = vld [vmem:[%s400 + $0x18] sm:$0xff]
      %v902 = vld [vmem:[%s400 + $0x20] sm:$0xff]
      %v903 = vld [vmem:[%s400 + $0x30] sm:$0xff]
      %v904 = vld [vmem:[%s400 + $0x38] sm:$0xff]
      %v905 = vld [vmem:[%s400 + $0x48] sm:$0xff]
      %v906 = vld [vmem:[%s400 + $0x50] sm:$0xff]
      %v907 = vld [vmem:[%s400 + $0x60] sm:$0xff]
      %v908 = vld [vmem:[%s400 + $0x68] sm:$0xff]
      %v909 = vld [vmem:[%s400 + $0x78] sm:$0xff]
      %v910 = vld [vmem:[%s400 + $0x80] sm:$0xff]
      %v911 = vld [vmem:[%s400 + $0x90] sm:$0xff]
      %v912 = vld [vmem:[%s400 + $0x98] sm:$0xff]
      %v913 = vld [vmem:[%s400 + $0xa8] sm:$0xff]
      %v914 = vld [vmem:[%s400 + $0xb0] sm:$0xff]
      %v915 = vpack.c.bf16 %v900, %v899
      %v916 = vpack.c.bf16 %v902, %v901
      %v917 = vpack.c.bf16 %v904, %v903
      %v918 = vpack.c.bf16 %v906, %v905
      %v919 = vpack.c.bf16 %v908, %v907
      %v920 = vpack.c.bf16 %v910, %v909
      %v921 = vpack.c.bf16 %v912, %v911
      %v922 = vpack.c.bf16 %v914, %v913
      %s923 = scalar_lea.vmem %s1, 6
      %v924 = vld [vmem:[%s923] sm:$0x3]
      %v926 = vsel %vm226, %v915, 0
      %v929 = vsel %vm226, %v916, 0
      %v932 = vsel %vm226, %v917, 0
      %v935 = vsel %vm226, %v918, 0
      %v938 = vsel %vm226, %v919, 0
      %v941 = vsel %vm226, %v920, 0
      %v944 = vsel %vm226, %v921, 0
      %v947 = vsel %vm226, %v922, 0
      %v950 = vsel %vm508, %v924, 0
      %952 = vmatprep.subr.bf16.mxu0 0
      %953 = vmatpush1.bf16.msra.mxu0 %v950
      %954 = vmatprep.subr.bf16.mxu0 0
      %955 = vmatpush1.bf16.msra.mxu0 0
      %956 = vmatprep.subr.bf16.mxu0 0
      %957 = vmatpush1.bf16.msra.mxu0 0
      %958 = vmatprep.subr.bf16.mxu0 0
      %959 = vmatpush1.bf16.msra.mxu0 0
      %960 = vmatprep.subr.bf16.mxu0 0
      %961 = vmatpush1.bf16.msra.mxu0 0
      %962 = vmatprep.subr.bf16.mxu0 0
      %963 = vmatpush1.bf16.msra.mxu0 0
      %964 = vmatprep.subr.bf16.mxu0 0
      %965 = vmatpush1.bf16.msra.mxu0 0
      %966 = vmatprep.subr.bf16.mxu0 0
      %967 = vmatpush1.bf16.msra.mxu0 0
      %968 = vmatprep.subr.bf16.mxu0 0
      %969 = vmatpush1.bf16.msra.mxu0 0
      %970 = vmatprep.subr.bf16.mxu0 0
      %971 = vmatpush1.bf16.msra.mxu0 0
      %972 = vmatprep.subr.bf16.mxu0 0
      %973 = vmatpush1.bf16.msra.mxu0 0
      %974 = vmatprep.subr.bf16.mxu0 0
      %975 = vmatpush1.bf16.msra.mxu0 0
      %976 = vmatprep.subr.bf16.mxu0 0
      %977 = vmatpush1.bf16.msra.mxu0 0
      %978 = vmatprep.subr.bf16.mxu0 0
      %979 = vmatpush1.bf16.msra.mxu0 0
      %980 = vmatprep.subr.bf16.mxu0 0
      %981 = vmatpush1.bf16.msra.mxu0 0
      %982 = vmatprep.subr.bf16.mxu0 0
      %983 = vmatpush1.bf16.msra.mxu0 0
      %984 = vmatprep.mubr.bf16.mxu0 0
      %985 = vmatmul.mubr.bf16.gmra.mrb[0].mxu0 %v926
      %v986 = vpop.f32.mrb[0].mxu0
      %v987 = vadd.f32 0.0, %v986
      %v988 = vpop.f32.mrb[0].mxu0
      %v989 = vpop.f32.mrb[0].mxu0
      %v990 = vadd.f32 0.0, %v989
      %v991 = vpop.f32.mrb[0].mxu0
      %992 = vmatprep.mubr.bf16.mxu0 0
      %993 = vmatmul.mubr.bf16.gmra.mrb[0].mxu0 %v929
      %v994 = vpop.f32.mrb[0].mxu0
      %v995 = vadd.f32 0.0, %v994
      %v996 = vpop.f32.mrb[0].mxu0
      %v997 = vpop.f32.mrb[0].mxu0
      %v998 = vadd.f32 0.0, %v997
      %v999 = vpop.f32.mrb[0].mxu0
      %1000 = vmatprep.mubr.bf16.mxu0 0
      %1001 = vmatmul.mubr.bf16.gmra.mrb[0].mxu0 %v932
      %v1002 = vpop.f32.mrb[0].mxu0
      %v1003 = vadd.f32 0.0, %v1002
      %v1004 = vpop.f32.mrb[0].mxu0
      %v1005 = vpop.f32.mrb[0].mxu0
      %v1006 = vadd.f32 0.0, %v1005
      %v1007 = vpop.f32.mrb[0].mxu0
      %1008 = vmatprep.mubr.bf16.mxu0 0
      %1009 = vmatmul.mubr.bf16.gmra.mrb[0].mxu0 %v935
      %v1010 = vpop.f32.mrb[0].mxu0
      %v1011 = vadd.f32 0.0, %v1010
      %v1012 = vpop.f32.mrb[0].mxu0
      %v1013 = vpop.f32.mrb[0].mxu0
      %v1014 = vadd.f32 0.0, %v1013
      %v1015 = vpop.f32.mrb[0].mxu0
      %1016 = vmatprep.mubr.bf16.mxu0 0
      %1017 = vmatmul.mubr.bf16.gmra.mrb[0].mxu0 %v938
      %v1018 = vpop.f32.mrb[0].mxu0
      %v1019 = vadd.f32 0.0, %v1018
      %v1020 = vpop.f32.mrb[0].mxu0
      %v1021 = vpop.f32.mrb[0].mxu0
      %v1022 = vadd.f32 0.0, %v1021
      %v1023 = vpop.f32.mrb[0].mxu0
      %1024 = vmatprep.mubr.bf16.mxu0 0
      %1025 = vmatmul.mubr.bf16.gmra.mrb[0].mxu0 %v941
      %v1026 = vpop.f32.mrb[0].mxu0
      %v1027 = vadd.f32 0.0, %v1026
      %v1028 = vpop.f32.mrb[0].mxu0
      %v1029 = vpop.f32.mrb[0].mxu0
      %v1030 = vadd.f32 0.0, %v1029
      %v1031 = vpop.f32.mrb[0].mxu0
      %1032 = vmatprep.mubr.bf16.mxu0 0
      %1033 = vmatmul.mubr.bf16.gmra.mrb[0].mxu0 %v944
      %v1034 = vpop.f32.mrb[0].mxu0
      %v1035 = vadd.f32 0.0, %v1034
      %v1036 = vpop.f32.mrb[0].mxu0
      %v1037 = vpop.f32.mrb[0].mxu0
      %v1038 = vadd.f32 0.0, %v1037
      %v1039 = vpop.f32.mrb[0].mxu0
      %1040 = vmatprep.mubr.bf16.mxu0 0
      %1041 = vmatmul.mubr.bf16.gmra.mrb[0].mxu0 %v947
      %v1042 = vpop.f32.mrb[0].mxu0
      %v1043 = vadd.f32 0.0, %v1042
      %v1044 = vpop.f32.mrb[0].mxu0
      %v1045 = vpop.f32.mrb[0].mxu0
      %v1046 = vadd.f32 0.0, %v1045
      %v1047 = vpop.f32.mrb[0].mxu0
      %1048 = vdwg.mxu0
      %v1049 = vadd.f32 %v883, %v987
      %v1050 = vadd.f32 %v884, %v990
      %v1051 = vadd.f32 %v885, %v995
      %v1052 = vadd.f32 %v886, %v998
      %v1053 = vadd.f32 %v887, %v1003
      %v1054 = vadd.f32 %v888, %v1006
      %v1055 = vadd.f32 %v889, %v1011
      %v1056 = vadd.f32 %v890, %v1014
      %v1057 = vadd.f32 %v891, %v1019
      %v1058 = vadd.f32 %v892, %v1022
      %v1059 = vadd.f32 %v893, %v1027
      %v1060 = vadd.f32 %v894, %v1030
      %v1061 = vadd.f32 %v895, %v1035
      %v1062 = vadd.f32 %v896, %v1038
      %v1063 = vadd.f32 %v897, %v1043
      %v1064 = vadd.f32 %v898, %v1046
      %v1065 = vld [vmem:[%s400 + $0x1] sm:$0xff]
      %v1066 = vld [vmem:[%s400 + $0x9] sm:$0xff]
      %v1067 = vld [vmem:[%s400 + $0x19] sm:$0xff]
      %v1068 = vld [vmem:[%s400 + $0x21] sm:$0xff]
      %v1069 = vld [vmem:[%s400 + $0x31] sm:$0xff]
      %v1070 = vld [vmem:[%s400 + $0x39] sm:$0xff]
      %v1071 = vld [vmem:[%s400 + $0x49] sm:$0xff]
      %v1072 = vld [vmem:[%s400 + $0x51] sm:$0xff]
      %v1073 = vld [vmem:[%s400 + $0x61] sm:$0xff]
      %v1074 = vld [vmem:[%s400 + $0x69] sm:$0xff]
      %v1075 = vld [vmem:[%s400 + $0x79] sm:$0xff]
      %v1076 = vld [vmem:[%s400 + $0x81] sm:$0xff]
      %v1077 = vld [vmem:[%s400 + $0x91] sm:$0xff]
      %v1078 = vld [vmem:[%s400 + $0x99] sm:$0xff]
      %v1079 = vld [vmem:[%s400 + $0xa9] sm:$0xff]
      %v1080 = vld [vmem:[%s400 + $0xb1] sm:$0xff]
      %v1081 = vpack.c.bf16 %v1066, %v1065
      %v1082 = vpack.c.bf16 %v1068, %v1067
      %v1083 = vpack.c.bf16 %v1070, %v1069
      %v1084 = vpack.c.bf16 %v1072, %v1071
      %v1085 = vpack.c.bf16 %v1074, %v1073
      %v1086 = vpack.c.bf16 %v1076, %v1075
      %v1087 = vpack.c.bf16 %v1078, %v1077
      %v1088 = vpack.c.bf16 %v1080, %v1079
      %s1089 = scalar_lea.vmem %s1, 8
      %v1090 = vld [vmem:[%s1089] sm:$0x3]
      %v1092 = vsel %vm226, %v1081, 0
      %v1095 = vsel %vm226, %v1082, 0
      %v1098 = vsel %vm226, %v1083, 0
      %v1101 = vsel %vm226, %v1084, 0
      %v1104 = vsel %vm226, %v1085, 0
      %v1107 = vsel %vm226, %v1086, 0
      %v1110 = vsel %vm226, %v1087, 0
      %v1113 = vsel %vm226, %v1088, 0
      %v1116 = vsel %vm508, %v1090, 0
      %1118 = vmatprep.subr.bf16.mxu0 0
      %1119 = vmatpush1.bf16.msra.mxu0 %v1116
      %1120 = vmatprep.subr.bf16.mxu0 0
      %1121 = vmatpush1.bf16.msra.mxu0 0
      %1122 = vmatprep.subr.bf16.mxu0 0
      %1123 = vmatpush1.bf16.msra.mxu0 0
      %1124 = vmatprep.subr.bf16.mxu0 0
      %1125 = vmatpush1.bf16.msra.mxu0 0
      %1126 = vmatprep.subr.bf16.mxu0 0
      %1127 = vmatpush1.bf16.msra.mxu0 0
      %1128 = vmatprep.subr.bf16.mxu0 0
      %1129 = vmatpush1.bf16.msra.mxu0 0
      %1130 = vmatprep.subr.bf16.mxu0 0
      %1131 = vmatpush1.bf16.msra.mxu0 0
      %1132 = vmatprep.subr.bf16.mxu0 0
      %1133 = vmatpush1.bf16.msra.mxu0 0
      %1134 = vmatprep.subr.bf16.mxu0 0
      %1135 = vmatpush1.bf16.msra.mxu0 0
      %1136 = vmatprep.subr.bf16.mxu0 0
      %1137 = vmatpush1.bf16.msra.mxu0 0
      %1138 = vmatprep.subr.bf16.mxu0 0
      %1139 = vmatpush1.bf16.msra.mxu0 0
      %1140 = vmatprep.subr.bf16.mxu0 0
      %1141 = vmatpush1.bf16.msra.mxu0 0
      %1142 = vmatprep.subr.bf16.mxu0 0
      %1143 = vmatpush1.bf16.msra.mxu0 0
      %1144 = vmatprep.subr.bf16.mxu0 0
      %1145 = vmatpush1.bf16.msra.mxu0 0
      %1146 = vmatprep.subr.bf16.mxu0 0
      %1147 = vmatpush1.bf16.msra.mxu0 0
      %1148 = vmatprep.subr.bf16.mxu0 0
      %1149 = vmatpush1.bf16.msra.mxu0 0
      %1150 = vmatprep.mubr.bf16.mxu0 0
      %1151 = vmatmul.mubr.bf16.gmra.mrb[0].mxu0 %v1092
      %v1152 = vpop.f32.mrb[0].mxu0
      %v1153 = vadd.f32 0.0, %v1152
      %v1154 = vpop.f32.mrb[0].mxu0
      %v1155 = vpop.f32.mrb[0].mxu0
      %v1156 = vadd.f32 0.0, %v1155
      %v1157 = vpop.f32.mrb[0].mxu0
      %1158 = vmatprep.mubr.bf16.mxu0 0
      %1159 = vmatmul.mubr.bf16.gmra.mrb[0].mxu0 %v1095
      %v1160 = vpop.f32.mrb[0].mxu0
      %v1161 = vadd.f32 0.0, %v1160
      %v1162 = vpop.f32.mrb[0].mxu0
      %v1163 = vpop.f32.mrb[0].mxu0
      %v1164 = vadd.f32 0.0, %v1163
      %v1165 = vpop.f32.mrb[0].mxu0
      %1166 = vmatprep.mubr.bf16.mxu0 0
      %1167 = vmatmul.mubr.bf16.gmra.mrb[0].mxu0 %v1098
      %v1168 = vpop.f32.mrb[0].mxu0
      %v1169 = vadd.f32 0.0, %v1168
      %v1170 = vpop.f32.mrb[0].mxu0
      %v1171 = vpop.f32.mrb[0].mxu0
      %v1172 = vadd.f32 0.0, %v1171
      %v1173 = vpop.f32.mrb[0].mxu0
      %1174 = vmatprep.mubr.bf16.mxu0 0
      %1175 = vmatmul.mubr.bf16.gmra.mrb[0].mxu0 %v1101
      %v1176 = vpop.f32.mrb[0].mxu0
      %v1177 = vadd.f32 0.0, %v1176
      %v1178 = vpop.f32.mrb[0].mxu0
      %v1179 = vpop.f32.mrb[0].mxu0
      %v1180 = vadd.f32 0.0, %v1179
      %v1181 = vpop.f32.mrb[0].mxu0
      %1182 = vmatprep.mubr.bf16.mxu0 0
      %1183 = vmatmul.mubr.bf16.gmra.mrb[0].mxu0 %v1104
      %v1184 = vpop.f32.mrb[0].mxu0
      %v1185 = vadd.f32 0.0, %v1184
      %v1186 = vpop.f32.mrb[0].mxu0
      %v1187 = vpop.f32.mrb[0].mxu0
      %v1188 = vadd.f32 0.0, %v1187
      %v1189 = vpop.f32.mrb[0].mxu0
      %1190 = vmatprep.mubr.bf16.mxu0 0
      %1191 = vmatmul.mubr.bf16.gmra.mrb[0].mxu0 %v1107
      %v1192 = vpop.f32.mrb[0].mxu0
      %v1193 = vadd.f32 0.0, %v1192
      %v1194 = vpop.f32.mrb[0].mxu0
      %v1195 = vpop.f32.mrb[0].mxu0
      %v1196 = vadd.f32 0.0, %v1195
      %v1197 = vpop.f32.mrb[0].mxu0
      %1198 = vmatprep.mubr.bf16.mxu0 0
      %1199 = vmatmul.mubr.bf16.gmra.mrb[0].mxu0 %v1110
      %v1200 = vpop.f32.mrb[0].mxu0
      %v1201 = vadd.f32 0.0, %v1200
      %v1202 = vpop.f32.mrb[0].mxu0
      %v1203 = vpop.f32.mrb[0].mxu0
      %v1204 = vadd.f32 0.0, %v1203
      %v1205 = vpop.f32.mrb[0].mxu0
      %1206 = vmatprep.mubr.bf16.mxu0 0
      %1207 = vmatmul.mubr.bf16.gmra.mrb[0].mxu0 %v1113
      %v1208 = vpop.f32.mrb[0].mxu0
      %v1209 = vadd.f32 0.0, %v1208
      %v1210 = vpop.f32.mrb[0].mxu0
      %v1211 = vpop.f32.mrb[0].mxu0
      %v1212 = vadd.f32 0.0, %v1211
      %v1213 = vpop.f32.mrb[0].mxu0
      %1214 = vdwg.mxu0
      %v1215 = vadd.f32 %v1049, %v1153
      %v1216 = vadd.f32 %v1050, %v1156
      %v1217 = vadd.f32 %v1051, %v1161
      %v1218 = vadd.f32 %v1052, %v1164
      %v1219 = vadd.f32 %v1053, %v1169
      %v1220 = vadd.f32 %v1054, %v1172
      %v1221 = vadd.f32 %v1055, %v1177
      %v1222 = vadd.f32 %v1056, %v1180
      %v1223 = vadd.f32 %v1057, %v1185
      %v1224 = vadd.f32 %v1058, %v1188
      %v1225 = vadd.f32 %v1059, %v1193
      %v1226 = vadd.f32 %v1060, %v1196
      %v1227 = vadd.f32 %v1061, %v1201
      %v1228 = vadd.f32 %v1062, %v1204
      %v1229 = vadd.f32 %v1063, %v1209
      %v1230 = vadd.f32 %v1064, %v1212
      %v1231 = vld [vmem:[%s400 + $0x2] sm:$0xff]
      %v1232 = vld [vmem:[%s400 + $0xa] sm:$0xff]
      %v1233 = vld [vmem:[%s400 + $0x1a] sm:$0xff]
      %v1234 = vld [vmem:[%s400 + $0x22] sm:$0xff]
      %v1235 = vld [vmem:[%s400 + $0x32] sm:$0xff]
      %v1236 = vld [vmem:[%s400 + $0x3a] sm:$0xff]
      %v1237 = vld [vmem:[%s400 + $0x4a] sm:$0xff]
      %v1238 = vld [vmem:[%s400 + $0x52] sm:$0xff]
      %v1239 = vld [vmem:[%s400 + $0x62] sm:$0xff]
      %v1240 = vld [vmem:[%s400 + $0x6a] sm:$0xff]
      %v1241 = vld [vmem:[%s400 + $0x7a] sm:$0xff]
      %v1242 = vld [vmem:[%s400 + $0x82] sm:$0xff]
      %v1243 = vld [vmem:[%s400 + $0x92] sm:$0xff]
      %v1244 = vld [vmem:[%s400 + $0x9a] sm:$0xff]
      %v1245 = vld [vmem:[%s400 + $0xaa] sm:$0xff]
      %v1246 = vld [vmem:[%s400 + $0xb2] sm:$0xff]
      %v1247 = vpack.c.bf16 %v1232, %v1231
      %v1248 = vpack.c.bf16 %v1234, %v1233
      %v1249 = vpack.c.bf16 %v1236, %v1235
      %v1250 = vpack.c.bf16 %v1238, %v1237
      %v1251 = vpack.c.bf16 %v1240, %v1239
      %v1252 = vpack.c.bf16 %v1242, %v1241
      %v1253 = vpack.c.bf16 %v1244, %v1243
      %v1254 = vpack.c.bf16 %v1246, %v1245
      %s1255 = scalar_lea.vmem %s1, 10
      %v1256 = vld [vmem:[%s1255] sm:$0x3]
      %v1258 = vsel %vm226, %v1247, 0
      %v1261 = vsel %vm226, %v1248, 0
      %v1264 = vsel %vm226, %v1249, 0
      %v1267 = vsel %vm226, %v1250, 0
      %v1270 = vsel %vm226, %v1251, 0
      %v1273 = vsel %vm226, %v1252, 0
      %v1276 = vsel %vm226, %v1253, 0
      %v1279 = vsel %vm226, %v1254, 0
      %v1282 = vsel %vm508, %v1256, 0
      %1284 = vmatprep.subr.bf16.mxu0 0
      %1285 = vmatpush1.bf16.msra.mxu0 %v1282
      %1286 = vmatprep.subr.bf16.mxu0 0
      %1287 = vmatpush1.bf16.msra.mxu0 0
      %1288 = vmatprep.subr.bf16.mxu0 0
      %1289 = vmatpush1.bf16.msra.mxu0 0
      %1290 = vmatprep.subr.bf16.mxu0 0
      %1291 = vmatpush1.bf16.msra.mxu0 0
      %1292 = vmatprep.subr.bf16.mxu0 0
      %1293 = vmatpush1.bf16.msra.mxu0 0
      %1294 = vmatprep.subr.bf16.mxu0 0
      %1295 = vmatpush1.bf16.msra.mxu0 0
      %1296 = vmatprep.subr.bf16.mxu0 0
      %1297 = vmatpush1.bf16.msra.mxu0 0
      %1298 = vmatprep.subr.bf16.mxu0 0
      %1299 = vmatpush1.bf16.msra.mxu0 0
      %1300 = vmatprep.subr.bf16.mxu0 0
      %1301 = vmatpush1.bf16.msra.mxu0 0
      %1302 = vmatprep.subr.bf16.mxu0 0
      %1303 = vmatpush1.bf16.msra.mxu0 0
      %1304 = vmatprep.subr.bf16.mxu0 0
      %1305 = vmatpush1.bf16.msra.mxu0 0
      %1306 = vmatprep.subr.bf16.mxu0 0
      %1307 = vmatpush1.bf16.msra.mxu0 0
      %1308 = vmatprep.subr.bf16.mxu0 0
      %1309 = vmatpush1.bf16.msra.mxu0 0
      %1310 = vmatprep.subr.bf16.mxu0 0
      %1311 = vmatpush1.bf16.msra.mxu0 0
      %1312 = vmatprep.subr.bf16.mxu0 0
      %1313 = vmatpush1.bf16.msra.mxu0 0
      %1314 = vmatprep.subr.bf16.mxu0 0
      %1315 = vmatpush1.bf16.msra.mxu0 0
      %1316 = vmatprep.mubr.bf16.mxu0 0
      %1317 = vmatmul.mubr.bf16.gmra.mrb[0].mxu0 %v1258
      %v1318 = vpop.f32.mrb[0].mxu0
      %v1319 = vadd.f32 0.0, %v1318
      %v1320 = vpop.f32.mrb[0].mxu0
      %v1321 = vpop.f32.mrb[0].mxu0
      %v1322 = vadd.f32 0.0, %v1321
      %v1323 = vpop.f32.mrb[0].mxu0
      %1324 = vmatprep.mubr.bf16.mxu0 0
      %1325 = vmatmul.mubr.bf16.gmra.mrb[0].mxu0 %v1261
      %v1326 = vpop.f32.mrb[0].mxu0
      %v1327 = vadd.f32 0.0, %v1326
      %v1328 = vpop.f32.mrb[0].mxu0
      %v1329 = vpop.f32.mrb[0].mxu0
      %v1330 = vadd.f32 0.0, %v1329
      %v1331 = vpop.f32.mrb[0].mxu0
      %1332 = vmatprep.mubr.bf16.mxu0 0
      %1333 = vmatmul.mubr.bf16.gmra.mrb[0].mxu0 %v1264
      %v1334 = vpop.f32.mrb[0].mxu0
      %v1335 = vadd.f32 0.0, %v1334
      %v1336 = vpop.f32.mrb[0].mxu0
      %v1337 = vpop.f32.mrb[0].mxu0
      %v1338 = vadd.f32 0.0, %v1337
      %v1339 = vpop.f32.mrb[0].mxu0
      %1340 = vmatprep.mubr.bf16.mxu0 0
      %1341 = vmatmul.mubr.bf16.gmra.mrb[0].mxu0 %v1267
      %v1342 = vpop.f32.mrb[0].mxu0
      %v1343 = vadd.f32 0.0, %v1342
      %v1344 = vpop.f32.mrb[0].mxu0
      %v1345 = vpop.f32.mrb[0].mxu0
      %v1346 = vadd.f32 0.0, %v1345
      %v1347 = vpop.f32.mrb[0].mxu0
      %1348 = vmatprep.mubr.bf16.mxu0 0
      %1349 = vmatmul.mubr.bf16.gmra.mrb[0].mxu0 %v1270
      %v1350 = vpop.f32.mrb[0].mxu0
      %v1351 = vadd.f32 0.0, %v1350
      %v1352 = vpop.f32.mrb[0].mxu0
      %v1353 = vpop.f32.mrb[0].mxu0
      %v1354 = vadd.f32 0.0, %v1353
      %v1355 = vpop.f32.mrb[0].mxu0
      %1356 = vmatprep.mubr.bf16.mxu0 0
      %1357 = vmatmul.mubr.bf16.gmra.mrb[0].mxu0 %v1273
      %v1358 = vpop.f32.mrb[0].mxu0
      %v1359 = vadd.f32 0.0, %v1358
      %v1360 = vpop.f32.mrb[0].mxu0
      %v1361 = vpop.f32.mrb[0].mxu0
      %v1362 = vadd.f32 0.0, %v1361
      %v1363 = vpop.f32.mrb[0].mxu0
      %1364 = vmatprep.mubr.bf16.mxu0 0
      %1365 = vmatmul.mubr.bf16.gmra.mrb[0].mxu0 %v1276
      %v1366 = vpop.f32.mrb[0].mxu0
      %v1367 = vadd.f32 0.0, %v1366
      %v1368 = vpop.f32.mrb[0].mxu0
      %v1369 = vpop.f32.mrb[0].mxu0
      %v1370 = vadd.f32 0.0, %v1369
      %v1371 = vpop.f32.mrb[0].mxu0
      %1372 = vmatprep.mubr.bf16.mxu0 0
      %1373 = vmatmul.mubr.bf16.gmra.mrb[0].mxu0 %v1279
      %v1374 = vpop.f32.mrb[0].mxu0
      %v1375 = vadd.f32 0.0, %v1374
      %v1376 = vpop.f32.mrb[0].mxu0
      %v1377 = vpop.f32.mrb[0].mxu0
      %v1378 = vadd.f32 0.0, %v1377
      %v1379 = vpop.f32.mrb[0].mxu0
      %1380 = vdwg.mxu0
      %v1381 = vadd.f32 %v1215, %v1319
      %v1382 = vadd.f32 %v1216, %v1322
      %v1383 = vadd.f32 %v1217, %v1327
      %v1384 = vadd.f32 %v1218, %v1330
      %v1385 = vadd.f32 %v1219, %v1335
      %v1386 = vadd.f32 %v1220, %v1338
      %v1387 = vadd.f32 %v1221, %v1343
      %v1388 = vadd.f32 %v1222, %v1346
      %v1389 = vadd.f32 %v1223, %v1351
      %v1390 = vadd.f32 %v1224, %v1354
      %v1391 = vadd.f32 %v1225, %v1359
      %v1392 = vadd.f32 %v1226, %v1362
      %v1393 = vadd.f32 %v1227, %v1367
      %v1394 = vadd.f32 %v1228, %v1370
      %v1395 = vadd.f32 %v1229, %v1375
      %v1396 = vadd.f32 %v1230, %v1378
      %s1397 = scalar_lea.vmem [#allocation2], 48
      %v1398 = vld [vmem:[%s1397] sm:$0xff]
      %v1399 = vld [vmem:[%s1397 + $0x8] sm:$0xff]
      %v1400 = vld [vmem:[%s1397 + $0x18] sm:$0xff]
      %v1401 = vld [vmem:[%s1397 + $0x20] sm:$0xff]
      %v1402 = vld [vmem:[%s1397 + $0x30] sm:$0xff]
      %v1403 = vld [vmem:[%s1397 + $0x38] sm:$0xff]
      %v1404 = vld [vmem:[%s1397 + $0x48] sm:$0xff]
      %v1405 = vld [vmem:[%s1397 + $0x50] sm:$0xff]
      %v1406 = vld [vmem:[%s1397 + $0x60] sm:$0xff]
      %v1407 = vld [vmem:[%s1397 + $0x68] sm:$0xff]
      %v1408 = vld [vmem:[%s1397 + $0x78] sm:$0xff]
      %v1409 = vld [vmem:[%s1397 + $0x80] sm:$0xff]
      %v1410 = vld [vmem:[%s1397 + $0x90] sm:$0xff]
      %v1411 = vld [vmem:[%s1397 + $0x98] sm:$0xff]
      %v1412 = vld [vmem:[%s1397 + $0xa8] sm:$0xff]
      %v1413 = vld [vmem:[%s1397 + $0xb0] sm:$0xff]
      %v1414 = vpack.c.bf16 %v1399, %v1398
      %v1415 = vpack.c.bf16 %v1401, %v1400
      %v1416 = vpack.c.bf16 %v1403, %v1402
      %v1417 = vpack.c.bf16 %v1405, %v1404
      %v1418 = vpack.c.bf16 %v1407, %v1406
      %v1419 = vpack.c.bf16 %v1409, %v1408
      %v1420 = vpack.c.bf16 %v1411, %v1410
      %v1421 = vpack.c.bf16 %v1413, %v1412
      %s1422 = scalar_lea.vmem %s1, 12
      %v1423 = vld [vmem:[%s1422] sm:$0x3]
      %v1425 = vsel %vm226, %v1414, 0
      %v1428 = vsel %vm226, %v1415, 0
      %v1431 = vsel %vm226, %v1416, 0
      %v1434 = vsel %vm226, %v1417, 0
      %v1437 = vsel %vm226, %v1418, 0
      %v1440 = vsel %vm226, %v1419, 0
      %v1443 = vsel %vm226, %v1420, 0
      %v1446 = vsel %vm226, %v1421, 0
      %v1449 = vsel %vm508, %v1423, 0
      %1451 = vmatprep.subr.bf16.mxu0 0
      %1452 = vmatpush1.bf16.msra.mxu0 %v1449
      %1453 = vmatprep.subr.bf16.mxu0 0
      %1454 = vmatpush1.bf16.msra.mxu0 0
      %1455 = vmatprep.subr.bf16.mxu0 0
      %1456 = vmatpush1.bf16.msra.mxu0 0
      %1457 = vmatprep.subr.bf16.mxu0 0
      %1458 = vmatpush1.bf16.msra.mxu0 0
      %1459 = vmatprep.subr.bf16.mxu0 0
      %1460 = vmatpush1.bf16.msra.mxu0 0
      %1461 = vmatprep.subr.bf16.mxu0 0
      %1462 = vmatpush1.bf16.msra.mxu0 0
      %1463 = vmatprep.subr.bf16.mxu0 0
      %1464 = vmatpush1.bf16.msra.mxu0 0
      %1465 = vmatprep.subr.bf16.mxu0 0
      %1466 = vmatpush1.bf16.msra.mxu0 0
      %1467 = vmatprep.subr.bf16.mxu0 0
      %1468 = vmatpush1.bf16.msra.mxu0 0
      %1469 = vmatprep.subr.bf16.mxu0 0
      %1470 = vmatpush1.bf16.msra.mxu0 0
      %1471 = vmatprep.subr.bf16.mxu0 0
      %1472 = vmatpush1.bf16.msra.mxu0 0
      %1473 = vmatprep.subr.bf16.mxu0 0
      %1474 = vmatpush1.bf16.msra.mxu0 0
      %1475 = vmatprep.subr.bf16.mxu0 0
      %1476 = vmatpush1.bf16.msra.mxu0 0
      %1477 = vmatprep.subr.bf16.mxu0 0
      %1478 = vmatpush1.bf16.msra.mxu0 0
      %1479 = vmatprep.subr.bf16.mxu0 0
      %1480 = vmatpush1.bf16.msra.mxu0 0
      %1481 = vmatprep.subr.bf16.mxu0 0
      %1482 = vmatpush1.bf16.msra.mxu0 0
      %1483 = vmatprep.mubr.bf16.mxu0 0
      %1484 = vmatmul.mubr.bf16.gmra.mrb[0].mxu0 %v1425
      %v1485 = vpop.f32.mrb[0].mxu0
      %v1486 = vadd.f32 0.0, %v1485
      %v1487 = vpop.f32.mrb[0].mxu0
      %v1488 = vpop.f32.mrb[0].mxu0
      %v1489 = vadd.f32 0.0, %v1488
      %v1490 = vpop.f32.mrb[0].mxu0
      %1491 = vmatprep.mubr.bf16.mxu0 0
      %1492 = vmatmul.mubr.bf16.gmra.mrb[0].mxu0 %v1428
      %v1493 = vpop.f32.mrb[0].mxu0
      %v1494 = vadd.f32 0.0, %v1493
      %v1495 = vpop.f32.mrb[0].mxu0
      %v1496 = vpop.f32.mrb[0].mxu0
      %v1497 = vadd.f32 0.0, %v1496
      %v1498 = vpop.f32.mrb[0].mxu0
      %1499 = vmatprep.mubr.bf16.mxu0 0
      %1500 = vmatmul.mubr.bf16.gmra.mrb[0].mxu0 %v1431
      %v1501 = vpop.f32.mrb[0].mxu0
      %v1502 = vadd.f32 0.0, %v1501
      %v1503 = vpop.f32.mrb[0].mxu0
      %v1504 = vpop.f32.mrb[0].mxu0
      %v1505 = vadd.f32 0.0, %v1504
      %v1506 = vpop.f32.mrb[0].mxu0
      %1507 = vmatprep.mubr.bf16.mxu0 0
      %1508 = vmatmul.mubr.bf16.gmra.mrb[0].mxu0 %v1434
      %v1509 = vpop.f32.mrb[0].mxu0
      %v1510 = vadd.f32 0.0, %v1509
      %v1511 = vpop.f32.mrb[0].mxu0
      %v1512 = vpop.f32.mrb[0].mxu0
      %v1513 = vadd.f32 0.0, %v1512
      %v1514 = vpop.f32.mrb[0].mxu0
      %1515 = vmatprep.mubr.bf16.mxu0 0
      %1516 = vmatmul.mubr.bf16.gmra.mrb[0].mxu0 %v1437
      %v1517 = vpop.f32.mrb[0].mxu0
      %v1518 = vadd.f32 0.0, %v1517
      %v1519 = vpop.f32.mrb[0].mxu0
      %v1520 = vpop.f32.mrb[0].mxu0
      %v1521 = vadd.f32 0.0, %v1520
      %v1522 = vpop.f32.mrb[0].mxu0
      %1523 = vmatprep.mubr.bf16.mxu0 0
      %1524 = vmatmul.mubr.bf16.gmra.mrb[0].mxu0 %v1440
      %v1525 = vpop.f32.mrb[0].mxu0
      %v1526 = vadd.f32 0.0, %v1525
      %v1527 = vpop.f32.mrb[0].mxu0
      %v1528 = vpop.f32.mrb[0].mxu0
      %v1529 = vadd.f32 0.0, %v1528
      %v1530 = vpop.f32.mrb[0].mxu0
      %1531 = vmatprep.mubr.bf16.mxu0 0
      %1532 = vmatmul.mubr.bf16.gmra.mrb[0].mxu0 %v1443
      %v1533 = vpop.f32.mrb[0].mxu0
      %v1534 = vadd.f32 0.0, %v1533
      %v1535 = vpop.f32.mrb[0].mxu0
      %v1536 = vpop.f32.mrb[0].mxu0
      %v1537 = vadd.f32 0.0, %v1536
      %v1538 = vpop.f32.mrb[0].mxu0
      %1539 = vmatprep.mubr.bf16.mxu0 0
      %1540 = vmatmul.mubr.bf16.gmra.mrb[0].mxu0 %v1446
      %v1541 = vpop.f32.mrb[0].mxu0
      %v1542 = vadd.f32 0.0, %v1541
      %v1543 = vpop.f32.mrb[0].mxu0
      %v1544 = vpop.f32.mrb[0].mxu0
      %v1545 = vadd.f32 0.0, %v1544
      %v1546 = vpop.f32.mrb[0].mxu0
      %1547 = vdwg.mxu0
      %v1548 = vadd.f32 %v1381, %v1486
      %v1549 = vadd.f32 %v1382, %v1489
      %v1550 = vadd.f32 %v1383, %v1494
      %v1551 = vadd.f32 %v1384, %v1497
      %v1552 = vadd.f32 %v1385, %v1502
      %v1553 = vadd.f32 %v1386, %v1505
      %v1554 = vadd.f32 %v1387, %v1510
      %v1555 = vadd.f32 %v1388, %v1513
      %v1556 = vadd.f32 %v1389, %v1518
      %v1557 = vadd.f32 %v1390, %v1521
      %v1558 = vadd.f32 %v1391, %v1526
      %v1559 = vadd.f32 %v1392, %v1529
      %v1560 = vadd.f32 %v1393, %v1534
      %v1561 = vadd.f32 %v1394, %v1537
      %v1562 = vadd.f32 %v1395, %v1542
      %v1563 = vadd.f32 %v1396, %v1545
      %v1564 = vld [vmem:[%s1397 + $0x1] sm:$0xff]
      %v1565 = vld [vmem:[%s1397 + $0x9] sm:$0xff]
      %v1566 = vld [vmem:[%s1397 + $0x19] sm:$0xff]
      %v1567 = vld [vmem:[%s1397 + $0x21] sm:$0xff]
      %v1568 = vld [vmem:[%s1397 + $0x31] sm:$0xff]
      %v1569 = vld [vmem:[%s1397 + $0x39] sm:$0xff]
      %v1570 = vld [vmem:[%s1397 + $0x49] sm:$0xff]
      %v1571 = vld [vmem:[%s1397 + $0x51] sm:$0xff]
      %v1572 = vld [vmem:[%s1397 + $0x61] sm:$0xff]
      %v1573 = vld [vmem:[%s1397 + $0x69] sm:$0xff]
      %v1574 = vld [vmem:[%s1397 + $0x79] sm:$0xff]
      %v1575 = vld [vmem:[%s1397 + $0x81] sm:$0xff]
      %v1576 = vld [vmem:[%s1397 + $0x91] sm:$0xff]
      %v1577 = vld [vmem:[%s1397 + $0x99] sm:$0xff]
      %v1578 = vld [vmem:[%s1397 + $0xa9] sm:$0xff]
      %v1579 = vld [vmem:[%s1397 + $0xb1] sm:$0xff]
      %v1580 = vpack.c.bf16 %v1565, %v1564
      %v1581 = vpack.c.bf16 %v1567, %v1566
      %v1582 = vpack.c.bf16 %v1569, %v1568
      %v1583 = vpack.c.bf16 %v1571, %v1570
      %v1584 = vpack.c.bf16 %v1573, %v1572
      %v1585 = vpack.c.bf16 %v1575, %v1574
      %v1586 = vpack.c.bf16 %v1577, %v1576
      %v1587 = vpack.c.bf16 %v1579, %v1578
      %s1588 = scalar_lea.vmem %s1, 14
      %v1589 = vld [vmem:[%s1588] sm:$0x3]
      %v1591 = vsel %vm226, %v1580, 0
      %v1594 = vsel %vm226, %v1581, 0
      %v1597 = vsel %vm226, %v1582, 0
      %v1600 = vsel %vm226, %v1583, 0
      %v1603 = vsel %vm226, %v1584, 0
      %v1606 = vsel %vm226, %v1585, 0
      %v1609 = vsel %vm226, %v1586, 0
      %v1612 = vsel %vm226, %v1587, 0
      %v1615 = vsel %vm508, %v1589, 0
      %1617 = vmatprep.subr.bf16.mxu0 0
      %1618 = vmatpush1.bf16.msra.mxu0 %v1615
      %1619 = vmatprep.subr.bf16.mxu0 0
      %1620 = vmatpush1.bf16.msra.mxu0 0
      %1621 = vmatprep.subr.bf16.mxu0 0
      %1622 = vmatpush1.bf16.msra.mxu0 0
      %1623 = vmatprep.subr.bf16.mxu0 0
      %1624 = vmatpush1.bf16.msra.mxu0 0
      %1625 = vmatprep.subr.bf16.mxu0 0
      %1626 = vmatpush1.bf16.msra.mxu0 0
      %1627 = vmatprep.subr.bf16.mxu0 0
      %1628 = vmatpush1.bf16.msra.mxu0 0
      %1629 = vmatprep.subr.bf16.mxu0 0
      %1630 = vmatpush1.bf16.msra.mxu0 0
      %1631 = vmatprep.subr.bf16.mxu0 0
      %1632 = vmatpush1.bf16.msra.mxu0 0
      %1633 = vmatprep.subr.bf16.mxu0 0
      %1634 = vmatpush1.bf16.msra.mxu0 0
      %1635 = vmatprep.subr.bf16.mxu0 0
      %1636 = vmatpush1.bf16.msra.mxu0 0
      %1637 = vmatprep.subr.bf16.mxu0 0
      %1638 = vmatpush1.bf16.msra.mxu0 0
      %1639 = vmatprep.subr.bf16.mxu0 0
      %1640 = vmatpush1.bf16.msra.mxu0 0
      %1641 = vmatprep.subr.bf16.mxu0 0
      %1642 = vmatpush1.bf16.msra.mxu0 0
      %1643 = vmatprep.subr.bf16.mxu0 0
      %1644 = vmatpush1.bf16.msra.mxu0 0
      %1645 = vmatprep.subr.bf16.mxu0 0
      %1646 = vmatpush1.bf16.msra.mxu0 0
      %1647 = vmatprep.subr.bf16.mxu0 0
      %1648 = vmatpush1.bf16.msra.mxu0 0
      %1649 = vmatprep.mubr.bf16.mxu0 0
      %1650 = vmatmul.mubr.bf16.gmra.mrb[0].mxu0 %v1591
      %v1651 = vpop.f32.mrb[0].mxu0
      %v1652 = vadd.f32 0.0, %v1651
      %v1653 = vpop.f32.mrb[0].mxu0
      %v1654 = vpop.f32.mrb[0].mxu0
      %v1655 = vadd.f32 0.0, %v1654
      %v1656 = vpop.f32.mrb[0].mxu0
      %1657 = vmatprep.mubr.bf16.mxu0 0
      %1658 = vmatmul.mubr.bf16.gmra.mrb[0].mxu0 %v1594
      %v1659 = vpop.f32.mrb[0].mxu0
      %v1660 = vadd.f32 0.0, %v1659
      %v1661 = vpop.f32.mrb[0].mxu0
      %v1662 = vpop.f32.mrb[0].mxu0
      %v1663 = vadd.f32 0.0, %v1662
      %v1664 = vpop.f32.mrb[0].mxu0
      %1665 = vmatprep.mubr.bf16.mxu0 0
      %1666 = vmatmul.mubr.bf16.gmra.mrb[0].mxu0 %v1597
      %v1667 = vpop.f32.mrb[0].mxu0
      %v1668 = vadd.f32 0.0, %v1667
      %v1669 = vpop.f32.mrb[0].mxu0
      %v1670 = vpop.f32.mrb[0].mxu0
      %v1671 = vadd.f32 0.0, %v1670
      %v1672 = vpop.f32.mrb[0].mxu0
      %1673 = vmatprep.mubr.bf16.mxu0 0
      %1674 = vmatmul.mubr.bf16.gmra.mrb[0].mxu0 %v1600
      %v1675 = vpop.f32.mrb[0].mxu0
      %v1676 = vadd.f32 0.0, %v1675
      %v1677 = vpop.f32.mrb[0].mxu0
      %v1678 = vpop.f32.mrb[0].mxu0
      %v1679 = vadd.f32 0.0, %v1678
      %v1680 = vpop.f32.mrb[0].mxu0
      %1681 = vmatprep.mubr.bf16.mxu0 0
      %1682 = vmatmul.mubr.bf16.gmra.mrb[0].mxu0 %v1603
      %v1683 = vpop.f32.mrb[0].mxu0
      %v1684 = vadd.f32 0.0, %v1683
      %v1685 = vpop.f32.mrb[0].mxu0
      %v1686 = vpop.f32.mrb[0].mxu0
      %v1687 = vadd.f32 0.0, %v1686
      %v1688 = vpop.f32.mrb[0].mxu0
      %1689 = vmatprep.mubr.bf16.mxu0 0
      %1690 = vmatmul.mubr.bf16.gmra.mrb[0].mxu0 %v1606
      %v1691 = vpop.f32.mrb[0].mxu0
      %v1692 = vadd.f32 0.0, %v1691
      %v1693 = vpop.f32.mrb[0].mxu0
      %v1694 = vpop.f32.mrb[0].mxu0
      %v1695 = vadd.f32 0.0, %v1694
      %v1696 = vpop.f32.mrb[0].mxu0
      %1697 = vmatprep.mubr.bf16.mxu0 0
      %1698 = vmatmul.mubr.bf16.gmra.mrb[0].mxu0 %v1609
      %v1699 = vpop.f32.mrb[0].mxu0
      %v1700 = vadd.f32 0.0, %v1699
      %v1701 = vpop.f32.mrb[0].mxu0
      %v1702 = vpop.f32.mrb[0].mxu0
      %v1703 = vadd.f32 0.0, %v1702
      %v1704 = vpop.f32.mrb[0].mxu0
      %1705 = vmatprep.mubr.bf16.mxu0 0
      %1706 = vmatmul.mubr.bf16.gmra.mrb[0].mxu0 %v1612
      %v1707 = vpop.f32.mrb[0].mxu0
      %v1708 = vadd.f32 0.0, %v1707
      %v1709 = vpop.f32.mrb[0].mxu0
      %v1710 = vpop.f32.mrb[0].mxu0
      %v1711 = vadd.f32 0.0, %v1710
      %v1712 = vpop.f32.mrb[0].mxu0
      %1713 = vdwg.mxu0
      %v1714 = vadd.f32 %v1548, %v1652
      %v1715 = vadd.f32 %v1549, %v1655
      %v1716 = vadd.f32 %v1550, %v1660
      %v1717 = vadd.f32 %v1551, %v1663
      %v1718 = vadd.f32 %v1552, %v1668
      %v1719 = vadd.f32 %v1553, %v1671
      %v1720 = vadd.f32 %v1554, %v1676
      %v1721 = vadd.f32 %v1555, %v1679
      %v1722 = vadd.f32 %v1556, %v1684
      %v1723 = vadd.f32 %v1557, %v1687
      %v1724 = vadd.f32 %v1558, %v1692
      %v1725 = vadd.f32 %v1559, %v1695
      %v1726 = vadd.f32 %v1560, %v1700
      %v1727 = vadd.f32 %v1561, %v1703
      %v1728 = vadd.f32 %v1562, %v1708
      %v1729 = vadd.f32 %v1563, %v1711
      %v1730 = vld [vmem:[%s1397 + $0x2] sm:$0xff]
      %v1731 = vld [vmem:[%s1397 + $0xa] sm:$0xff]
      %v1732 = vld [vmem:[%s1397 + $0x1a] sm:$0xff]
      %v1733 = vld [vmem:[%s1397 + $0x22] sm:$0xff]
      %v1734 = vld [vmem:[%s1397 + $0x32] sm:$0xff]
      %v1735 = vld [vmem:[%s1397 + $0x3a] sm:$0xff]
      %v1736 = vld [vmem:[%s1397 + $0x4a] sm:$0xff]
      %v1737 = vld [vmem:[%s1397 + $0x52] sm:$0xff]
      %v1738 = vld [vmem:[%s1397 + $0x62] sm:$0xff]
      %v1739 = vld [vmem:[%s1397 + $0x6a] sm:$0xff]
      %v1740 = vld [vmem:[%s1397 + $0x7a] sm:$0xff]
      %v1741 = vld [vmem:[%s1397 + $0x82] sm:$0xff]
      %v1742 = vld [vmem:[%s1397 + $0x92] sm:$0xff]
      %v1743 = vld [vmem:[%s1397 + $0x9a] sm:$0xff]
      %v1744 = vld [vmem:[%s1397 + $0xaa] sm:$0xff]
      %v1745 = vld [vmem:[%s1397 + $0xb2] sm:$0xff]
      %v1746 = vpack.c.bf16 %v1731, %v1730
      %v1747 = vpack.c.bf16 %v1733, %v1732
      %v1748 = vpack.c.bf16 %v1735, %v1734
      %v1749 = vpack.c.bf16 %v1737, %v1736
      %v1750 = vpack.c.bf16 %v1739, %v1738
      %v1751 = vpack.c.bf16 %v1741, %v1740
      %v1752 = vpack.c.bf16 %v1743, %v1742
      %v1753 = vpack.c.bf16 %v1745, %v1744
      %s1754 = scalar_lea.vmem %s1, 16
      %v1755 = vld [vmem:[%s1754] sm:$0x3]
      %v1757 = vsel %vm226, %v1746, 0
      %v1760 = vsel %vm226, %v1747, 0
      %v1763 = vsel %vm226, %v1748, 0
      %v1766 = vsel %vm226, %v1749, 0
      %v1769 = vsel %vm226, %v1750, 0
      %v1772 = vsel %vm226, %v1751, 0
      %v1775 = vsel %vm226, %v1752, 0
      %v1778 = vsel %vm226, %v1753, 0
      %v1781 = vsel %vm508, %v1755, 0
      %1783 = vmatprep.subr.bf16.mxu0 0
      %1784 = vmatpush1.bf16.msra.mxu0 %v1781
      %1785 = vmatprep.subr.bf16.mxu0 0
      %1786 = vmatpush1.bf16.msra.mxu0 0
      %1787 = vmatprep.subr.bf16.mxu0 0
      %1788 = vmatpush1.bf16.msra.mxu0 0
      %1789 = vmatprep.subr.bf16.mxu0 0
      %1790 = vmatpush1.bf16.msra.mxu0 0
      %1791 = vmatprep.subr.bf16.mxu0 0
      %1792 = vmatpush1.bf16.msra.mxu0 0
      %1793 = vmatprep.subr.bf16.mxu0 0
      %1794 = vmatpush1.bf16.msra.mxu0 0
      %1795 = vmatprep.subr.bf16.mxu0 0
      %1796 = vmatpush1.bf16.msra.mxu0 0
      %1797 = vmatprep.subr.bf16.mxu0 0
      %1798 = vmatpush1.bf16.msra.mxu0 0
      %1799 = vmatprep.subr.bf16.mxu0 0
      %1800 = vmatpush1.bf16.msra.mxu0 0
      %1801 = vmatprep.subr.bf16.mxu0 0
      %1802 = vmatpush1.bf16.msra.mxu0 0
      %1803 = vmatprep.subr.bf16.mxu0 0
      %1804 = vmatpush1.bf16.msra.mxu0 0
      %1805 = vmatprep.subr.bf16.mxu0 0
      %1806 = vmatpush1.bf16.msra.mxu0 0
      %1807 = vmatprep.subr.bf16.mxu0 0
      %1808 = vmatpush1.bf16.msra.mxu0 0
      %1809 = vmatprep.subr.bf16.mxu0 0
      %1810 = vmatpush1.bf16.msra.mxu0 0
      %1811 = vmatprep.subr.bf16.mxu0 0
      %1812 = vmatpush1.bf16.msra.mxu0 0
      %1813 = vmatprep.subr.bf16.mxu0 0
      %1814 = vmatpush1.bf16.msra.mxu0 0
      %1815 = vmatprep.mubr.bf16.mxu0 0
      %1816 = vmatmul.mubr.bf16.gmra.mrb[0].mxu0 %v1757
      %v1817 = vpop.f32.mrb[0].mxu0
      %v1818 = vadd.f32 0.0, %v1817
      %v1819 = vpop.f32.mrb[0].mxu0
      %v1820 = vpop.f32.mrb[0].mxu0
      %v1821 = vadd.f32 0.0, %v1820
      %v1822 = vpop.f32.mrb[0].mxu0
      %1823 = vmatprep.mubr.bf16.mxu0 0
      %1824 = vmatmul.mubr.bf16.gmra.mrb[0].mxu0 %v1760
      %v1825 = vpop.f32.mrb[0].mxu0
      %v1826 = vadd.f32 0.0, %v1825
      %v1827 = vpop.f32.mrb[0].mxu0
      %v1828 = vpop.f32.mrb[0].mxu0
      %v1829 = vadd.f32 0.0, %v1828
      %v1830 = vpop.f32.mrb[0].mxu0
      %1831 = vmatprep.mubr.bf16.mxu0 0
      %1832 = vmatmul.mubr.bf16.gmra.mrb[0].mxu0 %v1763
      %v1833 = vpop.f32.mrb[0].mxu0
      %v1834 = vadd.f32 0.0, %v1833
      %v1835 = vpop.f32.mrb[0].mxu0
      %v1836 = vpop.f32.mrb[0].mxu0
      %v1837 = vadd.f32 0.0, %v1836
      %v1838 = vpop.f32.mrb[0].mxu0
      %1839 = vmatprep.mubr.bf16.mxu0 0
      %1840 = vmatmul.mubr.bf16.gmra.mrb[0].mxu0 %v1766
      %v1841 = vpop.f32.mrb[0].mxu0
      %v1842 = vadd.f32 0.0, %v1841
      %v1843 = vpop.f32.mrb[0].mxu0
      %v1844 = vpop.f32.mrb[0].mxu0
      %v1845 = vadd.f32 0.0, %v1844
      %v1846 = vpop.f32.mrb[0].mxu0
      %1847 = vmatprep.mubr.bf16.mxu0 0
      %1848 = vmatmul.mubr.bf16.gmra.mrb[0].mxu0 %v1769
      %v1849 = vpop.f32.mrb[0].mxu0
      %v1850 = vadd.f32 0.0, %v1849
      %v1851 = vpop.f32.mrb[0].mxu0
      %v1852 = vpop.f32.mrb[0].mxu0
      %v1853 = vadd.f32 0.0, %v1852
      %v1854 = vpop.f32.mrb[0].mxu0
      %1855 = vmatprep.mubr.bf16.mxu0 0
      %1856 = vmatmul.mubr.bf16.gmra.mrb[0].mxu0 %v1772
      %v1857 = vpop.f32.mrb[0].mxu0
      %v1858 = vadd.f32 0.0, %v1857
      %v1859 = vpop.f32.mrb[0].mxu0
      %v1860 = vpop.f32.mrb[0].mxu0
      %v1861 = vadd.f32 0.0, %v1860
      %v1862 = vpop.f32.mrb[0].mxu0
      %1863 = vmatprep.mubr.bf16.mxu0 0
      %1864 = vmatmul.mubr.bf16.gmra.mrb[0].mxu0 %v1775
      %v1865 = vpop.f32.mrb[0].mxu0
      %v1866 = vadd.f32 0.0, %v1865
      %v1867 = vpop.f32.mrb[0].mxu0
      %v1868 = vpop.f32.mrb[0].mxu0
      %v1869 = vadd.f32 0.0, %v1868
      %v1870 = vpop.f32.mrb[0].mxu0
      %1871 = vmatprep.mubr.bf16.mxu0 0
      %1872 = vmatmul.mubr.bf16.gmra.mrb[0].mxu0 %v1778
      %v1873 = vpop.f32.mrb[0].mxu0
      %v1874 = vadd.f32 0.0, %v1873
      %v1875 = vpop.f32.mrb[0].mxu0
      %v1876 = vpop.f32.mrb[0].mxu0
      %v1877 = vadd.f32 0.0, %v1876
      %v1878 = vpop.f32.mrb[0].mxu0
      %1879 = vdwg.mxu0
      %v1880 = vadd.f32 %v1714, %v1818
      %v1881 = vadd.f32 %v1715, %v1821
      %v1882 = vadd.f32 %v1716, %v1826
      %v1883 = vadd.f32 %v1717, %v1829
      %v1884 = vadd.f32 %v1718, %v1834
      %v1885 = vadd.f32 %v1719, %v1837
      %v1886 = vadd.f32 %v1720, %v1842
      %v1887 = vadd.f32 %v1721, %v1845
      %v1888 = vadd.f32 %v1722, %v1850
      %v1889 = vadd.f32 %v1723, %v1853
      %v1890 = vadd.f32 %v1724, %v1858
      %v1891 = vadd.f32 %v1725, %v1861
      %v1892 = vadd.f32 %v1726, %v1866
      %v1893 = vadd.f32 %v1727, %v1869
      %v1894 = vadd.f32 %v1728, %v1874
      %v1895 = vadd.f32 %v1729, %v1877
      %v1896 = vld [vmem:[%s2] sm:$0x1]
      %v1898 = vlaneseq
      %v1899 = vshrl.u32 %v1898, 7
      %v1900 = vsub.s32 0, %v1899
      %v1901 = vrot.slane %v1896, %v1900
      %v1903 = vadd.f32 %v1880, %v1901
      %v1904 = vadd.f32 %v1881, %v1901
      %v1905 = vadd.f32 %v1882, %v1901
      %v1906 = vadd.f32 %v1883, %v1901
      %v1907 = vadd.f32 %v1884, %v1901
      %v1908 = vadd.f32 %v1885, %v1901
      %v1909 = vadd.f32 %v1886, %v1901
      %v1910 = vadd.f32 %v1887, %v1901
      %v1911 = vadd.f32 %v1888, %v1901
      %v1912 = vadd.f32 %v1889, %v1901
      %v1913 = vadd.f32 %v1890, %v1901
      %v1914 = vadd.f32 %v1891, %v1901
      %v1915 = vadd.f32 %v1892, %v1901
      %v1916 = vadd.f32 %v1893, %v1901
      %v1917 = vadd.f32 %v1894, %v1901
      %v1918 = vadd.f32 %v1895, %v1901
      %v1919 = vsub.f32 0.0, %v1903
      %v1920 = vsub.f32 0.0, %v1904
      %v1921 = vsub.f32 0.0, %v1905
      %v1922 = vsub.f32 0.0, %v1906
      %v1923 = vsub.f32 0.0, %v1907
      %v1924 = vsub.f32 0.0, %v1908
      %v1925 = vsub.f32 0.0, %v1909
      %v1926 = vsub.f32 0.0, %v1910
      %v1927 = vsub.f32 0.0, %v1911
      %v1928 = vsub.f32 0.0, %v1912
      %v1929 = vsub.f32 0.0, %v1913
      %v1930 = vsub.f32 0.0, %v1914
      %v1931 = vsub.f32 0.0, %v1915
      %v1932 = vsub.f32 0.0, %v1916
      %v1933 = vsub.f32 0.0, %v1917
      %v1934 = vsub.f32 0.0, %v1918
      %v1935 = vmul.f32 %v1919, 1.442695
      %v1936 = vpow.pop %v1935
      %v1937 = vmul.f32 %v1920, 1.442695
      %v1938 = vpow.pop %v1937
      %v1939 = vmul.f32 %v1921, 1.442695
      %v1940 = vpow.pop %v1939
      %v1941 = vmul.f32 %v1922, 1.442695
      %v1942 = vpow.pop %v1941
      %v1943 = vmul.f32 %v1923, 1.442695
      %v1944 = vpow.pop %v1943
      %v1945 = vmul.f32 %v1924, 1.442695
      %v1946 = vpow.pop %v1945
      %v1947 = vmul.f32 %v1925, 1.442695
      %v1948 = vpow.pop %v1947
      %v1949 = vmul.f32 %v1926, 1.442695
      %v1950 = vpow.pop %v1949
      %v1951 = vmul.f32 %v1927, 1.442695
      %v1952 = vpow.pop %v1951
      %v1953 = vmul.f32 %v1928, 1.442695
      %v1954 = vpow.pop %v1953
      %v1955 = vmul.f32 %v1929, 1.442695
      %v1956 = vpow.pop %v1955
      %v1957 = vmul.f32 %v1930, 1.442695
      %v1958 = vpow.pop %v1957
      %v1959 = vmul.f32 %v1931, 1.442695
      %v1960 = vpow.pop %v1959
      %v1961 = vmul.f32 %v1932, 1.442695
      %v1962 = vpow.pop %v1961
      %v1963 = vmul.f32 %v1933, 1.442695
      %v1964 = vpow.pop %v1963
      %v1965 = vmul.f32 %v1934, 1.442695
      %v1966 = vpow.pop %v1965
      %v1967 = vadd.f32 %v1936, 1.0
      %v1968 = vadd.f32 %v1938, 1.0
      %v1969 = vadd.f32 %v1940, 1.0
      %v1970 = vadd.f32 %v1942, 1.0
      %v1971 = vadd.f32 %v1944, 1.0
      %v1972 = vadd.f32 %v1946, 1.0
      %v1973 = vadd.f32 %v1948, 1.0
      %v1974 = vadd.f32 %v1950, 1.0
      %v1975 = vadd.f32 %v1952, 1.0
      %v1976 = vadd.f32 %v1954, 1.0
      %v1977 = vadd.f32 %v1956, 1.0
      %v1978 = vadd.f32 %v1958, 1.0
      %v1979 = vadd.f32 %v1960, 1.0
      %v1980 = vadd.f32 %v1962, 1.0
      %v1981 = vadd.f32 %v1964, 1.0
      %v1982 = vadd.f32 %v1966, 1.0
      %v1983 = vrcp.pop %v1967
      %v1984 = vmul.f32 1.0, %v1983
      %v1985 = vrcp.pop %v1968
      %v1986 = vmul.f32 1.0, %v1985
      %v1987 = vrcp.pop %v1969
      %v1988 = vmul.f32 1.0, %v1987
      %v1989 = vrcp.pop %v1970
      %v1990 = vmul.f32 1.0, %v1989
      %v1991 = vrcp.pop %v1971
      %v1992 = vmul.f32 1.0, %v1991
      %v1993 = vrcp.pop %v1972
      %v1994 = vmul.f32 1.0, %v1993
      %v1995 = vrcp.pop %v1973
      %v1996 = vmul.f32 1.0, %v1995
      %v1997 = vrcp.pop %v1974
      %v1998 = vmul.f32 1.0, %v1997
      %v1999 = vrcp.pop %v1975
      %v2000 = vmul.f32 1.0, %v1999
      %v2001 = vrcp.pop %v1976
      %v2002 = vmul.f32 1.0, %v2001
      %v2003 = vrcp.pop %v1977
      %v2004 = vmul.f32 1.0, %v2003
      %v2005 = vrcp.pop %v1978
      %v2006 = vmul.f32 1.0, %v2005
      %v2007 = vrcp.pop %v1979
      %v2008 = vmul.f32 1.0, %v2007
      %v2009 = vrcp.pop %v1980
      %v2010 = vmul.f32 1.0, %v2009
      %v2011 = vrcp.pop %v1981
      %v2012 = vmul.f32 1.0, %v2011
      %v2013 = vrcp.pop %v1982
      %v2014 = vmul.f32 1.0, %v2013
      %v2015 = vmul.f32 %v1903, %v1984
      %v2016 = vmul.f32 %v1904, %v1986
      %v2017 = vmul.f32 %v1905, %v1988
      %v2018 = vmul.f32 %v1906, %v1990
      %v2019 = vmul.f32 %v1907, %v1992
      %v2020 = vmul.f32 %v1908, %v1994
      %v2021 = vmul.f32 %v1909, %v1996
      %v2022 = vmul.f32 %v1910, %v1998
      %v2023 = vmul.f32 %v1911, %v2000
      %v2024 = vmul.f32 %v1912, %v2002
      %v2025 = vmul.f32 %v1913, %v2004
      %v2026 = vmul.f32 %v1914, %v2006
      %v2027 = vmul.f32 %v1915, %v2008
      %v2028 = vmul.f32 %v1916, %v2010
      %v2029 = vmul.f32 %v1917, %v2012
      %v2030 = vmul.f32 %v1918, %v2014
      %s2031 = scalar_lea.vmem [#allocation3], 24
      %2032 = vst.msk [vmem:[%s2031 + $0x1] sm:$0xff] %vm226, %v2015
      %2033 = vst.msk [vmem:[%s2031 + $0x9] sm:$0xff] %vm226, %v2016
      %2034 = vst.msk [vmem:[%s2031 + $0x19] sm:$0xff] %vm226, %v2017
      %2035 = vst.msk [vmem:[%s2031 + $0x21] sm:$0xff] %vm226, %v2018
      %2036 = vst.msk [vmem:[%s2031 + $0x31] sm:$0xff] %vm226, %v2019
      %2037 = vst.msk [vmem:[%s2031 + $0x39] sm:$0xff] %vm226, %v2020
      %2038 = vst.msk [vmem:[%s2031 + $0x49] sm:$0xff] %vm226, %v2021
      %2039 = vst.msk [vmem:[%s2031 + $0x51] sm:$0xff] %vm226, %v2022
      %2040 = vst.msk [vmem:[%s2031 + $0x61] sm:$0xff] %vm226, %v2023
      %2041 = vst.msk [vmem:[%s2031 + $0x69] sm:$0xff] %vm226, %v2024
      %2042 = vst.msk [vmem:[%s2031 + $0x79] sm:$0xff] %vm226, %v2025
      %2043 = vst.msk [vmem:[%s2031 + $0x81] sm:$0xff] %vm226, %v2026
      %2044 = vst.msk [vmem:[%s2031 + $0x91] sm:$0xff] %vm226, %v2027
      %2045 = vst.msk [vmem:[%s2031 + $0x99] sm:$0xff] %vm226, %v2028
      %2046 = vst.msk [vmem:[%s2031 + $0xa9] sm:$0xff] %vm226, %v2029
      %2047 = vst.msk [vmem:[%s2031 + $0xb1] sm:$0xff] %vm226, %v2030
      %s2048 = scalar_lea.vmem [#allocation2], 192
      %v2049 = vld [vmem:[%s2048] sm:$0xff]
      %v2050 = vld [vmem:[%s2048 + $0x8] sm:$0xff]
      %v2051 = vld [vmem:[%s2048 + $0x18] sm:$0xff]
      %v2052 = vld [vmem:[%s2048 + $0x20] sm:$0xff]
      %v2053 = vld [vmem:[%s2048 + $0x30] sm:$0xff]
      %v2054 = vld [vmem:[%s2048 + $0x38] sm:$0xff]
      %v2055 = vld [vmem:[%s2048 + $0x48] sm:$0xff]
      %v2056 = vld [vmem:[%s2048 + $0x50] sm:$0xff]
      %v2057 = vld [vmem:[%s2048 + $0x60] sm:$0xff]
      %v2058 = vld [vmem:[%s2048 + $0x68] sm:$0xff]
      %v2059 = vld [vmem:[%s2048 + $0x78] sm:$0xff]
      %v2060 = vld [vmem:[%s2048 + $0x80] sm:$0xff]
      %v2061 = vld [vmem:[%s2048 + $0x90] sm:$0xff]
      %v2062 = vld [vmem:[%s2048 + $0x98] sm:$0xff]
      %v2063 = vld [vmem:[%s2048 + $0xa8] sm:$0xff]
      %v2064 = vld [vmem:[%s2048 + $0xb0] sm:$0xff]
      %v2065 = vpack.c.bf16 %v2050, %v2049
      %v2066 = vpack.c.bf16 %v2052, %v2051
      %v2067 = vpack.c.bf16 %v2054, %v2053
      %v2068 = vpack.c.bf16 %v2056, %v2055
      %v2069 = vpack.c.bf16 %v2058, %v2057
      %v2070 = vpack.c.bf16 %v2060, %v2059
      %v2071 = vpack.c.bf16 %v2062, %v2061
      %v2072 = vpack.c.bf16 %v2064, %v2063
      %v2073 = vld [vmem:[%s1] sm:$0x3]
      %v2074 = vld [vmem:[%s2048 + $0x1] sm:$0xff]
      %v2075 = vld [vmem:[%s2048 + $0x9] sm:$0xff]
      %v2076 = vld [vmem:[%s2048 + $0x19] sm:$0xff]
      %v2077 = vld [vmem:[%s2048 + $0x21] sm:$0xff]
      %v2078 = vld [vmem:[%s2048 + $0x31] sm:$0xff]
      %v2079 = vld [vmem:[%s2048 + $0x39] sm:$0xff]
      %v2080 = vld [vmem:[%s2048 + $0x49] sm:$0xff]
      %v2081 = vld [vmem:[%s2048 + $0x51] sm:$0xff]
      %v2082 = vld [vmem:[%s2048 + $0x61] sm:$0xff]
      %v2083 = vld [vmem:[%s2048 + $0x69] sm:$0xff]
      %v2084 = vld [vmem:[%s2048 + $0x79] sm:$0xff]
      %v2085 = vld [vmem:[%s2048 + $0x81] sm:$0xff]
      %v2086 = vld [vmem:[%s2048 + $0x91] sm:$0xff]
      %v2087 = vld [vmem:[%s2048 + $0x99] sm:$0xff]
      %v2088 = vld [vmem:[%s2048 + $0xa9] sm:$0xff]
      %v2089 = vld [vmem:[%s2048 + $0xb1] sm:$0xff]
      %v2090 = vpack.c.bf16 %v2075, %v2074
      %v2091 = vpack.c.bf16 %v2077, %v2076
      %v2092 = vpack.c.bf16 %v2079, %v2078
      %v2093 = vpack.c.bf16 %v2081, %v2080
      %v2094 = vpack.c.bf16 %v2083, %v2082
      %v2095 = vpack.c.bf16 %v2085, %v2084
      %v2096 = vpack.c.bf16 %v2087, %v2086
      %v2097 = vpack.c.bf16 %v2089, %v2088
      %v2098 = vld [vmem:[%s482] sm:$0x3]
      %v2100 = vsel %vm226, %v2090, 0
      %v2103 = vsel %vm226, %v2091, 0
      %v2106 = vsel %vm226, %v2092, 0
      %v2109 = vsel %vm226, %v2093, 0
      %v2112 = vsel %vm226, %v2094, 0
      %v2115 = vsel %vm226, %v2095, 0
      %v2118 = vsel %vm226, %v2096, 0
      %v2121 = vsel %vm226, %v2097, 0
      %v2124 = vsel %vm508, %v2098, 0
      %2126 = vmatprep.subr.bf16.mxu0 0
      %2127 = vmatpush1.bf16.msra.mxu0 %v2124
      %2128 = vmatprep.subr.bf16.mxu0 0
      %2129 = vmatpush1.bf16.msra.mxu0 0
      %2130 = vmatprep.subr.bf16.mxu0 0
      %2131 = vmatpush1.bf16.msra.mxu0 0
      %2132 = vmatprep.subr.bf16.mxu0 0
      %2133 = vmatpush1.bf16.msra.mxu0 0
      %2134 = vmatprep.subr.bf16.mxu0 0
      %2135 = vmatpush1.bf16.msra.mxu0 0
      %2136 = vmatprep.subr.bf16.mxu0 0
      %2137 = vmatpush1.bf16.msra.mxu0 0
      %2138 = vmatprep.subr.bf16.mxu0 0
      %2139 = vmatpush1.bf16.msra.mxu0 0
      %2140 = vmatprep.subr.bf16.mxu0 0
      %2141 = vmatpush1.bf16.msra.mxu0 0
      %2142 = vmatprep.subr.bf16.mxu0 0
      %2143 = vmatpush1.bf16.msra.mxu0 0
      %2144 = vmatprep.subr.bf16.mxu0 0
      %2145 = vmatpush1.bf16.msra.mxu0 0
      %2146 = vmatprep.subr.bf16.mxu0 0
      %2147 = vmatpush1.bf16.msra.mxu0 0
      %2148 = vmatprep.subr.bf16.mxu0 0
      %2149 = vmatpush1.bf16.msra.mxu0 0
      %2150 = vmatprep.subr.bf16.mxu0 0
      %2151 = vmatpush1.bf16.msra.mxu0 0
      %2152 = vmatprep.subr.bf16.mxu0 0
      %2153 = vmatpush1.bf16.msra.mxu0 0
      %2154 = vmatprep.subr.bf16.mxu0 0
      %2155 = vmatpush1.bf16.msra.mxu0 0
      %2156 = vmatprep.subr.bf16.mxu0 0
      %2157 = vmatpush1.bf16.msra.mxu0 0
      %2158 = vmatprep.mubr.bf16.mxu0 0
      %2159 = vmatmul.mubr.bf16.gmra.mrb[0].mxu0 %v2100
      %v2160 = vpop.f32.mrb[0].mxu0
      %v2161 = vadd.f32 0.0, %v2160
      %v2162 = vpop.f32.mrb[0].mxu0
      %v2163 = vpop.f32.mrb[0].mxu0
      %v2164 = vadd.f32 0.0, %v2163
      %v2165 = vpop.f32.mrb[0].mxu0
      %2166 = vmatprep.mubr.bf16.mxu0 0
      %2167 = vmatmul.mubr.bf16.gmra.mrb[0].mxu0 %v2103
      %v2168 = vpop.f32.mrb[0].mxu0
      %v2169 = vadd.f32 0.0, %v2168
      %v2170 = vpop.f32.mrb[0].mxu0
      %v2171 = vpop.f32.mrb[0].mxu0
      %v2172 = vadd.f32 0.0, %v2171
      %v2173 = vpop.f32.mrb[0].mxu0
      %2174 = vmatprep.mubr.bf16.mxu0 0
      %2175 = vmatmul.mubr.bf16.gmra.mrb[0].mxu0 %v2106
      %v2176 = vpop.f32.mrb[0].mxu0
      %v2177 = vadd.f32 0.0, %v2176
      %v2178 = vpop.f32.mrb[0].mxu0
      %v2179 = vpop.f32.mrb[0].mxu0
      %v2180 = vadd.f32 0.0, %v2179
      %v2181 = vpop.f32.mrb[0].mxu0
      %2182 = vmatprep.mubr.bf16.mxu0 0
      %2183 = vmatmul.mubr.bf16.gmra.mrb[0].mxu0 %v2109
      %v2184 = vpop.f32.mrb[0].mxu0
      %v2185 = vadd.f32 0.0, %v2184
      %v2186 = vpop.f32.mrb[0].mxu0
      %v2187 = vpop.f32.mrb[0].mxu0
      %v2188 = vadd.f32 0.0, %v2187
      %v2189 = vpop.f32.mrb[0].mxu0
      %2190 = vmatprep.mubr.bf16.mxu0 0
      %2191 = vmatmul.mubr.bf16.gmra.mrb[0].mxu0 %v2112
      %v2192 = vpop.f32.mrb[0].mxu0
      %v2193 = vadd.f32 0.0, %v2192
      %v2194 = vpop.f32.mrb[0].mxu0
      %v2195 = vpop.f32.mrb[0].mxu0
      %v2196 = vadd.f32 0.0, %v2195
      %v2197 = vpop.f32.mrb[0].mxu0
      %2198 = vmatprep.mubr.bf16.mxu0 0
      %2199 = vmatmul.mubr.bf16.gmra.mrb[0].mxu0 %v2115
      %v2200 = vpop.f32.mrb[0].mxu0
      %v2201 = vadd.f32 0.0, %v2200
      %v2202 = vpop.f32.mrb[0].mxu0
      %v2203 = vpop.f32.mrb[0].mxu0
      %v2204 = vadd.f32 0.0, %v2203
      %v2205 = vpop.f32.mrb[0].mxu0
      %2206 = vmatprep.mubr.bf16.mxu0 0
      %2207 = vmatmul.mubr.bf16.gmra.mrb[0].mxu0 %v2118
      %v2208 = vpop.f32.mrb[0].mxu0
      %v2209 = vadd.f32 0.0, %v2208
      %v2210 = vpop.f32.mrb[0].mxu0
      %v2211 = vpop.f32.mrb[0].mxu0
      %v2212 = vadd.f32 0.0, %v2211
      %v2213 = vpop.f32.mrb[0].mxu0
      %2214 = vmatprep.mubr.bf16.mxu0 0
      %2215 = vmatmul.mubr.bf16.gmra.mrb[0].mxu0 %v2121
      %v2216 = vpop.f32.mrb[0].mxu0
      %v2217 = vadd.f32 0.0, %v2216
      %v2218 = vpop.f32.mrb[0].mxu0
      %v2219 = vpop.f32.mrb[0].mxu0
      %v2220 = vadd.f32 0.0, %v2219
      %v2221 = vpop.f32.mrb[0].mxu0
      %2222 = vdwg.mxu0
      %v2224 = vsel %vm226, %v2065, 0
      %v2227 = vsel %vm226, %v2066, 0
      %v2230 = vsel %vm226, %v2067, 0
      %v2233 = vsel %vm226, %v2068, 0
      %v2236 = vsel %vm226, %v2069, 0
      %v2239 = vsel %vm226, %v2070, 0
      %v2242 = vsel %vm226, %v2071, 0
      %v2245 = vsel %vm226, %v2072, 0
      %v2248 = vsel %vm508, %v2073, 0
      %2250 = vmatprep.subr.bf16.mxu0 0
      %2251 = vmatpush1.bf16.msra.mxu0 %v2248
      %2252 = vmatprep.subr.bf16.mxu0 0
      %2253 = vmatpush1.bf16.msra.mxu0 0
      %2254 = vmatprep.subr.bf16.mxu0 0
      %2255 = vmatpush1.bf16.msra.mxu0 0
      %2256 = vmatprep.subr.bf16.mxu0 0
      %2257 = vmatpush1.bf16.msra.mxu0 0
      %2258 = vmatprep.subr.bf16.mxu0 0
      %2259 = vmatpush1.bf16.msra.mxu0 0
      %2260 = vmatprep.subr.bf16.mxu0 0
      %2261 = vmatpush1.bf16.msra.mxu0 0
      %2262 = vmatprep.subr.bf16.mxu0 0
      %2263 = vmatpush1.bf16.msra.mxu0 0
      %2264 = vmatprep.subr.bf16.mxu0 0
      %2265 = vmatpush1.bf16.msra.mxu0 0
      %2266 = vmatprep.subr.bf16.mxu0 0
      %2267 = vmatpush1.bf16.msra.mxu0 0
      %2268 = vmatprep.subr.bf16.mxu0 0
      %2269 = vmatpush1.bf16.msra.mxu0 0
      %2270 = vmatprep.subr.bf16.mxu0 0
      %2271 = vmatpush1.bf16.msra.mxu0 0
      %2272 = vmatprep.subr.bf16.mxu0 0
      %2273 = vmatpush1.bf16.msra.mxu0 0
      %2274 = vmatprep.subr.bf16.mxu0 0
      %2275 = vmatpush1.bf16.msra.mxu0 0
      %2276 = vmatprep.subr.bf16.mxu0 0
      %2277 = vmatpush1.bf16.msra.mxu0 0
      %2278 = vmatprep.subr.bf16.mxu0 0
      %2279 = vmatpush1.bf16.msra.mxu0 0
      %2280 = vmatprep.subr.bf16.mxu0 0
      %2281 = vmatpush1.bf16.msra.mxu0 0
      %2282 = vmatprep.mubr.bf16.mxu0 0
      %2283 = vmatmul.mubr.bf16.gmra.mrb[0].mxu0 %v2224
      %v2284 = vpop.f32.mrb[0].mxu0
      %v2285 = vadd.f32 %v2161, %v2284
      %v2286 = vpop.f32.mrb[0].mxu0
      %v2287 = vpop.f32.mrb[0].mxu0
      %v2288 = vadd.f32 %v2164, %v2287
      %v2289 = vpop.f32.mrb[0].mxu0
      %2290 = vmatprep.mubr.bf16.mxu0 0
      %2291 = vmatmul.mubr.bf16.gmra.mrb[0].mxu0 %v2227
      %v2292 = vpop.f32.mrb[0].mxu0
      %v2293 = vadd.f32 %v2169, %v2292
      %v2294 = vpop.f32.mrb[0].mxu0
      %v2295 = vpop.f32.mrb[0].mxu0
      %v2296 = vadd.f32 %v2172, %v2295
      %v2297 = vpop.f32.mrb[0].mxu0
      %2298 = vmatprep.mubr.bf16.mxu0 0
      %2299 = vmatmul.mubr.bf16.gmra.mrb[0].mxu0 %v2230
      %v2300 = vpop.f32.mrb[0].mxu0
      %v2301 = vadd.f32 %v2177, %v2300
      %v2302 = vpop.f32.mrb[0].mxu0
      %v2303 = vpop.f32.mrb[0].mxu0
      %v2304 = vadd.f32 %v2180, %v2303
      %v2305 = vpop.f32.mrb[0].mxu0
      %2306 = vmatprep.mubr.bf16.mxu0 0
      %2307 = vmatmul.mubr.bf16.gmra.mrb[0].mxu0 %v2233
      %v2308 = vpop.f32.mrb[0].mxu0
      %v2309 = vadd.f32 %v2185, %v2308
      %v2310 = vpop.f32.mrb[0].mxu0
      %v2311 = vpop.f32.mrb[0].mxu0
      %v2312 = vadd.f32 %v2188, %v2311
      %v2313 = vpop.f32.mrb[0].mxu0
      %2314 = vmatprep.mubr.bf16.mxu0 0
      %2315 = vmatmul.mubr.bf16.gmra.mrb[0].mxu0 %v2236
      %v2316 = vpop.f32.mrb[0].mxu0
      %v2317 = vadd.f32 %v2193, %v2316
      %v2318 = vpop.f32.mrb[0].mxu0
      %v2319 = vpop.f32.mrb[0].mxu0
      %v2320 = vadd.f32 %v2196, %v2319
      %v2321 = vpop.f32.mrb[0].mxu0
      %2322 = vmatprep.mubr.bf16.mxu0 0
      %2323 = vmatmul.mubr.bf16.gmra.mrb[0].mxu0 %v2239
      %v2324 = vpop.f32.mrb[0].mxu0
      %v2325 = vadd.f32 %v2201, %v2324
      %v2326 = vpop.f32.mrb[0].mxu0
      %v2327 = vpop.f32.mrb[0].mxu0
      %v2328 = vadd.f32 %v2204, %v2327
      %v2329 = vpop.f32.mrb[0].mxu0
      %2330 = vmatprep.mubr.bf16.mxu0 0
      %2331 = vmatmul.mubr.bf16.gmra.mrb[0].mxu0 %v2242
      %v2332 = vpop.f32.mrb[0].mxu0
      %v2333 = vadd.f32 %v2209, %v2332
      %v2334 = vpop.f32.mrb[0].mxu0
      %v2335 = vpop.f32.mrb[0].mxu0
      %v2336 = vadd.f32 %v2212, %v2335
      %v2337 = vpop.f32.mrb[0].mxu0
      %2338 = vmatprep.mubr.bf16.mxu0 0
      %2339 = vmatmul.mubr.bf16.gmra.mrb[0].mxu0 %v2245
      %v2340 = vpop.f32.mrb[0].mxu0
      %v2341 = vadd.f32 %v2217, %v2340
      %v2342 = vpop.f32.mrb[0].mxu0
      %v2343 = vpop.f32.mrb[0].mxu0
      %v2344 = vadd.f32 %v2220, %v2343
      %v2345 = vpop.f32.mrb[0].mxu0
      %2346 = vdwg.mxu0
      %v2347 = vld [vmem:[%s2048 + $0x2] sm:$0xff]
      %v2348 = vld [vmem:[%s2048 + $0xa] sm:$0xff]
      %v2349 = vld [vmem:[%s2048 + $0x1a] sm:$0xff]
      %v2350 = vld [vmem:[%s2048 + $0x22] sm:$0xff]
      %v2351 = vld [vmem:[%s2048 + $0x32] sm:$0xff]
      %v2352 = vld [vmem:[%s2048 + $0x3a] sm:$0xff]
      %v2353 = vld [vmem:[%s2048 + $0x4a] sm:$0xff]
      %v2354 = vld [vmem:[%s2048 + $0x52] sm:$0xff]
      %v2355 = vld [vmem:[%s2048 + $0x62] sm:$0xff]
      %v2356 = vld [vmem:[%s2048 + $0x6a] sm:$0xff]
      %v2357 = vld [vmem:[%s2048 + $0x7a] sm:$0xff]
      %v2358 = vld [vmem:[%s2048 + $0x82] sm:$0xff]
      %v2359 = vld [vmem:[%s2048 + $0x92] sm:$0xff]
      %v2360 = vld [vmem:[%s2048 + $0x9a] sm:$0xff]
      %v2361 = vld [vmem:[%s2048 + $0xaa] sm:$0xff]
      %v2362 = vld [vmem:[%s2048 + $0xb2] sm:$0xff]
      %v2363 = vpack.c.bf16 %v2348, %v2347
      %v2364 = vpack.c.bf16 %v2350, %v2349
      %v2365 = vpack.c.bf16 %v2352, %v2351
      %v2366 = vpack.c.bf16 %v2354, %v2353
      %v2367 = vpack.c.bf16 %v2356, %v2355
      %v2368 = vpack.c.bf16 %v2358, %v2357
      %v2369 = vpack.c.bf16 %v2360, %v2359
      %v2370 = vpack.c.bf16 %v2362, %v2361
      %v2371 = vld [vmem:[%s757] sm:$0x3]
      %v2373 = vsel %vm226, %v2363, 0
      %v2376 = vsel %vm226, %v2364, 0
      %v2379 = vsel %vm226, %v2365, 0
      %v2382 = vsel %vm226, %v2366, 0
      %v2385 = vsel %vm226, %v2367, 0
      %v2388 = vsel %vm226, %v2368, 0
      %v2391 = vsel %vm226, %v2369, 0
      %v2394 = vsel %vm226, %v2370, 0
      %v2397 = vsel %vm508, %v2371, 0
      %2399 = vmatprep.subr.bf16.mxu0 0
      %2400 = vmatpush1.bf16.msra.mxu0 %v2397
      %2401 = vmatprep.subr.bf16.mxu0 0
      %2402 = vmatpush1.bf16.msra.mxu0 0
      %2403 = vmatprep.subr.bf16.mxu0 0
      %2404 = vmatpush1.bf16.msra.mxu0 0
      %2405 = vmatprep.subr.bf16.mxu0 0
      %2406 = vmatpush1.bf16.msra.mxu0 0
      %2407 = vmatprep.subr.bf16.mxu0 0
      %2408 = vmatpush1.bf16.msra.mxu0 0
      %2409 = vmatprep.subr.bf16.mxu0 0
      %2410 = vmatpush1.bf16.msra.mxu0 0
      %2411 = vmatprep.subr.bf16.mxu0 0
      %2412 = vmatpush1.bf16.msra.mxu0 0
      %2413 = vmatprep.subr.bf16.mxu0 0
      %2414 = vmatpush1.bf16.msra.mxu0 0
      %2415 = vmatprep.subr.bf16.mxu0 0
      %2416 = vmatpush1.bf16.msra.mxu0 0
      %2417 = vmatprep.subr.bf16.mxu0 0
      %2418 = vmatpush1.bf16.msra.mxu0 0
      %2419 = vmatprep.subr.bf16.mxu0 0
      %2420 = vmatpush1.bf16.msra.mxu0 0
      %2421 = vmatprep.subr.bf16.mxu0 0
      %2422 = vmatpush1.bf16.msra.mxu0 0
      %2423 = vmatprep.subr.bf16.mxu0 0
      %2424 = vmatpush1.bf16.msra.mxu0 0
      %2425 = vmatprep.subr.bf16.mxu0 0
      %2426 = vmatpush1.bf16.msra.mxu0 0
      %2427 = vmatprep.subr.bf16.mxu0 0
      %2428 = vmatpush1.bf16.msra.mxu0 0
      %2429 = vmatprep.subr.bf16.mxu0 0
      %2430 = vmatpush1.bf16.msra.mxu0 0
      %2431 = vmatprep.mubr.bf16.mxu0 0
      %2432 = vmatmul.mubr.bf16.gmra.mrb[0].mxu0 %v2373
      %v2433 = vpop.f32.mrb[0].mxu0
      %v2434 = vadd.f32 0.0, %v2433
      %v2435 = vpop.f32.mrb[0].mxu0
      %v2436 = vpop.f32.mrb[0].mxu0
      %v2437 = vadd.f32 0.0, %v2436
      %v2438 = vpop.f32.mrb[0].mxu0
      %2439 = vmatprep.mubr.bf16.mxu0 0
      %2440 = vmatmul.mubr.bf16.gmra.mrb[0].mxu0 %v2376
      %v2441 = vpop.f32.mrb[0].mxu0
      %v2442 = vadd.f32 0.0, %v2441
      %v2443 = vpop.f32.mrb[0].mxu0
      %v2444 = vpop.f32.mrb[0].mxu0
      %v2445 = vadd.f32 0.0, %v2444
      %v2446 = vpop.f32.mrb[0].mxu0
      %2447 = vmatprep.mubr.bf16.mxu0 0
      %2448 = vmatmul.mubr.bf16.gmra.mrb[0].mxu0 %v2379
      %v2449 = vpop.f32.mrb[0].mxu0
      %v2450 = vadd.f32 0.0, %v2449
      %v2451 = vpop.f32.mrb[0].mxu0
      %v2452 = vpop.f32.mrb[0].mxu0
      %v2453 = vadd.f32 0.0, %v2452
      %v2454 = vpop.f32.mrb[0].mxu0
      %2455 = vmatprep.mubr.bf16.mxu0 0
      %2456 = vmatmul.mubr.bf16.gmra.mrb[0].mxu0 %v2382
      %v2457 = vpop.f32.mrb[0].mxu0
      %v2458 = vadd.f32 0.0, %v2457
      %v2459 = vpop.f32.mrb[0].mxu0
      %v2460 = vpop.f32.mrb[0].mxu0
      %v2461 = vadd.f32 0.0, %v2460
      %v2462 = vpop.f32.mrb[0].mxu0
      %2463 = vmatprep.mubr.bf16.mxu0 0
      %2464 = vmatmul.mubr.bf16.gmra.mrb[0].mxu0 %v2385
      %v2465 = vpop.f32.mrb[0].mxu0
      %v2466 = vadd.f32 0.0, %v2465
      %v2467 = vpop.f32.mrb[0].mxu0
      %v2468 = vpop.f32.mrb[0].mxu0
      %v2469 = vadd.f32 0.0, %v2468
      %v2470 = vpop.f32.mrb[0].mxu0
      %2471 = vmatprep.mubr.bf16.mxu0 0
      %2472 = vmatmul.mubr.bf16.gmra.mrb[0].mxu0 %v2388
      %v2473 = vpop.f32.mrb[0].mxu0
      %v2474 = vadd.f32 0.0, %v2473
      %v2475 = vpop.f32.mrb[0].mxu0
      %v2476 = vpop.f32.mrb[0].mxu0
      %v2477 = vadd.f32 0.0, %v2476
      %v2478 = vpop.f32.mrb[0].mxu0
      %2479 = vmatprep.mubr.bf16.mxu0 0
      %2480 = vmatmul.mubr.bf16.gmra.mrb[0].mxu0 %v2391
      %v2481 = vpop.f32.mrb[0].mxu0
      %v2482 = vadd.f32 0.0, %v2481
      %v2483 = vpop.f32.mrb[0].mxu0
      %v2484 = vpop.f32.mrb[0].mxu0
      %v2485 = vadd.f32 0.0, %v2484
      %v2486 = vpop.f32.mrb[0].mxu0
      %2487 = vmatprep.mubr.bf16.mxu0 0
      %2488 = vmatmul.mubr.bf16.gmra.mrb[0].mxu0 %v2394
      %v2489 = vpop.f32.mrb[0].mxu0
      %v2490 = vadd.f32 0.0, %v2489
      %v2491 = vpop.f32.mrb[0].mxu0
      %v2492 = vpop.f32.mrb[0].mxu0
      %v2493 = vadd.f32 0.0, %v2492
      %v2494 = vpop.f32.mrb[0].mxu0
      %2495 = vdwg.mxu0
      %v2496 = vadd.f32 %v2285, %v2434
      %v2497 = vadd.f32 %v2288, %v2437
      %v2498 = vadd.f32 %v2293, %v2442
      %v2499 = vadd.f32 %v2296, %v2445
      %v2500 = vadd.f32 %v2301, %v2450
      %v2501 = vadd.f32 %v2304, %v2453
      %v2502 = vadd.f32 %v2309, %v2458
      %v2503 = vadd.f32 %v2312, %v2461
      %v2504 = vadd.f32 %v2317, %v2466
      %v2505 = vadd.f32 %v2320, %v2469
      %v2506 = vadd.f32 %v2325, %v2474
      %v2507 = vadd.f32 %v2328, %v2477
      %v2508 = vadd.f32 %v2333, %v2482
      %v2509 = vadd.f32 %v2336, %v2485
      %v2510 = vadd.f32 %v2341, %v2490
      %v2511 = vadd.f32 %v2344, %v2493
      %s2512 = scalar_lea.vmem [#allocation2], 216
      %v2513 = vld [vmem:[%s2512] sm:$0xff]
      %v2514 = vld [vmem:[%s2512 + $0x8] sm:$0xff]
      %v2515 = vld [vmem:[%s2512 + $0x18] sm:$0xff]
      %v2516 = vld [vmem:[%s2512 + $0x20] sm:$0xff]
      %v2517 = vld [vmem:[%s2512 + $0x30] sm:$0xff]
      %v2518 = vld [vmem:[%s2512 + $0x38] sm:$0xff]
      %v2519 = vld [vmem:[%s2512 + $0x48] sm:$0xff]
      %v2520 = vld [vmem:[%s2512 + $0x50] sm:$0xff]
      %v2521 = vld [vmem:[%s2512 + $0x60] sm:$0xff]
      %v2522 = vld [vmem:[%s2512 + $0x68] sm:$0xff]
      %v2523 = vld [vmem:[%s2512 + $0x78] sm:$0xff]
      %v2524 = vld [vmem:[%s2512 + $0x80] sm:$0xff]
      %v2525 = vld [vmem:[%s2512 + $0x90] sm:$0xff]
      %v2526 = vld [vmem:[%s2512 + $0x98] sm:$0xff]
      %v2527 = vld [vmem:[%s2512 + $0xa8] sm:$0xff]
      %v2528 = vld [vmem:[%s2512 + $0xb0] sm:$0xff]
      %v2529 = vpack.c.bf16 %v2514, %v2513
      %v2530 = vpack.c.bf16 %v2516, %v2515
      %v2531 = vpack.c.bf16 %v2518, %v2517
      %v2532 = vpack.c.bf16 %v2520, %v2519
      %v2533 = vpack.c.bf16 %v2522, %v2521
      %v2534 = vpack.c.bf16 %v2524, %v2523
      %v2535 = vpack.c.bf16 %v2526, %v2525
      %v2536 = vpack.c.bf16 %v2528, %v2527
      %v2537 = vld [vmem:[%s923] sm:$0x3]
      %v2539 = vsel %vm226, %v2529, 0
      %v2542 = vsel %vm226, %v2530, 0
      %v2545 = vsel %vm226, %v2531, 0
      %v2548 = vsel %vm226, %v2532, 0
      %v2551 = vsel %vm226, %v2533, 0
      %v2554 = vsel %vm226, %v2534, 0
      %v2557 = vsel %vm226, %v2535, 0
      %v2560 = vsel %vm226, %v2536, 0
      %v2563 = vsel %vm508, %v2537, 0
      %2565 = vmatprep.subr.bf16.mxu0 0
      %2566 = vmatpush1.bf16.msra.mxu0 %v2563
      %2567 = vmatprep.subr.bf16.mxu0 0
      %2568 = vmatpush1.bf16.msra.mxu0 0
      %2569 = vmatprep.subr.bf16.mxu0 0
      %2570 = vmatpush1.bf16.msra.mxu0 0
      %2571 = vmatprep.subr.bf16.mxu0 0
      %2572 = vmatpush1.bf16.msra.mxu0 0
      %2573 = vmatprep.subr.bf16.mxu0 0
      %2574 = vmatpush1.bf16.msra.mxu0 0
      %2575 = vmatprep.subr.bf16.mxu0 0
      %2576 = vmatpush1.bf16.msra.mxu0 0
      %2577 = vmatprep.subr.bf16.mxu0 0
      %2578 = vmatpush1.bf16.msra.mxu0 0
      %2579 = vmatprep.subr.bf16.mxu0 0
      %2580 = vmatpush1.bf16.msra.mxu0 0
      %2581 = vmatprep.subr.bf16.mxu0 0
      %2582 = vmatpush1.bf16.msra.mxu0 0
      %2583 = vmatprep.subr.bf16.mxu0 0
      %2584 = vmatpush1.bf16.msra.mxu0 0
      %2585 = vmatprep.subr.bf16.mxu0 0
      %2586 = vmatpush1.bf16.msra.mxu0 0
      %2587 = vmatprep.subr.bf16.mxu0 0
      %2588 = vmatpush1.bf16.msra.mxu0 0
      %2589 = vmatprep.subr.bf16.mxu0 0
      %2590 = vmatpush1.bf16.msra.mxu0 0
      %2591 = vmatprep.subr.bf16.mxu0 0
      %2592 = vmatpush1.bf16.msra.mxu0 0
      %2593 = vmatprep.subr.bf16.mxu0 0
      %2594 = vmatpush1.bf16.msra.mxu0 0
      %2595 = vmatprep.subr.bf16.mxu0 0
      %2596 = vmatpush1.bf16.msra.mxu0 0
      %2597 = vmatprep.mubr.bf16.mxu0 0
      %2598 = vmatmul.mubr.bf16.gmra.mrb[0].mxu0 %v2539
      %v2599 = vpop.f32.mrb[0].mxu0
      %v2600 = vadd.f32 0.0, %v2599
      %v2601 = vpop.f32.mrb[0].mxu0
      %v2602 = vpop.f32.mrb[0].mxu0
      %v2603 = vadd.f32 0.0, %v2602
      %v2604 = vpop.f32.mrb[0].mxu0
      %2605 = vmatprep.mubr.bf16.mxu0 0
      %2606 = vmatmul.mubr.bf16.gmra.mrb[0].mxu0 %v2542
      %v2607 = vpop.f32.mrb[0].mxu0
      %v2608 = vadd.f32 0.0, %v2607
      %v2609 = vpop.f32.mrb[0].mxu0
      %v2610 = vpop.f32.mrb[0].mxu0
      %v2611 = vadd.f32 0.0, %v2610
      %v2612 = vpop.f32.mrb[0].mxu0
      %2613 = vmatprep.mubr.bf16.mxu0 0
      %2614 = vmatmul.mubr.bf16.gmra.mrb[0].mxu0 %v2545
      %v2615 = vpop.f32.mrb[0].mxu0
      %v2616 = vadd.f32 0.0, %v2615
      %v2617 = vpop.f32.mrb[0].mxu0
      %v2618 = vpop.f32.mrb[0].mxu0
      %v2619 = vadd.f32 0.0, %v2618
      %v2620 = vpop.f32.mrb[0].mxu0
      %2621 = vmatprep.mubr.bf16.mxu0 0
      %2622 = vmatmul.mubr.bf16.gmra.mrb[0].mxu0 %v2548
      %v2623 = vpop.f32.mrb[0].mxu0
      %v2624 = vadd.f32 0.0, %v2623
      %v2625 = vpop.f32.mrb[0].mxu0
      %v2626 = vpop.f32.mrb[0].mxu0
      %v2627 = vadd.f32 0.0, %v2626
      %v2628 = vpop.f32.mrb[0].mxu0
      %2629 = vmatprep.mubr.bf16.mxu0 0
      %2630 = vmatmul.mubr.bf16.gmra.mrb[0].mxu0 %v2551
      %v2631 = vpop.f32.mrb[0].mxu0
      %v2632 = vadd.f32 0.0, %v2631
      %v2633 = vpop.f32.mrb[0].mxu0
      %v2634 = vpop.f32.mrb[0].mxu0
      %v2635 = vadd.f32 0.0, %v2634
      %v2636 = vpop.f32.mrb[0].mxu0
      %2637 = vmatprep.mubr.bf16.mxu0 0
      %2638 = vmatmul.mubr.bf16.gmra.mrb[0].mxu0 %v2554
      %v2639 = vpop.f32.mrb[0].mxu0
      %v2640 = vadd.f32 0.0, %v2639
      %v2641 = vpop.f32.mrb[0].mxu0
      %v2642 = vpop.f32.mrb[0].mxu0
      %v2643 = vadd.f32 0.0, %v2642
      %v2644 = vpop.f32.mrb[0].mxu0
      %2645 = vmatprep.mubr.bf16.mxu0 0
      %2646 = vmatmul.mubr.bf16.gmra.mrb[0].mxu0 %v2557
      %v2647 = vpop.f32.mrb[0].mxu0
      %v2648 = vadd.f32 0.0, %v2647
      %v2649 = vpop.f32.mrb[0].mxu0
      %v2650 = vpop.f32.mrb[0].mxu0
      %v2651 = vadd.f32 0.0, %v2650
      %v2652 = vpop.f32.mrb[0].mxu0
      %2653 = vmatprep.mubr.bf16.mxu0 0
      %2654 = vmatmul.mubr.bf16.gmra.mrb[0].mxu0 %v2560
      %v2655 = vpop.f32.mrb[0].mxu0
      %v2656 = vadd.f32 0.0, %v2655
      %v2657 = vpop.f32.mrb[0].mxu0
      %v2658 = vpop.f32.mrb[0].mxu0
      %v2659 = vadd.f32 0.0, %v2658
      %v2660 = vpop.f32.mrb[0].mxu0
      %2661 = vdwg.mxu0
      %v2662 = vadd.f32 %v2496, %v2600
      %v2663 = vadd.f32 %v2497, %v2603
      %v2664 = vadd.f32 %v2498, %v2608
      %v2665 = vadd.f32 %v2499, %v2611
      %v2666 = vadd.f32 %v2500, %v2616
      %v2667 = vadd.f32 %v2501, %v2619
      %v2668 = vadd.f32 %v2502, %v2624
      %v2669 = vadd.f32 %v2503, %v2627
      %v2670 = vadd.f32 %v2504, %v2632
      %v2671 = vadd.f32 %v2505, %v2635
      %v2672 = vadd.f32 %v2506, %v2640
      %v2673 = vadd.f32 %v2507, %v2643
      %v2674 = vadd.f32 %v2508, %v2648
      %v2675 = vadd.f32 %v2509, %v2651
      %v2676 = vadd.f32 %v2510, %v2656
      %v2677 = vadd.f32 %v2511, %v2659
      %v2678 = vld [vmem:[%s2512 + $0x1] sm:$0xff]
      %v2679 = vld [vmem:[%s2512 + $0x9] sm:$0xff]
      %v2680 = vld [vmem:[%s2512 + $0x19] sm:$0xff]
      %v2681 = vld [vmem:[%s2512 + $0x21] sm:$0xff]
      %v2682 = vld [vmem:[%s2512 + $0x31] sm:$0xff]
      %v2683 = vld [vmem:[%s2512 + $0x39] sm:$0xff]
      %v2684 = vld [vmem:[%s2512 + $0x49] sm:$0xff]
      %v2685 = vld [vmem:[%s2512 + $0x51] sm:$0xff]
      %v2686 = vld [vmem:[%s2512 + $0x61] sm:$0xff]
      %v2687 = vld [vmem:[%s2512 + $0x69] sm:$0xff]
      %v2688 = vld [vmem:[%s2512 + $0x79] sm:$0xff]
      %v2689 = vld [vmem:[%s2512 + $0x81] sm:$0xff]
      %v2690 = vld [vmem:[%s2512 + $0x91] sm:$0xff]
      %v2691 = vld [vmem:[%s2512 + $0x99] sm:$0xff]
      %v2692 = vld [vmem:[%s2512 + $0xa9] sm:$0xff]
      %v2693 = vld [vmem:[%s2512 + $0xb1] sm:$0xff]
      %v2694 = vpack.c.bf16 %v2679, %v2678
      %v2695 = vpack.c.bf16 %v2681, %v2680
      %v2696 = vpack.c.bf16 %v2683, %v2682
      %v2697 = vpack.c.bf16 %v2685, %v2684
      %v2698 = vpack.c.bf16 %v2687, %v2686
      %v2699 = vpack.c.bf16 %v2689, %v2688
      %v2700 = vpack.c.bf16 %v2691, %v2690
      %v2701 = vpack.c.bf16 %v2693, %v2692
      %v2702 = vld [vmem:[%s1089] sm:$0x3]
      %v2704 = vsel %vm226, %v2694, 0
      %v2707 = vsel %vm226, %v2695, 0
      %v2710 = vsel %vm226, %v2696, 0
      %v2713 = vsel %vm226, %v2697, 0
      %v2716 = vsel %vm226, %v2698, 0
      %v2719 = vsel %vm226, %v2699, 0
      %v2722 = vsel %vm226, %v2700, 0
      %v2725 = vsel %vm226, %v2701, 0
      %v2728 = vsel %vm508, %v2702, 0
      %2730 = vmatprep.subr.bf16.mxu0 0
      %2731 = vmatpush1.bf16.msra.mxu0 %v2728
      %2732 = vmatprep.subr.bf16.mxu0 0
      %2733 = vmatpush1.bf16.msra.mxu0 0
      %2734 = vmatprep.subr.bf16.mxu0 0
      %2735 = vmatpush1.bf16.msra.mxu0 0
      %2736 = vmatprep.subr.bf16.mxu0 0
      %2737 = vmatpush1.bf16.msra.mxu0 0
      %2738 = vmatprep.subr.bf16.mxu0 0
      %2739 = vmatpush1.bf16.msra.mxu0 0
      %2740 = vmatprep.subr.bf16.mxu0 0
      %2741 = vmatpush1.bf16.msra.mxu0 0
      %2742 = vmatprep.subr.bf16.mxu0 0
      %2743 = vmatpush1.bf16.msra.mxu0 0
      %2744 = vmatprep.subr.bf16.mxu0 0
      %2745 = vmatpush1.bf16.msra.mxu0 0
      %2746 = vmatprep.subr.bf16.mxu0 0
      %2747 = vmatpush1.bf16.msra.mxu0 0
      %2748 = vmatprep.subr.bf16.mxu0 0
      %2749 = vmatpush1.bf16.msra.mxu0 0
      %2750 = vmatprep.subr.bf16.mxu0 0
      %2751 = vmatpush1.bf16.msra.mxu0 0
      %2752 = vmatprep.subr.bf16.mxu0 0
      %2753 = vmatpush1.bf16.msra.mxu0 0
      %2754 = vmatprep.subr.bf16.mxu0 0
      %2755 = vmatpush1.bf16.msra.mxu0 0
      %2756 = vmatprep.subr.bf16.mxu0 0
      %2757 = vmatpush1.bf16.msra.mxu0 0
      %2758 = vmatprep.subr.bf16.mxu0 0
      %2759 = vmatpush1.bf16.msra.mxu0 0
      %2760 = vmatprep.subr.bf16.mxu0 0
      %2761 = vmatpush1.bf16.msra.mxu0 0
      %2762 = vmatprep.mubr.bf16.mxu0 0
      %2763 = vmatmul.mubr.bf16.gmra.mrb[0].mxu0 %v2704
      %v2764 = vpop.f32.mrb[0].mxu0
      %v2765 = vadd.f32 0.0, %v2764
      %v2766 = vpop.f32.mrb[0].mxu0
      %v2767 = vpop.f32.mrb[0].mxu0
      %v2768 = vadd.f32 0.0, %v2767
      %v2769 = vpop.f32.mrb[0].mxu0
      %2770 = vmatprep.mubr.bf16.mxu0 0
      %2771 = vmatmul.mubr.bf16.gmra.mrb[0].mxu0 %v2707
      %v2772 = vpop.f32.mrb[0].mxu0
      %v2773 = vadd.f32 0.0, %v2772
      %v2774 = vpop.f32.mrb[0].mxu0
      %v2775 = vpop.f32.mrb[0].mxu0
      %v2776 = vadd.f32 0.0, %v2775
      %v2777 = vpop.f32.mrb[0].mxu0
      %2778 = vmatprep.mubr.bf16.mxu0 0
      %2779 = vmatmul.mubr.bf16.gmra.mrb[0].mxu0 %v2710
      %v2780 = vpop.f32.mrb[0].mxu0
      %v2781 = vadd.f32 0.0, %v2780
      %v2782 = vpop.f32.mrb[0].mxu0
      %v2783 = vpop.f32.mrb[0].mxu0
      %v2784 = vadd.f32 0.0, %v2783
      %v2785 = vpop.f32.mrb[0].mxu0
      %2786 = vmatprep.mubr.bf16.mxu0 0
      %2787 = vmatmul.mubr.bf16.gmra.mrb[0].mxu0 %v2713
      %v2788 = vpop.f32.mrb[0].mxu0
      %v2789 = vadd.f32 0.0, %v2788
      %v2790 = vpop.f32.mrb[0].mxu0
      %v2791 = vpop.f32.mrb[0].mxu0
      %v2792 = vadd.f32 0.0, %v2791
      %v2793 = vpop.f32.mrb[0].mxu0
      %2794 = vmatprep.mubr.bf16.mxu0 0
      %2795 = vmatmul.mubr.bf16.gmra.mrb[0].mxu0 %v2716
      %v2796 = vpop.f32.mrb[0].mxu0
      %v2797 = vadd.f32 0.0, %v2796
      %v2798 = vpop.f32.mrb[0].mxu0
      %v2799 = vpop.f32.mrb[0].mxu0
      %v2800 = vadd.f32 0.0, %v2799
      %v2801 = vpop.f32.mrb[0].mxu0
      %2802 = vmatprep.mubr.bf16.mxu0 0
      %2803 = vmatmul.mubr.bf16.gmra.mrb[0].mxu0 %v2719
      %v2804 = vpop.f32.mrb[0].mxu0
      %v2805 = vadd.f32 0.0, %v2804
      %v2806 = vpop.f32.mrb[0].mxu0
      %v2807 = vpop.f32.mrb[0].mxu0
      %v2808 = vadd.f32 0.0, %v2807
      %v2809 = vpop.f32.mrb[0].mxu0
      %2810 = vmatprep.mubr.bf16.mxu0 0
      %2811 = vmatmul.mubr.bf16.gmra.mrb[0].mxu0 %v2722
      %v2812 = vpop.f32.mrb[0].mxu0
      %v2813 = vadd.f32 0.0, %v2812
      %v2814 = vpop.f32.mrb[0].mxu0
      %v2815 = vpop.f32.mrb[0].mxu0
      %v2816 = vadd.f32 0.0, %v2815
      %v2817 = vpop.f32.mrb[0].mxu0
      %2818 = vmatprep.mubr.bf16.mxu0 0
      %2819 = vmatmul.mubr.bf16.gmra.mrb[0].mxu0 %v2725
      %v2820 = vpop.f32.mrb[0].mxu0
      %v2821 = vadd.f32 0.0, %v2820
      %v2822 = vpop.f32.mrb[0].mxu0
      %v2823 = vpop.f32.mrb[0].mxu0
      %v2824 = vadd.f32 0.0, %v2823
      %v2825 = vpop.f32.mrb[0].mxu0
      %2826 = vdwg.mxu0
      %v2827 = vadd.f32 %v2662, %v2765
      %v2828 = vadd.f32 %v2663, %v2768
      %v2829 = vadd.f32 %v2664, %v2773
      %v2830 = vadd.f32 %v2665, %v2776
      %v2831 = vadd.f32 %v2666, %v2781
      %v2832 = vadd.f32 %v2667, %v2784
      %v2833 = vadd.f32 %v2668, %v2789
      %v2834 = vadd.f32 %v2669, %v2792
      %v2835 = vadd.f32 %v2670, %v2797
      %v2836 = vadd.f32 %v2671, %v2800
      %v2837 = vadd.f32 %v2672, %v2805
      %v2838 = vadd.f32 %v2673, %v2808
      %v2839 = vadd.f32 %v2674, %v2813
      %v2840 = vadd.f32 %v2675, %v2816
      %v2841 = vadd.f32 %v2676, %v2821
      %v2842 = vadd.f32 %v2677, %v2824
      %v2843 = vld [vmem:[%s2512 + $0x2] sm:$0xff]
      %v2844 = vld [vmem:[%s2512 + $0xa] sm:$0xff]
      %v2845 = vld [vmem:[%s2512 + $0x1a] sm:$0xff]
      %v2846 = vld [vmem:[%s2512 + $0x22] sm:$0xff]
      %v2847 = vld [vmem:[%s2512 + $0x32] sm:$0xff]
      %v2848 = vld [vmem:[%s2512 + $0x3a] sm:$0xff]
      %v2849 = vld [vmem:[%s2512 + $0x4a] sm:$0xff]
      %v2850 = vld [vmem:[%s2512 + $0x52] sm:$0xff]
      %v2851 = vld [vmem:[%s2512 + $0x62] sm:$0xff]
      %v2852 = vld [vmem:[%s2512 + $0x6a] sm:$0xff]
      %v2853 = vld [vmem:[%s2512 + $0x7a] sm:$0xff]
      %v2854 = vld [vmem:[%s2512 + $0x82] sm:$0xff]
      %v2855 = vld [vmem:[%s2512 + $0x92] sm:$0xff]
      %v2856 = vld [vmem:[%s2512 + $0x9a] sm:$0xff]
      %v2857 = vld [vmem:[%s2512 + $0xaa] sm:$0xff]
      %v2858 = vld [vmem:[%s2512 + $0xb2] sm:$0xff]
      %v2859 = vpack.c.bf16 %v2844, %v2843
      %v2860 = vpack.c.bf16 %v2846, %v2845
      %v2861 = vpack.c.bf16 %v2848, %v2847
      %v2862 = vpack.c.bf16 %v2850, %v2849
      %v2863 = vpack.c.bf16 %v2852, %v2851
      %v2864 = vpack.c.bf16 %v2854, %v2853
      %v2865 = vpack.c.bf16 %v2856, %v2855
      %v2866 = vpack.c.bf16 %v2858, %v2857
      %v2867 = vld [vmem:[%s1255] sm:$0x3]
      %v2869 = vsel %vm226, %v2859, 0
      %v2872 = vsel %vm226, %v2860, 0
      %v2875 = vsel %vm226, %v2861, 0
      %v2878 = vsel %vm226, %v2862, 0
      %v2881 = vsel %vm226, %v2863, 0
      %v2884 = vsel %vm226, %v2864, 0
      %v2887 = vsel %vm226, %v2865, 0
      %v2890 = vsel %vm226, %v2866, 0
      %v2893 = vsel %vm508, %v2867, 0
      %2895 = vmatprep.subr.bf16.mxu0 0
      %2896 = vmatpush1.bf16.msra.mxu0 %v2893
      %2897 = vmatprep.subr.bf16.mxu0 0
      %2898 = vmatpush1.bf16.msra.mxu0 0
      %2899 = vmatprep.subr.bf16.mxu0 0
      %2900 = vmatpush1.bf16.msra.mxu0 0
      %2901 = vmatprep.subr.bf16.mxu0 0
      %2902 = vmatpush1.bf16.msra.mxu0 0
      %2903 = vmatprep.subr.bf16.mxu0 0
      %2904 = vmatpush1.bf16.msra.mxu0 0
      %2905 = vmatprep.subr.bf16.mxu0 0
      %2906 = vmatpush1.bf16.msra.mxu0 0
      %2907 = vmatprep.subr.bf16.mxu0 0
      %2908 = vmatpush1.bf16.msra.mxu0 0
      %2909 = vmatprep.subr.bf16.mxu0 0
      %2910 = vmatpush1.bf16.msra.mxu0 0
      %2911 = vmatprep.subr.bf16.mxu0 0
      %2912 = vmatpush1.bf16.msra.mxu0 0
      %2913 = vmatprep.subr.bf16.mxu0 0
      %2914 = vmatpush1.bf16.msra.mxu0 0
      %2915 = vmatprep.subr.bf16.mxu0 0
      %2916 = vmatpush1.bf16.msra.mxu0 0
      %2917 = vmatprep.subr.bf16.mxu0 0
      %2918 = vmatpush1.bf16.msra.mxu0 0
      %2919 = vmatprep.subr.bf16.mxu0 0
      %2920 = vmatpush1.bf16.msra.mxu0 0
      %2921 = vmatprep.subr.bf16.mxu0 0
      %2922 = vmatpush1.bf16.msra.mxu0 0
      %2923 = vmatprep.subr.bf16.mxu0 0
      %2924 = vmatpush1.bf16.msra.mxu0 0
      %2925 = vmatprep.subr.bf16.mxu0 0
      %2926 = vmatpush1.bf16.msra.mxu0 0
      %2927 = vmatprep.mubr.bf16.mxu0 0
      %2928 = vmatmul.mubr.bf16.gmra.mrb[0].mxu0 %v2869
      %v2929 = vpop.f32.mrb[0].mxu0
      %v2930 = vadd.f32 0.0, %v2929
      %v2931 = vpop.f32.mrb[0].mxu0
      %v2932 = vpop.f32.mrb[0].mxu0
      %v2933 = vadd.f32 0.0, %v2932
      %v2934 = vpop.f32.mrb[0].mxu0
      %2935 = vmatprep.mubr.bf16.mxu0 0
      %2936 = vmatmul.mubr.bf16.gmra.mrb[0].mxu0 %v2872
      %v2937 = vpop.f32.mrb[0].mxu0
      %v2938 = vadd.f32 0.0, %v2937
      %v2939 = vpop.f32.mrb[0].mxu0
      %v2940 = vpop.f32.mrb[0].mxu0
      %v2941 = vadd.f32 0.0, %v2940
      %v2942 = vpop.f32.mrb[0].mxu0
      %2943 = vmatprep.mubr.bf16.mxu0 0
      %2944 = vmatmul.mubr.bf16.gmra.mrb[0].mxu0 %v2875
      %v2945 = vpop.f32.mrb[0].mxu0
      %v2946 = vadd.f32 0.0, %v2945
      %v2947 = vpop.f32.mrb[0].mxu0
      %v2948 = vpop.f32.mrb[0].mxu0
      %v2949 = vadd.f32 0.0, %v2948
      %v2950 = vpop.f32.mrb[0].mxu0
      %2951 = vmatprep.mubr.bf16.mxu0 0
      %2952 = vmatmul.mubr.bf16.gmra.mrb[0].mxu0 %v2878
      %v2953 = vpop.f32.mrb[0].mxu0
      %v2954 = vadd.f32 0.0, %v2953
      %v2955 = vpop.f32.mrb[0].mxu0
      %v2956 = vpop.f32.mrb[0].mxu0
      %v2957 = vadd.f32 0.0, %v2956
      %v2958 = vpop.f32.mrb[0].mxu0
      %2959 = vmatprep.mubr.bf16.mxu0 0
      %2960 = vmatmul.mubr.bf16.gmra.mrb[0].mxu0 %v2881
      %v2961 = vpop.f32.mrb[0].mxu0
      %v2962 = vadd.f32 0.0, %v2961
      %v2963 = vpop.f32.mrb[0].mxu0
      %v2964 = vpop.f32.mrb[0].mxu0
      %v2965 = vadd.f32 0.0, %v2964
      %v2966 = vpop.f32.mrb[0].mxu0
      %2967 = vmatprep.mubr.bf16.mxu0 0
      %2968 = vmatmul.mubr.bf16.gmra.mrb[0].mxu0 %v2884
      %v2969 = vpop.f32.mrb[0].mxu0
      %v2970 = vadd.f32 0.0, %v2969
      %v2971 = vpop.f32.mrb[0].mxu0
      %v2972 = vpop.f32.mrb[0].mxu0
      %v2973 = vadd.f32 0.0, %v2972
      %v2974 = vpop.f32.mrb[0].mxu0
      %2975 = vmatprep.mubr.bf16.mxu0 0
      %2976 = vmatmul.mubr.bf16.gmra.mrb[0].mxu0 %v2887
      %v2977 = vpop.f32.mrb[0].mxu0
      %v2978 = vadd.f32 0.0, %v2977
      %v2979 = vpop.f32.mrb[0].mxu0
      %v2980 = vpop.f32.mrb[0].mxu0
      %v2981 = vadd.f32 0.0, %v2980
      %v2982 = vpop.f32.mrb[0].mxu0
      %2983 = vmatprep.mubr.bf16.mxu0 0
      %2984 = vmatmul.mubr.bf16.gmra.mrb[0].mxu0 %v2890
      %v2985 = vpop.f32.mrb[0].mxu0
      %v2986 = vadd.f32 0.0, %v2985
      %v2987 = vpop.f32.mrb[0].mxu0
      %v2988 = vpop.f32.mrb[0].mxu0
      %v2989 = vadd.f32 0.0, %v2988
      %v2990 = vpop.f32.mrb[0].mxu0
      %2991 = vdwg.mxu0
      %v2992 = vadd.f32 %v2827, %v2930
      %v2993 = vadd.f32 %v2828, %v2933
      %v2994 = vadd.f32 %v2829, %v2938
      %v2995 = vadd.f32 %v2830, %v2941
      %v2996 = vadd.f32 %v2831, %v2946
      %v2997 = vadd.f32 %v2832, %v2949
      %v2998 = vadd.f32 %v2833, %v2954
      %v2999 = vadd.f32 %v2834, %v2957
      %v3000 = vadd.f32 %v2835, %v2962
      %v3001 = vadd.f32 %v2836, %v2965
      %v3002 = vadd.f32 %v2837, %v2970
      %v3003 = vadd.f32 %v2838, %v2973
      %v3004 = vadd.f32 %v2839, %v2978
      %v3005 = vadd.f32 %v2840, %v2981
      %v3006 = vadd.f32 %v2841, %v2986
      %v3007 = vadd.f32 %v2842, %v2989
      %s3008 = scalar_lea.vmem [#allocation2], 240
      %v3009 = vld [vmem:[%s3008] sm:$0xff]
      %v3010 = vld [vmem:[%s3008 + $0x8] sm:$0xff]
      %v3011 = vld [vmem:[%s3008 + $0x18] sm:$0xff]
      %v3012 = vld [vmem:[%s3008 + $0x20] sm:$0xff]
      %v3013 = vld [vmem:[%s3008 + $0x30] sm:$0xff]
      %v3014 = vld [vmem:[%s3008 + $0x38] sm:$0xff]
      %v3015 = vld [vmem:[%s3008 + $0x48] sm:$0xff]
      %v3016 = vld [vmem:[%s3008 + $0x50] sm:$0xff]
      %v3017 = vld [vmem:[%s3008 + $0x60] sm:$0xff]
      %v3018 = vld [vmem:[%s3008 + $0x68] sm:$0xff]
      %v3019 = vld [vmem:[%s3008 + $0x78] sm:$0xff]
      %v3020 = vld [vmem:[%s3008 + $0x80] sm:$0xff]
      %v3021 = vld [vmem:[%s3008 + $0x90] sm:$0xff]
      %v3022 = vld [vmem:[%s3008 + $0x98] sm:$0xff]
      %v3023 = vld [vmem:[%s3008 + $0xa8] sm:$0xff]
      %v3024 = vld [vmem:[%s3008 + $0xb0] sm:$0xff]
      %v3025 = vpack.c.bf16 %v3010, %v3009
      %v3026 = vpack.c.bf16 %v3012, %v3011
      %v3027 = vpack.c.bf16 %v3014, %v3013
      %v3028 = vpack.c.bf16 %v3016, %v3015
      %v3029 = vpack.c.bf16 %v3018, %v3017
      %v3030 = vpack.c.bf16 %v3020, %v3019
      %v3031 = vpack.c.bf16 %v3022, %v3021
      %v3032 = vpack.c.bf16 %v3024, %v3023
      %v3033 = vld [vmem:[%s1422] sm:$0x3]
      %v3035 = vsel %vm226, %v3025, 0
      %v3038 = vsel %vm226, %v3026, 0
      %v3041 = vsel %vm226, %v3027, 0
      %v3044 = vsel %vm226, %v3028, 0
      %v3047 = vsel %vm226, %v3029, 0
      %v3050 = vsel %vm226, %v3030, 0
      %v3053 = vsel %vm226, %v3031, 0
      %v3056 = vsel %vm226, %v3032, 0
      %v3059 = vsel %vm508, %v3033, 0
      %3061 = vmatprep.subr.bf16.mxu0 0
      %3062 = vmatpush1.bf16.msra.mxu0 %v3059
      %3063 = vmatprep.subr.bf16.mxu0 0
      %3064 = vmatpush1.bf16.msra.mxu0 0
      %3065 = vmatprep.subr.bf16.mxu0 0
      %3066 = vmatpush1.bf16.msra.mxu0 0
      %3067 = vmatprep.subr.bf16.mxu0 0
      %3068 = vmatpush1.bf16.msra.mxu0 0
      %3069 = vmatprep.subr.bf16.mxu0 0
      %3070 = vmatpush1.bf16.msra.mxu0 0
      %3071 = vmatprep.subr.bf16.mxu0 0
      %3072 = vmatpush1.bf16.msra.mxu0 0
      %3073 = vmatprep.subr.bf16.mxu0 0
      %3074 = vmatpush1.bf16.msra.mxu0 0
      %3075 = vmatprep.subr.bf16.mxu0 0
      %3076 = vmatpush1.bf16.msra.mxu0 0
      %3077 = vmatprep.subr.bf16.mxu0 0
      %3078 = vmatpush1.bf16.msra.mxu0 0
      %3079 = vmatprep.subr.bf16.mxu0 0
      %3080 = vmatpush1.bf16.msra.mxu0 0
      %3081 = vmatprep.subr.bf16.mxu0 0
      %3082 = vmatpush1.bf16.msra.mxu0 0
      %3083 = vmatprep.subr.bf16.mxu0 0
      %3084 = vmatpush1.bf16.msra.mxu0 0
      %3085 = vmatprep.subr.bf16.mxu0 0
      %3086 = vmatpush1.bf16.msra.mxu0 0
      %3087 = vmatprep.subr.bf16.mxu0 0
      %3088 = vmatpush1.bf16.msra.mxu0 0
      %3089 = vmatprep.subr.bf16.mxu0 0
      %3090 = vmatpush1.bf16.msra.mxu0 0
      %3091 = vmatprep.subr.bf16.mxu0 0
      %3092 = vmatpush1.bf16.msra.mxu0 0
      %3093 = vmatprep.mubr.bf16.mxu0 0
      %3094 = vmatmul.mubr.bf16.gmra.mrb[0].mxu0 %v3035
      %v3095 = vpop.f32.mrb[0].mxu0
      %v3096 = vadd.f32 0.0, %v3095
      %v3097 = vpop.f32.mrb[0].mxu0
      %v3098 = vpop.f32.mrb[0].mxu0
      %v3099 = vadd.f32 0.0, %v3098
      %v3100 = vpop.f32.mrb[0].mxu0
      %3101 = vmatprep.mubr.bf16.mxu0 0
      %3102 = vmatmul.mubr.bf16.gmra.mrb[0].mxu0 %v3038
      %v3103 = vpop.f32.mrb[0].mxu0
      %v3104 = vadd.f32 0.0, %v3103
      %v3105 = vpop.f32.mrb[0].mxu0
      %v3106 = vpop.f32.mrb[0].mxu0
      %v3107 = vadd.f32 0.0, %v3106
      %v3108 = vpop.f32.mrb[0].mxu0
      %3109 = vmatprep.mubr.bf16.mxu0 0
      %3110 = vmatmul.mubr.bf16.gmra.mrb[0].mxu0 %v3041
      %v3111 = vpop.f32.mrb[0].mxu0
      %v3112 = vadd.f32 0.0, %v3111
      %v3113 = vpop.f32.mrb[0].mxu0
      %v3114 = vpop.f32.mrb[0].mxu0
      %v3115 = vadd.f32 0.0, %v3114
      %v3116 = vpop.f32.mrb[0].mxu0
      %3117 = vmatprep.mubr.bf16.mxu0 0
      %3118 = vmatmul.mubr.bf16.gmra.mrb[0].mxu0 %v3044
      %v3119 = vpop.f32.mrb[0].mxu0
      %v3120 = vadd.f32 0.0, %v3119
      %v3121 = vpop.f32.mrb[0].mxu0
      %v3122 = vpop.f32.mrb[0].mxu0
      %v3123 = vadd.f32 0.0, %v3122
      %v3124 = vpop.f32.mrb[0].mxu0
      %3125 = vmatprep.mubr.bf16.mxu0 0
      %3126 = vmatmul.mubr.bf16.gmra.mrb[0].mxu0 %v3047
      %v3127 = vpop.f32.mrb[0].mxu0
      %v3128 = vadd.f32 0.0, %v3127
      %v3129 = vpop.f32.mrb[0].mxu0
      %v3130 = vpop.f32.mrb[0].mxu0
      %v3131 = vadd.f32 0.0, %v3130
      %v3132 = vpop.f32.mrb[0].mxu0
      %3133 = vmatprep.mubr.bf16.mxu0 0
      %3134 = vmatmul.mubr.bf16.gmra.mrb[0].mxu0 %v3050
      %v3135 = vpop.f32.mrb[0].mxu0
      %v3136 = vadd.f32 0.0, %v3135
      %v3137 = vpop.f32.mrb[0].mxu0
      %v3138 = vpop.f32.mrb[0].mxu0
      %v3139 = vadd.f32 0.0, %v3138
      %v3140 = vpop.f32.mrb[0].mxu0
      %3141 = vmatprep.mubr.bf16.mxu0 0
      %3142 = vmatmul.mubr.bf16.gmra.mrb[0].mxu0 %v3053
      %v3143 = vpop.f32.mrb[0].mxu0
      %v3144 = vadd.f32 0.0, %v3143
      %v3145 = vpop.f32.mrb[0].mxu0
      %v3146 = vpop.f32.mrb[0].mxu0
      %v3147 = vadd.f32 0.0, %v3146
      %v3148 = vpop.f32.mrb[0].mxu0
      %3149 = vmatprep.mubr.bf16.mxu0 0
      %3150 = vmatmul.mubr.bf16.gmra.mrb[0].mxu0 %v3056
      %v3151 = vpop.f32.mrb[0].mxu0
      %v3152 = vadd.f32 0.0, %v3151
      %v3153 = vpop.f32.mrb[0].mxu0
      %v3154 = vpop.f32.mrb[0].mxu0
      %v3155 = vadd.f32 0.0, %v3154
      %v3156 = vpop.f32.mrb[0].mxu0
      %3157 = vdwg.mxu0
      %v3158 = vadd.f32 %v2992, %v3096
      %v3159 = vadd.f32 %v2993, %v3099
      %v3160 = vadd.f32 %v2994, %v3104
      %v3161 = vadd.f32 %v2995, %v3107
      %v3162 = vadd.f32 %v2996, %v3112
      %v3163 = vadd.f32 %v2997, %v3115
      %v3164 = vadd.f32 %v2998, %v3120
      %v3165 = vadd.f32 %v2999, %v3123
      %v3166 = vadd.f32 %v3000, %v3128
      %v3167 = vadd.f32 %v3001, %v3131
      %v3168 = vadd.f32 %v3002, %v3136
      %v3169 = vadd.f32 %v3003, %v3139
      %v3170 = vadd.f32 %v3004, %v3144
      %v3171 = vadd.f32 %v3005, %v3147
      %v3172 = vadd.f32 %v3006, %v3152
      %v3173 = vadd.f32 %v3007, %v3155
      %v3174 = vld [vmem:[%s3008 + $0x1] sm:$0xff]
      %v3175 = vld [vmem:[%s3008 + $0x9] sm:$0xff]
      %v3176 = vld [vmem:[%s3008 + $0x19] sm:$0xff]
      %v3177 = vld [vmem:[%s3008 + $0x21] sm:$0xff]
      %v3178 = vld [vmem:[%s3008 + $0x31] sm:$0xff]
      %v3179 = vld [vmem:[%s3008 + $0x39] sm:$0xff]
      %v3180 = vld [vmem:[%s3008 + $0x49] sm:$0xff]
      %v3181 = vld [vmem:[%s3008 + $0x51] sm:$0xff]
      %v3182 = vld [vmem:[%s3008 + $0x61] sm:$0xff]
      %v3183 = vld [vmem:[%s3008 + $0x69] sm:$0xff]
      %v3184 = vld [vmem:[%s3008 + $0x79] sm:$0xff]
      %v3185 = vld [vmem:[%s3008 + $0x81] sm:$0xff]
      %v3186 = vld [vmem:[%s3008 + $0x91] sm:$0xff]
      %v3187 = vld [vmem:[%s3008 + $0x99] sm:$0xff]
      %v3188 = vld [vmem:[%s3008 + $0xa9] sm:$0xff]
      %v3189 = vld [vmem:[%s3008 + $0xb1] sm:$0xff]
      %v3190 = vpack.c.bf16 %v3175, %v3174
      %v3191 = vpack.c.bf16 %v3177, %v3176
      %v3192 = vpack.c.bf16 %v3179, %v3178
      %v3193 = vpack.c.bf16 %v3181, %v3180
      %v3194 = vpack.c.bf16 %v3183, %v3182
      %v3195 = vpack.c.bf16 %v3185, %v3184
      %v3196 = vpack.c.bf16 %v3187, %v3186
      %v3197 = vpack.c.bf16 %v3189, %v3188
      %v3198 = vld [vmem:[%s1588] sm:$0x3]
      %v3200 = vsel %vm226, %v3190, 0
      %v3203 = vsel %vm226, %v3191, 0
      %v3206 = vsel %vm226, %v3192, 0
      %v3209 = vsel %vm226, %v3193, 0
      %v3212 = vsel %vm226, %v3194, 0
      %v3215 = vsel %vm226, %v3195, 0
      %v3218 = vsel %vm226, %v3196, 0
      %v3221 = vsel %vm226, %v3197, 0
      %v3224 = vsel %vm508, %v3198, 0
      %3226 = vmatprep.subr.bf16.mxu0 0
      %3227 = vmatpush1.bf16.msra.mxu0 %v3224
      %3228 = vmatprep.subr.bf16.mxu0 0
      %3229 = vmatpush1.bf16.msra.mxu0 0
      %3230 = vmatprep.subr.bf16.mxu0 0
      %3231 = vmatpush1.bf16.msra.mxu0 0
      %3232 = vmatprep.subr.bf16.mxu0 0
      %3233 = vmatpush1.bf16.msra.mxu0 0
      %3234 = vmatprep.subr.bf16.mxu0 0
      %3235 = vmatpush1.bf16.msra.mxu0 0
      %3236 = vmatprep.subr.bf16.mxu0 0
      %3237 = vmatpush1.bf16.msra.mxu0 0
      %3238 = vmatprep.subr.bf16.mxu0 0
      %3239 = vmatpush1.bf16.msra.mxu0 0
      %3240 = vmatprep.subr.bf16.mxu0 0
      %3241 = vmatpush1.bf16.msra.mxu0 0
      %3242 = vmatprep.subr.bf16.mxu0 0
      %3243 = vmatpush1.bf16.msra.mxu0 0
      %3244 = vmatprep.subr.bf16.mxu0 0
      %3245 = vmatpush1.bf16.msra.mxu0 0
      %3246 = vmatprep.subr.bf16.mxu0 0
      %3247 = vmatpush1.bf16.msra.mxu0 0
      %3248 = vmatprep.subr.bf16.mxu0 0
      %3249 = vmatpush1.bf16.msra.mxu0 0
      %3250 = vmatprep.subr.bf16.mxu0 0
      %3251 = vmatpush1.bf16.msra.mxu0 0
      %3252 = vmatprep.subr.bf16.mxu0 0
      %3253 = vmatpush1.bf16.msra.mxu0 0
      %3254 = vmatprep.subr.bf16.mxu0 0
      %3255 = vmatpush1.bf16.msra.mxu0 0
      %3256 = vmatprep.subr.bf16.mxu0 0
      %3257 = vmatpush1.bf16.msra.mxu0 0
      %3258 = vmatprep.mubr.bf16.mxu0 0
      %3259 = vmatmul.mubr.bf16.gmra.mrb[0].mxu0 %v3200
      %v3260 = vpop.f32.mrb[0].mxu0
      %v3261 = vadd.f32 0.0, %v3260
      %v3262 = vpop.f32.mrb[0].mxu0
      %v3263 = vpop.f32.mrb[0].mxu0
      %v3264 = vadd.f32 0.0, %v3263
      %v3265 = vpop.f32.mrb[0].mxu0
      %3266 = vmatprep.mubr.bf16.mxu0 0
      %3267 = vmatmul.mubr.bf16.gmra.mrb[0].mxu0 %v3203
      %v3268 = vpop.f32.mrb[0].mxu0
      %v3269 = vadd.f32 0.0, %v3268
      %v3270 = vpop.f32.mrb[0].mxu0
      %v3271 = vpop.f32.mrb[0].mxu0
      %v3272 = vadd.f32 0.0, %v3271
      %v3273 = vpop.f32.mrb[0].mxu0
      %3274 = vmatprep.mubr.bf16.mxu0 0
      %3275 = vmatmul.mubr.bf16.gmra.mrb[0].mxu0 %v3206
      %v3276 = vpop.f32.mrb[0].mxu0
      %v3277 = vadd.f32 0.0, %v3276
      %v3278 = vpop.f32.mrb[0].mxu0
      %v3279 = vpop.f32.mrb[0].mxu0
      %v3280 = vadd.f32 0.0, %v3279
      %v3281 = vpop.f32.mrb[0].mxu0
      %3282 = vmatprep.mubr.bf16.mxu0 0
      %3283 = vmatmul.mubr.bf16.gmra.mrb[0].mxu0 %v3209
      %v3284 = vpop.f32.mrb[0].mxu0
      %v3285 = vadd.f32 0.0, %v3284
      %v3286 = vpop.f32.mrb[0].mxu0
      %v3287 = vpop.f32.mrb[0].mxu0
      %v3288 = vadd.f32 0.0, %v3287
      %v3289 = vpop.f32.mrb[0].mxu0
      %3290 = vmatprep.mubr.bf16.mxu0 0
      %3291 = vmatmul.mubr.bf16.gmra.mrb[0].mxu0 %v3212
      %v3292 = vpop.f32.mrb[0].mxu0
      %v3293 = vadd.f32 0.0, %v3292
      %v3294 = vpop.f32.mrb[0].mxu0
      %v3295 = vpop.f32.mrb[0].mxu0
      %v3296 = vadd.f32 0.0, %v3295
      %v3297 = vpop.f32.mrb[0].mxu0
      %3298 = vmatprep.mubr.bf16.mxu0 0
      %3299 = vmatmul.mubr.bf16.gmra.mrb[0].mxu0 %v3215
      %v3300 = vpop.f32.mrb[0].mxu0
      %v3301 = vadd.f32 0.0, %v3300
      %v3302 = vpop.f32.mrb[0].mxu0
      %v3303 = vpop.f32.mrb[0].mxu0
      %v3304 = vadd.f32 0.0, %v3303
      %v3305 = vpop.f32.mrb[0].mxu0
      %3306 = vmatprep.mubr.bf16.mxu0 0
      %3307 = vmatmul.mubr.bf16.gmra.mrb[0].mxu0 %v3218
      %v3308 = vpop.f32.mrb[0].mxu0
      %v3309 = vadd.f32 0.0, %v3308
      %v3310 = vpop.f32.mrb[0].mxu0
      %v3311 = vpop.f32.mrb[0].mxu0
      %v3312 = vadd.f32 0.0, %v3311
      %v3313 = vpop.f32.mrb[0].mxu0
      %3314 = vmatprep.mubr.bf16.mxu0 0
      %3315 = vmatmul.mubr.bf16.gmra.mrb[0].mxu0 %v3221
      %v3316 = vpop.f32.mrb[0].mxu0
      %v3317 = vadd.f32 0.0, %v3316
      %v3318 = vpop.f32.mrb[0].mxu0
      %v3319 = vpop.f32.mrb[0].mxu0
      %v3320 = vadd.f32 0.0, %v3319
      %v3321 = vpop.f32.mrb[0].mxu0
      %3322 = vdwg.mxu0
      %v3323 = vadd.f32 %v3158, %v3261
      %v3324 = vadd.f32 %v3159, %v3264
      %v3325 = vadd.f32 %v3160, %v3269
      %v3326 = vadd.f32 %v3161, %v3272
      %v3327 = vadd.f32 %v3162, %v3277
      %v3328 = vadd.f32 %v3163, %v3280
      %v3329 = vadd.f32 %v3164, %v3285
      %v3330 = vadd.f32 %v3165, %v3288
      %v3331 = vadd.f32 %v3166, %v3293
      %v3332 = vadd.f32 %v3167, %v3296
      %v3333 = vadd.f32 %v3168, %v3301
      %v3334 = vadd.f32 %v3169, %v3304
      %v3335 = vadd.f32 %v3170, %v3309
      %v3336 = vadd.f32 %v3171, %v3312
      %v3337 = vadd.f32 %v3172, %v3317
      %v3338 = vadd.f32 %v3173, %v3320
      %v3339 = vld [vmem:[%s3008 + $0x2] sm:$0xff]
      %v3340 = vld [vmem:[%s3008 + $0xa] sm:$0xff]
      %v3341 = vld [vmem:[%s3008 + $0x1a] sm:$0xff]
      %v3342 = vld [vmem:[%s3008 + $0x22] sm:$0xff]
      %v3343 = vld [vmem:[%s3008 + $0x32] sm:$0xff]
      %v3344 = vld [vmem:[%s3008 + $0x3a] sm:$0xff]
      %v3345 = vld [vmem:[%s3008 + $0x4a] sm:$0xff]
      %v3346 = vld [vmem:[%s3008 + $0x52] sm:$0xff]
      %v3347 = vld [vmem:[%s3008 + $0x62] sm:$0xff]
      %v3348 = vld [vmem:[%s3008 + $0x6a] sm:$0xff]
      %v3349 = vld [vmem:[%s3008 + $0x7a] sm:$0xff]
      %v3350 = vld [vmem:[%s3008 + $0x82] sm:$0xff]
      %v3351 = vld [vmem:[%s3008 + $0x92] sm:$0xff]
      %v3352 = vld [vmem:[%s3008 + $0x9a] sm:$0xff]
      %v3353 = vld [vmem:[%s3008 + $0xaa] sm:$0xff]
      %v3354 = vld [vmem:[%s3008 + $0xb2] sm:$0xff]
      %v3355 = vpack.c.bf16 %v3340, %v3339
      %v3356 = vpack.c.bf16 %v3342, %v3341
      %v3357 = vpack.c.bf16 %v3344, %v3343
      %v3358 = vpack.c.bf16 %v3346, %v3345
      %v3359 = vpack.c.bf16 %v3348, %v3347
      %v3360 = vpack.c.bf16 %v3350, %v3349
      %v3361 = vpack.c.bf16 %v3352, %v3351
      %v3362 = vpack.c.bf16 %v3354, %v3353
      %v3363 = vld [vmem:[%s1754] sm:$0x3]
      %v3365 = vsel %vm226, %v3355, 0
      %v3368 = vsel %vm226, %v3356, 0
      %v3371 = vsel %vm226, %v3357, 0
      %v3374 = vsel %vm226, %v3358, 0
      %v3377 = vsel %vm226, %v3359, 0
      %v3380 = vsel %vm226, %v3360, 0
      %v3383 = vsel %vm226, %v3361, 0
      %v3386 = vsel %vm226, %v3362, 0
      %v3389 = vsel %vm508, %v3363, 0
      %3391 = vmatprep.subr.bf16.mxu0 0
      %3392 = vmatpush1.bf16.msra.mxu0 %v3389
      %3393 = vmatprep.subr.bf16.mxu0 0
      %3394 = vmatpush1.bf16.msra.mxu0 0
      %3395 = vmatprep.subr.bf16.mxu0 0
      %3396 = vmatpush1.bf16.msra.mxu0 0
      %3397 = vmatprep.subr.bf16.mxu0 0
      %3398 = vmatpush1.bf16.msra.mxu0 0
      %3399 = vmatprep.subr.bf16.mxu0 0
      %3400 = vmatpush1.bf16.msra.mxu0 0
      %3401 = vmatprep.subr.bf16.mxu0 0
      %3402 = vmatpush1.bf16.msra.mxu0 0
      %3403 = vmatprep.subr.bf16.mxu0 0
      %3404 = vmatpush1.bf16.msra.mxu0 0
      %3405 = vmatprep.subr.bf16.mxu0 0
      %3406 = vmatpush1.bf16.msra.mxu0 0
      %3407 = vmatprep.subr.bf16.mxu0 0
      %3408 = vmatpush1.bf16.msra.mxu0 0
      %3409 = vmatprep.subr.bf16.mxu0 0
      %3410 = vmatpush1.bf16.msra.mxu0 0
      %3411 = vmatprep.subr.bf16.mxu0 0
      %3412 = vmatpush1.bf16.msra.mxu0 0
      %3413 = vmatprep.subr.bf16.mxu0 0
      %3414 = vmatpush1.bf16.msra.mxu0 0
      %3415 = vmatprep.subr.bf16.mxu0 0
      %3416 = vmatpush1.bf16.msra.mxu0 0
      %3417 = vmatprep.subr.bf16.mxu0 0
      %3418 = vmatpush1.bf16.msra.mxu0 0
      %3419 = vmatprep.subr.bf16.mxu0 0
      %3420 = vmatpush1.bf16.msra.mxu0 0
      %3421 = vmatprep.subr.bf16.mxu0 0
      %3422 = vmatpush1.bf16.msra.mxu0 0
      %3423 = vmatprep.mubr.bf16.mxu0 0
      %3424 = vmatmul.mubr.bf16.gmra.mrb[0].mxu0 %v3365
      %v3425 = vpop.f32.mrb[0].mxu0
      %v3426 = vadd.f32 0.0, %v3425
      %v3427 = vpop.f32.mrb[0].mxu0
      %v3428 = vpop.f32.mrb[0].mxu0
      %v3429 = vadd.f32 0.0, %v3428
      %v3430 = vpop.f32.mrb[0].mxu0
      %3431 = vmatprep.mubr.bf16.mxu0 0
      %3432 = vmatmul.mubr.bf16.gmra.mrb[0].mxu0 %v3368
      %v3433 = vpop.f32.mrb[0].mxu0
      %v3434 = vadd.f32 0.0, %v3433
      %v3435 = vpop.f32.mrb[0].mxu0
      %v3436 = vpop.f32.mrb[0].mxu0
      %v3437 = vadd.f32 0.0, %v3436
      %v3438 = vpop.f32.mrb[0].mxu0
      %3439 = vmatprep.mubr.bf16.mxu0 0
      %3440 = vmatmul.mubr.bf16.gmra.mrb[0].mxu0 %v3371
      %v3441 = vpop.f32.mrb[0].mxu0
      %v3442 = vadd.f32 0.0, %v3441
      %v3443 = vpop.f32.mrb[0].mxu0
      %v3444 = vpop.f32.mrb[0].mxu0
      %v3445 = vadd.f32 0.0, %v3444
      %v3446 = vpop.f32.mrb[0].mxu0
      %3447 = vmatprep.mubr.bf16.mxu0 0
      %3448 = vmatmul.mubr.bf16.gmra.mrb[0].mxu0 %v3374
      %v3449 = vpop.f32.mrb[0].mxu0
      %v3450 = vadd.f32 0.0, %v3449
      %v3451 = vpop.f32.mrb[0].mxu0
      %v3452 = vpop.f32.mrb[0].mxu0
      %v3453 = vadd.f32 0.0, %v3452
      %v3454 = vpop.f32.mrb[0].mxu0
      %3455 = vmatprep.mubr.bf16.mxu0 0
      %3456 = vmatmul.mubr.bf16.gmra.mrb[0].mxu0 %v3377
      %v3457 = vpop.f32.mrb[0].mxu0
      %v3458 = vadd.f32 0.0, %v3457
      %v3459 = vpop.f32.mrb[0].mxu0
      %v3460 = vpop.f32.mrb[0].mxu0
      %v3461 = vadd.f32 0.0, %v3460
      %v3462 = vpop.f32.mrb[0].mxu0
      %3463 = vmatprep.mubr.bf16.mxu0 0
      %3464 = vmatmul.mubr.bf16.gmra.mrb[0].mxu0 %v3380
      %v3465 = vpop.f32.mrb[0].mxu0
      %v3466 = vadd.f32 0.0, %v3465
      %v3467 = vpop.f32.mrb[0].mxu0
      %v3468 = vpop.f32.mrb[0].mxu0
      %v3469 = vadd.f32 0.0, %v3468
      %v3470 = vpop.f32.mrb[0].mxu0
      %3471 = vmatprep.mubr.bf16.mxu0 0
      %3472 = vmatmul.mubr.bf16.gmra.mrb[0].mxu0 %v3383
      %v3473 = vpop.f32.mrb[0].mxu0
      %v3474 = vadd.f32 0.0, %v3473
      %v3475 = vpop.f32.mrb[0].mxu0
      %v3476 = vpop.f32.mrb[0].mxu0
      %v3477 = vadd.f32 0.0, %v3476
      %v3478 = vpop.f32.mrb[0].mxu0
      %3479 = vmatprep.mubr.bf16.mxu0 0
      %3480 = vmatmul.mubr.bf16.gmra.mrb[0].mxu0 %v3386
      %v3481 = vpop.f32.mrb[0].mxu0
      %v3482 = vadd.f32 0.0, %v3481
      %v3483 = vpop.f32.mrb[0].mxu0
      %v3484 = vpop.f32.mrb[0].mxu0
      %v3485 = vadd.f32 0.0, %v3484
      %v3486 = vpop.f32.mrb[0].mxu0
      %3487 = vdwg.mxu0
      %v3488 = vadd.f32 %v3323, %v3426
      %v3489 = vadd.f32 %v3324, %v3429
      %v3490 = vadd.f32 %v3325, %v3434
      %v3491 = vadd.f32 %v3326, %v3437
      %v3492 = vadd.f32 %v3327, %v3442
      %v3493 = vadd.f32 %v3328, %v3445
      %v3494 = vadd.f32 %v3329, %v3450
      %v3495 = vadd.f32 %v3330, %v3453
      %v3496 = vadd.f32 %v3331, %v3458
      %v3497 = vadd.f32 %v3332, %v3461
      %v3498 = vadd.f32 %v3333, %v3466
      %v3499 = vadd.f32 %v3334, %v3469
      %v3500 = vadd.f32 %v3335, %v3474
      %v3501 = vadd.f32 %v3336, %v3477
      %v3502 = vadd.f32 %v3337, %v3482
      %v3503 = vadd.f32 %v3338, %v3485
      %v3504 = vld [vmem:[%s2] sm:$0x1]
      %v3506 = vlaneseq
      %v3507 = vshrl.u32 %v3506, 7
      %v3508 = vsub.s32 0, %v3507
      %v3509 = vrot.slane %v3504, %v3508
      %v3511 = vadd.f32 %v3488, %v3509
      %v3512 = vadd.f32 %v3489, %v3509
      %v3513 = vadd.f32 %v3490, %v3509
      %v3514 = vadd.f32 %v3491, %v3509
      %v3515 = vadd.f32 %v3492, %v3509
      %v3516 = vadd.f32 %v3493, %v3509
      %v3517 = vadd.f32 %v3494, %v3509
      %v3518 = vadd.f32 %v3495, %v3509
      %v3519 = vadd.f32 %v3496, %v3509
      %v3520 = vadd.f32 %v3497, %v3509
      %v3521 = vadd.f32 %v3498, %v3509
      %v3522 = vadd.f32 %v3499, %v3509
      %v3523 = vadd.f32 %v3500, %v3509
      %v3524 = vadd.f32 %v3501, %v3509
      %v3525 = vadd.f32 %v3502, %v3509
      %v3526 = vadd.f32 %v3503, %v3509
      %v3527 = vsub.f32 0.0, %v3511
      %v3528 = vsub.f32 0.0, %v3512
      %v3529 = vsub.f32 0.0, %v3513
      %v3530 = vsub.f32 0.0, %v3514
      %v3531 = vsub.f32 0.0, %v3515
      %v3532 = vsub.f32 0.0, %v3516
      %v3533 = vsub.f32 0.0, %v3517
      %v3534 = vsub.f32 0.0, %v3518
      %v3535 = vsub.f32 0.0, %v3519
      %v3536 = vsub.f32 0.0, %v3520
      %v3537 = vsub.f32 0.0, %v3521
      %v3538 = vsub.f32 0.0, %v3522
      %v3539 = vsub.f32 0.0, %v3523
      %v3540 = vsub.f32 0.0, %v3524
      %v3541 = vsub.f32 0.0, %v3525
      %v3542 = vsub.f32 0.0, %v3526
      %v3543 = vmul.f32 %v3527, 1.442695
      %v3544 = vpow.pop %v3543
      %v3545 = vmul.f32 %v3528, 1.442695
      %v3546 = vpow.pop %v3545
      %v3547 = vmul.f32 %v3529, 1.442695
      %v3548 = vpow.pop %v3547
      %v3549 = vmul.f32 %v3530, 1.442695
      %v3550 = vpow.pop %v3549
      %v3551 = vmul.f32 %v3531, 1.442695
      %v3552 = vpow.pop %v3551
      %v3553 = vmul.f32 %v3532, 1.442695
      %v3554 = vpow.pop %v3553
      %v3555 = vmul.f32 %v3533, 1.442695
      %v3556 = vpow.pop %v3555
      %v3557 = vmul.f32 %v3534, 1.442695
      %v3558 = vpow.pop %v3557
      %v3559 = vmul.f32 %v3535, 1.442695
      %v3560 = vpow.pop %v3559
      %v3561 = vmul.f32 %v3536, 1.442695
      %v3562 = vpow.pop %v3561
      %v3563 = vmul.f32 %v3537, 1.442695
      %v3564 = vpow.pop %v3563
      %v3565 = vmul.f32 %v3538, 1.442695
      %v3566 = vpow.pop %v3565
      %v3567 = vmul.f32 %v3539, 1.442695
      %v3568 = vpow.pop %v3567
      %v3569 = vmul.f32 %v3540, 1.442695
      %v3570 = vpow.pop %v3569
      %v3571 = vmul.f32 %v3541, 1.442695
      %v3572 = vpow.pop %v3571
      %v3573 = vmul.f32 %v3542, 1.442695
      %v3574 = vpow.pop %v3573
      %v3575 = vadd.f32 %v3544, 1.0
      %v3576 = vadd.f32 %v3546, 1.0
      %v3577 = vadd.f32 %v3548, 1.0
      %v3578 = vadd.f32 %v3550, 1.0
      %v3579 = vadd.f32 %v3552, 1.0
      %v3580 = vadd.f32 %v3554, 1.0
      %v3581 = vadd.f32 %v3556, 1.0
      %v3582 = vadd.f32 %v3558, 1.0
      %v3583 = vadd.f32 %v3560, 1.0
      %v3584 = vadd.f32 %v3562, 1.0
      %v3585 = vadd.f32 %v3564, 1.0
      %v3586 = vadd.f32 %v3566, 1.0
      %v3587 = vadd.f32 %v3568, 1.0
      %v3588 = vadd.f32 %v3570, 1.0
      %v3589 = vadd.f32 %v3572, 1.0
      %v3590 = vadd.f32 %v3574, 1.0
      %v3591 = vrcp.pop %v3575
      %v3592 = vmul.f32 1.0, %v3591
      %v3593 = vrcp.pop %v3576
      %v3594 = vmul.f32 1.0, %v3593
      %v3595 = vrcp.pop %v3577
      %v3596 = vmul.f32 1.0, %v3595
      %v3597 = vrcp.pop %v3578
      %v3598 = vmul.f32 1.0, %v3597
      %v3599 = vrcp.pop %v3579
      %v3600 = vmul.f32 1.0, %v3599
      %v3601 = vrcp.pop %v3580
      %v3602 = vmul.f32 1.0, %v3601
      %v3603 = vrcp.pop %v3581
      %v3604 = vmul.f32 1.0, %v3603
      %v3605 = vrcp.pop %v3582
      %v3606 = vmul.f32 1.0, %v3605
      %v3607 = vrcp.pop %v3583
      %v3608 = vmul.f32 1.0, %v3607
      %v3609 = vrcp.pop %v3584
      %v3610 = vmul.f32 1.0, %v3609
      %v3611 = vrcp.pop %v3585
      %v3612 = vmul.f32 1.0, %v3611
      %v3613 = vrcp.pop %v3586
      %v3614 = vmul.f32 1.0, %v3613
      %v3615 = vrcp.pop %v3587
      %v3616 = vmul.f32 1.0, %v3615
      %v3617 = vrcp.pop %v3588
      %v3618 = vmul.f32 1.0, %v3617
      %v3619 = vrcp.pop %v3589
      %v3620 = vmul.f32 1.0, %v3619
      %v3621 = vrcp.pop %v3590
      %v3622 = vmul.f32 1.0, %v3621
      %v3623 = vmul.f32 %v3511, %v3592
      %v3624 = vmul.f32 %v3512, %v3594
      %v3625 = vmul.f32 %v3513, %v3596
      %v3626 = vmul.f32 %v3514, %v3598
      %v3627 = vmul.f32 %v3515, %v3600
      %v3628 = vmul.f32 %v3516, %v3602
      %v3629 = vmul.f32 %v3517, %v3604
      %v3630 = vmul.f32 %v3518, %v3606
      %v3631 = vmul.f32 %v3519, %v3608
      %v3632 = vmul.f32 %v3520, %v3610
      %v3633 = vmul.f32 %v3521, %v3612
      %v3634 = vmul.f32 %v3522, %v3614
      %v3635 = vmul.f32 %v3523, %v3616
      %v3636 = vmul.f32 %v3524, %v3618
      %v3637 = vmul.f32 %v3525, %v3620
      %v3638 = vmul.f32 %v3526, %v3622
      %s3639 = scalar_lea.vmem [#allocation3], 216
      %3640 = vst.msk [vmem:[%s3639 + $0x1] sm:$0xff] %vm226, %v3623
      %3641 = vst.msk [vmem:[%s3639 + $0x9] sm:$0xff] %vm226, %v3624
      %3642 = vst.msk [vmem:[%s3639 + $0x19] sm:$0xff] %vm226, %v3625
      %3643 = vst.msk [vmem:[%s3639 + $0x21] sm:$0xff] %vm226, %v3626
      %3644 = vst.msk [vmem:[%s3639 + $0x31] sm:$0xff] %vm226, %v3627
      %3645 = vst.msk [vmem:[%s3639 + $0x39] sm:$0xff] %vm226, %v3628
      %3646 = vst.msk [vmem:[%s3639 + $0x49] sm:$0xff] %vm226, %v3629
      %3647 = vst.msk [vmem:[%s3639 + $0x51] sm:$0xff] %vm226, %v3630
      %3648 = vst.msk [vmem:[%s3639 + $0x61] sm:$0xff] %vm226, %v3631
      %3649 = vst.msk [vmem:[%s3639 + $0x69] sm:$0xff] %vm226, %v3632
      %3650 = vst.msk [vmem:[%s3639 + $0x79] sm:$0xff] %vm226, %v3633
      %3651 = vst.msk [vmem:[%s3639 + $0x81] sm:$0xff] %vm226, %v3634
      %3652 = vst.msk [vmem:[%s3639 + $0x91] sm:$0xff] %vm226, %v3635
      %3653 = vst.msk [vmem:[%s3639 + $0x99] sm:$0xff] %vm226, %v3636
      %3654 = vst.msk [vmem:[%s3639 + $0xa9] sm:$0xff] %vm226, %v3637
      %3655 = vst.msk [vmem:[%s3639 + $0xb1] sm:$0xff] %vm226, %v3638
      %v3656 = vld [vmem:[#allocation3] sm:$0xff]
      %v3657 = vld [vmem:[#allocation3 + $0x8] sm:$0xff]
      %v3658 = vld [vmem:[#allocation3 + $0x18] sm:$0xff]
      %v3659 = vld [vmem:[#allocation3 + $0x20] sm:$0xff]
      %v3660 = vld [vmem:[#allocation3 + $0x30] sm:$0xff]
      %v3661 = vld [vmem:[#allocation3 + $0x38] sm:$0xff]
      %v3662 = vld [vmem:[#allocation3 + $0x48] sm:$0xff]
      %v3663 = vld [vmem:[#allocation3 + $0x50] sm:$0xff]
      %v3664 = vld [vmem:[#allocation3 + $0x60] sm:$0xff]
      %v3665 = vld [vmem:[#allocation3 + $0x68] sm:$0xff]
      %v3666 = vld [vmem:[#allocation3 + $0x78] sm:$0xff]
      %v3667 = vld [vmem:[#allocation3 + $0x80] sm:$0xff]
      %v3668 = vld [vmem:[#allocation3 + $0x90] sm:$0xff]
      %v3669 = vld [vmem:[#allocation3 + $0x98] sm:$0xff]
      %v3670 = vld [vmem:[#allocation3 + $0xa8] sm:$0xff]
      %v3671 = vld [vmem:[#allocation3 + $0xb0] sm:$0xff]
      %v3672 = vpack.c.bf16 %v3657, %v3656
      %v3673 = vpack.c.bf16 %v3659, %v3658
      %v3674 = vpack.c.bf16 %v3661, %v3660
      %v3675 = vpack.c.bf16 %v3663, %v3662
      %v3676 = vpack.c.bf16 %v3665, %v3664
      %v3677 = vpack.c.bf16 %v3667, %v3666
      %v3678 = vpack.c.bf16 %v3669, %v3668
      %v3679 = vpack.c.bf16 %v3671, %v3670
      %v3680 = vld [vmem:[%s3] sm:$0x3]
      %v3681 = vld [vmem:[#allocation3 + $0x1] sm:$0xff]
      %v3682 = vld [vmem:[#allocation3 + $0x9] sm:$0xff]
      %v3683 = vld [vmem:[#allocation3 + $0x19] sm:$0xff]
      %v3684 = vld [vmem:[#allocation3 + $0x21] sm:$0xff]
      %v3685 = vld [vmem:[#allocation3 + $0x31] sm:$0xff]
      %v3686 = vld [vmem:[#allocation3 + $0x39] sm:$0xff]
      %v3687 = vld [vmem:[#allocation3 + $0x49] sm:$0xff]
      %v3688 = vld [vmem:[#allocation3 + $0x51] sm:$0xff]
      %v3689 = vld [vmem:[#allocation3 + $0x61] sm:$0xff]
      %v3690 = vld [vmem:[#allocation3 + $0x69] sm:$0xff]
      %v3691 = vld [vmem:[#allocation3 + $0x79] sm:$0xff]
      %v3692 = vld [vmem:[#allocation3 + $0x81] sm:$0xff]
      %v3693 = vld [vmem:[#allocation3 + $0x91] sm:$0xff]
      %v3694 = vld [vmem:[#allocation3 + $0x99] sm:$0xff]
      %v3695 = vld [vmem:[#allocation3 + $0xa9] sm:$0xff]
      %v3696 = vld [vmem:[#allocation3 + $0xb1] sm:$0xff]
      %v3697 = vpack.c.bf16 %v3682, %v3681
      %v3698 = vpack.c.bf16 %v3684, %v3683
      %v3699 = vpack.c.bf16 %v3686, %v3685
      %v3700 = vpack.c.bf16 %v3688, %v3687
      %v3701 = vpack.c.bf16 %v3690, %v3689
      %v3702 = vpack.c.bf16 %v3692, %v3691
      %v3703 = vpack.c.bf16 %v3694, %v3693
      %v3704 = vpack.c.bf16 %v3696, %v3695
      %s3705 = scalar_lea.vmem %s3, 2
      %v3706 = vld [vmem:[%s3705] sm:$0x3]
      %v3708 = vsel %vm226, %v3697, 0
      %v3711 = vsel %vm226, %v3698, 0
      %v3714 = vsel %vm226, %v3699, 0
      %v3717 = vsel %vm226, %v3700, 0
      %v3720 = vsel %vm226, %v3701, 0
      %v3723 = vsel %vm226, %v3702, 0
      %v3726 = vsel %vm226, %v3703, 0
      %v3729 = vsel %vm226, %v3704, 0
      %v3732 = vsel %vm508, %v3706, 0
      %3734 = vmatprep.subr.bf16.mxu0 0
      %3735 = vmatpush1.bf16.msra.mxu0 %v3732
      %3736 = vmatprep.subr.bf16.mxu0 0
      %3737 = vmatpush1.bf16.msra.mxu0 0
      %3738 = vmatprep.subr.bf16.mxu0 0
      %3739 = vmatpush1.bf16.msra.mxu0 0
      %3740 = vmatprep.subr.bf16.mxu0 0
      %3741 = vmatpush1.bf16.msra.mxu0 0
      %3742 = vmatprep.subr.bf16.mxu0 0
      %3743 = vmatpush1.bf16.msra.mxu0 0
      %3744 = vmatprep.subr.bf16.mxu0 0
      %3745 = vmatpush1.bf16.msra.mxu0 0
      %3746 = vmatprep.subr.bf16.mxu0 0
      %3747 = vmatpush1.bf16.msra.mxu0 0
      %3748 = vmatprep.subr.bf16.mxu0 0
      %3749 = vmatpush1.bf16.msra.mxu0 0
      %3750 = vmatprep.subr.bf16.mxu0 0
      %3751 = vmatpush1.bf16.msra.mxu0 0
      %3752 = vmatprep.subr.bf16.mxu0 0
      %3753 = vmatpush1.bf16.msra.mxu0 0
      %3754 = vmatprep.subr.bf16.mxu0 0
      %3755 = vmatpush1.bf16.msra.mxu0 0
      %3756 = vmatprep.subr.bf16.mxu0 0
      %3757 = vmatpush1.bf16.msra.mxu0 0
      %3758 = vmatprep.subr.bf16.mxu0 0
      %3759 = vmatpush1.bf16.msra.mxu0 0
      %3760 = vmatprep.subr.bf16.mxu0 0
      %3761 = vmatpush1.bf16.msra.mxu0 0
      %3762 = vmatprep.subr.bf16.mxu0 0
      %3763 = vmatpush1.bf16.msra.mxu0 0
      %3764 = vmatprep.subr.bf16.mxu0 0
      %3765 = vmatpush1.bf16.msra.mxu0 0
      %3766 = vmatprep.mubr.bf16.mxu0 0
      %3767 = vmatmul.mubr.bf16.gmra.mrb[0].mxu0 %v3708
      %v3768 = vpop.f32.mrb[0].mxu0
      %v3769 = vadd.f32 0.0, %v3768
      %v3770 = vpop.f32.mrb[0].mxu0
      %v3771 = vpop.f32.mrb[0].mxu0
      %v3772 = vadd.f32 0.0, %v3771
      %v3773 = vpop.f32.mrb[0].mxu0
      %3774 = vmatprep.mubr.bf16.mxu0 0
      %3775 = vmatmul.mubr.bf16.gmra.mrb[0].mxu0 %v3711
      %v3776 = vpop.f32.mrb[0].mxu0
      %v3777 = vadd.f32 0.0, %v3776
      %v3778 = vpop.f32.mrb[0].mxu0
      %v3779 = vpop.f32.mrb[0].mxu0
      %v3780 = vadd.f32 0.0, %v3779
      %v3781 = vpop.f32.mrb[0].mxu0
      %3782 = vmatprep.mubr.bf16.mxu0 0
      %3783 = vmatmul.mubr.bf16.gmra.mrb[0].mxu0 %v3714
      %v3784 = vpop.f32.mrb[0].mxu0
      %v3785 = vadd.f32 0.0, %v3784
      %v3786 = vpop.f32.mrb[0].mxu0
      %v3787 = vpop.f32.mrb[0].mxu0
      %v3788 = vadd.f32 0.0, %v3787
      %v3789 = vpop.f32.mrb[0].mxu0
      %3790 = vmatprep.mubr.bf16.mxu0 0
      %3791 = vmatmul.mubr.bf16.gmra.mrb[0].mxu0 %v3717
      %v3792 = vpop.f32.mrb[0].mxu0
      %v3793 = vadd.f32 0.0, %v3792
      %v3794 = vpop.f32.mrb[0].mxu0
      %v3795 = vpop.f32.mrb[0].mxu0
      %v3796 = vadd.f32 0.0, %v3795
      %v3797 = vpop.f32.mrb[0].mxu0
      %3798 = vmatprep.mubr.bf16.mxu0 0
      %3799 = vmatmul.mubr.bf16.gmra.mrb[0].mxu0 %v3720
      %v3800 = vpop.f32.mrb[0].mxu0
      %v3801 = vadd.f32 0.0, %v3800
      %v3802 = vpop.f32.mrb[0].mxu0
      %v3803 = vpop.f32.mrb[0].mxu0
      %v3804 = vadd.f32 0.0, %v3803
      %v3805 = vpop.f32.mrb[0].mxu0
      %3806 = vmatprep.mubr.bf16.mxu0 0
      %3807 = vmatmul.mubr.bf16.gmra.mrb[0].mxu0 %v3723
      %v3808 = vpop.f32.mrb[0].mxu0
      %v3809 = vadd.f32 0.0, %v3808
      %v3810 = vpop.f32.mrb[0].mxu0
      %v3811 = vpop.f32.mrb[0].mxu0
      %v3812 = vadd.f32 0.0, %v3811
      %v3813 = vpop.f32.mrb[0].mxu0
      %3814 = vmatprep.mubr.bf16.mxu0 0
      %3815 = vmatmul.mubr.bf16.gmra.mrb[0].mxu0 %v3726
      %v3816 = vpop.f32.mrb[0].mxu0
      %v3817 = vadd.f32 0.0, %v3816
      %v3818 = vpop.f32.mrb[0].mxu0
      %v3819 = vpop.f32.mrb[0].mxu0
      %v3820 = vadd.f32 0.0, %v3819
      %v3821 = vpop.f32.mrb[0].mxu0
      %3822 = vmatprep.mubr.bf16.mxu0 0
      %3823 = vmatmul.mubr.bf16.gmra.mrb[0].mxu0 %v3729
      %v3824 = vpop.f32.mrb[0].mxu0
      %v3825 = vadd.f32 0.0, %v3824
      %v3826 = vpop.f32.mrb[0].mxu0
      %v3827 = vpop.f32.mrb[0].mxu0
      %v3828 = vadd.f32 0.0, %v3827
      %v3829 = vpop.f32.mrb[0].mxu0
      %3830 = vdwg.mxu0
      %v3832 = vsel %vm226, %v3672, 0
      %v3835 = vsel %vm226, %v3673, 0
      %v3838 = vsel %vm226, %v3674, 0
      %v3841 = vsel %vm226, %v3675, 0
      %v3844 = vsel %vm226, %v3676, 0
      %v3847 = vsel %vm226, %v3677, 0
      %v3850 = vsel %vm226, %v3678, 0
      %v3853 = vsel %vm226, %v3679, 0
      %v3856 = vsel %vm508, %v3680, 0
      %3858 = vmatprep.subr.bf16.mxu0 0
      %3859 = vmatpush1.bf16.msra.mxu0 %v3856
      %3860 = vmatprep.subr.bf16.mxu0 0
      %3861 = vmatpush1.bf16.msra.mxu0 0
      %3862 = vmatprep.subr.bf16.mxu0 0
      %3863 = vmatpush1.bf16.msra.mxu0 0
      %3864 = vmatprep.subr.bf16.mxu0 0
      %3865 = vmatpush1.bf16.msra.mxu0 0
      %3866 = vmatprep.subr.bf16.mxu0 0
      %3867 = vmatpush1.bf16.msra.mxu0 0
      %3868 = vmatprep.subr.bf16.mxu0 0
      %3869 = vmatpush1.bf16.msra.mxu0 0
      %3870 = vmatprep.subr.bf16.mxu0 0
      %3871 = vmatpush1.bf16.msra.mxu0 0
      %3872 = vmatprep.subr.bf16.mxu0 0
      %3873 = vmatpush1.bf16.msra.mxu0 0
      %3874 = vmatprep.subr.bf16.mxu0 0
      %3875 = vmatpush1.bf16.msra.mxu0 0
      %3876 = vmatprep.subr.bf16.mxu0 0
      %3877 = vmatpush1.bf16.msra.mxu0 0
      %3878 = vmatprep.subr.bf16.mxu0 0
      %3879 = vmatpush1.bf16.msra.mxu0 0
      %3880 = vmatprep.subr.bf16.mxu0 0
      %3881 = vmatpush1.bf16.msra.mxu0 0
      %3882 = vmatprep.subr.bf16.mxu0 0
      %3883 = vmatpush1.bf16.msra.mxu0 0
      %3884 = vmatprep.subr.bf16.mxu0 0
      %3885 = vmatpush1.bf16.msra.mxu0 0
      %3886 = vmatprep.subr.bf16.mxu0 0
      %3887 = vmatpush1.bf16.msra.mxu0 0
      %3888 = vmatprep.subr.bf16.mxu0 0
      %3889 = vmatpush1.bf16.msra.mxu0 0
      %3890 = vmatprep.mubr.bf16.mxu0 0
      %3891 = vmatmul.mubr.bf16.gmra.mrb[0].mxu0 %v3832
      %v3892 = vpop.f32.mrb[0].mxu0
      %v3893 = vadd.f32 %v3769, %v3892
      %v3894 = vpop.f32.mrb[0].mxu0
      %v3895 = vpop.f32.mrb[0].mxu0
      %v3896 = vadd.f32 %v3772, %v3895
      %v3897 = vpop.f32.mrb[0].mxu0
      %3898 = vmatprep.mubr.bf16.mxu0 0
      %3899 = vmatmul.mubr.bf16.gmra.mrb[0].mxu0 %v3835
      %v3900 = vpop.f32.mrb[0].mxu0
      %v3901 = vadd.f32 %v3777, %v3900
      %v3902 = vpop.f32.mrb[0].mxu0
      %v3903 = vpop.f32.mrb[0].mxu0
      %v3904 = vadd.f32 %v3780, %v3903
      %v3905 = vpop.f32.mrb[0].mxu0
      %3906 = vmatprep.mubr.bf16.mxu0 0
      %3907 = vmatmul.mubr.bf16.gmra.mrb[0].mxu0 %v3838
      %v3908 = vpop.f32.mrb[0].mxu0
      %v3909 = vadd.f32 %v3785, %v3908
      %v3910 = vpop.f32.mrb[0].mxu0
      %v3911 = vpop.f32.mrb[0].mxu0
      %v3912 = vadd.f32 %v3788, %v3911
      %v3913 = vpop.f32.mrb[0].mxu0
      %3914 = vmatprep.mubr.bf16.mxu0 0
      %3915 = vmatmul.mubr.bf16.gmra.mrb[0].mxu0 %v3841
      %v3916 = vpop.f32.mrb[0].mxu0
      %v3917 = vadd.f32 %v3793, %v3916
      %v3918 = vpop.f32.mrb[0].mxu0
      %v3919 = vpop.f32.mrb[0].mxu0
      %v3920 = vadd.f32 %v3796, %v3919
      %v3921 = vpop.f32.mrb[0].mxu0
      %3922 = vmatprep.mubr.bf16.mxu0 0
      %3923 = vmatmul.mubr.bf16.gmra.mrb[0].mxu0 %v3844
      %v3924 = vpop.f32.mrb[0].mxu0
      %v3925 = vadd.f32 %v3801, %v3924
      %v3926 = vpop.f32.mrb[0].mxu0
      %v3927 = vpop.f32.mrb[0].mxu0
      %v3928 = vadd.f32 %v3804, %v3927
      %v3929 = vpop.f32.mrb[0].mxu0
      %3930 = vmatprep.mubr.bf16.mxu0 0
      %3931 = vmatmul.mubr.bf16.gmra.mrb[0].mxu0 %v3847
      %v3932 = vpop.f32.mrb[0].mxu0
      %v3933 = vadd.f32 %v3809, %v3932
      %v3934 = vpop.f32.mrb[0].mxu0
      %v3935 = vpop.f32.mrb[0].mxu0
      %v3936 = vadd.f32 %v3812, %v3935
      %v3937 = vpop.f32.mrb[0].mxu0
      %3938 = vmatprep.mubr.bf16.mxu0 0
      %3939 = vmatmul.mubr.bf16.gmra.mrb[0].mxu0 %v3850
      %v3940 = vpop.f32.mrb[0].mxu0
      %v3941 = vadd.f32 %v3817, %v3940
      %v3942 = vpop.f32.mrb[0].mxu0
      %v3943 = vpop.f32.mrb[0].mxu0
      %v3944 = vadd.f32 %v3820, %v3943
      %v3945 = vpop.f32.mrb[0].mxu0
      %3946 = vmatprep.mubr.bf16.mxu0 0
      %3947 = vmatmul.mubr.bf16.gmra.mrb[0].mxu0 %v3853
      %v3948 = vpop.f32.mrb[0].mxu0
      %v3949 = vadd.f32 %v3825, %v3948
      %v3950 = vpop.f32.mrb[0].mxu0
      %v3951 = vpop.f32.mrb[0].mxu0
      %v3952 = vadd.f32 %v3828, %v3951
      %v3953 = vpop.f32.mrb[0].mxu0
      %3954 = vdwg.mxu0
      %v3955 = vld [vmem:[#allocation3 + $0x2] sm:$0xff]
      %v3956 = vld [vmem:[#allocation3 + $0xa] sm:$0xff]
      %v3957 = vld [vmem:[#allocation3 + $0x1a] sm:$0xff]
      %v3958 = vld [vmem:[#allocation3 + $0x22] sm:$0xff]
      %v3959 = vld [vmem:[#allocation3 + $0x32] sm:$0xff]
      %v3960 = vld [vmem:[#allocation3 + $0x3a] sm:$0xff]
      %v3961 = vld [vmem:[#allocation3 + $0x4a] sm:$0xff]
      %v3962 = vld [vmem:[#allocation3 + $0x52] sm:$0xff]
      %v3963 = vld [vmem:[#allocation3 + $0x62] sm:$0xff]
      %v3964 = vld [vmem:[#allocation3 + $0x6a] sm:$0xff]
      %v3965 = vld [vmem:[#allocation3 + $0x7a] sm:$0xff]
      %v3966 = vld [vmem:[#allocation3 + $0x82] sm:$0xff]
      %v3967 = vld [vmem:[#allocation3 + $0x92] sm:$0xff]
      %v3968 = vld [vmem:[#allocation3 + $0x9a] sm:$0xff]
      %v3969 = vld [vmem:[#allocation3 + $0xaa] sm:$0xff]
      %v3970 = vld [vmem:[#allocation3 + $0xb2] sm:$0xff]
      %v3971 = vpack.c.bf16 %v3956, %v3955
      %v3972 = vpack.c.bf16 %v3958, %v3957
      %v3973 = vpack.c.bf16 %v3960, %v3959
      %v3974 = vpack.c.bf16 %v3962, %v3961
      %v3975 = vpack.c.bf16 %v3964, %v3963
      %v3976 = vpack.c.bf16 %v3966, %v3965
      %v3977 = vpack.c.bf16 %v3968, %v3967
      %v3978 = vpack.c.bf16 %v3970, %v3969
      %s3979 = scalar_lea.vmem %s3, 4
      %v3980 = vld [vmem:[%s3979] sm:$0x3]
      %v3982 = vsel %vm226, %v3971, 0
      %v3985 = vsel %vm226, %v3972, 0
      %v3988 = vsel %vm226, %v3973, 0
      %v3991 = vsel %vm226, %v3974, 0
      %v3994 = vsel %vm226, %v3975, 0
      %v3997 = vsel %vm226, %v3976, 0
      %v4000 = vsel %vm226, %v3977, 0
      %v4003 = vsel %vm226, %v3978, 0
      %v4006 = vsel %vm508, %v3980, 0
      %4008 = vmatprep.subr.bf16.mxu0 0
      %4009 = vmatpush1.bf16.msra.mxu0 %v4006
      %4010 = vmatprep.subr.bf16.mxu0 0
      %4011 = vmatpush1.bf16.msra.mxu0 0
      %4012 = vmatprep.subr.bf16.mxu0 0
      %4013 = vmatpush1.bf16.msra.mxu0 0
      %4014 = vmatprep.subr.bf16.mxu0 0
      %4015 = vmatpush1.bf16.msra.mxu0 0
      %4016 = vmatprep.subr.bf16.mxu0 0
      %4017 = vmatpush1.bf16.msra.mxu0 0
      %4018 = vmatprep.subr.bf16.mxu0 0
      %4019 = vmatpush1.bf16.msra.mxu0 0
      %4020 = vmatprep.subr.bf16.mxu0 0
      %4021 = vmatpush1.bf16.msra.mxu0 0
      %4022 = vmatprep.subr.bf16.mxu0 0
      %4023 = vmatpush1.bf16.msra.mxu0 0
      %4024 = vmatprep.subr.bf16.mxu0 0
      %4025 = vmatpush1.bf16.msra.mxu0 0
      %4026 = vmatprep.subr.bf16.mxu0 0
      %4027 = vmatpush1.bf16.msra.mxu0 0
      %4028 = vmatprep.subr.bf16.mxu0 0
      %4029 = vmatpush1.bf16.msra.mxu0 0
      %4030 = vmatprep.subr.bf16.mxu0 0
      %4031 = vmatpush1.bf16.msra.mxu0 0
      %4032 = vmatprep.subr.bf16.mxu0 0
      %4033 = vmatpush1.bf16.msra.mxu0 0
      %4034 = vmatprep.subr.bf16.mxu0 0
      %4035 = vmatpush1.bf16.msra.mxu0 0
      %4036 = vmatprep.subr.bf16.mxu0 0
      %4037 = vmatpush1.bf16.msra.mxu0 0
      %4038 = vmatprep.subr.bf16.mxu0 0
      %4039 = vmatpush1.bf16.msra.mxu0 0
      %4040 = vmatprep.mubr.bf16.mxu0 0
      %4041 = vmatmul.mubr.bf16.gmra.mrb[0].mxu0 %v3982
      %v4042 = vpop.f32.mrb[0].mxu0
      %v4043 = vadd.f32 0.0, %v4042
      %v4044 = vpop.f32.mrb[0].mxu0
      %v4045 = vpop.f32.mrb[0].mxu0
      %v4046 = vadd.f32 0.0, %v4045
      %v4047 = vpop.f32.mrb[0].mxu0
      %4048 = vmatprep.mubr.bf16.mxu0 0
      %4049 = vmatmul.mubr.bf16.gmra.mrb[0].mxu0 %v3985
      %v4050 = vpop.f32.mrb[0].mxu0
      %v4051 = vadd.f32 0.0, %v4050
      %v4052 = vpop.f32.mrb[0].mxu0
      %v4053 = vpop.f32.mrb[0].mxu0
      %v4054 = vadd.f32 0.0, %v4053
      %v4055 = vpop.f32.mrb[0].mxu0
      %4056 = vmatprep.mubr.bf16.mxu0 0
      %4057 = vmatmul.mubr.bf16.gmra.mrb[0].mxu0 %v3988
      %v4058 = vpop.f32.mrb[0].mxu0
      %v4059 = vadd.f32 0.0, %v4058
      %v4060 = vpop.f32.mrb[0].mxu0
      %v4061 = vpop.f32.mrb[0].mxu0
      %v4062 = vadd.f32 0.0, %v4061
      %v4063 = vpop.f32.mrb[0].mxu0
      %4064 = vmatprep.mubr.bf16.mxu0 0
      %4065 = vmatmul.mubr.bf16.gmra.mrb[0].mxu0 %v3991
      %v4066 = vpop.f32.mrb[0].mxu0
      %v4067 = vadd.f32 0.0, %v4066
      %v4068 = vpop.f32.mrb[0].mxu0
      %v4069 = vpop.f32.mrb[0].mxu0
      %v4070 = vadd.f32 0.0, %v4069
      %v4071 = vpop.f32.mrb[0].mxu0
      %4072 = vmatprep.mubr.bf16.mxu0 0
      %4073 = vmatmul.mubr.bf16.gmra.mrb[0].mxu0 %v3994
      %v4074 = vpop.f32.mrb[0].mxu0
      %v4075 = vadd.f32 0.0, %v4074
      %v4076 = vpop.f32.mrb[0].mxu0
      %v4077 = vpop.f32.mrb[0].mxu0
      %v4078 = vadd.f32 0.0, %v4077
      %v4079 = vpop.f32.mrb[0].mxu0
      %4080 = vmatprep.mubr.bf16.mxu0 0
      %4081 = vmatmul.mubr.bf16.gmra.mrb[0].mxu0 %v3997
      %v4082 = vpop.f32.mrb[0].mxu0
      %v4083 = vadd.f32 0.0, %v4082
      %v4084 = vpop.f32.mrb[0].mxu0
      %v4085 = vpop.f32.mrb[0].mxu0
      %v4086 = vadd.f32 0.0, %v4085
      %v4087 = vpop.f32.mrb[0].mxu0
      %4088 = vmatprep.mubr.bf16.mxu0 0
      %4089 = vmatmul.mubr.bf16.gmra.mrb[0].mxu0 %v4000
      %v4090 = vpop.f32.mrb[0].mxu0
      %v4091 = vadd.f32 0.0, %v4090
      %v4092 = vpop.f32.mrb[0].mxu0
      %v4093 = vpop.f32.mrb[0].mxu0
      %v4094 = vadd.f32 0.0, %v4093
      %v4095 = vpop.f32.mrb[0].mxu0
      %4096 = vmatprep.mubr.bf16.mxu0 0
      %4097 = vmatmul.mubr.bf16.gmra.mrb[0].mxu0 %v4003
      %v4098 = vpop.f32.mrb[0].mxu0
      %v4099 = vadd.f32 0.0, %v4098
      %v4100 = vpop.f32.mrb[0].mxu0
      %v4101 = vpop.f32.mrb[0].mxu0
      %v4102 = vadd.f32 0.0, %v4101
      %v4103 = vpop.f32.mrb[0].mxu0
      %4104 = vdwg.mxu0
      %v4105 = vadd.f32 %v3893, %v4043
      %v4106 = vadd.f32 %v3896, %v4046
      %v4107 = vadd.f32 %v3901, %v4051
      %v4108 = vadd.f32 %v3904, %v4054
      %v4109 = vadd.f32 %v3909, %v4059
      %v4110 = vadd.f32 %v3912, %v4062
      %v4111 = vadd.f32 %v3917, %v4067
      %v4112 = vadd.f32 %v3920, %v4070
      %v4113 = vadd.f32 %v3925, %v4075
      %v4114 = vadd.f32 %v3928, %v4078
      %v4115 = vadd.f32 %v3933, %v4083
      %v4116 = vadd.f32 %v3936, %v4086
      %v4117 = vadd.f32 %v3941, %v4091
      %v4118 = vadd.f32 %v3944, %v4094
      %v4119 = vadd.f32 %v3949, %v4099
      %v4120 = vadd.f32 %v3952, %v4102
      %v4121 = vld [vmem:[%s2031] sm:$0xff]
      %v4122 = vld [vmem:[%s2031 + $0x8] sm:$0xff]
      %v4123 = vld [vmem:[%s2031 + $0x18] sm:$0xff]
      %v4124 = vld [vmem:[%s2031 + $0x20] sm:$0xff]
      %v4125 = vld [vmem:[%s2031 + $0x30] sm:$0xff]
      %v4126 = vld [vmem:[%s2031 + $0x38] sm:$0xff]
      %v4127 = vld [vmem:[%s2031 + $0x48] sm:$0xff]
      %v4128 = vld [vmem:[%s2031 + $0x50] sm:$0xff]
      %v4129 = vld [vmem:[%s2031 + $0x60] sm:$0xff]
      %v4130 = vld [vmem:[%s2031 + $0x68] sm:$0xff]
      %v4131 = vld [vmem:[%s2031 + $0x78] sm:$0xff]
      %v4132 = vld [vmem:[%s2031 + $0x80] sm:$0xff]
      %v4133 = vld [vmem:[%s2031 + $0x90] sm:$0xff]
      %v4134 = vld [vmem:[%s2031 + $0x98] sm:$0xff]
      %v4135 = vld [vmem:[%s2031 + $0xa8] sm:$0xff]
      %v4136 = vld [vmem:[%s2031 + $0xb0] sm:$0xff]
      %v4137 = vpack.c.bf16 %v4122, %v4121
      %v4138 = vpack.c.bf16 %v4124, %v4123
      %v4139 = vpack.c.bf16 %v4126, %v4125
      %v4140 = vpack.c.bf16 %v4128, %v4127
      %v4141 = vpack.c.bf16 %v4130, %v4129
      %v4142 = vpack.c.bf16 %v4132, %v4131
      %v4143 = vpack.c.bf16 %v4134, %v4133
      %v4144 = vpack.c.bf16 %v4136, %v4135
      %s4145 = scalar_lea.vmem %s3, 6
      %v4146 = vld [vmem:[%s4145] sm:$0x3]
      %v4148 = vsel %vm226, %v4137, 0
      %v4151 = vsel %vm226, %v4138, 0
      %v4154 = vsel %vm226, %v4139, 0
      %v4157 = vsel %vm226, %v4140, 0
      %v4160 = vsel %vm226, %v4141, 0
      %v4163 = vsel %vm226, %v4142, 0
      %v4166 = vsel %vm226, %v4143, 0
      %v4169 = vsel %vm226, %v4144, 0
      %v4172 = vsel %vm508, %v4146, 0
      %4174 = vmatprep.subr.bf16.mxu0 0
      %4175 = vmatpush1.bf16.msra.mxu0 %v4172
      %4176 = vmatprep.subr.bf16.mxu0 0
      %4177 = vmatpush1.bf16.msra.mxu0 0
      %4178 = vmatprep.subr.bf16.mxu0 0
      %4179 = vmatpush1.bf16.msra.mxu0 0
      %4180 = vmatprep.subr.bf16.mxu0 0
      %4181 = vmatpush1.bf16.msra.mxu0 0
      %4182 = vmatprep.subr.bf16.mxu0 0
      %4183 = vmatpush1.bf16.msra.mxu0 0
      %4184 = vmatprep.subr.bf16.mxu0 0
      %4185 = vmatpush1.bf16.msra.mxu0 0
      %4186 = vmatprep.subr.bf16.mxu0 0
      %4187 = vmatpush1.bf16.msra.mxu0 0
      %4188 = vmatprep.subr.bf16.mxu0 0
      %4189 = vmatpush1.bf16.msra.mxu0 0
      %4190 = vmatprep.subr.bf16.mxu0 0
      %4191 = vmatpush1.bf16.msra.mxu0 0
      %4192 = vmatprep.subr.bf16.mxu0 0
      %4193 = vmatpush1.bf16.msra.mxu0 0
      %4194 = vmatprep.subr.bf16.mxu0 0
      %4195 = vmatpush1.bf16.msra.mxu0 0
      %4196 = vmatprep.subr.bf16.mxu0 0
      %4197 = vmatpush1.bf16.msra.mxu0 0
      %4198 = vmatprep.subr.bf16.mxu0 0
      %4199 = vmatpush1.bf16.msra.mxu0 0
      %4200 = vmatprep.subr.bf16.mxu0 0
      %4201 = vmatpush1.bf16.msra.mxu0 0
      %4202 = vmatprep.subr.bf16.mxu0 0
      %4203 = vmatpush1.bf16.msra.mxu0 0
      %4204 = vmatprep.subr.bf16.mxu0 0
      %4205 = vmatpush1.bf16.msra.mxu0 0
      %4206 = vmatprep.mubr.bf16.mxu0 0
      %4207 = vmatmul.mubr.bf16.gmra.mrb[0].mxu0 %v4148
      %v4208 = vpop.f32.mrb[0].mxu0
      %v4209 = vadd.f32 0.0, %v4208
      %v4210 = vpop.f32.mrb[0].mxu0
      %v4211 = vpop.f32.mrb[0].mxu0
      %v4212 = vadd.f32 0.0, %v4211
      %v4213 = vpop.f32.mrb[0].mxu0
      %4214 = vmatprep.mubr.bf16.mxu0 0
      %4215 = vmatmul.mubr.bf16.gmra.mrb[0].mxu0 %v4151
      %v4216 = vpop.f32.mrb[0].mxu0
      %v4217 = vadd.f32 0.0, %v4216
      %v4218 = vpop.f32.mrb[0].mxu0
      %v4219 = vpop.f32.mrb[0].mxu0
      %v4220 = vadd.f32 0.0, %v4219
      %v4221 = vpop.f32.mrb[0].mxu0
      %4222 = vmatprep.mubr.bf16.mxu0 0
      %4223 = vmatmul.mubr.bf16.gmra.mrb[0].mxu0 %v4154
      %v4224 = vpop.f32.mrb[0].mxu0
      %v4225 = vadd.f32 0.0, %v4224
      %v4226 = vpop.f32.mrb[0].mxu0
      %v4227 = vpop.f32.mrb[0].mxu0
      %v4228 = vadd.f32 0.0, %v4227
      %v4229 = vpop.f32.mrb[0].mxu0
      %4230 = vmatprep.mubr.bf16.mxu0 0
      %4231 = vmatmul.mubr.bf16.gmra.mrb[0].mxu0 %v4157
      %v4232 = vpop.f32.mrb[0].mxu0
      %v4233 = vadd.f32 0.0, %v4232
      %v4234 = vpop.f32.mrb[0].mxu0
      %v4235 = vpop.f32.mrb[0].mxu0
      %v4236 = vadd.f32 0.0, %v4235
      %v4237 = vpop.f32.mrb[0].mxu0
      %4238 = vmatprep.mubr.bf16.mxu0 0
      %4239 = vmatmul.mubr.bf16.gmra.mrb[0].mxu0 %v4160
      %v4240 = vpop.f32.mrb[0].mxu0
      %v4241 = vadd.f32 0.0, %v4240
      %v4242 = vpop.f32.mrb[0].mxu0
      %v4243 = vpop.f32.mrb[0].mxu0
      %v4244 = vadd.f32 0.0, %v4243
      %v4245 = vpop.f32.mrb[0].mxu0
      %4246 = vmatprep.mubr.bf16.mxu0 0
      %4247 = vmatmul.mubr.bf16.gmra.mrb[0].mxu0 %v4163
      %v4248 = vpop.f32.mrb[0].mxu0
      %v4249 = vadd.f32 0.0, %v4248
      %v4250 = vpop.f32.mrb[0].mxu0
      %v4251 = vpop.f32.mrb[0].mxu0
      %v4252 = vadd.f32 0.0, %v4251
      %v4253 = vpop.f32.mrb[0].mxu0
      %4254 = vmatprep.mubr.bf16.mxu0 0
      %4255 = vmatmul.mubr.bf16.gmra.mrb[0].mxu0 %v4166
      %v4256 = vpop.f32.mrb[0].mxu0
      %v4257 = vadd.f32 0.0, %v4256
      %v4258 = vpop.f32.mrb[0].mxu0
      %v4259 = vpop.f32.mrb[0].mxu0
      %v4260 = vadd.f32 0.0, %v4259
      %v4261 = vpop.f32.mrb[0].mxu0
      %4262 = vmatprep.mubr.bf16.mxu0 0
      %4263 = vmatmul.mubr.bf16.gmra.mrb[0].mxu0 %v4169
      %v4264 = vpop.f32.mrb[0].mxu0
      %v4265 = vadd.f32 0.0, %v4264
      %v4266 = vpop.f32.mrb[0].mxu0
      %v4267 = vpop.f32.mrb[0].mxu0
      %v4268 = vadd.f32 0.0, %v4267
      %v4269 = vpop.f32.mrb[0].mxu0
      %4270 = vdwg.mxu0
      %v4271 = vadd.f32 %v4105, %v4209
      %v4272 = vadd.f32 %v4106, %v4212
      %v4273 = vadd.f32 %v4107, %v4217
      %v4274 = vadd.f32 %v4108, %v4220
      %v4275 = vadd.f32 %v4109, %v4225
      %v4276 = vadd.f32 %v4110, %v4228
      %v4277 = vadd.f32 %v4111, %v4233
      %v4278 = vadd.f32 %v4112, %v4236
      %v4279 = vadd.f32 %v4113, %v4241
      %v4280 = vadd.f32 %v4114, %v4244
      %v4281 = vadd.f32 %v4115, %v4249
      %v4282 = vadd.f32 %v4116, %v4252
      %v4283 = vadd.f32 %v4117, %v4257
      %v4284 = vadd.f32 %v4118, %v4260
      %v4285 = vadd.f32 %v4119, %v4265
      %v4286 = vadd.f32 %v4120, %v4268
      %v4287 = vld [vmem:[%s2031 + $0x1] sm:$0xff]
      %v4288 = vld [vmem:[%s2031 + $0x9] sm:$0xff]
      %v4289 = vld [vmem:[%s2031 + $0x19] sm:$0xff]
      %v4290 = vld [vmem:[%s2031 + $0x21] sm:$0xff]
      %v4291 = vld [vmem:[%s2031 + $0x31] sm:$0xff]
      %v4292 = vld [vmem:[%s2031 + $0x39] sm:$0xff]
      %v4293 = vld [vmem:[%s2031 + $0x49] sm:$0xff]
      %v4294 = vld [vmem:[%s2031 + $0x51] sm:$0xff]
      %v4295 = vld [vmem:[%s2031 + $0x61] sm:$0xff]
      %v4296 = vld [vmem:[%s2031 + $0x69] sm:$0xff]
      %v4297 = vld [vmem:[%s2031 + $0x79] sm:$0xff]
      %v4298 = vld [vmem:[%s2031 + $0x81] sm:$0xff]
      %v4299 = vld [vmem:[%s2031 + $0x91] sm:$0xff]
      %v4300 = vld [vmem:[%s2031 + $0x99] sm:$0xff]
      %v4301 = vld [vmem:[%s2031 + $0xa9] sm:$0xff]
      %v4302 = vld [vmem:[%s2031 + $0xb1] sm:$0xff]
      %v4303 = vpack.c.bf16 %v4288, %v4287
      %v4304 = vpack.c.bf16 %v4290, %v4289
      %v4305 = vpack.c.bf16 %v4292, %v4291
      %v4306 = vpack.c.bf16 %v4294, %v4293
      %v4307 = vpack.c.bf16 %v4296, %v4295
      %v4308 = vpack.c.bf16 %v4298, %v4297
      %v4309 = vpack.c.bf16 %v4300, %v4299
      %v4310 = vpack.c.bf16 %v4302, %v4301
      %s4311 = scalar_lea.vmem %s3, 8
      %v4312 = vld [vmem:[%s4311] sm:$0x3]
      %v4314 = vsel %vm226, %v4303, 0
      %v4317 = vsel %vm226, %v4304, 0
      %v4320 = vsel %vm226, %v4305, 0
      %v4323 = vsel %vm226, %v4306, 0
      %v4326 = vsel %vm226, %v4307, 0
      %v4329 = vsel %vm226, %v4308, 0
      %v4332 = vsel %vm226, %v4309, 0
      %v4335 = vsel %vm226, %v4310, 0
      %v4338 = vsel %vm508, %v4312, 0
      %4340 = vmatprep.subr.bf16.mxu0 0
      %4341 = vmatpush1.bf16.msra.mxu0 %v4338
      %4342 = vmatprep.subr.bf16.mxu0 0
      %4343 = vmatpush1.bf16.msra.mxu0 0
      %4344 = vmatprep.subr.bf16.mxu0 0
      %4345 = vmatpush1.bf16.msra.mxu0 0
      %4346 = vmatprep.subr.bf16.mxu0 0
      %4347 = vmatpush1.bf16.msra.mxu0 0
      %4348 = vmatprep.subr.bf16.mxu0 0
      %4349 = vmatpush1.bf16.msra.mxu0 0
      %4350 = vmatprep.subr.bf16.mxu0 0
      %4351 = vmatpush1.bf16.msra.mxu0 0
      %4352 = vmatprep.subr.bf16.mxu0 0
      %4353 = vmatpush1.bf16.msra.mxu0 0
      %4354 = vmatprep.subr.bf16.mxu0 0
      %4355 = vmatpush1.bf16.msra.mxu0 0
      %4356 = vmatprep.subr.bf16.mxu0 0
      %4357 = vmatpush1.bf16.msra.mxu0 0
      %4358 = vmatprep.subr.bf16.mxu0 0
      %4359 = vmatpush1.bf16.msra.mxu0 0
      %4360 = vmatprep.subr.bf16.mxu0 0
      %4361 = vmatpush1.bf16.msra.mxu0 0
      %4362 = vmatprep.subr.bf16.mxu0 0
      %4363 = vmatpush1.bf16.msra.mxu0 0
      %4364 = vmatprep.subr.bf16.mxu0 0
      %4365 = vmatpush1.bf16.msra.mxu0 0
      %4366 = vmatprep.subr.bf16.mxu0 0
      %4367 = vmatpush1.bf16.msra.mxu0 0
      %4368 = vmatprep.subr.bf16.mxu0 0
      %4369 = vmatpush1.bf16.msra.mxu0 0
      %4370 = vmatprep.subr.bf16.mxu0 0
      %4371 = vmatpush1.bf16.msra.mxu0 0
      %4372 = vmatprep.mubr.bf16.mxu0 0
      %4373 = vmatmul.mubr.bf16.gmra.mrb[0].mxu0 %v4314
      %v4374 = vpop.f32.mrb[0].mxu0
      %v4375 = vadd.f32 0.0, %v4374
      %v4376 = vpop.f32.mrb[0].mxu0
      %v4377 = vpop.f32.mrb[0].mxu0
      %v4378 = vadd.f32 0.0, %v4377
      %v4379 = vpop.f32.mrb[0].mxu0
      %4380 = vmatprep.mubr.bf16.mxu0 0
      %4381 = vmatmul.mubr.bf16.gmra.mrb[0].mxu0 %v4317
      %v4382 = vpop.f32.mrb[0].mxu0
      %v4383 = vadd.f32 0.0, %v4382
      %v4384 = vpop.f32.mrb[0].mxu0
      %v4385 = vpop.f32.mrb[0].mxu0
      %v4386 = vadd.f32 0.0, %v4385
      %v4387 = vpop.f32.mrb[0].mxu0
      %4388 = vmatprep.mubr.bf16.mxu0 0
      %4389 = vmatmul.mubr.bf16.gmra.mrb[0].mxu0 %v4320
      %v4390 = vpop.f32.mrb[0].mxu0
      %v4391 = vadd.f32 0.0, %v4390
      %v4392 = vpop.f32.mrb[0].mxu0
      %v4393 = vpop.f32.mrb[0].mxu0
      %v4394 = vadd.f32 0.0, %v4393
      %v4395 = vpop.f32.mrb[0].mxu0
      %4396 = vmatprep.mubr.bf16.mxu0 0
      %4397 = vmatmul.mubr.bf16.gmra.mrb[0].mxu0 %v4323
      %v4398 = vpop.f32.mrb[0].mxu0
      %v4399 = vadd.f32 0.0, %v4398
      %v4400 = vpop.f32.mrb[0].mxu0
      %v4401 = vpop.f32.mrb[0].mxu0
      %v4402 = vadd.f32 0.0, %v4401
      %v4403 = vpop.f32.mrb[0].mxu0
      %4404 = vmatprep.mubr.bf16.mxu0 0
      %4405 = vmatmul.mubr.bf16.gmra.mrb[0].mxu0 %v4326
      %v4406 = vpop.f32.mrb[0].mxu0
      %v4407 = vadd.f32 0.0, %v4406
      %v4408 = vpop.f32.mrb[0].mxu0
      %v4409 = vpop.f32.mrb[0].mxu0
      %v4410 = vadd.f32 0.0, %v4409
      %v4411 = vpop.f32.mrb[0].mxu0
      %4412 = vmatprep.mubr.bf16.mxu0 0
      %4413 = vmatmul.mubr.bf16.gmra.mrb[0].mxu0 %v4329
      %v4414 = vpop.f32.mrb[0].mxu0
      %v4415 = vadd.f32 0.0, %v4414
      %v4416 = vpop.f32.mrb[0].mxu0
      %v4417 = vpop.f32.mrb[0].mxu0
      %v4418 = vadd.f32 0.0, %v4417
      %v4419 = vpop.f32.mrb[0].mxu0
      %4420 = vmatprep.mubr.bf16.mxu0 0
      %4421 = vmatmul.mubr.bf16.gmra.mrb[0].mxu0 %v4332
      %v4422 = vpop.f32.mrb[0].mxu0
      %v4423 = vadd.f32 0.0, %v4422
      %v4424 = vpop.f32.mrb[0].mxu0
      %v4425 = vpop.f32.mrb[0].mxu0
      %v4426 = vadd.f32 0.0, %v4425
      %v4427 = vpop.f32.mrb[0].mxu0
      %4428 = vmatprep.mubr.bf16.mxu0 0
      %4429 = vmatmul.mubr.bf16.gmra.mrb[0].mxu0 %v4335
      %v4430 = vpop.f32.mrb[0].mxu0
      %v4431 = vadd.f32 0.0, %v4430
      %v4432 = vpop.f32.mrb[0].mxu0
      %v4433 = vpop.f32.mrb[0].mxu0
      %v4434 = vadd.f32 0.0, %v4433
      %v4435 = vpop.f32.mrb[0].mxu0
      %4436 = vdwg.mxu0
      %v4437 = vadd.f32 %v4271, %v4375
      %v4438 = vadd.f32 %v4272, %v4378
      %v4439 = vadd.f32 %v4273, %v4383
      %v4440 = vadd.f32 %v4274, %v4386
      %v4441 = vadd.f32 %v4275, %v4391
      %v4442 = vadd.f32 %v4276, %v4394
      %v4443 = vadd.f32 %v4277, %v4399
      %v4444 = vadd.f32 %v4278, %v4402
      %v4445 = vadd.f32 %v4279, %v4407
      %v4446 = vadd.f32 %v4280, %v4410
      %v4447 = vadd.f32 %v4281, %v4415
      %v4448 = vadd.f32 %v4282, %v4418
      %v4449 = vadd.f32 %v4283, %v4423
      %v4450 = vadd.f32 %v4284, %v4426
      %v4451 = vadd.f32 %v4285, %v4431
      %v4452 = vadd.f32 %v4286, %v4434
      %v4453 = vld [vmem:[%s2031 + $0x2] sm:$0xff]
      %v4454 = vld [vmem:[%s2031 + $0xa] sm:$0xff]
      %v4455 = vld [vmem:[%s2031 + $0x1a] sm:$0xff]
      %v4456 = vld [vmem:[%s2031 + $0x22] sm:$0xff]
      %v4457 = vld [vmem:[%s2031 + $0x32] sm:$0xff]
      %v4458 = vld [vmem:[%s2031 + $0x3a] sm:$0xff]
      %v4459 = vld [vmem:[%s2031 + $0x4a] sm:$0xff]
      %v4460 = vld [vmem:[%s2031 + $0x52] sm:$0xff]
      %v4461 = vld [vmem:[%s2031 + $0x62] sm:$0xff]
      %v4462 = vld [vmem:[%s2031 + $0x6a] sm:$0xff]
      %v4463 = vld [vmem:[%s2031 + $0x7a] sm:$0xff]
      %v4464 = vld [vmem:[%s2031 + $0x82] sm:$0xff]
      %v4465 = vld [vmem:[%s2031 + $0x92] sm:$0xff]
      %v4466 = vld [vmem:[%s2031 + $0x9a] sm:$0xff]
      %v4467 = vld [vmem:[%s2031 + $0xaa] sm:$0xff]
      %v4468 = vld [vmem:[%s2031 + $0xb2] sm:$0xff]
      %v4469 = vpack.c.bf16 %v4454, %v4453
      %v4470 = vpack.c.bf16 %v4456, %v4455
      %v4471 = vpack.c.bf16 %v4458, %v4457
      %v4472 = vpack.c.bf16 %v4460, %v4459
      %v4473 = vpack.c.bf16 %v4462, %v4461
      %v4474 = vpack.c.bf16 %v4464, %v4463
      %v4475 = vpack.c.bf16 %v4466, %v4465
      %v4476 = vpack.c.bf16 %v4468, %v4467
      %s4477 = scalar_lea.vmem %s3, 10
      %v4478 = vld [vmem:[%s4477] sm:$0x3]
      %v4480 = vsel %vm226, %v4469, 0
      %v4483 = vsel %vm226, %v4470, 0
      %v4486 = vsel %vm226, %v4471, 0
      %v4489 = vsel %vm226, %v4472, 0
      %v4492 = vsel %vm226, %v4473, 0
      %v4495 = vsel %vm226, %v4474, 0
      %v4498 = vsel %vm226, %v4475, 0
      %v4501 = vsel %vm226, %v4476, 0
      %v4504 = vsel %vm508, %v4478, 0
      %4506 = vmatprep.subr.bf16.mxu0 0
      %4507 = vmatpush1.bf16.msra.mxu0 %v4504
      %4508 = vmatprep.subr.bf16.mxu0 0
      %4509 = vmatpush1.bf16.msra.mxu0 0
      %4510 = vmatprep.subr.bf16.mxu0 0
      %4511 = vmatpush1.bf16.msra.mxu0 0
      %4512 = vmatprep.subr.bf16.mxu0 0
      %4513 = vmatpush1.bf16.msra.mxu0 0
      %4514 = vmatprep.subr.bf16.mxu0 0
      %4515 = vmatpush1.bf16.msra.mxu0 0
      %4516 = vmatprep.subr.bf16.mxu0 0
      %4517 = vmatpush1.bf16.msra.mxu0 0
      %4518 = vmatprep.subr.bf16.mxu0 0
      %4519 = vmatpush1.bf16.msra.mxu0 0
      %4520 = vmatprep.subr.bf16.mxu0 0
      %4521 = vmatpush1.bf16.msra.mxu0 0
      %4522 = vmatprep.subr.bf16.mxu0 0
      %4523 = vmatpush1.bf16.msra.mxu0 0
      %4524 = vmatprep.subr.bf16.mxu0 0
      %4525 = vmatpush1.bf16.msra.mxu0 0
      %4526 = vmatprep.subr.bf16.mxu0 0
      %4527 = vmatpush1.bf16.msra.mxu0 0
      %4528 = vmatprep.subr.bf16.mxu0 0
      %4529 = vmatpush1.bf16.msra.mxu0 0
      %4530 = vmatprep.subr.bf16.mxu0 0
      %4531 = vmatpush1.bf16.msra.mxu0 0
      %4532 = vmatprep.subr.bf16.mxu0 0
      %4533 = vmatpush1.bf16.msra.mxu0 0
      %4534 = vmatprep.subr.bf16.mxu0 0
      %4535 = vmatpush1.bf16.msra.mxu0 0
      %4536 = vmatprep.subr.bf16.mxu0 0
      %4537 = vmatpush1.bf16.msra.mxu0 0
      %4538 = vmatprep.mubr.bf16.mxu0 0
      %4539 = vmatmul.mubr.bf16.gmra.mrb[0].mxu0 %v4480
      %v4540 = vpop.f32.mrb[0].mxu0
      %v4541 = vadd.f32 0.0, %v4540
      %v4542 = vpop.f32.mrb[0].mxu0
      %v4543 = vpop.f32.mrb[0].mxu0
      %v4544 = vadd.f32 0.0, %v4543
      %v4545 = vpop.f32.mrb[0].mxu0
      %4546 = vmatprep.mubr.bf16.mxu0 0
      %4547 = vmatmul.mubr.bf16.gmra.mrb[0].mxu0 %v4483
      %v4548 = vpop.f32.mrb[0].mxu0
      %v4549 = vadd.f32 0.0, %v4548
      %v4550 = vpop.f32.mrb[0].mxu0
      %v4551 = vpop.f32.mrb[0].mxu0
      %v4552 = vadd.f32 0.0, %v4551
      %v4553 = vpop.f32.mrb[0].mxu0
      %4554 = vmatprep.mubr.bf16.mxu0 0
      %4555 = vmatmul.mubr.bf16.gmra.mrb[0].mxu0 %v4486
      %v4556 = vpop.f32.mrb[0].mxu0
      %v4557 = vadd.f32 0.0, %v4556
      %v4558 = vpop.f32.mrb[0].mxu0
      %v4559 = vpop.f32.mrb[0].mxu0
      %v4560 = vadd.f32 0.0, %v4559
      %v4561 = vpop.f32.mrb[0].mxu0
      %4562 = vmatprep.mubr.bf16.mxu0 0
      %4563 = vmatmul.mubr.bf16.gmra.mrb[0].mxu0 %v4489
      %v4564 = vpop.f32.mrb[0].mxu0
      %v4565 = vadd.f32 0.0, %v4564
      %v4566 = vpop.f32.mrb[0].mxu0
      %v4567 = vpop.f32.mrb[0].mxu0
      %v4568 = vadd.f32 0.0, %v4567
      %v4569 = vpop.f32.mrb[0].mxu0
      %4570 = vmatprep.mubr.bf16.mxu0 0
      %4571 = vmatmul.mubr.bf16.gmra.mrb[0].mxu0 %v4492
      %v4572 = vpop.f32.mrb[0].mxu0
      %v4573 = vadd.f32 0.0, %v4572
      %v4574 = vpop.f32.mrb[0].mxu0
      %v4575 = vpop.f32.mrb[0].mxu0
      %v4576 = vadd.f32 0.0, %v4575
      %v4577 = vpop.f32.mrb[0].mxu0
      %4578 = vmatprep.mubr.bf16.mxu0 0
      %4579 = vmatmul.mubr.bf16.gmra.mrb[0].mxu0 %v4495
      %v4580 = vpop.f32.mrb[0].mxu0
      %v4581 = vadd.f32 0.0, %v4580
      %v4582 = vpop.f32.mrb[0].mxu0
      %v4583 = vpop.f32.mrb[0].mxu0
      %v4584 = vadd.f32 0.0, %v4583
      %v4585 = vpop.f32.mrb[0].mxu0
      %4586 = vmatprep.mubr.bf16.mxu0 0
      %4587 = vmatmul.mubr.bf16.gmra.mrb[0].mxu0 %v4498
      %v4588 = vpop.f32.mrb[0].mxu0
      %v4589 = vadd.f32 0.0, %v4588
      %v4590 = vpop.f32.mrb[0].mxu0
      %v4591 = vpop.f32.mrb[0].mxu0
      %v4592 = vadd.f32 0.0, %v4591
      %v4593 = vpop.f32.mrb[0].mxu0
      %4594 = vmatprep.mubr.bf16.mxu0 0
      %4595 = vmatmul.mubr.bf16.gmra.mrb[0].mxu0 %v4501
      %v4596 = vpop.f32.mrb[0].mxu0
      %v4597 = vadd.f32 0.0, %v4596
      %v4598 = vpop.f32.mrb[0].mxu0
      %v4599 = vpop.f32.mrb[0].mxu0
      %v4600 = vadd.f32 0.0, %v4599
      %v4601 = vpop.f32.mrb[0].mxu0
      %4602 = vdwg.mxu0
      %v4603 = vadd.f32 %v4437, %v4541
      %v4604 = vadd.f32 %v4438, %v4544
      %v4605 = vadd.f32 %v4439, %v4549
      %v4606 = vadd.f32 %v4440, %v4552
      %v4607 = vadd.f32 %v4441, %v4557
      %v4608 = vadd.f32 %v4442, %v4560
      %v4609 = vadd.f32 %v4443, %v4565
      %v4610 = vadd.f32 %v4444, %v4568
      %v4611 = vadd.f32 %v4445, %v4573
      %v4612 = vadd.f32 %v4446, %v4576
      %v4613 = vadd.f32 %v4447, %v4581
      %v4614 = vadd.f32 %v4448, %v4584
      %v4615 = vadd.f32 %v4449, %v4589
      %v4616 = vadd.f32 %v4450, %v4592
      %v4617 = vadd.f32 %v4451, %v4597
      %v4618 = vadd.f32 %v4452, %v4600
      %s4619 = scalar_lea.vmem [#allocation3], 48
      %v4620 = vld [vmem:[%s4619] sm:$0xff]
      %v4621 = vld [vmem:[%s4619 + $0x8] sm:$0xff]
      %v4622 = vld [vmem:[%s4619 + $0x18] sm:$0xff]
      %v4623 = vld [vmem:[%s4619 + $0x20] sm:$0xff]
      %v4624 = vld [vmem:[%s4619 + $0x30] sm:$0xff]
      %v4625 = vld [vmem:[%s4619 + $0x38] sm:$0xff]
      %v4626 = vld [vmem:[%s4619 + $0x48] sm:$0xff]
      %v4627 = vld [vmem:[%s4619 + $0x50] sm:$0xff]
      %v4628 = vld [vmem:[%s4619 + $0x60] sm:$0xff]
      %v4629 = vld [vmem:[%s4619 + $0x68] sm:$0xff]
      %v4630 = vld [vmem:[%s4619 + $0x78] sm:$0xff]
      %v4631 = vld [vmem:[%s4619 + $0x80] sm:$0xff]
      %v4632 = vld [vmem:[%s4619 + $0x90] sm:$0xff]
      %v4633 = vld [vmem:[%s4619 + $0x98] sm:$0xff]
      %v4634 = vld [vmem:[%s4619 + $0xa8] sm:$0xff]
      %v4635 = vld [vmem:[%s4619 + $0xb0] sm:$0xff]
      %v4636 = vpack.c.bf16 %v4621, %v4620
      %v4637 = vpack.c.bf16 %v4623, %v4622
      %v4638 = vpack.c.bf16 %v4625, %v4624
      %v4639 = vpack.c.bf16 %v4627, %v4626
      %v4640 = vpack.c.bf16 %v4629, %v4628
      %v4641 = vpack.c.bf16 %v4631, %v4630
      %v4642 = vpack.c.bf16 %v4633, %v4632
      %v4643 = vpack.c.bf16 %v4635, %v4634
      %s4644 = scalar_lea.vmem %s3, 12
      %v4645 = vld [vmem:[%s4644] sm:$0x3]
      %v4647 = vsel %vm226, %v4636, 0
      %v4650 = vsel %vm226, %v4637, 0
      %v4653 = vsel %vm226, %v4638, 0
      %v4656 = vsel %vm226, %v4639, 0
      %v4659 = vsel %vm226, %v4640, 0
      %v4662 = vsel %vm226, %v4641, 0
      %v4665 = vsel %vm226, %v4642, 0
      %v4668 = vsel %vm226, %v4643, 0
      %v4671 = vsel %vm508, %v4645, 0
      %4673 = vmatprep.subr.bf16.mxu0 0
      %4674 = vmatpush1.bf16.msra.mxu0 %v4671
      %4675 = vmatprep.subr.bf16.mxu0 0
      %4676 = vmatpush1.bf16.msra.mxu0 0
      %4677 = vmatprep.subr.bf16.mxu0 0
      %4678 = vmatpush1.bf16.msra.mxu0 0
      %4679 = vmatprep.subr.bf16.mxu0 0
      %4680 = vmatpush1.bf16.msra.mxu0 0
      %4681 = vmatprep.subr.bf16.mxu0 0
      %4682 = vmatpush1.bf16.msra.mxu0 0
      %4683 = vmatprep.subr.bf16.mxu0 0
      %4684 = vmatpush1.bf16.msra.mxu0 0
      %4685 = vmatprep.subr.bf16.mxu0 0
      %4686 = vmatpush1.bf16.msra.mxu0 0
      %4687 = vmatprep.subr.bf16.mxu0 0
      %4688 = vmatpush1.bf16.msra.mxu0 0
      %4689 = vmatprep.subr.bf16.mxu0 0
      %4690 = vmatpush1.bf16.msra.mxu0 0
      %4691 = vmatprep.subr.bf16.mxu0 0
      %4692 = vmatpush1.bf16.msra.mxu0 0
      %4693 = vmatprep.subr.bf16.mxu0 0
      %4694 = vmatpush1.bf16.msra.mxu0 0
      %4695 = vmatprep.subr.bf16.mxu0 0
      %4696 = vmatpush1.bf16.msra.mxu0 0
      %4697 = vmatprep.subr.bf16.mxu0 0
      %4698 = vmatpush1.bf16.msra.mxu0 0
      %4699 = vmatprep.subr.bf16.mxu0 0
      %4700 = vmatpush1.bf16.msra.mxu0 0
      %4701 = vmatprep.subr.bf16.mxu0 0
      %4702 = vmatpush1.bf16.msra.mxu0 0
      %4703 = vmatprep.subr.bf16.mxu0 0
      %4704 = vmatpush1.bf16.msra.mxu0 0
      %4705 = vmatprep.mubr.bf16.mxu0 0
      %4706 = vmatmul.mubr.bf16.gmra.mrb[0].mxu0 %v4647
      %v4707 = vpop.f32.mrb[0].mxu0
      %v4708 = vadd.f32 0.0, %v4707
      %v4709 = vpop.f32.mrb[0].mxu0
      %v4710 = vpop.f32.mrb[0].mxu0
      %v4711 = vadd.f32 0.0, %v4710
      %v4712 = vpop.f32.mrb[0].mxu0
      %4713 = vmatprep.mubr.bf16.mxu0 0
      %4714 = vmatmul.mubr.bf16.gmra.mrb[0].mxu0 %v4650
      %v4715 = vpop.f32.mrb[0].mxu0
      %v4716 = vadd.f32 0.0, %v4715
      %v4717 = vpop.f32.mrb[0].mxu0
      %v4718 = vpop.f32.mrb[0].mxu0
      %v4719 = vadd.f32 0.0, %v4718
      %v4720 = vpop.f32.mrb[0].mxu0
      %4721 = vmatprep.mubr.bf16.mxu0 0
      %4722 = vmatmul.mubr.bf16.gmra.mrb[0].mxu0 %v4653
      %v4723 = vpop.f32.mrb[0].mxu0
      %v4724 = vadd.f32 0.0, %v4723
      %v4725 = vpop.f32.mrb[0].mxu0
      %v4726 = vpop.f32.mrb[0].mxu0
      %v4727 = vadd.f32 0.0, %v4726
      %v4728 = vpop.f32.mrb[0].mxu0
      %4729 = vmatprep.mubr.bf16.mxu0 0
      %4730 = vmatmul.mubr.bf16.gmra.mrb[0].mxu0 %v4656
      %v4731 = vpop.f32.mrb[0].mxu0
      %v4732 = vadd.f32 0.0, %v4731
      %v4733 = vpop.f32.mrb[0].mxu0
      %v4734 = vpop.f32.mrb[0].mxu0
      %v4735 = vadd.f32 0.0, %v4734
      %v4736 = vpop.f32.mrb[0].mxu0
      %4737 = vmatprep.mubr.bf16.mxu0 0
      %4738 = vmatmul.mubr.bf16.gmra.mrb[0].mxu0 %v4659
      %v4739 = vpop.f32.mrb[0].mxu0
      %v4740 = vadd.f32 0.0, %v4739
      %v4741 = vpop.f32.mrb[0].mxu0
      %v4742 = vpop.f32.mrb[0].mxu0
      %v4743 = vadd.f32 0.0, %v4742
      %v4744 = vpop.f32.mrb[0].mxu0
      %4745 = vmatprep.mubr.bf16.mxu0 0
      %4746 = vmatmul.mubr.bf16.gmra.mrb[0].mxu0 %v4662
      %v4747 = vpop.f32.mrb[0].mxu0
      %v4748 = vadd.f32 0.0, %v4747
      %v4749 = vpop.f32.mrb[0].mxu0
      %v4750 = vpop.f32.mrb[0].mxu0
      %v4751 = vadd.f32 0.0, %v4750
      %v4752 = vpop.f32.mrb[0].mxu0
      %4753 = vmatprep.mubr.bf16.mxu0 0
      %4754 = vmatmul.mubr.bf16.gmra.mrb[0].mxu0 %v4665
      %v4755 = vpop.f32.mrb[0].mxu0
      %v4756 = vadd.f32 0.0, %v4755
      %v4757 = vpop.f32.mrb[0].mxu0
      %v4758 = vpop.f32.mrb[0].mxu0
      %v4759 = vadd.f32 0.0, %v4758
      %v4760 = vpop.f32.mrb[0].mxu0
      %4761 = vmatprep.mubr.bf16.mxu0 0
      %4762 = vmatmul.mubr.bf16.gmra.mrb[0].mxu0 %v4668
      %v4763 = vpop.f32.mrb[0].mxu0
      %v4764 = vadd.f32 0.0, %v4763
      %v4765 = vpop.f32.mrb[0].mxu0
      %v4766 = vpop.f32.mrb[0].mxu0
      %v4767 = vadd.f32 0.0, %v4766
      %v4768 = vpop.f32.mrb[0].mxu0
      %4769 = vdwg.mxu0
      %v4770 = vadd.f32 %v4603, %v4708
      %v4771 = vadd.f32 %v4604, %v4711
      %v4772 = vadd.f32 %v4605, %v4716
      %v4773 = vadd.f32 %v4606, %v4719
      %v4774 = vadd.f32 %v4607, %v4724
      %v4775 = vadd.f32 %v4608, %v4727
      %v4776 = vadd.f32 %v4609, %v4732
      %v4777 = vadd.f32 %v4610, %v4735
      %v4778 = vadd.f32 %v4611, %v4740
      %v4779 = vadd.f32 %v4612, %v4743
      %v4780 = vadd.f32 %v4613, %v4748
      %v4781 = vadd.f32 %v4614, %v4751
      %v4782 = vadd.f32 %v4615, %v4756
      %v4783 = vadd.f32 %v4616, %v4759
      %v4784 = vadd.f32 %v4617, %v4764
      %v4785 = vadd.f32 %v4618, %v4767
      %v4786 = vld [vmem:[%s4619 + $0x1] sm:$0xff]
      %v4787 = vld [vmem:[%s4619 + $0x9] sm:$0xff]
      %v4788 = vld [vmem:[%s4619 + $0x19] sm:$0xff]
      %v4789 = vld [vmem:[%s4619 + $0x21] sm:$0xff]
      %v4790 = vld [vmem:[%s4619 + $0x31] sm:$0xff]
      %v4791 = vld [vmem:[%s4619 + $0x39] sm:$0xff]
      %v4792 = vld [vmem:[%s4619 + $0x49] sm:$0xff]
      %v4793 = vld [vmem:[%s4619 + $0x51] sm:$0xff]
      %v4794 = vld [vmem:[%s4619 + $0x61] sm:$0xff]
      %v4795 = vld [vmem:[%s4619 + $0x69] sm:$0xff]
      %v4796 = vld [vmem:[%s4619 + $0x79] sm:$0xff]
      %v4797 = vld [vmem:[%s4619 + $0x81] sm:$0xff]
      %v4798 = vld [vmem:[%s4619 + $0x91] sm:$0xff]
      %v4799 = vld [vmem:[%s4619 + $0x99] sm:$0xff]
      %v4800 = vld [vmem:[%s4619 + $0xa9] sm:$0xff]
      %v4801 = vld [vmem:[%s4619 + $0xb1] sm:$0xff]
      %v4802 = vpack.c.bf16 %v4787, %v4786
      %v4803 = vpack.c.bf16 %v4789, %v4788
      %v4804 = vpack.c.bf16 %v4791, %v4790
      %v4805 = vpack.c.bf16 %v4793, %v4792
      %v4806 = vpack.c.bf16 %v4795, %v4794
      %v4807 = vpack.c.bf16 %v4797, %v4796
      %v4808 = vpack.c.bf16 %v4799, %v4798
      %v4809 = vpack.c.bf16 %v4801, %v4800
      %s4810 = scalar_lea.vmem %s3, 14
      %v4811 = vld [vmem:[%s4810] sm:$0x3]
      %v4813 = vsel %vm226, %v4802, 0
      %v4816 = vsel %vm226, %v4803, 0
      %v4819 = vsel %vm226, %v4804, 0
      %v4822 = vsel %vm226, %v4805, 0
      %v4825 = vsel %vm226, %v4806, 0
      %v4828 = vsel %vm226, %v4807, 0
      %v4831 = vsel %vm226, %v4808, 0
      %v4834 = vsel %vm226, %v4809, 0
      %v4837 = vsel %vm508, %v4811, 0
      %4839 = vmatprep.subr.bf16.mxu0 0
      %4840 = vmatpush1.bf16.msra.mxu0 %v4837
      %4841 = vmatprep.subr.bf16.mxu0 0
      %4842 = vmatpush1.bf16.msra.mxu0 0
      %4843 = vmatprep.subr.bf16.mxu0 0
      %4844 = vmatpush1.bf16.msra.mxu0 0
      %4845 = vmatprep.subr.bf16.mxu0 0
      %4846 = vmatpush1.bf16.msra.mxu0 0
      %4847 = vmatprep.subr.bf16.mxu0 0
      %4848 = vmatpush1.bf16.msra.mxu0 0
      %4849 = vmatprep.subr.bf16.mxu0 0
      %4850 = vmatpush1.bf16.msra.mxu0 0
      %4851 = vmatprep.subr.bf16.mxu0 0
      %4852 = vmatpush1.bf16.msra.mxu0 0
      %4853 = vmatprep.subr.bf16.mxu0 0
      %4854 = vmatpush1.bf16.msra.mxu0 0
      %4855 = vmatprep.subr.bf16.mxu0 0
      %4856 = vmatpush1.bf16.msra.mxu0 0
      %4857 = vmatprep.subr.bf16.mxu0 0
      %4858 = vmatpush1.bf16.msra.mxu0 0
      %4859 = vmatprep.subr.bf16.mxu0 0
      %4860 = vmatpush1.bf16.msra.mxu0 0
      %4861 = vmatprep.subr.bf16.mxu0 0
      %4862 = vmatpush1.bf16.msra.mxu0 0
      %4863 = vmatprep.subr.bf16.mxu0 0
      %4864 = vmatpush1.bf16.msra.mxu0 0
      %4865 = vmatprep.subr.bf16.mxu0 0
      %4866 = vmatpush1.bf16.msra.mxu0 0
      %4867 = vmatprep.subr.bf16.mxu0 0
      %4868 = vmatpush1.bf16.msra.mxu0 0
      %4869 = vmatprep.subr.bf16.mxu0 0
      %4870 = vmatpush1.bf16.msra.mxu0 0
      %4871 = vmatprep.mubr.bf16.mxu0 0
      %4872 = vmatmul.mubr.bf16.gmra.mrb[0].mxu0 %v4813
      %v4873 = vpop.f32.mrb[0].mxu0
      %v4874 = vadd.f32 0.0, %v4873
      %v4875 = vpop.f32.mrb[0].mxu0
      %v4876 = vpop.f32.mrb[0].mxu0
      %v4877 = vadd.f32 0.0, %v4876
      %v4878 = vpop.f32.mrb[0].mxu0
      %4879 = vmatprep.mubr.bf16.mxu0 0
      %4880 = vmatmul.mubr.bf16.gmra.mrb[0].mxu0 %v4816
      %v4881 = vpop.f32.mrb[0].mxu0
      %v4882 = vadd.f32 0.0, %v4881
      %v4883 = vpop.f32.mrb[0].mxu0
      %v4884 = vpop.f32.mrb[0].mxu0
      %v4885 = vadd.f32 0.0, %v4884
      %v4886 = vpop.f32.mrb[0].mxu0
      %4887 = vmatprep.mubr.bf16.mxu0 0
      %4888 = vmatmul.mubr.bf16.gmra.mrb[0].mxu0 %v4819
      %v4889 = vpop.f32.mrb[0].mxu0
      %v4890 = vadd.f32 0.0, %v4889
      %v4891 = vpop.f32.mrb[0].mxu0
      %v4892 = vpop.f32.mrb[0].mxu0
      %v4893 = vadd.f32 0.0, %v4892
      %v4894 = vpop.f32.mrb[0].mxu0
      %4895 = vmatprep.mubr.bf16.mxu0 0
      %4896 = vmatmul.mubr.bf16.gmra.mrb[0].mxu0 %v4822
      %v4897 = vpop.f32.mrb[0].mxu0
      %v4898 = vadd.f32 0.0, %v4897
      %v4899 = vpop.f32.mrb[0].mxu0
      %v4900 = vpop.f32.mrb[0].mxu0
      %v4901 = vadd.f32 0.0, %v4900
      %v4902 = vpop.f32.mrb[0].mxu0
      %4903 = vmatprep.mubr.bf16.mxu0 0
      %4904 = vmatmul.mubr.bf16.gmra.mrb[0].mxu0 %v4825
      %v4905 = vpop.f32.mrb[0].mxu0
      %v4906 = vadd.f32 0.0, %v4905
      %v4907 = vpop.f32.mrb[0].mxu0
      %v4908 = vpop.f32.mrb[0].mxu0
      %v4909 = vadd.f32 0.0, %v4908
      %v4910 = vpop.f32.mrb[0].mxu0
      %4911 = vmatprep.mubr.bf16.mxu0 0
      %4912 = vmatmul.mubr.bf16.gmra.mrb[0].mxu0 %v4828
      %v4913 = vpop.f32.mrb[0].mxu0
      %v4914 = vadd.f32 0.0, %v4913
      %v4915 = vpop.f32.mrb[0].mxu0
      %v4916 = vpop.f32.mrb[0].mxu0
      %v4917 = vadd.f32 0.0, %v4916
      %v4918 = vpop.f32.mrb[0].mxu0
      %4919 = vmatprep.mubr.bf16.mxu0 0
      %4920 = vmatmul.mubr.bf16.gmra.mrb[0].mxu0 %v4831
      %v4921 = vpop.f32.mrb[0].mxu0
      %v4922 = vadd.f32 0.0, %v4921
      %v4923 = vpop.f32.mrb[0].mxu0
      %v4924 = vpop.f32.mrb[0].mxu0
      %v4925 = vadd.f32 0.0, %v4924
      %v4926 = vpop.f32.mrb[0].mxu0
      %4927 = vmatprep.mubr.bf16.mxu0 0
      %4928 = vmatmul.mubr.bf16.gmra.mrb[0].mxu0 %v4834
      %v4929 = vpop.f32.mrb[0].mxu0
      %v4930 = vadd.f32 0.0, %v4929
      %v4931 = vpop.f32.mrb[0].mxu0
      %v4932 = vpop.f32.mrb[0].mxu0
      %v4933 = vadd.f32 0.0, %v4932
      %v4934 = vpop.f32.mrb[0].mxu0
      %4935 = vdwg.mxu0
      %v4936 = vadd.f32 %v4770, %v4874
      %v4937 = vadd.f32 %v4771, %v4877
      %v4938 = vadd.f32 %v4772, %v4882
      %v4939 = vadd.f32 %v4773, %v4885
      %v4940 = vadd.f32 %v4774, %v4890
      %v4941 = vadd.f32 %v4775, %v4893
      %v4942 = vadd.f32 %v4776, %v4898
      %v4943 = vadd.f32 %v4777, %v4901
      %v4944 = vadd.f32 %v4778, %v4906
      %v4945 = vadd.f32 %v4779, %v4909
      %v4946 = vadd.f32 %v4780, %v4914
      %v4947 = vadd.f32 %v4781, %v4917
      %v4948 = vadd.f32 %v4782, %v4922
      %v4949 = vadd.f32 %v4783, %v4925
      %v4950 = vadd.f32 %v4784, %v4930
      %v4951 = vadd.f32 %v4785, %v4933
      %v4952 = vld [vmem:[%s4619 + $0x2] sm:$0xff]
      %v4953 = vld [vmem:[%s4619 + $0xa] sm:$0xff]
      %v4954 = vld [vmem:[%s4619 + $0x1a] sm:$0xff]
      %v4955 = vld [vmem:[%s4619 + $0x22] sm:$0xff]
      %v4956 = vld [vmem:[%s4619 + $0x32] sm:$0xff]
      %v4957 = vld [vmem:[%s4619 + $0x3a] sm:$0xff]
      %v4958 = vld [vmem:[%s4619 + $0x4a] sm:$0xff]
      %v4959 = vld [vmem:[%s4619 + $0x52] sm:$0xff]
      %v4960 = vld [vmem:[%s4619 + $0x62] sm:$0xff]
      %v4961 = vld [vmem:[%s4619 + $0x6a] sm:$0xff]
      %v4962 = vld [vmem:[%s4619 + $0x7a] sm:$0xff]
      %v4963 = vld [vmem:[%s4619 + $0x82] sm:$0xff]
      %v4964 = vld [vmem:[%s4619 + $0x92] sm:$0xff]
      %v4965 = vld [vmem:[%s4619 + $0x9a] sm:$0xff]
      %v4966 = vld [vmem:[%s4619 + $0xaa] sm:$0xff]
      %v4967 = vld [vmem:[%s4619 + $0xb2] sm:$0xff]
      %v4968 = vpack.c.bf16 %v4953, %v4952
      %v4969 = vpack.c.bf16 %v4955, %v4954
      %v4970 = vpack.c.bf16 %v4957, %v4956
      %v4971 = vpack.c.bf16 %v4959, %v4958
      %v4972 = vpack.c.bf16 %v4961, %v4960
      %v4973 = vpack.c.bf16 %v4963, %v4962
      %v4974 = vpack.c.bf16 %v4965, %v4964
      %v4975 = vpack.c.bf16 %v4967, %v4966
      %s4976 = scalar_lea.vmem %s3, 16
      %v4977 = vld [vmem:[%s4976] sm:$0x3]
      %v4979 = vsel %vm226, %v4968, 0
      %v4982 = vsel %vm226, %v4969, 0
      %v4985 = vsel %vm226, %v4970, 0
      %v4988 = vsel %vm226, %v4971, 0
      %v4991 = vsel %vm226, %v4972, 0
      %v4994 = vsel %vm226, %v4973, 0
      %v4997 = vsel %vm226, %v4974, 0
      %v5000 = vsel %vm226, %v4975, 0
      %v5003 = vsel %vm508, %v4977, 0
      %5005 = vmatprep.subr.bf16.mxu0 0
      %5006 = vmatpush1.bf16.msra.mxu0 %v5003
      %5007 = vmatprep.subr.bf16.mxu0 0
      %5008 = vmatpush1.bf16.msra.mxu0 0
      %5009 = vmatprep.subr.bf16.mxu0 0
      %5010 = vmatpush1.bf16.msra.mxu0 0
      %5011 = vmatprep.subr.bf16.mxu0 0
      %5012 = vmatpush1.bf16.msra.mxu0 0
      %5013 = vmatprep.subr.bf16.mxu0 0
      %5014 = vmatpush1.bf16.msra.mxu0 0
      %5015 = vmatprep.subr.bf16.mxu0 0
      %5016 = vmatpush1.bf16.msra.mxu0 0
      %5017 = vmatprep.subr.bf16.mxu0 0
      %5018 = vmatpush1.bf16.msra.mxu0 0
      %5019 = vmatprep.subr.bf16.mxu0 0
      %5020 = vmatpush1.bf16.msra.mxu0 0
      %5021 = vmatprep.subr.bf16.mxu0 0
      %5022 = vmatpush1.bf16.msra.mxu0 0
      %5023 = vmatprep.subr.bf16.mxu0 0
      %5024 = vmatpush1.bf16.msra.mxu0 0
      %5025 = vmatprep.subr.bf16.mxu0 0
      %5026 = vmatpush1.bf16.msra.mxu0 0
      %5027 = vmatprep.subr.bf16.mxu0 0
      %5028 = vmatpush1.bf16.msra.mxu0 0
      %5029 = vmatprep.subr.bf16.mxu0 0
      %5030 = vmatpush1.bf16.msra.mxu0 0
      %5031 = vmatprep.subr.bf16.mxu0 0
      %5032 = vmatpush1.bf16.msra.mxu0 0
      %5033 = vmatprep.subr.bf16.mxu0 0
      %5034 = vmatpush1.bf16.msra.mxu0 0
      %5035 = vmatprep.subr.bf16.mxu0 0
      %5036 = vmatpush1.bf16.msra.mxu0 0
      %5037 = vmatprep.mubr.bf16.mxu0 0
      %5038 = vmatmul.mubr.bf16.gmra.mrb[0].mxu0 %v4979
      %v5039 = vpop.f32.mrb[0].mxu0
      %v5040 = vadd.f32 0.0, %v5039
      %v5041 = vpop.f32.mrb[0].mxu0
      %v5042 = vpop.f32.mrb[0].mxu0
      %v5043 = vadd.f32 0.0, %v5042
      %v5044 = vpop.f32.mrb[0].mxu0
      %5045 = vmatprep.mubr.bf16.mxu0 0
      %5046 = vmatmul.mubr.bf16.gmra.mrb[0].mxu0 %v4982
      %v5047 = vpop.f32.mrb[0].mxu0
      %v5048 = vadd.f32 0.0, %v5047
      %v5049 = vpop.f32.mrb[0].mxu0
      %v5050 = vpop.f32.mrb[0].mxu0
      %v5051 = vadd.f32 0.0, %v5050
      %v5052 = vpop.f32.mrb[0].mxu0
      %5053 = vmatprep.mubr.bf16.mxu0 0
      %5054 = vmatmul.mubr.bf16.gmra.mrb[0].mxu0 %v4985
      %v5055 = vpop.f32.mrb[0].mxu0
      %v5056 = vadd.f32 0.0, %v5055
      %v5057 = vpop.f32.mrb[0].mxu0
      %v5058 = vpop.f32.mrb[0].mxu0
      %v5059 = vadd.f32 0.0, %v5058
      %v5060 = vpop.f32.mrb[0].mxu0
      %5061 = vmatprep.mubr.bf16.mxu0 0
      %5062 = vmatmul.mubr.bf16.gmra.mrb[0].mxu0 %v4988
      %v5063 = vpop.f32.mrb[0].mxu0
      %v5064 = vadd.f32 0.0, %v5063
      %v5065 = vpop.f32.mrb[0].mxu0
      %v5066 = vpop.f32.mrb[0].mxu0
      %v5067 = vadd.f32 0.0, %v5066
      %v5068 = vpop.f32.mrb[0].mxu0
      %5069 = vmatprep.mubr.bf16.mxu0 0
      %5070 = vmatmul.mubr.bf16.gmra.mrb[0].mxu0 %v4991
      %v5071 = vpop.f32.mrb[0].mxu0
      %v5072 = vadd.f32 0.0, %v5071
      %v5073 = vpop.f32.mrb[0].mxu0
      %v5074 = vpop.f32.mrb[0].mxu0
      %v5075 = vadd.f32 0.0, %v5074
      %v5076 = vpop.f32.mrb[0].mxu0
      %5077 = vmatprep.mubr.bf16.mxu0 0
      %5078 = vmatmul.mubr.bf16.gmra.mrb[0].mxu0 %v4994
      %v5079 = vpop.f32.mrb[0].mxu0
      %v5080 = vadd.f32 0.0, %v5079
      %v5081 = vpop.f32.mrb[0].mxu0
      %v5082 = vpop.f32.mrb[0].mxu0
      %v5083 = vadd.f32 0.0, %v5082
      %v5084 = vpop.f32.mrb[0].mxu0
      %5085 = vmatprep.mubr.bf16.mxu0 0
      %5086 = vmatmul.mubr.bf16.gmra.mrb[0].mxu0 %v4997
      %v5087 = vpop.f32.mrb[0].mxu0
      %v5088 = vadd.f32 0.0, %v5087
      %v5089 = vpop.f32.mrb[0].mxu0
      %v5090 = vpop.f32.mrb[0].mxu0
      %v5091 = vadd.f32 0.0, %v5090
      %v5092 = vpop.f32.mrb[0].mxu0
      %5093 = vmatprep.mubr.bf16.mxu0 0
      %5094 = vmatmul.mubr.bf16.gmra.mrb[0].mxu0 %v5000
      %v5095 = vpop.f32.mrb[0].mxu0
      %v5096 = vadd.f32 0.0, %v5095
      %v5097 = vpop.f32.mrb[0].mxu0
      %v5098 = vpop.f32.mrb[0].mxu0
      %v5099 = vadd.f32 0.0, %v5098
      %v5100 = vpop.f32.mrb[0].mxu0
      %5101 = vdwg.mxu0
      %v5102 = vadd.f32 %v4936, %v5040
      %v5103 = vadd.f32 %v4937, %v5043
      %v5104 = vadd.f32 %v4938, %v5048
      %v5105 = vadd.f32 %v4939, %v5051
      %v5106 = vadd.f32 %v4940, %v5056
      %v5107 = vadd.f32 %v4941, %v5059
      %v5108 = vadd.f32 %v4942, %v5064
      %v5109 = vadd.f32 %v4943, %v5067
      %v5110 = vadd.f32 %v4944, %v5072
      %v5111 = vadd.f32 %v4945, %v5075
      %v5112 = vadd.f32 %v4946, %v5080
      %v5113 = vadd.f32 %v4947, %v5083
      %v5114 = vadd.f32 %v4948, %v5088
      %v5115 = vadd.f32 %v4949, %v5091
      %v5116 = vadd.f32 %v4950, %v5096
      %v5117 = vadd.f32 %v4951, %v5099
      %v5118 = vld [vmem:[%s4] sm:$0x1]
      %v5120 = vlaneseq
      %v5121 = vshrl.u32 %v5120, 7
      %v5122 = vsub.s32 0, %v5121
      %v5123 = vrot.slane %v5118, %v5122
      %v5125 = vadd.f32 %v5102, %v5123
      %v5126 = vadd.f32 %v5103, %v5123
      %v5127 = vadd.f32 %v5104, %v5123
      %v5128 = vadd.f32 %v5105, %v5123
      %v5129 = vadd.f32 %v5106, %v5123
      %v5130 = vadd.f32 %v5107, %v5123
      %v5131 = vadd.f32 %v5108, %v5123
      %v5132 = vadd.f32 %v5109, %v5123
      %v5133 = vadd.f32 %v5110, %v5123
      %v5134 = vadd.f32 %v5111, %v5123
      %v5135 = vadd.f32 %v5112, %v5123
      %v5136 = vadd.f32 %v5113, %v5123
      %v5137 = vadd.f32 %v5114, %v5123
      %v5138 = vadd.f32 %v5115, %v5123
      %v5139 = vadd.f32 %v5116, %v5123
      %v5140 = vadd.f32 %v5117, %v5123
      %v5141 = vsub.f32 0.0, %v5125
      %v5142 = vsub.f32 0.0, %v5126
      %v5143 = vsub.f32 0.0, %v5127
      %v5144 = vsub.f32 0.0, %v5128
      %v5145 = vsub.f32 0.0, %v5129
      %v5146 = vsub.f32 0.0, %v5130
      %v5147 = vsub.f32 0.0, %v5131
      %v5148 = vsub.f32 0.0, %v5132
      %v5149 = vsub.f32 0.0, %v5133
      %v5150 = vsub.f32 0.0, %v5134
      %v5151 = vsub.f32 0.0, %v5135
      %v5152 = vsub.f32 0.0, %v5136
      %v5153 = vsub.f32 0.0, %v5137
      %v5154 = vsub.f32 0.0, %v5138
      %v5155 = vsub.f32 0.0, %v5139
      %v5156 = vsub.f32 0.0, %v5140
      %v5157 = vmul.f32 %v5141, 1.442695
      %v5158 = vpow.pop %v5157
      %v5159 = vmul.f32 %v5142, 1.442695
      %v5160 = vpow.pop %v5159
      %v5161 = vmul.f32 %v5143, 1.442695
      %v5162 = vpow.pop %v5161
      %v5163 = vmul.f32 %v5144, 1.442695
      %v5164 = vpow.pop %v5163
      %v5165 = vmul.f32 %v5145, 1.442695
      %v5166 = vpow.pop %v5165
      %v5167 = vmul.f32 %v5146, 1.442695
      %v5168 = vpow.pop %v5167
      %v5169 = vmul.f32 %v5147, 1.442695
      %v5170 = vpow.pop %v5169
      %v5171 = vmul.f32 %v5148, 1.442695
      %v5172 = vpow.pop %v5171
      %v5173 = vmul.f32 %v5149, 1.442695
      %v5174 = vpow.pop %v5173
      %v5175 = vmul.f32 %v5150, 1.442695
      %v5176 = vpow.pop %v5175
      %v5177 = vmul.f32 %v5151, 1.442695
      %v5178 = vpow.pop %v5177
      %v5179 = vmul.f32 %v5152, 1.442695
      %v5180 = vpow.pop %v5179
      %v5181 = vmul.f32 %v5153, 1.442695
      %v5182 = vpow.pop %v5181
      %v5183 = vmul.f32 %v5154, 1.442695
      %v5184 = vpow.pop %v5183
      %v5185 = vmul.f32 %v5155, 1.442695
      %v5186 = vpow.pop %v5185
      %v5187 = vmul.f32 %v5156, 1.442695
      %v5188 = vpow.pop %v5187
      %v5189 = vadd.f32 %v5158, 1.0
      %v5190 = vadd.f32 %v5160, 1.0
      %v5191 = vadd.f32 %v5162, 1.0
      %v5192 = vadd.f32 %v5164, 1.0
      %v5193 = vadd.f32 %v5166, 1.0
      %v5194 = vadd.f32 %v5168, 1.0
      %v5195 = vadd.f32 %v5170, 1.0
      %v5196 = vadd.f32 %v5172, 1.0
      %v5197 = vadd.f32 %v5174, 1.0
      %v5198 = vadd.f32 %v5176, 1.0
      %v5199 = vadd.f32 %v5178, 1.0
      %v5200 = vadd.f32 %v5180, 1.0
      %v5201 = vadd.f32 %v5182, 1.0
      %v5202 = vadd.f32 %v5184, 1.0
      %v5203 = vadd.f32 %v5186, 1.0
      %v5204 = vadd.f32 %v5188, 1.0
      %v5205 = vrcp.pop %v5189
      %v5206 = vmul.f32 1.0, %v5205
      %v5207 = vrcp.pop %v5190
      %v5208 = vmul.f32 1.0, %v5207
      %v5209 = vrcp.pop %v5191
      %v5210 = vmul.f32 1.0, %v5209
      %v5211 = vrcp.pop %v5192
      %v5212 = vmul.f32 1.0, %v5211
      %v5213 = vrcp.pop %v5193
      %v5214 = vmul.f32 1.0, %v5213
      %v5215 = vrcp.pop %v5194
      %v5216 = vmul.f32 1.0, %v5215
      %v5217 = vrcp.pop %v5195
      %v5218 = vmul.f32 1.0, %v5217
      %v5219 = vrcp.pop %v5196
      %v5220 = vmul.f32 1.0, %v5219
      %v5221 = vrcp.pop %v5197
      %v5222 = vmul.f32 1.0, %v5221
      %v5223 = vrcp.pop %v5198
      %v5224 = vmul.f32 1.0, %v5223
      %v5225 = vrcp.pop %v5199
      %v5226 = vmul.f32 1.0, %v5225
      %v5227 = vrcp.pop %v5200
      %v5228 = vmul.f32 1.0, %v5227
      %v5229 = vrcp.pop %v5201
      %v5230 = vmul.f32 1.0, %v5229
      %v5231 = vrcp.pop %v5202
      %v5232 = vmul.f32 1.0, %v5231
      %v5233 = vrcp.pop %v5203
      %v5234 = vmul.f32 1.0, %v5233
      %v5235 = vrcp.pop %v5204
      %v5236 = vmul.f32 1.0, %v5235
      %v5237 = vmul.f32 %v5125, %v5206
      %v5238 = vmul.f32 %v5126, %v5208
      %v5239 = vmul.f32 %v5127, %v5210
      %v5240 = vmul.f32 %v5128, %v5212
      %v5241 = vmul.f32 %v5129, %v5214
      %v5242 = vmul.f32 %v5130, %v5216
      %v5243 = vmul.f32 %v5131, %v5218
      %v5244 = vmul.f32 %v5132, %v5220
      %v5245 = vmul.f32 %v5133, %v5222
      %v5246 = vmul.f32 %v5134, %v5224
      %v5247 = vmul.f32 %v5135, %v5226
      %v5248 = vmul.f32 %v5136, %v5228
      %v5249 = vmul.f32 %v5137, %v5230
      %v5250 = vmul.f32 %v5138, %v5232
      %v5251 = vmul.f32 %v5139, %v5234
      %v5252 = vmul.f32 %v5140, %v5236
      %v5253 = vpack.c.bf16 %v5238, %v5237
      %v5254 = vpack.c.bf16 %v5240, %v5239
      %v5255 = vpack.c.bf16 %v5242, %v5241
      %v5256 = vpack.c.bf16 %v5244, %v5243
      %v5257 = vpack.c.bf16 %v5246, %v5245
      %v5258 = vpack.c.bf16 %v5248, %v5247
      %v5259 = vpack.c.bf16 %v5250, %v5249
      %v5260 = vpack.c.bf16 %v5252, %v5251
      %v5269 = vunpack.c.l.b16 %v5253
      %v5270 = vunpack.c.h.b16 %v5253
      %v5271 = vunpack.c.l.b16 %v5254
      %v5272 = vunpack.c.h.b16 %v5254
      %v5273 = vunpack.c.l.b16 %v5255
      %v5274 = vunpack.c.h.b16 %v5255
      %v5275 = vunpack.c.l.b16 %v5256
      %v5276 = vunpack.c.h.b16 %v5256
      %v5277 = vunpack.c.l.b16 %v5257
      %v5278 = vunpack.c.h.b16 %v5257
      %v5279 = vunpack.c.l.b16 %v5258
      %v5280 = vunpack.c.h.b16 %v5258
      %v5281 = vunpack.c.l.b16 %v5259
      %v5282 = vunpack.c.h.b16 %v5259
      %v5283 = vunpack.c.l.b16 %v5260
      %v5284 = vunpack.c.h.b16 %v5260
      %v5285 = vpack.c.b16 %v5269, %v5269
      %v5286 = vpack.c.b16 %v5270, %v5270
      %v5287 = vpack.c.b16 %v5271, %v5271
      %v5288 = vpack.c.b16 %v5272, %v5272
      %v5289 = vpack.c.b16 %v5273, %v5273
      %v5290 = vpack.c.b16 %v5274, %v5274
      %v5291 = vpack.c.b16 %v5275, %v5275
      %v5292 = vpack.c.b16 %v5276, %v5276
      %v5293 = vpack.c.b16 %v5277, %v5277
      %v5294 = vpack.c.b16 %v5278, %v5278
      %v5295 = vpack.c.b16 %v5279, %v5279
      %v5296 = vpack.c.b16 %v5280, %v5280
      %v5297 = vpack.c.b16 %v5281, %v5281
      %v5298 = vpack.c.b16 %v5282, %v5282
      %v5299 = vpack.c.b16 %v5283, %v5283
      %v5300 = vpack.c.b16 %v5284, %v5284
      %vm5317 = vcmask 27648
      %5318 = vst.msk [vmem:[%s224] sm:$0xf] %vm5317, %v5285
      %5319 = vst.msk [vmem:[%s224 + $0x4] sm:$0xf] %vm5317, %v5286
      %5320 = vst.msk [vmem:[%s224 + $0x8] sm:$0xf] %vm5317, %v5287
      %5321 = vst.msk [vmem:[%s224 + $0xc] sm:$0xf] %vm5317, %v5288
      %5322 = vst.msk [vmem:[%s224 + $0x10] sm:$0xf] %vm5317, %v5289
      %5323 = vst.msk [vmem:[%s224 + $0x14] sm:$0xf] %vm5317, %v5290
      %5324 = vst.msk [vmem:[%s224 + $0x18] sm:$0xf] %vm5317, %v5291
      %5325 = vst.msk [vmem:[%s224 + $0x1c] sm:$0xf] %vm5317, %v5292
      %5326 = vst.msk [vmem:[%s224 + $0x20] sm:$0xf] %vm5317, %v5293
      %5327 = vst.msk [vmem:[%s224 + $0x24] sm:$0xf] %vm5317, %v5294
      %5328 = vst.msk [vmem:[%s224 + $0x28] sm:$0xf] %vm5317, %v5295
      %5329 = vst.msk [vmem:[%s224 + $0x2c] sm:$0xf] %vm5317, %v5296
      %5330 = vst.msk [vmem:[%s224 + $0x30] sm:$0xf] %vm5317, %v5297
      %5331 = vst.msk [vmem:[%s224 + $0x34] sm:$0xf] %vm5317, %v5298
      %5332 = vst.msk [vmem:[%s224 + $0x38] sm:$0xf] %vm5317, %v5299
      %5333 = vst.msk [vmem:[%s224 + $0x3c] sm:$0xf] %vm5317, %v5300
      %s5334 = scalar_lea.vmem [#allocation3], 192
      %v5335 = vld [vmem:[%s5334] sm:$0xff]
      %v5336 = vld [vmem:[%s5334 + $0x8] sm:$0xff]
      %v5337 = vld [vmem:[%s5334 + $0x18] sm:$0xff]
      %v5338 = vld [vmem:[%s5334 + $0x20] sm:$0xff]
      %v5339 = vld [vmem:[%s5334 + $0x30] sm:$0xff]
      %v5340 = vld [vmem:[%s5334 + $0x38] sm:$0xff]
      %v5341 = vld [vmem:[%s5334 + $0x48] sm:$0xff]
      %v5342 = vld [vmem:[%s5334 + $0x50] sm:$0xff]
      %v5343 = vld [vmem:[%s5334 + $0x60] sm:$0xff]
      %v5344 = vld [vmem:[%s5334 + $0x68] sm:$0xff]
      %v5345 = vld [vmem:[%s5334 + $0x78] sm:$0xff]
      %v5346 = vld [vmem:[%s5334 + $0x80] sm:$0xff]
      %v5347 = vld [vmem:[%s5334 + $0x90] sm:$0xff]
      %v5348 = vld [vmem:[%s5334 + $0x98] sm:$0xff]
      %v5349 = vld [vmem:[%s5334 + $0xa8] sm:$0xff]
      %v5350 = vld [vmem:[%s5334 + $0xb0] sm:$0xff]
      %v5351 = vpack.c.bf16 %v5336, %v5335
      %v5352 = vpack.c.bf16 %v5338, %v5337
      %v5353 = vpack.c.bf16 %v5340, %v5339
      %v5354 = vpack.c.bf16 %v5342, %v5341
      %v5355 = vpack.c.bf16 %v5344, %v5343
      %v5356 = vpack.c.bf16 %v5346, %v5345
      %v5357 = vpack.c.bf16 %v5348, %v5347
      %v5358 = vpack.c.bf16 %v5350, %v5349
      %v5359 = vld [vmem:[%s3] sm:$0x3]
      %v5360 = vld [vmem:[%s5334 + $0x1] sm:$0xff]
      %v5361 = vld [vmem:[%s5334 + $0x9] sm:$0xff]
      %v5362 = vld [vmem:[%s5334 + $0x19] sm:$0xff]
      %v5363 = vld [vmem:[%s5334 + $0x21] sm:$0xff]
      %v5364 = vld [vmem:[%s5334 + $0x31] sm:$0xff]
      %v5365 = vld [vmem:[%s5334 + $0x39] sm:$0xff]
      %v5366 = vld [vmem:[%s5334 + $0x49] sm:$0xff]
      %v5367 = vld [vmem:[%s5334 + $0x51] sm:$0xff]
      %v5368 = vld [vmem:[%s5334 + $0x61] sm:$0xff]
      %v5369 = vld [vmem:[%s5334 + $0x69] sm:$0xff]
      %v5370 = vld [vmem:[%s5334 + $0x79] sm:$0xff]
      %v5371 = vld [vmem:[%s5334 + $0x81] sm:$0xff]
      %v5372 = vld [vmem:[%s5334 + $0x91] sm:$0xff]
      %v5373 = vld [vmem:[%s5334 + $0x99] sm:$0xff]
      %v5374 = vld [vmem:[%s5334 + $0xa9] sm:$0xff]
      %v5375 = vld [vmem:[%s5334 + $0xb1] sm:$0xff]
      %v5376 = vpack.c.bf16 %v5361, %v5360
      %v5377 = vpack.c.bf16 %v5363, %v5362
      %v5378 = vpack.c.bf16 %v5365, %v5364
      %v5379 = vpack.c.bf16 %v5367, %v5366
      %v5380 = vpack.c.bf16 %v5369, %v5368
      %v5381 = vpack.c.bf16 %v5371, %v5370
      %v5382 = vpack.c.bf16 %v5373, %v5372
      %v5383 = vpack.c.bf16 %v5375, %v5374
      %v5384 = vld [vmem:[%s3705] sm:$0x3]
      %v5386 = vsel %vm226, %v5376, 0
      %v5389 = vsel %vm226, %v5377, 0
      %v5392 = vsel %vm226, %v5378, 0
      %v5395 = vsel %vm226, %v5379, 0
      %v5398 = vsel %vm226, %v5380, 0
      %v5401 = vsel %vm226, %v5381, 0
      %v5404 = vsel %vm226, %v5382, 0
      %v5407 = vsel %vm226, %v5383, 0
      %v5410 = vsel %vm508, %v5384, 0
      %5412 = vmatprep.subr.bf16.mxu0 0
      %5413 = vmatpush1.bf16.msra.mxu0 %v5410
      %5414 = vmatprep.subr.bf16.mxu0 0
      %5415 = vmatpush1.bf16.msra.mxu0 0
      %5416 = vmatprep.subr.bf16.mxu0 0
      %5417 = vmatpush1.bf16.msra.mxu0 0
      %5418 = vmatprep.subr.bf16.mxu0 0
      %5419 = vmatpush1.bf16.msra.mxu0 0
      %5420 = vmatprep.subr.bf16.mxu0 0
      %5421 = vmatpush1.bf16.msra.mxu0 0
      %5422 = vmatprep.subr.bf16.mxu0 0
      %5423 = vmatpush1.bf16.msra.mxu0 0
      %5424 = vmatprep.subr.bf16.mxu0 0
      %5425 = vmatpush1.bf16.msra.mxu0 0
      %5426 = vmatprep.subr.bf16.mxu0 0
      %5427 = vmatpush1.bf16.msra.mxu0 0
      %5428 = vmatprep.subr.bf16.mxu0 0
      %5429 = vmatpush1.bf16.msra.mxu0 0
      %5430 = vmatprep.subr.bf16.mxu0 0
      %5431 = vmatpush1.bf16.msra.mxu0 0
      %5432 = vmatprep.subr.bf16.mxu0 0
      %5433 = vmatpush1.bf16.msra.mxu0 0
      %5434 = vmatprep.subr.bf16.mxu0 0
      %5435 = vmatpush1.bf16.msra.mxu0 0
      %5436 = vmatprep.subr.bf16.mxu0 0
      %5437 = vmatpush1.bf16.msra.mxu0 0
      %5438 = vmatprep.subr.bf16.mxu0 0
      %5439 = vmatpush1.bf16.msra.mxu0 0
      %5440 = vmatprep.subr.bf16.mxu0 0
      %5441 = vmatpush1.bf16.msra.mxu0 0
      %5442 = vmatprep.subr.bf16.mxu0 0
      %5443 = vmatpush1.bf16.msra.mxu0 0
      %5444 = vmatprep.mubr.bf16.mxu0 0
      %5445 = vmatmul.mubr.bf16.gmra.mrb[0].mxu0 %v5386
      %v5446 = vpop.f32.mrb[0].mxu0
      %v5447 = vadd.f32 0.0, %v5446
      %v5448 = vpop.f32.mrb[0].mxu0
      %v5449 = vpop.f32.mrb[0].mxu0
      %v5450 = vadd.f32 0.0, %v5449
      %v5451 = vpop.f32.mrb[0].mxu0
      %5452 = vmatprep.mubr.bf16.mxu0 0
      %5453 = vmatmul.mubr.bf16.gmra.mrb[0].mxu0 %v5389
      %v5454 = vpop.f32.mrb[0].mxu0
      %v5455 = vadd.f32 0.0, %v5454
      %v5456 = vpop.f32.mrb[0].mxu0
      %v5457 = vpop.f32.mrb[0].mxu0
      %v5458 = vadd.f32 0.0, %v5457
      %v5459 = vpop.f32.mrb[0].mxu0
      %5460 = vmatprep.mubr.bf16.mxu0 0
      %5461 = vmatmul.mubr.bf16.gmra.mrb[0].mxu0 %v5392
      %v5462 = vpop.f32.mrb[0].mxu0
      %v5463 = vadd.f32 0.0, %v5462
      %v5464 = vpop.f32.mrb[0].mxu0
      %v5465 = vpop.f32.mrb[0].mxu0
      %v5466 = vadd.f32 0.0, %v5465
      %v5467 = vpop.f32.mrb[0].mxu0
      %5468 = vmatprep.mubr.bf16.mxu0 0
      %5469 = vmatmul.mubr.bf16.gmra.mrb[0].mxu0 %v5395
      %v5470 = vpop.f32.mrb[0].mxu0
      %v5471 = vadd.f32 0.0, %v5470
      %v5472 = vpop.f32.mrb[0].mxu0
      %v5473 = vpop.f32.mrb[0].mxu0
      %v5474 = vadd.f32 0.0, %v5473
      %v5475 = vpop.f32.mrb[0].mxu0
      %5476 = vmatprep.mubr.bf16.mxu0 0
      %5477 = vmatmul.mubr.bf16.gmra.mrb[0].mxu0 %v5398
      %v5478 = vpop.f32.mrb[0].mxu0
      %v5479 = vadd.f32 0.0, %v5478
      %v5480 = vpop.f32.mrb[0].mxu0
      %v5481 = vpop.f32.mrb[0].mxu0
      %v5482 = vadd.f32 0.0, %v5481
      %v5483 = vpop.f32.mrb[0].mxu0
      %5484 = vmatprep.mubr.bf16.mxu0 0
      %5485 = vmatmul.mubr.bf16.gmra.mrb[0].mxu0 %v5401
      %v5486 = vpop.f32.mrb[0].mxu0
      %v5487 = vadd.f32 0.0, %v5486
      %v5488 = vpop.f32.mrb[0].mxu0
      %v5489 = vpop.f32.mrb[0].mxu0
      %v5490 = vadd.f32 0.0, %v5489
      %v5491 = vpop.f32.mrb[0].mxu0
      %5492 = vmatprep.mubr.bf16.mxu0 0
      %5493 = vmatmul.mubr.bf16.gmra.mrb[0].mxu0 %v5404
      %v5494 = vpop.f32.mrb[0].mxu0
      %v5495 = vadd.f32 0.0, %v5494
      %v5496 = vpop.f32.mrb[0].mxu0
      %v5497 = vpop.f32.mrb[0].mxu0
      %v5498 = vadd.f32 0.0, %v5497
      %v5499 = vpop.f32.mrb[0].mxu0
      %5500 = vmatprep.mubr.bf16.mxu0 0
      %5501 = vmatmul.mubr.bf16.gmra.mrb[0].mxu0 %v5407
      %v5502 = vpop.f32.mrb[0].mxu0
      %v5503 = vadd.f32 0.0, %v5502
      %v5504 = vpop.f32.mrb[0].mxu0
      %v5505 = vpop.f32.mrb[0].mxu0
      %v5506 = vadd.f32 0.0, %v5505
      %v5507 = vpop.f32.mrb[0].mxu0
      %5508 = vdwg.mxu0
      %v5510 = vsel %vm226, %v5351, 0
      %v5513 = vsel %vm226, %v5352, 0
      %v5516 = vsel %vm226, %v5353, 0
      %v5519 = vsel %vm226, %v5354, 0
      %v5522 = vsel %vm226, %v5355, 0
      %v5525 = vsel %vm226, %v5356, 0
      %v5528 = vsel %vm226, %v5357, 0
      %v5531 = vsel %vm226, %v5358, 0
      %v5534 = vsel %vm508, %v5359, 0
      %5536 = vmatprep.subr.bf16.mxu0 0
      %5537 = vmatpush1.bf16.msra.mxu0 %v5534
      %5538 = vmatprep.subr.bf16.mxu0 0
      %5539 = vmatpush1.bf16.msra.mxu0 0
      %5540 = vmatprep.subr.bf16.mxu0 0
      %5541 = vmatpush1.bf16.msra.mxu0 0
      %5542 = vmatprep.subr.bf16.mxu0 0
      %5543 = vmatpush1.bf16.msra.mxu0 0
      %5544 = vmatprep.subr.bf16.mxu0 0
      %5545 = vmatpush1.bf16.msra.mxu0 0
      %5546 = vmatprep.subr.bf16.mxu0 0
      %5547 = vmatpush1.bf16.msra.mxu0 0
      %5548 = vmatprep.subr.bf16.mxu0 0
      %5549 = vmatpush1.bf16.msra.mxu0 0
      %5550 = vmatprep.subr.bf16.mxu0 0
      %5551 = vmatpush1.bf16.msra.mxu0 0
      %5552 = vmatprep.subr.bf16.mxu0 0
      %5553 = vmatpush1.bf16.msra.mxu0 0
      %5554 = vmatprep.subr.bf16.mxu0 0
      %5555 = vmatpush1.bf16.msra.mxu0 0
      %5556 = vmatprep.subr.bf16.mxu0 0
      %5557 = vmatpush1.bf16.msra.mxu0 0
      %5558 = vmatprep.subr.bf16.mxu0 0
      %5559 = vmatpush1.bf16.msra.mxu0 0
      %5560 = vmatprep.subr.bf16.mxu0 0
      %5561 = vmatpush1.bf16.msra.mxu0 0
      %5562 = vmatprep.subr.bf16.mxu0 0
      %5563 = vmatpush1.bf16.msra.mxu0 0
      %5564 = vmatprep.subr.bf16.mxu0 0
      %5565 = vmatpush1.bf16.msra.mxu0 0
      %5566 = vmatprep.subr.bf16.mxu0 0
      %5567 = vmatpush1.bf16.msra.mxu0 0
      %5568 = vmatprep.mubr.bf16.mxu0 0
      %5569 = vmatmul.mubr.bf16.gmra.mrb[0].mxu0 %v5510
      %v5570 = vpop.f32.mrb[0].mxu0
      %v5571 = vadd.f32 %v5447, %v5570
      %v5572 = vpop.f32.mrb[0].mxu0
      %v5573 = vpop.f32.mrb[0].mxu0
      %v5574 = vadd.f32 %v5450, %v5573
      %v5575 = vpop.f32.mrb[0].mxu0
      %5576 = vmatprep.mubr.bf16.mxu0 0
      %5577 = vmatmul.mubr.bf16.gmra.mrb[0].mxu0 %v5513
      %v5578 = vpop.f32.mrb[0].mxu0
      %v5579 = vadd.f32 %v5455, %v5578
      %v5580 = vpop.f32.mrb[0].mxu0
      %v5581 = vpop.f32.mrb[0].mxu0
      %v5582 = vadd.f32 %v5458, %v5581
      %v5583 = vpop.f32.mrb[0].mxu0
      %5584 = vmatprep.mubr.bf16.mxu0 0
      %5585 = vmatmul.mubr.bf16.gmra.mrb[0].mxu0 %v5516
      %v5586 = vpop.f32.mrb[0].mxu0
      %v5587 = vadd.f32 %v5463, %v5586
      %v5588 = vpop.f32.mrb[0].mxu0
      %v5589 = vpop.f32.mrb[0].mxu0
      %v5590 = vadd.f32 %v5466, %v5589
      %v5591 = vpop.f32.mrb[0].mxu0
      %5592 = vmatprep.mubr.bf16.mxu0 0
      %5593 = vmatmul.mubr.bf16.gmra.mrb[0].mxu0 %v5519
      %v5594 = vpop.f32.mrb[0].mxu0
      %v5595 = vadd.f32 %v5471, %v5594
      %v5596 = vpop.f32.mrb[0].mxu0
      %v5597 = vpop.f32.mrb[0].mxu0
      %v5598 = vadd.f32 %v5474, %v5597
      %v5599 = vpop.f32.mrb[0].mxu0
      %5600 = vmatprep.mubr.bf16.mxu0 0
      %5601 = vmatmul.mubr.bf16.gmra.mrb[0].mxu0 %v5522
      %v5602 = vpop.f32.mrb[0].mxu0
      %v5603 = vadd.f32 %v5479, %v5602
      %v5604 = vpop.f32.mrb[0].mxu0
      %v5605 = vpop.f32.mrb[0].mxu0
      %v5606 = vadd.f32 %v5482, %v5605
      %v5607 = vpop.f32.mrb[0].mxu0
      %5608 = vmatprep.mubr.bf16.mxu0 0
      %5609 = vmatmul.mubr.bf16.gmra.mrb[0].mxu0 %v5525
      %v5610 = vpop.f32.mrb[0].mxu0
      %v5611 = vadd.f32 %v5487, %v5610
      %v5612 = vpop.f32.mrb[0].mxu0
      %v5613 = vpop.f32.mrb[0].mxu0
      %v5614 = vadd.f32 %v5490, %v5613
      %v5615 = vpop.f32.mrb[0].mxu0
      %5616 = vmatprep.mubr.bf16.mxu0 0
      %5617 = vmatmul.mubr.bf16.gmra.mrb[0].mxu0 %v5528
      %v5618 = vpop.f32.mrb[0].mxu0
      %v5619 = vadd.f32 %v5495, %v5618
      %v5620 = vpop.f32.mrb[0].mxu0
      %v5621 = vpop.f32.mrb[0].mxu0
      %v5622 = vadd.f32 %v5498, %v5621
      %v5623 = vpop.f32.mrb[0].mxu0
      %5624 = vmatprep.mubr.bf16.mxu0 0
      %5625 = vmatmul.mubr.bf16.gmra.mrb[0].mxu0 %v5531
      %v5626 = vpop.f32.mrb[0].mxu0
      %v5627 = vadd.f32 %v5503, %v5626
      %v5628 = vpop.f32.mrb[0].mxu0
      %v5629 = vpop.f32.mrb[0].mxu0
      %v5630 = vadd.f32 %v5506, %v5629
      %v5631 = vpop.f32.mrb[0].mxu0
      %5632 = vdwg.mxu0
      %v5633 = vld [vmem:[%s5334 + $0x2] sm:$0xff]
      %v5634 = vld [vmem:[%s5334 + $0xa] sm:$0xff]
      %v5635 = vld [vmem:[%s5334 + $0x1a] sm:$0xff]
      %v5636 = vld [vmem:[%s5334 + $0x22] sm:$0xff]
      %v5637 = vld [vmem:[%s5334 + $0x32] sm:$0xff]
      %v5638 = vld [vmem:[%s5334 + $0x3a] sm:$0xff]
      %v5639 = vld [vmem:[%s5334 + $0x4a] sm:$0xff]
      %v5640 = vld [vmem:[%s5334 + $0x52] sm:$0xff]
      %v5641 = vld [vmem:[%s5334 + $0x62] sm:$0xff]
      %v5642 = vld [vmem:[%s5334 + $0x6a] sm:$0xff]
      %v5643 = vld [vmem:[%s5334 + $0x7a] sm:$0xff]
      %v5644 = vld [vmem:[%s5334 + $0x82] sm:$0xff]
      %v5645 = vld [vmem:[%s5334 + $0x92] sm:$0xff]
      %v5646 = vld [vmem:[%s5334 + $0x9a] sm:$0xff]
      %v5647 = vld [vmem:[%s5334 + $0xaa] sm:$0xff]
      %v5648 = vld [vmem:[%s5334 + $0xb2] sm:$0xff]
      %v5649 = vpack.c.bf16 %v5634, %v5633
      %v5650 = vpack.c.bf16 %v5636, %v5635
      %v5651 = vpack.c.bf16 %v5638, %v5637
      %v5652 = vpack.c.bf16 %v5640, %v5639
      %v5653 = vpack.c.bf16 %v5642, %v5641
      %v5654 = vpack.c.bf16 %v5644, %v5643
      %v5655 = vpack.c.bf16 %v5646, %v5645
      %v5656 = vpack.c.bf16 %v5648, %v5647
      %v5657 = vld [vmem:[%s3979] sm:$0x3]
      %v5659 = vsel %vm226, %v5649, 0
      %v5662 = vsel %vm226, %v5650, 0
      %v5665 = vsel %vm226, %v5651, 0
      %v5668 = vsel %vm226, %v5652, 0
      %v5671 = vsel %vm226, %v5653, 0
      %v5674 = vsel %vm226, %v5654, 0
      %v5677 = vsel %vm226, %v5655, 0
      %v5680 = vsel %vm226, %v5656, 0
      %v5683 = vsel %vm508, %v5657, 0
      %5685 = vmatprep.subr.bf16.mxu0 0
      %5686 = vmatpush1.bf16.msra.mxu0 %v5683
      %5687 = vmatprep.subr.bf16.mxu0 0
      %5688 = vmatpush1.bf16.msra.mxu0 0
      %5689 = vmatprep.subr.bf16.mxu0 0
      %5690 = vmatpush1.bf16.msra.mxu0 0
      %5691 = vmatprep.subr.bf16.mxu0 0
      %5692 = vmatpush1.bf16.msra.mxu0 0
      %5693 = vmatprep.subr.bf16.mxu0 0
      %5694 = vmatpush1.bf16.msra.mxu0 0
      %5695 = vmatprep.subr.bf16.mxu0 0
      %5696 = vmatpush1.bf16.msra.mxu0 0
      %5697 = vmatprep.subr.bf16.mxu0 0
      %5698 = vmatpush1.bf16.msra.mxu0 0
      %5699 = vmatprep.subr.bf16.mxu0 0
      %5700 = vmatpush1.bf16.msra.mxu0 0
      %5701 = vmatprep.subr.bf16.mxu0 0
      %5702 = vmatpush1.bf16.msra.mxu0 0
      %5703 = vmatprep.subr.bf16.mxu0 0
      %5704 = vmatpush1.bf16.msra.mxu0 0
      %5705 = vmatprep.subr.bf16.mxu0 0
      %5706 = vmatpush1.bf16.msra.mxu0 0
      %5707 = vmatprep.subr.bf16.mxu0 0
      %5708 = vmatpush1.bf16.msra.mxu0 0
      %5709 = vmatprep.subr.bf16.mxu0 0
      %5710 = vmatpush1.bf16.msra.mxu0 0
      %5711 = vmatprep.subr.bf16.mxu0 0
      %5712 = vmatpush1.bf16.msra.mxu0 0
      %5713 = vmatprep.subr.bf16.mxu0 0
      %5714 = vmatpush1.bf16.msra.mxu0 0
      %5715 = vmatprep.subr.bf16.mxu0 0
      %5716 = vmatpush1.bf16.msra.mxu0 0
      %5717 = vmatprep.mubr.bf16.mxu0 0
      %5718 = vmatmul.mubr.bf16.gmra.mrb[0].mxu0 %v5659
      %v5719 = vpop.f32.mrb[0].mxu0
      %v5720 = vadd.f32 0.0, %v5719
      %v5721 = vpop.f32.mrb[0].mxu0
      %v5722 = vpop.f32.mrb[0].mxu0
      %v5723 = vadd.f32 0.0, %v5722
      %v5724 = vpop.f32.mrb[0].mxu0
      %5725 = vmatprep.mubr.bf16.mxu0 0
      %5726 = vmatmul.mubr.bf16.gmra.mrb[0].mxu0 %v5662
      %v5727 = vpop.f32.mrb[0].mxu0
      %v5728 = vadd.f32 0.0, %v5727
      %v5729 = vpop.f32.mrb[0].mxu0
      %v5730 = vpop.f32.mrb[0].mxu0
      %v5731 = vadd.f32 0.0, %v5730
      %v5732 = vpop.f32.mrb[0].mxu0
      %5733 = vmatprep.mubr.bf16.mxu0 0
      %5734 = vmatmul.mubr.bf16.gmra.mrb[0].mxu0 %v5665
      %v5735 = vpop.f32.mrb[0].mxu0
      %v5736 = vadd.f32 0.0, %v5735
      %v5737 = vpop.f32.mrb[0].mxu0
      %v5738 = vpop.f32.mrb[0].mxu0
      %v5739 = vadd.f32 0.0, %v5738
      %v5740 = vpop.f32.mrb[0].mxu0
      %5741 = vmatprep.mubr.bf16.mxu0 0
      %5742 = vmatmul.mubr.bf16.gmra.mrb[0].mxu0 %v5668
      %v5743 = vpop.f32.mrb[0].mxu0
      %v5744 = vadd.f32 0.0, %v5743
      %v5745 = vpop.f32.mrb[0].mxu0
      %v5746 = vpop.f32.mrb[0].mxu0
      %v5747 = vadd.f32 0.0, %v5746
      %v5748 = vpop.f32.mrb[0].mxu0
      %5749 = vmatprep.mubr.bf16.mxu0 0
      %5750 = vmatmul.mubr.bf16.gmra.mrb[0].mxu0 %v5671
      %v5751 = vpop.f32.mrb[0].mxu0
      %v5752 = vadd.f32 0.0, %v5751
      %v5753 = vpop.f32.mrb[0].mxu0
      %v5754 = vpop.f32.mrb[0].mxu0
      %v5755 = vadd.f32 0.0, %v5754
      %v5756 = vpop.f32.mrb[0].mxu0
      %5757 = vmatprep.mubr.bf16.mxu0 0
      %5758 = vmatmul.mubr.bf16.gmra.mrb[0].mxu0 %v5674
      %v5759 = vpop.f32.mrb[0].mxu0
      %v5760 = vadd.f32 0.0, %v5759
      %v5761 = vpop.f32.mrb[0].mxu0
      %v5762 = vpop.f32.mrb[0].mxu0
      %v5763 = vadd.f32 0.0, %v5762
      %v5764 = vpop.f32.mrb[0].mxu0
      %5765 = vmatprep.mubr.bf16.mxu0 0
      %5766 = vmatmul.mubr.bf16.gmra.mrb[0].mxu0 %v5677
      %v5767 = vpop.f32.mrb[0].mxu0
      %v5768 = vadd.f32 0.0, %v5767
      %v5769 = vpop.f32.mrb[0].mxu0
      %v5770 = vpop.f32.mrb[0].mxu0
      %v5771 = vadd.f32 0.0, %v5770
      %v5772 = vpop.f32.mrb[0].mxu0
      %5773 = vmatprep.mubr.bf16.mxu0 0
      %5774 = vmatmul.mubr.bf16.gmra.mrb[0].mxu0 %v5680
      %v5775 = vpop.f32.mrb[0].mxu0
      %v5776 = vadd.f32 0.0, %v5775
      %v5777 = vpop.f32.mrb[0].mxu0
      %v5778 = vpop.f32.mrb[0].mxu0
      %v5779 = vadd.f32 0.0, %v5778
      %v5780 = vpop.f32.mrb[0].mxu0
      %5781 = vdwg.mxu0
      %v5782 = vadd.f32 %v5571, %v5720
      %v5783 = vadd.f32 %v5574, %v5723
      %v5784 = vadd.f32 %v5579, %v5728
      %v5785 = vadd.f32 %v5582, %v5731
      %v5786 = vadd.f32 %v5587, %v5736
      %v5787 = vadd.f32 %v5590, %v5739
      %v5788 = vadd.f32 %v5595, %v5744
      %v5789 = vadd.f32 %v5598, %v5747
      %v5790 = vadd.f32 %v5603, %v5752
      %v5791 = vadd.f32 %v5606, %v5755
      %v5792 = vadd.f32 %v5611, %v5760
      %v5793 = vadd.f32 %v5614, %v5763
      %v5794 = vadd.f32 %v5619, %v5768
      %v5795 = vadd.f32 %v5622, %v5771
      %v5796 = vadd.f32 %v5627, %v5776
      %v5797 = vadd.f32 %v5630, %v5779
      %v5798 = vld [vmem:[%s3639] sm:$0xff]
      %v5799 = vld [vmem:[%s3639 + $0x8] sm:$0xff]
      %v5800 = vld [vmem:[%s3639 + $0x18] sm:$0xff]
      %v5801 = vld [vmem:[%s3639 + $0x20] sm:$0xff]
      %v5802 = vld [vmem:[%s3639 + $0x30] sm:$0xff]
      %v5803 = vld [vmem:[%s3639 + $0x38] sm:$0xff]
      %v5804 = vld [vmem:[%s3639 + $0x48] sm:$0xff]
      %v5805 = vld [vmem:[%s3639 + $0x50] sm:$0xff]
      %v5806 = vld [vmem:[%s3639 + $0x60] sm:$0xff]
      %v5807 = vld [vmem:[%s3639 + $0x68] sm:$0xff]
      %v5808 = vld [vmem:[%s3639 + $0x78] sm:$0xff]
      %v5809 = vld [vmem:[%s3639 + $0x80] sm:$0xff]
      %v5810 = vld [vmem:[%s3639 + $0x90] sm:$0xff]
      %v5811 = vld [vmem:[%s3639 + $0x98] sm:$0xff]
      %v5812 = vld [vmem:[%s3639 + $0xa8] sm:$0xff]
      %v5813 = vld [vmem:[%s3639 + $0xb0] sm:$0xff]
      %v5814 = vpack.c.bf16 %v5799, %v5798
      %v5815 = vpack.c.bf16 %v5801, %v5800
      %v5816 = vpack.c.bf16 %v5803, %v5802
      %v5817 = vpack.c.bf16 %v5805, %v5804
      %v5818 = vpack.c.bf16 %v5807, %v5806
      %v5819 = vpack.c.bf16 %v5809, %v5808
      %v5820 = vpack.c.bf16 %v5811, %v5810
      %v5821 = vpack.c.bf16 %v5813, %v5812
      %v5822 = vld [vmem:[%s4145] sm:$0x3]
      %v5824 = vsel %vm226, %v5814, 0
      %v5827 = vsel %vm226, %v5815, 0
      %v5830 = vsel %vm226, %v5816, 0
      %v5833 = vsel %vm226, %v5817, 0
      %v5836 = vsel %vm226, %v5818, 0
      %v5839 = vsel %vm226, %v5819, 0
      %v5842 = vsel %vm226, %v5820, 0
      %v5845 = vsel %vm226, %v5821, 0
      %v5848 = vsel %vm508, %v5822, 0
      %5850 = vmatprep.subr.bf16.mxu0 0
      %5851 = vmatpush1.bf16.msra.mxu0 %v5848
      %5852 = vmatprep.subr.bf16.mxu0 0
      %5853 = vmatpush1.bf16.msra.mxu0 0
      %5854 = vmatprep.subr.bf16.mxu0 0
      %5855 = vmatpush1.bf16.msra.mxu0 0
      %5856 = vmatprep.subr.bf16.mxu0 0
      %5857 = vmatpush1.bf16.msra.mxu0 0
      %5858 = vmatprep.subr.bf16.mxu0 0
      %5859 = vmatpush1.bf16.msra.mxu0 0
      %5860 = vmatprep.subr.bf16.mxu0 0
      %5861 = vmatpush1.bf16.msra.mxu0 0
      %5862 = vmatprep.subr.bf16.mxu0 0
      %5863 = vmatpush1.bf16.msra.mxu0 0
      %5864 = vmatprep.subr.bf16.mxu0 0
      %5865 = vmatpush1.bf16.msra.mxu0 0
      %5866 = vmatprep.subr.bf16.mxu0 0
      %5867 = vmatpush1.bf16.msra.mxu0 0
      %5868 = vmatprep.subr.bf16.mxu0 0
      %5869 = vmatpush1.bf16.msra.mxu0 0
      %5870 = vmatprep.subr.bf16.mxu0 0
      %5871 = vmatpush1.bf16.msra.mxu0 0
      %5872 = vmatprep.subr.bf16.mxu0 0
      %5873 = vmatpush1.bf16.msra.mxu0 0
      %5874 = vmatprep.subr.bf16.mxu0 0
      %5875 = vmatpush1.bf16.msra.mxu0 0
      %5876 = vmatprep.subr.bf16.mxu0 0
      %5877 = vmatpush1.bf16.msra.mxu0 0
      %5878 = vmatprep.subr.bf16.mxu0 0
      %5879 = vmatpush1.bf16.msra.mxu0 0
      %5880 = vmatprep.subr.bf16.mxu0 0
      %5881 = vmatpush1.bf16.msra.mxu0 0
      %5882 = vmatprep.mubr.bf16.mxu0 0
      %5883 = vmatmul.mubr.bf16.gmra.mrb[0].mxu0 %v5824
      %v5884 = vpop.f32.mrb[0].mxu0
      %v5885 = vadd.f32 0.0, %v5884
      %v5886 = vpop.f32.mrb[0].mxu0
      %v5887 = vpop.f32.mrb[0].mxu0
      %v5888 = vadd.f32 0.0, %v5887
      %v5889 = vpop.f32.mrb[0].mxu0
      %5890 = vmatprep.mubr.bf16.mxu0 0
      %5891 = vmatmul.mubr.bf16.gmra.mrb[0].mxu0 %v5827
      %v5892 = vpop.f32.mrb[0].mxu0
      %v5893 = vadd.f32 0.0, %v5892
      %v5894 = vpop.f32.mrb[0].mxu0
      %v5895 = vpop.f32.mrb[0].mxu0
      %v5896 = vadd.f32 0.0, %v5895
      %v5897 = vpop.f32.mrb[0].mxu0
      %5898 = vmatprep.mubr.bf16.mxu0 0
      %5899 = vmatmul.mubr.bf16.gmra.mrb[0].mxu0 %v5830
      %v5900 = vpop.f32.mrb[0].mxu0
      %v5901 = vadd.f32 0.0, %v5900
      %v5902 = vpop.f32.mrb[0].mxu0
      %v5903 = vpop.f32.mrb[0].mxu0
      %v5904 = vadd.f32 0.0, %v5903
      %v5905 = vpop.f32.mrb[0].mxu0
      %5906 = vmatprep.mubr.bf16.mxu0 0
      %5907 = vmatmul.mubr.bf16.gmra.mrb[0].mxu0 %v5833
      %v5908 = vpop.f32.mrb[0].mxu0
      %v5909 = vadd.f32 0.0, %v5908
      %v5910 = vpop.f32.mrb[0].mxu0
      %v5911 = vpop.f32.mrb[0].mxu0
      %v5912 = vadd.f32 0.0, %v5911
      %v5913 = vpop.f32.mrb[0].mxu0
      %5914 = vmatprep.mubr.bf16.mxu0 0
      %5915 = vmatmul.mubr.bf16.gmra.mrb[0].mxu0 %v5836
      %v5916 = vpop.f32.mrb[0].mxu0
      %v5917 = vadd.f32 0.0, %v5916
      %v5918 = vpop.f32.mrb[0].mxu0
      %v5919 = vpop.f32.mrb[0].mxu0
      %v5920 = vadd.f32 0.0, %v5919
      %v5921 = vpop.f32.mrb[0].mxu0
      %5922 = vmatprep.mubr.bf16.mxu0 0
      %5923 = vmatmul.mubr.bf16.gmra.mrb[0].mxu0 %v5839
      %v5924 = vpop.f32.mrb[0].mxu0
      %v5925 = vadd.f32 0.0, %v5924
      %v5926 = vpop.f32.mrb[0].mxu0
      %v5927 = vpop.f32.mrb[0].mxu0
      %v5928 = vadd.f32 0.0, %v5927
      %v5929 = vpop.f32.mrb[0].mxu0
      %5930 = vmatprep.mubr.bf16.mxu0 0
      %5931 = vmatmul.mubr.bf16.gmra.mrb[0].mxu0 %v5842
      %v5932 = vpop.f32.mrb[0].mxu0
      %v5933 = vadd.f32 0.0, %v5932
      %v5934 = vpop.f32.mrb[0].mxu0
      %v5935 = vpop.f32.mrb[0].mxu0
      %v5936 = vadd.f32 0.0, %v5935
      %v5937 = vpop.f32.mrb[0].mxu0
      %5938 = vmatprep.mubr.bf16.mxu0 0
      %5939 = vmatmul.mubr.bf16.gmra.mrb[0].mxu0 %v5845
      %v5940 = vpop.f32.mrb[0].mxu0
      %v5941 = vadd.f32 0.0, %v5940
      %v5942 = vpop.f32.mrb[0].mxu0
      %v5943 = vpop.f32.mrb[0].mxu0
      %v5944 = vadd.f32 0.0, %v5943
      %v5945 = vpop.f32.mrb[0].mxu0
      %5946 = vdwg.mxu0
      %v5947 = vadd.f32 %v5782, %v5885
      %v5948 = vadd.f32 %v5783, %v5888
      %v5949 = vadd.f32 %v5784, %v5893
      %v5950 = vadd.f32 %v5785, %v5896
      %v5951 = vadd.f32 %v5786, %v5901
      %v5952 = vadd.f32 %v5787, %v5904
      %v5953 = vadd.f32 %v5788, %v5909
      %v5954 = vadd.f32 %v5789, %v5912
      %v5955 = vadd.f32 %v5790, %v5917
      %v5956 = vadd.f32 %v5791, %v5920
      %v5957 = vadd.f32 %v5792, %v5925
      %v5958 = vadd.f32 %v5793, %v5928
      %v5959 = vadd.f32 %v5794, %v5933
      %v5960 = vadd.f32 %v5795, %v5936
      %v5961 = vadd.f32 %v5796, %v5941
      %v5962 = vadd.f32 %v5797, %v5944
      %v5963 = vld [vmem:[%s3639 + $0x1] sm:$0xff]
      %v5964 = vld [vmem:[%s3639 + $0x9] sm:$0xff]
      %v5965 = vld [vmem:[%s3639 + $0x19] sm:$0xff]
      %v5966 = vld [vmem:[%s3639 + $0x21] sm:$0xff]
      %v5967 = vld [vmem:[%s3639 + $0x31] sm:$0xff]
      %v5968 = vld [vmem:[%s3639 + $0x39] sm:$0xff]
      %v5969 = vld [vmem:[%s3639 + $0x49] sm:$0xff]
      %v5970 = vld [vmem:[%s3639 + $0x51] sm:$0xff]
      %v5971 = vld [vmem:[%s3639 + $0x61] sm:$0xff]
      %v5972 = vld [vmem:[%s3639 + $0x69] sm:$0xff]
      %v5973 = vld [vmem:[%s3639 + $0x79] sm:$0xff]
      %v5974 = vld [vmem:[%s3639 + $0x81] sm:$0xff]
      %v5975 = vld [vmem:[%s3639 + $0x91] sm:$0xff]
      %v5976 = vld [vmem:[%s3639 + $0x99] sm:$0xff]
      %v5977 = vld [vmem:[%s3639 + $0xa9] sm:$0xff]
      %v5978 = vld [vmem:[%s3639 + $0xb1] sm:$0xff]
      %v5979 = vpack.c.bf16 %v5964, %v5963
      %v5980 = vpack.c.bf16 %v5966, %v5965
      %v5981 = vpack.c.bf16 %v5968, %v5967
      %v5982 = vpack.c.bf16 %v5970, %v5969
      %v5983 = vpack.c.bf16 %v5972, %v5971
      %v5984 = vpack.c.bf16 %v5974, %v5973
      %v5985 = vpack.c.bf16 %v5976, %v5975
      %v5986 = vpack.c.bf16 %v5978, %v5977
      %v5987 = vld [vmem:[%s4311] sm:$0x3]
      %v5989 = vsel %vm226, %v5979, 0
      %v5992 = vsel %vm226, %v5980, 0
      %v5995 = vsel %vm226, %v5981, 0
      %v5998 = vsel %vm226, %v5982, 0
      %v6001 = vsel %vm226, %v5983, 0
      %v6004 = vsel %vm226, %v5984, 0
      %v6007 = vsel %vm226, %v5985, 0
      %v6010 = vsel %vm226, %v5986, 0
      %v6013 = vsel %vm508, %v5987, 0
      %6015 = vmatprep.subr.bf16.mxu0 0
      %6016 = vmatpush1.bf16.msra.mxu0 %v6013
      %6017 = vmatprep.subr.bf16.mxu0 0
      %6018 = vmatpush1.bf16.msra.mxu0 0
      %6019 = vmatprep.subr.bf16.mxu0 0
      %6020 = vmatpush1.bf16.msra.mxu0 0
      %6021 = vmatprep.subr.bf16.mxu0 0
      %6022 = vmatpush1.bf16.msra.mxu0 0
      %6023 = vmatprep.subr.bf16.mxu0 0
      %6024 = vmatpush1.bf16.msra.mxu0 0
      %6025 = vmatprep.subr.bf16.mxu0 0
      %6026 = vmatpush1.bf16.msra.mxu0 0
      %6027 = vmatprep.subr.bf16.mxu0 0
      %6028 = vmatpush1.bf16.msra.mxu0 0
      %6029 = vmatprep.subr.bf16.mxu0 0
      %6030 = vmatpush1.bf16.msra.mxu0 0
      %6031 = vmatprep.subr.bf16.mxu0 0
      %6032 = vmatpush1.bf16.msra.mxu0 0
      %6033 = vmatprep.subr.bf16.mxu0 0
      %6034 = vmatpush1.bf16.msra.mxu0 0
      %6035 = vmatprep.subr.bf16.mxu0 0
      %6036 = vmatpush1.bf16.msra.mxu0 0
      %6037 = vmatprep.subr.bf16.mxu0 0
      %6038 = vmatpush1.bf16.msra.mxu0 0
      %6039 = vmatprep.subr.bf16.mxu0 0
      %6040 = vmatpush1.bf16.msra.mxu0 0
      %6041 = vmatprep.subr.bf16.mxu0 0
      %6042 = vmatpush1.bf16.msra.mxu0 0
      %6043 = vmatprep.subr.bf16.mxu0 0
      %6044 = vmatpush1.bf16.msra.mxu0 0
      %6045 = vmatprep.subr.bf16.mxu0 0
      %6046 = vmatpush1.bf16.msra.mxu0 0
      %6047 = vmatprep.mubr.bf16.mxu0 0
      %6048 = vmatmul.mubr.bf16.gmra.mrb[0].mxu0 %v5989
      %v6049 = vpop.f32.mrb[0].mxu0
      %v6050 = vadd.f32 0.0, %v6049
      %v6051 = vpop.f32.mrb[0].mxu0
      %v6052 = vpop.f32.mrb[0].mxu0
      %v6053 = vadd.f32 0.0, %v6052
      %v6054 = vpop.f32.mrb[0].mxu0
      %6055 = vmatprep.mubr.bf16.mxu0 0
      %6056 = vmatmul.mubr.bf16.gmra.mrb[0].mxu0 %v5992
      %v6057 = vpop.f32.mrb[0].mxu0
      %v6058 = vadd.f32 0.0, %v6057
      %v6059 = vpop.f32.mrb[0].mxu0
      %v6060 = vpop.f32.mrb[0].mxu0
      %v6061 = vadd.f32 0.0, %v6060
      %v6062 = vpop.f32.mrb[0].mxu0
      %6063 = vmatprep.mubr.bf16.mxu0 0
      %6064 = vmatmul.mubr.bf16.gmra.mrb[0].mxu0 %v5995
      %v6065 = vpop.f32.mrb[0].mxu0
      %v6066 = vadd.f32 0.0, %v6065
      %v6067 = vpop.f32.mrb[0].mxu0
      %v6068 = vpop.f32.mrb[0].mxu0
      %v6069 = vadd.f32 0.0, %v6068
      %v6070 = vpop.f32.mrb[0].mxu0
      %6071 = vmatprep.mubr.bf16.mxu0 0
      %6072 = vmatmul.mubr.bf16.gmra.mrb[0].mxu0 %v5998
      %v6073 = vpop.f32.mrb[0].mxu0
      %v6074 = vadd.f32 0.0, %v6073
      %v6075 = vpop.f32.mrb[0].mxu0
      %v6076 = vpop.f32.mrb[0].mxu0
      %v6077 = vadd.f32 0.0, %v6076
      %v6078 = vpop.f32.mrb[0].mxu0
      %6079 = vmatprep.mubr.bf16.mxu0 0
      %6080 = vmatmul.mubr.bf16.gmra.mrb[0].mxu0 %v6001
      %v6081 = vpop.f32.mrb[0].mxu0
      %v6082 = vadd.f32 0.0, %v6081
      %v6083 = vpop.f32.mrb[0].mxu0
      %v6084 = vpop.f32.mrb[0].mxu0
      %v6085 = vadd.f32 0.0, %v6084
      %v6086 = vpop.f32.mrb[0].mxu0
      %6087 = vmatprep.mubr.bf16.mxu0 0
      %6088 = vmatmul.mubr.bf16.gmra.mrb[0].mxu0 %v6004
      %v6089 = vpop.f32.mrb[0].mxu0
      %v6090 = vadd.f32 0.0, %v6089
      %v6091 = vpop.f32.mrb[0].mxu0
      %v6092 = vpop.f32.mrb[0].mxu0
      %v6093 = vadd.f32 0.0, %v6092
      %v6094 = vpop.f32.mrb[0].mxu0
      %6095 = vmatprep.mubr.bf16.mxu0 0
      %6096 = vmatmul.mubr.bf16.gmra.mrb[0].mxu0 %v6007
      %v6097 = vpop.f32.mrb[0].mxu0
      %v6098 = vadd.f32 0.0, %v6097
      %v6099 = vpop.f32.mrb[0].mxu0
      %v6100 = vpop.f32.mrb[0].mxu0
      %v6101 = vadd.f32 0.0, %v6100
      %v6102 = vpop.f32.mrb[0].mxu0
      %6103 = vmatprep.mubr.bf16.mxu0 0
      %6104 = vmatmul.mubr.bf16.gmra.mrb[0].mxu0 %v6010
      %v6105 = vpop.f32.mrb[0].mxu0
      %v6106 = vadd.f32 0.0, %v6105
      %v6107 = vpop.f32.mrb[0].mxu0
      %v6108 = vpop.f32.mrb[0].mxu0
      %v6109 = vadd.f32 0.0, %v6108
      %v6110 = vpop.f32.mrb[0].mxu0
      %6111 = vdwg.mxu0
      %v6112 = vadd.f32 %v5947, %v6050
      %v6113 = vadd.f32 %v5948, %v6053
      %v6114 = vadd.f32 %v5949, %v6058
      %v6115 = vadd.f32 %v5950, %v6061
      %v6116 = vadd.f32 %v5951, %v6066
      %v6117 = vadd.f32 %v5952, %v6069
      %v6118 = vadd.f32 %v5953, %v6074
      %v6119 = vadd.f32 %v5954, %v6077
      %v6120 = vadd.f32 %v5955, %v6082
      %v6121 = vadd.f32 %v5956, %v6085
      %v6122 = vadd.f32 %v5957, %v6090
      %v6123 = vadd.f32 %v5958, %v6093
      %v6124 = vadd.f32 %v5959, %v6098
      %v6125 = vadd.f32 %v5960, %v6101
      %v6126 = vadd.f32 %v5961, %v6106
      %v6127 = vadd.f32 %v5962, %v6109
      %v6128 = vld [vmem:[%s3639 + $0x2] sm:$0xff]
      %v6129 = vld [vmem:[%s3639 + $0xa] sm:$0xff]
      %v6130 = vld [vmem:[%s3639 + $0x1a] sm:$0xff]
      %v6131 = vld [vmem:[%s3639 + $0x22] sm:$0xff]
      %v6132 = vld [vmem:[%s3639 + $0x32] sm:$0xff]
      %v6133 = vld [vmem:[%s3639 + $0x3a] sm:$0xff]
      %v6134 = vld [vmem:[%s3639 + $0x4a] sm:$0xff]
      %v6135 = vld [vmem:[%s3639 + $0x52] sm:$0xff]
      %v6136 = vld [vmem:[%s3639 + $0x62] sm:$0xff]
      %v6137 = vld [vmem:[%s3639 + $0x6a] sm:$0xff]
      %v6138 = vld [vmem:[%s3639 + $0x7a] sm:$0xff]
      %v6139 = vld [vmem:[%s3639 + $0x82] sm:$0xff]
      %v6140 = vld [vmem:[%s3639 + $0x92] sm:$0xff]
      %v6141 = vld [vmem:[%s3639 + $0x9a] sm:$0xff]
      %v6142 = vld [vmem:[%s3639 + $0xaa] sm:$0xff]
      %v6143 = vld [vmem:[%s3639 + $0xb2] sm:$0xff]
      %v6144 = vpack.c.bf16 %v6129, %v6128
      %v6145 = vpack.c.bf16 %v6131, %v6130
      %v6146 = vpack.c.bf16 %v6133, %v6132
      %v6147 = vpack.c.bf16 %v6135, %v6134
      %v6148 = vpack.c.bf16 %v6137, %v6136
      %v6149 = vpack.c.bf16 %v6139, %v6138
      %v6150 = vpack.c.bf16 %v6141, %v6140
      %v6151 = vpack.c.bf16 %v6143, %v6142
      %v6152 = vld [vmem:[%s4477] sm:$0x3]
      %v6154 = vsel %vm226, %v6144, 0
      %v6157 = vsel %vm226, %v6145, 0
      %v6160 = vsel %vm226, %v6146, 0
      %v6163 = vsel %vm226, %v6147, 0
      %v6166 = vsel %vm226, %v6148, 0
      %v6169 = vsel %vm226, %v6149, 0
      %v6172 = vsel %vm226, %v6150, 0
      %v6175 = vsel %vm226, %v6151, 0
      %v6178 = vsel %vm508, %v6152, 0
      %6180 = vmatprep.subr.bf16.mxu0 0
      %6181 = vmatpush1.bf16.msra.mxu0 %v6178
      %6182 = vmatprep.subr.bf16.mxu0 0
      %6183 = vmatpush1.bf16.msra.mxu0 0
      %6184 = vmatprep.subr.bf16.mxu0 0
      %6185 = vmatpush1.bf16.msra.mxu0 0
      %6186 = vmatprep.subr.bf16.mxu0 0
      %6187 = vmatpush1.bf16.msra.mxu0 0
      %6188 = vmatprep.subr.bf16.mxu0 0
      %6189 = vmatpush1.bf16.msra.mxu0 0
      %6190 = vmatprep.subr.bf16.mxu0 0
      %6191 = vmatpush1.bf16.msra.mxu0 0
      %6192 = vmatprep.subr.bf16.mxu0 0
      %6193 = vmatpush1.bf16.msra.mxu0 0
      %6194 = vmatprep.subr.bf16.mxu0 0
      %6195 = vmatpush1.bf16.msra.mxu0 0
      %6196 = vmatprep.subr.bf16.mxu0 0
      %6197 = vmatpush1.bf16.msra.mxu0 0
      %6198 = vmatprep.subr.bf16.mxu0 0
      %6199 = vmatpush1.bf16.msra.mxu0 0
      %6200 = vmatprep.subr.bf16.mxu0 0
      %6201 = vmatpush1.bf16.msra.mxu0 0
      %6202 = vmatprep.subr.bf16.mxu0 0
      %6203 = vmatpush1.bf16.msra.mxu0 0
      %6204 = vmatprep.subr.bf16.mxu0 0
      %6205 = vmatpush1.bf16.msra.mxu0 0
      %6206 = vmatprep.subr.bf16.mxu0 0
      %6207 = vmatpush1.bf16.msra.mxu0 0
      %6208 = vmatprep.subr.bf16.mxu0 0
      %6209 = vmatpush1.bf16.msra.mxu0 0
      %6210 = vmatprep.subr.bf16.mxu0 0
      %6211 = vmatpush1.bf16.msra.mxu0 0
      %6212 = vmatprep.mubr.bf16.mxu0 0
      %6213 = vmatmul.mubr.bf16.gmra.mrb[0].mxu0 %v6154
      %v6214 = vpop.f32.mrb[0].mxu0
      %v6215 = vadd.f32 0.0, %v6214
      %v6216 = vpop.f32.mrb[0].mxu0
      %v6217 = vpop.f32.mrb[0].mxu0
      %v6218 = vadd.f32 0.0, %v6217
      %v6219 = vpop.f32.mrb[0].mxu0
      %6220 = vmatprep.mubr.bf16.mxu0 0
      %6221 = vmatmul.mubr.bf16.gmra.mrb[0].mxu0 %v6157
      %v6222 = vpop.f32.mrb[0].mxu0
      %v6223 = vadd.f32 0.0, %v6222
      %v6224 = vpop.f32.mrb[0].mxu0
      %v6225 = vpop.f32.mrb[0].mxu0
      %v6226 = vadd.f32 0.0, %v6225
      %v6227 = vpop.f32.mrb[0].mxu0
      %6228 = vmatprep.mubr.bf16.mxu0 0
      %6229 = vmatmul.mubr.bf16.gmra.mrb[0].mxu0 %v6160
      %v6230 = vpop.f32.mrb[0].mxu0
      %v6231 = vadd.f32 0.0, %v6230
      %v6232 = vpop.f32.mrb[0].mxu0
      %v6233 = vpop.f32.mrb[0].mxu0
      %v6234 = vadd.f32 0.0, %v6233
      %v6235 = vpop.f32.mrb[0].mxu0
      %6236 = vmatprep.mubr.bf16.mxu0 0
      %6237 = vmatmul.mubr.bf16.gmra.mrb[0].mxu0 %v6163
      %v6238 = vpop.f32.mrb[0].mxu0
      %v6239 = vadd.f32 0.0, %v6238
      %v6240 = vpop.f32.mrb[0].mxu0
      %v6241 = vpop.f32.mrb[0].mxu0
      %v6242 = vadd.f32 0.0, %v6241
      %v6243 = vpop.f32.mrb[0].mxu0
      %6244 = vmatprep.mubr.bf16.mxu0 0
      %6245 = vmatmul.mubr.bf16.gmra.mrb[0].mxu0 %v6166
      %v6246 = vpop.f32.mrb[0].mxu0
      %v6247 = vadd.f32 0.0, %v6246
      %v6248 = vpop.f32.mrb[0].mxu0
      %v6249 = vpop.f32.mrb[0].mxu0
      %v6250 = vadd.f32 0.0, %v6249
      %v6251 = vpop.f32.mrb[0].mxu0
      %6252 = vmatprep.mubr.bf16.mxu0 0
      %6253 = vmatmul.mubr.bf16.gmra.mrb[0].mxu0 %v6169
      %v6254 = vpop.f32.mrb[0].mxu0
      %v6255 = vadd.f32 0.0, %v6254
      %v6256 = vpop.f32.mrb[0].mxu0
      %v6257 = vpop.f32.mrb[0].mxu0
      %v6258 = vadd.f32 0.0, %v6257
      %v6259 = vpop.f32.mrb[0].mxu0
      %6260 = vmatprep.mubr.bf16.mxu0 0
      %6261 = vmatmul.mubr.bf16.gmra.mrb[0].mxu0 %v6172
      %v6262 = vpop.f32.mrb[0].mxu0
      %v6263 = vadd.f32 0.0, %v6262
      %v6264 = vpop.f32.mrb[0].mxu0
      %v6265 = vpop.f32.mrb[0].mxu0
      %v6266 = vadd.f32 0.0, %v6265
      %v6267 = vpop.f32.mrb[0].mxu0
      %6268 = vmatprep.mubr.bf16.mxu0 0
      %6269 = vmatmul.mubr.bf16.gmra.mrb[0].mxu0 %v6175
      %v6270 = vpop.f32.mrb[0].mxu0
      %v6271 = vadd.f32 0.0, %v6270
      %v6272 = vpop.f32.mrb[0].mxu0
      %v6273 = vpop.f32.mrb[0].mxu0
      %v6274 = vadd.f32 0.0, %v6273
      %v6275 = vpop.f32.mrb[0].mxu0
      %6276 = vdwg.mxu0
      %v6277 = vadd.f32 %v6112, %v6215
      %v6278 = vadd.f32 %v6113, %v6218
      %v6279 = vadd.f32 %v6114, %v6223
      %v6280 = vadd.f32 %v6115, %v6226
      %v6281 = vadd.f32 %v6116, %v6231
      %v6282 = vadd.f32 %v6117, %v6234
      %v6283 = vadd.f32 %v6118, %v6239
      %v6284 = vadd.f32 %v6119, %v6242
      %v6285 = vadd.f32 %v6120, %v6247
      %v6286 = vadd.f32 %v6121, %v6250
      %v6287 = vadd.f32 %v6122, %v6255
      %v6288 = vadd.f32 %v6123, %v6258
      %v6289 = vadd.f32 %v6124, %v6263
      %v6290 = vadd.f32 %v6125, %v6266
      %v6291 = vadd.f32 %v6126, %v6271
      %v6292 = vadd.f32 %v6127, %v6274
      %s6293 = scalar_lea.vmem [#allocation3], 240
      %v6294 = vld [vmem:[%s6293] sm:$0xff]
      %v6295 = vld [vmem:[%s6293 + $0x8] sm:$0xff]
      %v6296 = vld [vmem:[%s6293 + $0x18] sm:$0xff]
      %v6297 = vld [vmem:[%s6293 + $0x20] sm:$0xff]
      %v6298 = vld [vmem:[%s6293 + $0x30] sm:$0xff]
      %v6299 = vld [vmem:[%s6293 + $0x38] sm:$0xff]
      %v6300 = vld [vmem:[%s6293 + $0x48] sm:$0xff]
      %v6301 = vld [vmem:[%s6293 + $0x50] sm:$0xff]
      %v6302 = vld [vmem:[%s6293 + $0x60] sm:$0xff]
      %v6303 = vld [vmem:[%s6293 + $0x68] sm:$0xff]
      %v6304 = vld [vmem:[%s6293 + $0x78] sm:$0xff]
      %v6305 = vld [vmem:[%s6293 + $0x80] sm:$0xff]
      %v6306 = vld [vmem:[%s6293 + $0x90] sm:$0xff]
      %v6307 = vld [vmem:[%s6293 + $0x98] sm:$0xff]
      %v6308 = vld [vmem:[%s6293 + $0xa8] sm:$0xff]
      %v6309 = vld [vmem:[%s6293 + $0xb0] sm:$0xff]
      %v6310 = vpack.c.bf16 %v6295, %v6294
      %v6311 = vpack.c.bf16 %v6297, %v6296
      %v6312 = vpack.c.bf16 %v6299, %v6298
      %v6313 = vpack.c.bf16 %v6301, %v6300
      %v6314 = vpack.c.bf16 %v6303, %v6302
      %v6315 = vpack.c.bf16 %v6305, %v6304
      %v6316 = vpack.c.bf16 %v6307, %v6306
      %v6317 = vpack.c.bf16 %v6309, %v6308
      %v6318 = vld [vmem:[%s4644] sm:$0x3]
      %v6320 = vsel %vm226, %v6310, 0
      %v6323 = vsel %vm226, %v6311, 0
      %v6326 = vsel %vm226, %v6312, 0
      %v6329 = vsel %vm226, %v6313, 0
      %v6332 = vsel %vm226, %v6314, 0
      %v6335 = vsel %vm226, %v6315, 0
      %v6338 = vsel %vm226, %v6316, 0
      %v6341 = vsel %vm226, %v6317, 0
      %v6344 = vsel %vm508, %v6318, 0
      %6346 = vmatprep.subr.bf16.mxu0 0
      %6347 = vmatpush1.bf16.msra.mxu0 %v6344
      %6348 = vmatprep.subr.bf16.mxu0 0
      %6349 = vmatpush1.bf16.msra.mxu0 0
      %6350 = vmatprep.subr.bf16.mxu0 0
      %6351 = vmatpush1.bf16.msra.mxu0 0
      %6352 = vmatprep.subr.bf16.mxu0 0
      %6353 = vmatpush1.bf16.msra.mxu0 0
      %6354 = vmatprep.subr.bf16.mxu0 0
      %6355 = vmatpush1.bf16.msra.mxu0 0
      %6356 = vmatprep.subr.bf16.mxu0 0
      %6357 = vmatpush1.bf16.msra.mxu0 0
      %6358 = vmatprep.subr.bf16.mxu0 0
      %6359 = vmatpush1.bf16.msra.mxu0 0
      %6360 = vmatprep.subr.bf16.mxu0 0
      %6361 = vmatpush1.bf16.msra.mxu0 0
      %6362 = vmatprep.subr.bf16.mxu0 0
      %6363 = vmatpush1.bf16.msra.mxu0 0
      %6364 = vmatprep.subr.bf16.mxu0 0
      %6365 = vmatpush1.bf16.msra.mxu0 0
      %6366 = vmatprep.subr.bf16.mxu0 0
      %6367 = vmatpush1.bf16.msra.mxu0 0
      %6368 = vmatprep.subr.bf16.mxu0 0
      %6369 = vmatpush1.bf16.msra.mxu0 0
      %6370 = vmatprep.subr.bf16.mxu0 0
      %6371 = vmatpush1.bf16.msra.mxu0 0
      %6372 = vmatprep.subr.bf16.mxu0 0
      %6373 = vmatpush1.bf16.msra.mxu0 0
      %6374 = vmatprep.subr.bf16.mxu0 0
      %6375 = vmatpush1.bf16.msra.mxu0 0
      %6376 = vmatprep.subr.bf16.mxu0 0
      %6377 = vmatpush1.bf16.msra.mxu0 0
      %6378 = vmatprep.mubr.bf16.mxu0 0
      %6379 = vmatmul.mubr.bf16.gmra.mrb[0].mxu0 %v6320
      %v6380 = vpop.f32.mrb[0].mxu0
      %v6381 = vadd.f32 0.0, %v6380
      %v6382 = vpop.f32.mrb[0].mxu0
      %v6383 = vpop.f32.mrb[0].mxu0
      %v6384 = vadd.f32 0.0, %v6383
      %v6385 = vpop.f32.mrb[0].mxu0
      %6386 = vmatprep.mubr.bf16.mxu0 0
      %6387 = vmatmul.mubr.bf16.gmra.mrb[0].mxu0 %v6323
      %v6388 = vpop.f32.mrb[0].mxu0
      %v6389 = vadd.f32 0.0, %v6388
      %v6390 = vpop.f32.mrb[0].mxu0
      %v6391 = vpop.f32.mrb[0].mxu0
      %v6392 = vadd.f32 0.0, %v6391
      %v6393 = vpop.f32.mrb[0].mxu0
      %6394 = vmatprep.mubr.bf16.mxu0 0
      %6395 = vmatmul.mubr.bf16.gmra.mrb[0].mxu0 %v6326
      %v6396 = vpop.f32.mrb[0].mxu0
      %v6397 = vadd.f32 0.0, %v6396
      %v6398 = vpop.f32.mrb[0].mxu0
      %v6399 = vpop.f32.mrb[0].mxu0
      %v6400 = vadd.f32 0.0, %v6399
      %v6401 = vpop.f32.mrb[0].mxu0
      %6402 = vmatprep.mubr.bf16.mxu0 0
      %6403 = vmatmul.mubr.bf16.gmra.mrb[0].mxu0 %v6329
      %v6404 = vpop.f32.mrb[0].mxu0
      %v6405 = vadd.f32 0.0, %v6404
      %v6406 = vpop.f32.mrb[0].mxu0
      %v6407 = vpop.f32.mrb[0].mxu0
      %v6408 = vadd.f32 0.0, %v6407
      %v6409 = vpop.f32.mrb[0].mxu0
      %6410 = vmatprep.mubr.bf16.mxu0 0
      %6411 = vmatmul.mubr.bf16.gmra.mrb[0].mxu0 %v6332
      %v6412 = vpop.f32.mrb[0].mxu0
      %v6413 = vadd.f32 0.0, %v6412
      %v6414 = vpop.f32.mrb[0].mxu0
      %v6415 = vpop.f32.mrb[0].mxu0
      %v6416 = vadd.f32 0.0, %v6415
      %v6417 = vpop.f32.mrb[0].mxu0
      %6418 = vmatprep.mubr.bf16.mxu0 0
      %6419 = vmatmul.mubr.bf16.gmra.mrb[0].mxu0 %v6335
      %v6420 = vpop.f32.mrb[0].mxu0
      %v6421 = vadd.f32 0.0, %v6420
      %v6422 = vpop.f32.mrb[0].mxu0
      %v6423 = vpop.f32.mrb[0].mxu0
      %v6424 = vadd.f32 0.0, %v6423
      %v6425 = vpop.f32.mrb[0].mxu0
      %6426 = vmatprep.mubr.bf16.mxu0 0
      %6427 = vmatmul.mubr.bf16.gmra.mrb[0].mxu0 %v6338
      %v6428 = vpop.f32.mrb[0].mxu0
      %v6429 = vadd.f32 0.0, %v6428
      %v6430 = vpop.f32.mrb[0].mxu0
      %v6431 = vpop.f32.mrb[0].mxu0
      %v6432 = vadd.f32 0.0, %v6431
      %v6433 = vpop.f32.mrb[0].mxu0
      %6434 = vmatprep.mubr.bf16.mxu0 0
      %6435 = vmatmul.mubr.bf16.gmra.mrb[0].mxu0 %v6341
      %v6436 = vpop.f32.mrb[0].mxu0
      %v6437 = vadd.f32 0.0, %v6436
      %v6438 = vpop.f32.mrb[0].mxu0
      %v6439 = vpop.f32.mrb[0].mxu0
      %v6440 = vadd.f32 0.0, %v6439
      %v6441 = vpop.f32.mrb[0].mxu0
      %6442 = vdwg.mxu0
      %v6443 = vadd.f32 %v6277, %v6381
      %v6444 = vadd.f32 %v6278, %v6384
      %v6445 = vadd.f32 %v6279, %v6389
      %v6446 = vadd.f32 %v6280, %v6392
      %v6447 = vadd.f32 %v6281, %v6397
      %v6448 = vadd.f32 %v6282, %v6400
      %v6449 = vadd.f32 %v6283, %v6405
      %v6450 = vadd.f32 %v6284, %v6408
      %v6451 = vadd.f32 %v6285, %v6413
      %v6452 = vadd.f32 %v6286, %v6416
      %v6453 = vadd.f32 %v6287, %v6421
      %v6454 = vadd.f32 %v6288, %v6424
      %v6455 = vadd.f32 %v6289, %v6429
      %v6456 = vadd.f32 %v6290, %v6432
      %v6457 = vadd.f32 %v6291, %v6437
      %v6458 = vadd.f32 %v6292, %v6440
      %v6459 = vld [vmem:[%s6293 + $0x1] sm:$0xff]
      %v6460 = vld [vmem:[%s6293 + $0x9] sm:$0xff]
      %v6461 = vld [vmem:[%s6293 + $0x19] sm:$0xff]
      %v6462 = vld [vmem:[%s6293 + $0x21] sm:$0xff]
      %v6463 = vld [vmem:[%s6293 + $0x31] sm:$0xff]
      %v6464 = vld [vmem:[%s6293 + $0x39] sm:$0xff]
      %v6465 = vld [vmem:[%s6293 + $0x49] sm:$0xff]
      %v6466 = vld [vmem:[%s6293 + $0x51] sm:$0xff]
      %v6467 = vld [vmem:[%s6293 + $0x61] sm:$0xff]
      %v6468 = vld [vmem:[%s6293 + $0x69] sm:$0xff]
      %v6469 = vld [vmem:[%s6293 + $0x79] sm:$0xff]
      %v6470 = vld [vmem:[%s6293 + $0x81] sm:$0xff]
      %v6471 = vld [vmem:[%s6293 + $0x91] sm:$0xff]
      %v6472 = vld [vmem:[%s6293 + $0x99] sm:$0xff]
      %v6473 = vld [vmem:[%s6293 + $0xa9] sm:$0xff]
      %v6474 = vld [vmem:[%s6293 + $0xb1] sm:$0xff]
      %v6475 = vpack.c.bf16 %v6460, %v6459
      %v6476 = vpack.c.bf16 %v6462, %v6461
      %v6477 = vpack.c.bf16 %v6464, %v6463
      %v6478 = vpack.c.bf16 %v6466, %v6465
      %v6479 = vpack.c.bf16 %v6468, %v6467
      %v6480 = vpack.c.bf16 %v6470, %v6469
      %v6481 = vpack.c.bf16 %v6472, %v6471
      %v6482 = vpack.c.bf16 %v6474, %v6473
      %v6483 = vld [vmem:[%s4810] sm:$0x3]
      %v6485 = vsel %vm226, %v6475, 0
      %v6488 = vsel %vm226, %v6476, 0
      %v6491 = vsel %vm226, %v6477, 0
      %v6494 = vsel %vm226, %v6478, 0
      %v6497 = vsel %vm226, %v6479, 0
      %v6500 = vsel %vm226, %v6480, 0
      %v6503 = vsel %vm226, %v6481, 0
      %v6506 = vsel %vm226, %v6482, 0
      %v6509 = vsel %vm508, %v6483, 0
      %6511 = vmatprep.subr.bf16.mxu0 0
      %6512 = vmatpush1.bf16.msra.mxu0 %v6509
      %6513 = vmatprep.subr.bf16.mxu0 0
      %6514 = vmatpush1.bf16.msra.mxu0 0
      %6515 = vmatprep.subr.bf16.mxu0 0
      %6516 = vmatpush1.bf16.msra.mxu0 0
      %6517 = vmatprep.subr.bf16.mxu0 0
      %6518 = vmatpush1.bf16.msra.mxu0 0
      %6519 = vmatprep.subr.bf16.mxu0 0
      %6520 = vmatpush1.bf16.msra.mxu0 0
      %6521 = vmatprep.subr.bf16.mxu0 0
      %6522 = vmatpush1.bf16.msra.mxu0 0
      %6523 = vmatprep.subr.bf16.mxu0 0
      %6524 = vmatpush1.bf16.msra.mxu0 0
      %6525 = vmatprep.subr.bf16.mxu0 0
      %6526 = vmatpush1.bf16.msra.mxu0 0
      %6527 = vmatprep.subr.bf16.mxu0 0
      %6528 = vmatpush1.bf16.msra.mxu0 0
      %6529 = vmatprep.subr.bf16.mxu0 0
      %6530 = vmatpush1.bf16.msra.mxu0 0
      %6531 = vmatprep.subr.bf16.mxu0 0
      %6532 = vmatpush1.bf16.msra.mxu0 0
      %6533 = vmatprep.subr.bf16.mxu0 0
      %6534 = vmatpush1.bf16.msra.mxu0 0
      %6535 = vmatprep.subr.bf16.mxu0 0
      %6536 = vmatpush1.bf16.msra.mxu0 0
      %6537 = vmatprep.subr.bf16.mxu0 0
      %6538 = vmatpush1.bf16.msra.mxu0 0
      %6539 = vmatprep.subr.bf16.mxu0 0
      %6540 = vmatpush1.bf16.msra.mxu0 0
      %6541 = vmatprep.subr.bf16.mxu0 0
      %6542 = vmatpush1.bf16.msra.mxu0 0
      %6543 = vmatprep.mubr.bf16.mxu0 0
      %6544 = vmatmul.mubr.bf16.gmra.mrb[0].mxu0 %v6485
      %v6545 = vpop.f32.mrb[0].mxu0
      %v6546 = vadd.f32 0.0, %v6545
      %v6547 = vpop.f32.mrb[0].mxu0
      %v6548 = vpop.f32.mrb[0].mxu0
      %v6549 = vadd.f32 0.0, %v6548
      %v6550 = vpop.f32.mrb[0].mxu0
      %6551 = vmatprep.mubr.bf16.mxu0 0
      %6552 = vmatmul.mubr.bf16.gmra.mrb[0].mxu0 %v6488
      %v6553 = vpop.f32.mrb[0].mxu0
      %v6554 = vadd.f32 0.0, %v6553
      %v6555 = vpop.f32.mrb[0].mxu0
      %v6556 = vpop.f32.mrb[0].mxu0
      %v6557 = vadd.f32 0.0, %v6556
      %v6558 = vpop.f32.mrb[0].mxu0
      %6559 = vmatprep.mubr.bf16.mxu0 0
      %6560 = vmatmul.mubr.bf16.gmra.mrb[0].mxu0 %v6491
      %v6561 = vpop.f32.mrb[0].mxu0
      %v6562 = vadd.f32 0.0, %v6561
      %v6563 = vpop.f32.mrb[0].mxu0
      %v6564 = vpop.f32.mrb[0].mxu0
      %v6565 = vadd.f32 0.0, %v6564
      %v6566 = vpop.f32.mrb[0].mxu0
      %6567 = vmatprep.mubr.bf16.mxu0 0
      %6568 = vmatmul.mubr.bf16.gmra.mrb[0].mxu0 %v6494
      %v6569 = vpop.f32.mrb[0].mxu0
      %v6570 = vadd.f32 0.0, %v6569
      %v6571 = vpop.f32.mrb[0].mxu0
      %v6572 = vpop.f32.mrb[0].mxu0
      %v6573 = vadd.f32 0.0, %v6572
      %v6574 = vpop.f32.mrb[0].mxu0
      %6575 = vmatprep.mubr.bf16.mxu0 0
      %6576 = vmatmul.mubr.bf16.gmra.mrb[0].mxu0 %v6497
      %v6577 = vpop.f32.mrb[0].mxu0
      %v6578 = vadd.f32 0.0, %v6577
      %v6579 = vpop.f32.mrb[0].mxu0
      %v6580 = vpop.f32.mrb[0].mxu0
      %v6581 = vadd.f32 0.0, %v6580
      %v6582 = vpop.f32.mrb[0].mxu0
      %6583 = vmatprep.mubr.bf16.mxu0 0
      %6584 = vmatmul.mubr.bf16.gmra.mrb[0].mxu0 %v6500
      %v6585 = vpop.f32.mrb[0].mxu0
      %v6586 = vadd.f32 0.0, %v6585
      %v6587 = vpop.f32.mrb[0].mxu0
      %v6588 = vpop.f32.mrb[0].mxu0
      %v6589 = vadd.f32 0.0, %v6588
      %v6590 = vpop.f32.mrb[0].mxu0
      %6591 = vmatprep.mubr.bf16.mxu0 0
      %6592 = vmatmul.mubr.bf16.gmra.mrb[0].mxu0 %v6503
      %v6593 = vpop.f32.mrb[0].mxu0
      %v6594 = vadd.f32 0.0, %v6593
      %v6595 = vpop.f32.mrb[0].mxu0
      %v6596 = vpop.f32.mrb[0].mxu0
      %v6597 = vadd.f32 0.0, %v6596
      %v6598 = vpop.f32.mrb[0].mxu0
      %6599 = vmatprep.mubr.bf16.mxu0 0
      %6600 = vmatmul.mubr.bf16.gmra.mrb[0].mxu0 %v6506
      %v6601 = vpop.f32.mrb[0].mxu0
      %v6602 = vadd.f32 0.0, %v6601
      %v6603 = vpop.f32.mrb[0].mxu0
      %v6604 = vpop.f32.mrb[0].mxu0
      %v6605 = vadd.f32 0.0, %v6604
      %v6606 = vpop.f32.mrb[0].mxu0
      %6607 = vdwg.mxu0
      %v6608 = vadd.f32 %v6443, %v6546
      %v6609 = vadd.f32 %v6444, %v6549
      %v6610 = vadd.f32 %v6445, %v6554
      %v6611 = vadd.f32 %v6446, %v6557
      %v6612 = vadd.f32 %v6447, %v6562
      %v6613 = vadd.f32 %v6448, %v6565
      %v6614 = vadd.f32 %v6449, %v6570
      %v6615 = vadd.f32 %v6450, %v6573
      %v6616 = vadd.f32 %v6451, %v6578
      %v6617 = vadd.f32 %v6452, %v6581
      %v6618 = vadd.f32 %v6453, %v6586
      %v6619 = vadd.f32 %v6454, %v6589
      %v6620 = vadd.f32 %v6455, %v6594
      %v6621 = vadd.f32 %v6456, %v6597
      %v6622 = vadd.f32 %v6457, %v6602
      %v6623 = vadd.f32 %v6458, %v6605
      %v6624 = vld [vmem:[%s6293 + $0x2] sm:$0xff]
      %v6625 = vld [vmem:[%s6293 + $0xa] sm:$0xff]
      %v6626 = vld [vmem:[%s6293 + $0x1a] sm:$0xff]
      %v6627 = vld [vmem:[%s6293 + $0x22] sm:$0xff]
      %v6628 = vld [vmem:[%s6293 + $0x32] sm:$0xff]
      %v6629 = vld [vmem:[%s6293 + $0x3a] sm:$0xff]
      %v6630 = vld [vmem:[%s6293 + $0x4a] sm:$0xff]
      %v6631 = vld [vmem:[%s6293 + $0x52] sm:$0xff]
      %v6632 = vld [vmem:[%s6293 + $0x62] sm:$0xff]
      %v6633 = vld [vmem:[%s6293 + $0x6a] sm:$0xff]
      %v6634 = vld [vmem:[%s6293 + $0x7a] sm:$0xff]
      %v6635 = vld [vmem:[%s6293 + $0x82] sm:$0xff]
      %v6636 = vld [vmem:[%s6293 + $0x92] sm:$0xff]
      %v6637 = vld [vmem:[%s6293 + $0x9a] sm:$0xff]
      %v6638 = vld [vmem:[%s6293 + $0xaa] sm:$0xff]
      %v6639 = vld [vmem:[%s6293 + $0xb2] sm:$0xff]
      %v6640 = vpack.c.bf16 %v6625, %v6624
      %v6641 = vpack.c.bf16 %v6627, %v6626
      %v6642 = vpack.c.bf16 %v6629, %v6628
      %v6643 = vpack.c.bf16 %v6631, %v6630
      %v6644 = vpack.c.bf16 %v6633, %v6632
      %v6645 = vpack.c.bf16 %v6635, %v6634
      %v6646 = vpack.c.bf16 %v6637, %v6636
      %v6647 = vpack.c.bf16 %v6639, %v6638
      %v6648 = vld [vmem:[%s4976] sm:$0x3]
      %v6650 = vsel %vm226, %v6640, 0
      %v6653 = vsel %vm226, %v6641, 0
      %v6656 = vsel %vm226, %v6642, 0
      %v6659 = vsel %vm226, %v6643, 0
      %v6662 = vsel %vm226, %v6644, 0
      %v6665 = vsel %vm226, %v6645, 0
      %v6668 = vsel %vm226, %v6646, 0
      %v6671 = vsel %vm226, %v6647, 0
      %v6674 = vsel %vm508, %v6648, 0
      %6676 = vmatprep.subr.bf16.mxu0 0
      %6677 = vmatpush1.bf16.msra.mxu0 %v6674
      %6678 = vmatprep.subr.bf16.mxu0 0
      %6679 = vmatpush1.bf16.msra.mxu0 0
      %6680 = vmatprep.subr.bf16.mxu0 0
      %6681 = vmatpush1.bf16.msra.mxu0 0
      %6682 = vmatprep.subr.bf16.mxu0 0
      %6683 = vmatpush1.bf16.msra.mxu0 0
      %6684 = vmatprep.subr.bf16.mxu0 0
      %6685 = vmatpush1.bf16.msra.mxu0 0
      %6686 = vmatprep.subr.bf16.mxu0 0
      %6687 = vmatpush1.bf16.msra.mxu0 0
      %6688 = vmatprep.subr.bf16.mxu0 0
      %6689 = vmatpush1.bf16.msra.mxu0 0
      %6690 = vmatprep.subr.bf16.mxu0 0
      %6691 = vmatpush1.bf16.msra.mxu0 0
      %6692 = vmatprep.subr.bf16.mxu0 0
      %6693 = vmatpush1.bf16.msra.mxu0 0
      %6694 = vmatprep.subr.bf16.mxu0 0
      %6695 = vmatpush1.bf16.msra.mxu0 0
      %6696 = vmatprep.subr.bf16.mxu0 0
      %6697 = vmatpush1.bf16.msra.mxu0 0
      %6698 = vmatprep.subr.bf16.mxu0 0
      %6699 = vmatpush1.bf16.msra.mxu0 0
      %6700 = vmatprep.subr.bf16.mxu0 0
      %6701 = vmatpush1.bf16.msra.mxu0 0
      %6702 = vmatprep.subr.bf16.mxu0 0
      %6703 = vmatpush1.bf16.msra.mxu0 0
      %6704 = vmatprep.subr.bf16.mxu0 0
      %6705 = vmatpush1.bf16.msra.mxu0 0
      %6706 = vmatprep.subr.bf16.mxu0 0
      %6707 = vmatpush1.bf16.msra.mxu0 0
      %6708 = vmatprep.mubr.bf16.mxu0 0
      %6709 = vmatmul.mubr.bf16.gmra.mrb[0].mxu0 %v6650
      %v6710 = vpop.f32.mrb[0].mxu0
      %v6711 = vadd.f32 0.0, %v6710
      %v6712 = vpop.f32.mrb[0].mxu0
      %v6713 = vpop.f32.mrb[0].mxu0
      %v6714 = vadd.f32 0.0, %v6713
      %v6715 = vpop.f32.mrb[0].mxu0
      %6716 = vmatprep.mubr.bf16.mxu0 0
      %6717 = vmatmul.mubr.bf16.gmra.mrb[0].mxu0 %v6653
      %v6718 = vpop.f32.mrb[0].mxu0
      %v6719 = vadd.f32 0.0, %v6718
      %v6720 = vpop.f32.mrb[0].mxu0
      %v6721 = vpop.f32.mrb[0].mxu0
      %v6722 = vadd.f32 0.0, %v6721
      %v6723 = vpop.f32.mrb[0].mxu0
      %6724 = vmatprep.mubr.bf16.mxu0 0
      %6725 = vmatmul.mubr.bf16.gmra.mrb[0].mxu0 %v6656
      %v6726 = vpop.f32.mrb[0].mxu0
      %v6727 = vadd.f32 0.0, %v6726
      %v6728 = vpop.f32.mrb[0].mxu0
      %v6729 = vpop.f32.mrb[0].mxu0
      %v6730 = vadd.f32 0.0, %v6729
      %v6731 = vpop.f32.mrb[0].mxu0
      %6732 = vmatprep.mubr.bf16.mxu0 0
      %6733 = vmatmul.mubr.bf16.gmra.mrb[0].mxu0 %v6659
      %v6734 = vpop.f32.mrb[0].mxu0
      %v6735 = vadd.f32 0.0, %v6734
      %v6736 = vpop.f32.mrb[0].mxu0
      %v6737 = vpop.f32.mrb[0].mxu0
      %v6738 = vadd.f32 0.0, %v6737
      %v6739 = vpop.f32.mrb[0].mxu0
      %6740 = vmatprep.mubr.bf16.mxu0 0
      %6741 = vmatmul.mubr.bf16.gmra.mrb[0].mxu0 %v6662
      %v6742 = vpop.f32.mrb[0].mxu0
      %v6743 = vadd.f32 0.0, %v6742
      %v6744 = vpop.f32.mrb[0].mxu0
      %v6745 = vpop.f32.mrb[0].mxu0
      %v6746 = vadd.f32 0.0, %v6745
      %v6747 = vpop.f32.mrb[0].mxu0
      %6748 = vmatprep.mubr.bf16.mxu0 0
      %6749 = vmatmul.mubr.bf16.gmra.mrb[0].mxu0 %v6665
      %v6750 = vpop.f32.mrb[0].mxu0
      %v6751 = vadd.f32 0.0, %v6750
      %v6752 = vpop.f32.mrb[0].mxu0
      %v6753 = vpop.f32.mrb[0].mxu0
      %v6754 = vadd.f32 0.0, %v6753
      %v6755 = vpop.f32.mrb[0].mxu0
      %6756 = vmatprep.mubr.bf16.mxu0 0
      %6757 = vmatmul.mubr.bf16.gmra.mrb[0].mxu0 %v6668
      %v6758 = vpop.f32.mrb[0].mxu0
      %v6759 = vadd.f32 0.0, %v6758
      %v6760 = vpop.f32.mrb[0].mxu0
      %v6761 = vpop.f32.mrb[0].mxu0
      %v6762 = vadd.f32 0.0, %v6761
      %v6763 = vpop.f32.mrb[0].mxu0
      %6764 = vmatprep.mubr.bf16.mxu0 0
      %6765 = vmatmul.mubr.bf16.gmra.mrb[0].mxu0 %v6671
      %v6766 = vpop.f32.mrb[0].mxu0
      %v6767 = vadd.f32 0.0, %v6766
      %v6768 = vpop.f32.mrb[0].mxu0
      %v6769 = vpop.f32.mrb[0].mxu0
      %v6770 = vadd.f32 0.0, %v6769
      %v6771 = vpop.f32.mrb[0].mxu0
      %6772 = vdwg.mxu0
      %v6773 = vadd.f32 %v6608, %v6711
      %v6774 = vadd.f32 %v6609, %v6714
      %v6775 = vadd.f32 %v6610, %v6719
      %v6776 = vadd.f32 %v6611, %v6722
      %v6777 = vadd.f32 %v6612, %v6727
      %v6778 = vadd.f32 %v6613, %v6730
      %v6779 = vadd.f32 %v6614, %v6735
      %v6780 = vadd.f32 %v6615, %v6738
      %v6781 = vadd.f32 %v6616, %v6743
      %v6782 = vadd.f32 %v6617, %v6746
      %v6783 = vadd.f32 %v6618, %v6751
      %v6784 = vadd.f32 %v6619, %v6754
      %v6785 = vadd.f32 %v6620, %v6759
      %v6786 = vadd.f32 %v6621, %v6762
      %v6787 = vadd.f32 %v6622, %v6767
      %v6788 = vadd.f32 %v6623, %v6770
      %v6789 = vld [vmem:[%s4] sm:$0x1]
      %v6791 = vlaneseq
      %v6792 = vshrl.u32 %v6791, 7
      %v6793 = vsub.s32 0, %v6792
      %v6794 = vrot.slane %v6789, %v6793
      %v6796 = vadd.f32 %v6773, %v6794
      %v6797 = vadd.f32 %v6774, %v6794
      %v6798 = vadd.f32 %v6775, %v6794
      %v6799 = vadd.f32 %v6776, %v6794
      %v6800 = vadd.f32 %v6777, %v6794
      %v6801 = vadd.f32 %v6778, %v6794
      %v6802 = vadd.f32 %v6779, %v6794
      %v6803 = vadd.f32 %v6780, %v6794
      %v6804 = vadd.f32 %v6781, %v6794
      %v6805 = vadd.f32 %v6782, %v6794
      %v6806 = vadd.f32 %v6783, %v6794
      %v6807 = vadd.f32 %v6784, %v6794
      %v6808 = vadd.f32 %v6785, %v6794
      %v6809 = vadd.f32 %v6786, %v6794
      %v6810 = vadd.f32 %v6787, %v6794
      %v6811 = vadd.f32 %v6788, %v6794
      %v6812 = vsub.f32 0.0, %v6796
      %v6813 = vsub.f32 0.0, %v6797
      %v6814 = vsub.f32 0.0, %v6798
      %v6815 = vsub.f32 0.0, %v6799
      %v6816 = vsub.f32 0.0, %v6800
      %v6817 = vsub.f32 0.0, %v6801
      %v6818 = vsub.f32 0.0, %v6802
      %v6819 = vsub.f32 0.0, %v6803
      %v6820 = vsub.f32 0.0, %v6804
      %v6821 = vsub.f32 0.0, %v6805
      %v6822 = vsub.f32 0.0, %v6806
      %v6823 = vsub.f32 0.0, %v6807
      %v6824 = vsub.f32 0.0, %v6808
      %v6825 = vsub.f32 0.0, %v6809
      %v6826 = vsub.f32 0.0, %v6810
      %v6827 = vsub.f32 0.0, %v6811
      %v6828 = vmul.f32 %v6812, 1.442695
      %v6829 = vpow.pop %v6828
      %v6830 = vmul.f32 %v6813, 1.442695
      %v6831 = vpow.pop %v6830
      %v6832 = vmul.f32 %v6814, 1.442695
      %v6833 = vpow.pop %v6832
      %v6834 = vmul.f32 %v6815, 1.442695
      %v6835 = vpow.pop %v6834
      %v6836 = vmul.f32 %v6816, 1.442695
      %v6837 = vpow.pop %v6836
      %v6838 = vmul.f32 %v6817, 1.442695
      %v6839 = vpow.pop %v6838
      %v6840 = vmul.f32 %v6818, 1.442695
      %v6841 = vpow.pop %v6840
      %v6842 = vmul.f32 %v6819, 1.442695
      %v6843 = vpow.pop %v6842
      %v6844 = vmul.f32 %v6820, 1.442695
      %v6845 = vpow.pop %v6844
      %v6846 = vmul.f32 %v6821, 1.442695
      %v6847 = vpow.pop %v6846
      %v6848 = vmul.f32 %v6822, 1.442695
      %v6849 = vpow.pop %v6848
      %v6850 = vmul.f32 %v6823, 1.442695
      %v6851 = vpow.pop %v6850
      %v6852 = vmul.f32 %v6824, 1.442695
      %v6853 = vpow.pop %v6852
      %v6854 = vmul.f32 %v6825, 1.442695
      %v6855 = vpow.pop %v6854
      %v6856 = vmul.f32 %v6826, 1.442695
      %v6857 = vpow.pop %v6856
      %v6858 = vmul.f32 %v6827, 1.442695
      %v6859 = vpow.pop %v6858
      %v6860 = vadd.f32 %v6829, 1.0
      %v6861 = vadd.f32 %v6831, 1.0
      %v6862 = vadd.f32 %v6833, 1.0
      %v6863 = vadd.f32 %v6835, 1.0
      %v6864 = vadd.f32 %v6837, 1.0
      %v6865 = vadd.f32 %v6839, 1.0
      %v6866 = vadd.f32 %v6841, 1.0
      %v6867 = vadd.f32 %v6843, 1.0
      %v6868 = vadd.f32 %v6845, 1.0
      %v6869 = vadd.f32 %v6847, 1.0
      %v6870 = vadd.f32 %v6849, 1.0
      %v6871 = vadd.f32 %v6851, 1.0
      %v6872 = vadd.f32 %v6853, 1.0
      %v6873 = vadd.f32 %v6855, 1.0
      %v6874 = vadd.f32 %v6857, 1.0
      %v6875 = vadd.f32 %v6859, 1.0
      %v6876 = vrcp.pop %v6860
      %v6877 = vmul.f32 1.0, %v6876
      %v6878 = vrcp.pop %v6861
      %v6879 = vmul.f32 1.0, %v6878
      %v6880 = vrcp.pop %v6862
      %v6881 = vmul.f32 1.0, %v6880
      %v6882 = vrcp.pop %v6863
      %v6883 = vmul.f32 1.0, %v6882
      %v6884 = vrcp.pop %v6864
      %v6885 = vmul.f32 1.0, %v6884
      %v6886 = vrcp.pop %v6865
      %v6887 = vmul.f32 1.0, %v6886
      %v6888 = vrcp.pop %v6866
      %v6889 = vmul.f32 1.0, %v6888
      %v6890 = vrcp.pop %v6867
      %v6891 = vmul.f32 1.0, %v6890
      %v6892 = vrcp.pop %v6868
      %v6893 = vmul.f32 1.0, %v6892
      %v6894 = vrcp.pop %v6869
      %v6895 = vmul.f32 1.0, %v6894
      %v6896 = vrcp.pop %v6870
      %v6897 = vmul.f32 1.0, %v6896
      %v6898 = vrcp.pop %v6871
      %v6899 = vmul.f32 1.0, %v6898
      %v6900 = vrcp.pop %v6872
      %v6901 = vmul.f32 1.0, %v6900
      %v6902 = vrcp.pop %v6873
      %v6903 = vmul.f32 1.0, %v6902
      %v6904 = vrcp.pop %v6874
      %v6905 = vmul.f32 1.0, %v6904
      %v6906 = vrcp.pop %v6875
      %v6907 = vmul.f32 1.0, %v6906
      %v6908 = vmul.f32 %v6796, %v6877
      %v6909 = vmul.f32 %v6797, %v6879
      %v6910 = vmul.f32 %v6798, %v6881
      %v6911 = vmul.f32 %v6799, %v6883
      %v6912 = vmul.f32 %v6800, %v6885
      %v6913 = vmul.f32 %v6801, %v6887
      %v6914 = vmul.f32 %v6802, %v6889
      %v6915 = vmul.f32 %v6803, %v6891
      %v6916 = vmul.f32 %v6804, %v6893
      %v6917 = vmul.f32 %v6805, %v6895
      %v6918 = vmul.f32 %v6806, %v6897
      %v6919 = vmul.f32 %v6807, %v6899
      %v6920 = vmul.f32 %v6808, %v6901
      %v6921 = vmul.f32 %v6809, %v6903
      %v6922 = vmul.f32 %v6810, %v6905
      %v6923 = vmul.f32 %v6811, %v6907
      %v6924 = vpack.c.bf16 %v6909, %v6908
      %v6925 = vpack.c.bf16 %v6911, %v6910
      %v6926 = vpack.c.bf16 %v6913, %v6912
      %v6927 = vpack.c.bf16 %v6915, %v6914
      %v6928 = vpack.c.bf16 %v6917, %v6916
      %v6929 = vpack.c.bf16 %v6919, %v6918
      %v6930 = vpack.c.bf16 %v6921, %v6920
      %v6931 = vpack.c.bf16 %v6923, %v6922
      %v6940 = vunpack.c.l.b16 %v6924
      %v6941 = vunpack.c.h.b16 %v6924
      %v6942 = vunpack.c.l.b16 %v6925
      %v6943 = vunpack.c.h.b16 %v6925
      %v6944 = vunpack.c.l.b16 %v6926
      %v6945 = vunpack.c.h.b16 %v6926
      %v6946 = vunpack.c.l.b16 %v6927
      %v6947 = vunpack.c.h.b16 %v6927
      %v6948 = vunpack.c.l.b16 %v6928
      %v6949 = vunpack.c.h.b16 %v6928
      %v6950 = vunpack.c.l.b16 %v6929
      %v6951 = vunpack.c.h.b16 %v6929
      %v6952 = vunpack.c.l.b16 %v6930
      %v6953 = vunpack.c.h.b16 %v6930
      %v6954 = vunpack.c.l.b16 %v6931
      %v6955 = vunpack.c.h.b16 %v6931
      %v6956 = vpack.c.b16 %v6940, %v6940
      %v6957 = vpack.c.b16 %v6941, %v6941
      %v6958 = vpack.c.b16 %v6942, %v6942
      %v6959 = vpack.c.b16 %v6943, %v6943
      %v6960 = vpack.c.b16 %v6944, %v6944
      %v6961 = vpack.c.b16 %v6945, %v6945
      %v6962 = vpack.c.b16 %v6946, %v6946
      %v6963 = vpack.c.b16 %v6947, %v6947
      %v6964 = vpack.c.b16 %v6948, %v6948
      %v6965 = vpack.c.b16 %v6949, %v6949
      %v6966 = vpack.c.b16 %v6950, %v6950
      %v6967 = vpack.c.b16 %v6951, %v6951
      %v6968 = vpack.c.b16 %v6952, %v6952
      %v6969 = vpack.c.b16 %v6953, %v6953
      %v6970 = vpack.c.b16 %v6954, %v6954
      %v6971 = vpack.c.b16 %v6955, %v6955
      %s6988 = scalar_lea.vmem %s224, 64
      %6989 = vst.msk [vmem:[%s6988] sm:$0xf] %vm5317, %v6956
      %6990 = vst.msk [vmem:[%s6988 + $0x4] sm:$0xf] %vm5317, %v6957
      %6991 = vst.msk [vmem:[%s6988 + $0x8] sm:$0xf] %vm5317, %v6958
      %6992 = vst.msk [vmem:[%s6988 + $0xc] sm:$0xf] %vm5317, %v6959
      %6993 = vst.msk [vmem:[%s6988 + $0x10] sm:$0xf] %vm5317, %v6960
      %6994 = vst.msk [vmem:[%s6988 + $0x14] sm:$0xf] %vm5317, %v6961
      %6995 = vst.msk [vmem:[%s6988 + $0x18] sm:$0xf] %vm5317, %v6962
      %6996 = vst.msk [vmem:[%s6988 + $0x1c] sm:$0xf] %vm5317, %v6963
      %6997 = vst.msk [vmem:[%s6988 + $0x20] sm:$0xf] %vm5317, %v6964
      %6998 = vst.msk [vmem:[%s6988 + $0x24] sm:$0xf] %vm5317, %v6965
      %6999 = vst.msk [vmem:[%s6988 + $0x28] sm:$0xf] %vm5317, %v6966
      %7000 = vst.msk [vmem:[%s6988 + $0x2c] sm:$0xf] %vm5317, %v6967
      %7001 = vst.msk [vmem:[%s6988 + $0x30] sm:$0xf] %vm5317, %v6968
      %7002 = vst.msk [vmem:[%s6988 + $0x34] sm:$0xf] %vm5317, %v6969
      %7003 = vst.msk [vmem:[%s6988 + $0x38] sm:$0xf] %vm5317, %v6970
      %7004 = vst.msk [vmem:[%s6988 + $0x3c] sm:$0xf] %vm5317, %v6971
      %p7005 = scmp.lt.s32.totalorder %s16, 1
      %s7006 = scalar_select %p7005, %s16, 1
      %s7007 = smul.addr %s7006, 32
      %s7008 = smul.addr %s7007, 4
      %s7009 = scalar_lea.vmem %s5, %s7008
      // Predicated region
      $region41: #{c2f_v2_forward.4} parent=39 // pred_check
        %p7010 = pneg %p144
      $region42: #{c2f_v2_forward.4} parent=39 // pred_check_branch
        %7012 = sbr.rel (%p7010) target = $region44
      $region43: #{c2f_v2_forward.4} parent=39 // pred_region
        _
      $region44: #{c2f_v2_forward.4} parent=39 // pred_fallthru
        _
    $region40: #{c2f_v2_forward.4} parent=5 // pred_fallthru
      _
    %p7013 = scmp.le.s32.totalorder 2, %s11
    // Predicated region
    $region45: #{c2f_v2_forward.4} parent=5 // pred_check
      %p7014 = pneg %p7013
    $region46: #{c2f_v2_forward.4} parent=5 // pred_check_branch
      %7016 = sbr.rel (%p7014) target = $region48
    $region47: #{c2f_v2_forward.4} parent=5 // pred_region
      %s7017 = ssub.s32 %s11, 2
      // Predicated region
      $region49: #{c2f_v2_forward.4} parent=47 // pred_check
        %p7018 = pneg %p150
      $region50: #{c2f_v2_forward.4} parent=47 // pred_check_branch
        %7020 = sbr.rel (%p7018) target = $region52
      $region51: #{c2f_v2_forward.4} parent=47 // pred_region
        %p7021 = scmp.lt.s32.totalorder %s17, 1
        %s7022 = scalar_select %p7021, %s17, 1
        %s7023 = smul.addr %s7022, 32
        %s7024 = smul.addr %s7023, 4
        %s7025 = scalar_lea.vmem %s5, %s7024
      $region52: #{c2f_v2_forward.4} parent=47 // pred_fallthru
        _
    $region48: #{c2f_v2_forward.4} parent=5 // pred_fallthru
      _
  $region6: #{c2f_v2_forward.4} parent=0 // loop_footer
    %s15 = sadd.s32 1, %s11
  $region7: #{c2f_v2_forward.4} parent=0 // loop_footer_branch
    %10 = sbr.rel target = $region3
  $region8: #{c2f_v2_forward.4} parent=0 // loop_exit
    _

</llo_original>
